<compile_context>
chip_gen: v5e
topology: v5e:2x2
jax: 0.10.0
libtpu: 0.0.40
codegen_flags: <defaults>
</compile_context>

<pallas_src>
import numpy as np
import jax
import jax.numpy as jnp
from jax.experimental import pallas as pl
from jax.experimental.pallas import tpu as pltpu

COUT_LANES = 128  # pad Cout up to a full lane tile for lane-dense stores


def conv3d_relu_kernel(x_ref, w_ref, b_ref, o_ref, acc_ref):
    """One batch element: 3x3x3 conv + bias + ReLU (kw pre-fused into channels).

    x_ref:   [1, D+2, H+2, W, 3*Cin]  bf16  (spatially padded, kw-fused input)
    w_ref:   [9, 3*Cin, COUTP]        bf16  (one matrix per (kd, kh) tap)
    b_ref:   [1, COUTP]               f32
    o_ref:   [1, D*H*W, COUTP]        bf16
    acc_ref: [D*H*W, COUTP]           f32   VMEM scratch accumulator
    """
    _, Dp2, Hp2, W, K = x_ref.shape
    D, H = Dp2 - 2, Hp2 - 2

    # 9 statically unrolled MXU matmuls with K = 3*Cin.  The (kd, kh) slices
    # only touch leading dims and the flatten keeps (W, 3*Cin) as the tiled
    # minor dims (W is a multiple of 8), so no relayout copies are generated.
    for t in range(9):
        kd, kh = t // 3, t % 3
        slab = x_ref[0, kd:kd + D, kh:kh + H, :, :]        # [D, H, W, 3*Cin]
        slab2d = slab.reshape(D * H * W, K)
        contrib = jnp.dot(slab2d, w_ref[t],
                          preferred_element_type=jnp.float32)
        if t == 0:
            acc_ref[...] = contrib
        else:
            acc_ref[...] += contrib

    out = jnp.maximum(acc_ref[...] + b_ref[...], 0.0)      # bias + ReLU
    o_ref[0, :, :] = out.astype(o_ref.dtype)               # 128-lane dense store


def conv3d_relu(x_ndhwc, w_oidhw, b):
    """Single conv stage.

    x_ndhwc: [N, D, H, W, Cin] bf16;  w_oidhw: [Cout, Cin, 3, 3, 3] f32;
    returns [N, D, H, W, Cout] bf16.
    """
    N, D, H, W, Cin = x_ndhwc.shape
    Cout = w_oidhw.shape[0]
    coutp = max(COUT_LANES,
                ((Cout + COUT_LANES - 1) // COUT_LANES) * COUT_LANES)

    # Pad spatial dims and fuse the kw tap into the channel dim.  XLA fuses
    # the pad + shifted slices + concat into a single producer of xkw, so this
    # replaces both the stand-alone jnp.pad pass and the 27 in-kernel
    # slice/reshape copies of the previous version.
    xp = jnp.pad(x_ndhwc, ((0, 0), (1, 1), (1, 1), (1, 1), (0, 0)))
    xkw = jnp.concatenate([xp[:, :, :, k:k + W, :] for k in range(3)], axis=-1)
    # xkw: [N, D+2, H+2, W, 3*Cin]

    # [Cout, Cin, kd, kh, kw] -> [(kd,kh)=9, (kw,Cin)=3*Cin, Cout] -> pad Cout.
    wt = jnp.transpose(w_oidhw, (2, 3, 4, 1, 0)).reshape(9, 3 * Cin, Cout)
    wt = jnp.pad(wt, ((0, 0), (0, 0), (0, coutp - Cout))).astype(jnp.bfloat16)
    b2 = jnp.pad(b, (0, coutp - Cout)).astype(jnp.float32).reshape(1, coutp)

    # Rough whole-volume VMEM footprint guard (see TODO about halo tiling).
    vmem_est = (2 * xkw[0].size * 2 + 2 * wt.size * 2 + 2 * b2.size * 4
                + (2 * 2 + 4) * D * H * W * coutp)
    assert vmem_est < 24 * 1024 * 1024, "add spatial (halo) tiling for this size"

    flops = 2 * N * D * H * W * 27 * Cin * Cout
    bytes_accessed = (xkw.size * 2 + wt.size * 2 + b2.size * 4
                      + N * D * H * W * coutp * 2)

    out = pl.pallas_call(
        conv3d_relu_kernel,
        out_shape=jax.ShapeDtypeStruct((N, D * H * W, coutp), jnp.bfloat16),
        grid=(N,),
        in_specs=[
            pl.BlockSpec((1, D + 2, H + 2, W, 3 * Cin),
                         lambda n: (n, 0, 0, 0, 0)),
            pl.BlockSpec((9, 3 * Cin, coutp), lambda n: (0, 0, 0)),
            pl.BlockSpec((1, coutp), lambda n: (0, 0)),
        ],
        out_specs=pl.BlockSpec((1, D * H * W, coutp), lambda n: (n, 0, 0)),
        scratch_shapes=[pltpu.VMEM((D * H * W, coutp), jnp.float32)],
        compiler_params=pltpu.CompilerParams(
            dimension_semantics=("parallel",)),
        cost_estimate=pl.CostEstimate(flops=flops, transcendentals=0,
                                      bytes_accessed=bytes_accessed),
    )(xkw, wt, b2)

    # Lane-dense kernel output -> real channel count (reshape is free on HBM).
    return out.reshape(N, D, H, W, coutp)[..., :Cout]


def conv_block_forward(x_ncdhw, weights, biases):
    """ConvBlock forward.  x_ncdhw: [N, Cin, D, H, W] f32 (PyTorch layout)."""
    # NCDHW -> NDHWC, bf16 activations between stages.
    y = jnp.transpose(x_ncdhw, (0, 2, 3, 4, 1)).astype(jnp.bfloat16)
    for w, b in zip(weights, biases):
        y = conv3d_relu(y, w, b)
    # NDHWC -> NCDHW, back to f32 to match the PyTorch module's output dtype.
    return jnp.transpose(y, (0, 4, 1, 2, 3)).astype(jnp.float32)


def reference_forward(x_ncdhw, weights, biases):
    """Pure-JAX f32 reference (lax conv) for correctness checking."""
    y = x_ncdhw
    for w, b in zip(weights, biases):
        y = jax.lax.conv_general_dilated(
            y, w, window_strides=(1, 1, 1), padding="SAME",
            dimension_numbers=("NCDHW", "OIDHW", "NCDHW"))
        y = y + b[None, :, None, None, None]
        y = jnp.maximum(y, 0.0)
    return y


def init_params(key, n_stages, n_filters_in, n_filters_out):
    """Deterministic synthetic params with PyTorch Conv3d shapes."""
    weights, biases = [], []
    for i in range(n_stages):
        cin = n_filters_in if i == 0 else n_filters_out
        key, kw, kb = jax.random.split(key, 3)
        fan_in = cin * 3 * 3 * 3
        bound = 1.0 / np.sqrt(fan_in)
        w = jax.random.uniform(kw, (n_filters_out, cin, 3, 3, 3),
                               jnp.float32, -bound, bound)
        b = jax.random.uniform(kb, (n_filters_out,), jnp.float32,
                               -bound, bound)
        weights.append(w)
        biases.append(b)
    return weights, biases


if __name__ == "__main__":
    # ConvBlock(n_stages=2, n_filters_in=4, n_filters_out=8, normalization='none')
    n_stages, n_filters_in, n_filters_out = 2, 4, 8
    N, D, H, W = 2, 8, 8, 8

    key = jax.random.PRNGKey(0)
    key, kx = jax.random.split(key)
    x = jax.random.normal(kx, (N, n_filters_in, D, H, W), jnp.float32)

    weights, biases = init_params(key, n_stages, n_filters_in, n_filters_out)

    out = conv_block_forward(x, weights, biases)
    out = jax.block_until_ready(out)

    ref = jax.block_until_ready(reference_forward(x, weights, biases))
    assert out.shape == (N, n_filters_out, D, H, W)
    # Tolerance loosened vs. the f32 reference because activations/weights are
    # cast to bf16 at the pallas_call boundary (accumulation stays f32).
    np.testing.assert_allclose(np.asarray(out), np.asarray(ref),
                               rtol=2e-2, atol=2e-2)

    print("KERNEL_OK")
</pallas_src>

<mosaic_0001>
module attributes {stable_mosaic.version = 11 : i64} {
  func.func @conv3d_relu_kernel(%arg0: i32, %arg1: memref<1x10x10x8x12xbf16, #tpu.memory_space<vmem>>, %arg2: memref<9x12x128xbf16, #tpu.memory_space<vmem>>, %arg3: memref<1x128xf32, #tpu.memory_space<vmem>>, %arg4: memref<1x512x128xbf16, #tpu.memory_space<vmem>>, %arg5: memref<512x128xf32, #tpu.memory_space<vmem>>) attributes {dimension_semantics = [#tpu.dimension_semantics<parallel>], iteration_bounds = array<i64: 2>, scalar_prefetch = 0 : i64, scratch_operands = 1 : i64, tpu.core_type = #tpu.core_type<tc>, window_params = [{transform_indices = @transform_0, window_bounds = array<i64: 1, 10, 10, 8, 12>}, {pipeline_mode = #tpu.pipeline_mode<synchronous>, transform_indices = @transform_1, window_bounds = array<i64: 9, 12, 128>}, {pipeline_mode = #tpu.pipeline_mode<synchronous>, transform_indices = @transform_2, window_bounds = array<i64: 1, 128>}, {transform_indices = @transform_3, window_bounds = array<i64: 1, 512, 128>}]} {
    %c0 = arith.constant 0 : index
    %c0_0 = arith.constant 0 : index
    %c0_1 = arith.constant 0 : index
    %c0_2 = arith.constant 0 : index
    %c0_3 = arith.constant 0 : index
    %0 = vector.load %arg1[%c0, %c0_0, %c0_1, %c0_2, %c0_3] : memref<1x10x10x8x12xbf16, #tpu.memory_space<vmem>>, vector<1x8x8x8x12xbf16>
    %1 = vector.shape_cast %0 : vector<1x8x8x8x12xbf16> to vector<8x8x8x12xbf16>
    %2 = vector.shape_cast %1 : vector<8x8x8x12xbf16> to vector<512x12xbf16>
    %c0_4 = arith.constant 0 : index
    %c0_5 = arith.constant 0 : index
    %c0_6 = arith.constant 0 : index
    %3 = vector.load %arg2[%c0_4, %c0_5, %c0_6] : memref<9x12x128xbf16, #tpu.memory_space<vmem>>, vector<1x12x128xbf16>
    %4 = vector.shape_cast %3 : vector<1x12x128xbf16> to vector<12x128xbf16>
    %cst = arith.constant dense<0.000000e+00> : vector<512x128xf32>
    %5 = tpu.matmul %2, %4, %cst {dimension_numbers = #tpu.dot_dimension_numbers<[1], [0], [0], [1], [0, 0, 1, 1], [], []>} : vector<512x12xbf16>, vector<12x128xbf16>, vector<512x128xf32> -> vector<512x128xf32>
    %c0_7 = arith.constant 0 : index
    %c0_8 = arith.constant 0 : index
    %6 = vector.load %arg5[%c0_7, %c0_8] : memref<512x128xf32, #tpu.memory_space<vmem>>, vector<512x128xf32>
    tpu.vector_store %arg5[%c0_7, %c0_8], %5 {strides = array<i32>} : memref<512x128xf32, #tpu.memory_space<vmem>>, vector<512x128xf32>,
    %c0_9 = arith.constant 0 : index
    %c0_10 = arith.constant 0 : index
    %c1 = arith.constant 1 : index
    %c0_11 = arith.constant 0 : index
    %c0_12 = arith.constant 0 : index
    %7 = vector.load %arg1[%c0_9, %c0_10, %c1, %c0_11, %c0_12] : memref<1x10x10x8x12xbf16, #tpu.memory_space<vmem>>, vector<1x8x8x8x12xbf16>
    %8 = vector.shape_cast %7 : vector<1x8x8x8x12xbf16> to vector<8x8x8x12xbf16>
    %9 = vector.shape_cast %8 : vector<8x8x8x12xbf16> to vector<512x12xbf16>
    %c1_13 = arith.constant 1 : index
    %c0_14 = arith.constant 0 : index
    %c0_15 = arith.constant 0 : index
    %10 = vector.load %arg2[%c1_13, %c0_14, %c0_15] : memref<9x12x128xbf16, #tpu.memory_space<vmem>>, vector<1x12x128xbf16>
    %11 = vector.shape_cast %10 : vector<1x12x128xbf16> to vector<12x128xbf16>
    %cst_16 = arith.constant dense<0.000000e+00> : vector<512x128xf32>
    %12 = tpu.matmul %9, %11, %cst_16 {dimension_numbers = #tpu.dot_dimension_numbers<[1], [0], [0], [1], [0, 0, 1, 1], [], []>} : vector<512x12xbf16>, vector<12x128xbf16>, vector<512x128xf32> -> vector<512x128xf32>
    %c0_17 = arith.constant 0 : index
    %c0_18 = arith.constant 0 : index
    %13 = vector.load %arg5[%c0_17, %c0_18] : memref<512x128xf32, #tpu.memory_space<vmem>>, vector<512x128xf32>
    %14 = arith.addf %13, %12 : vector<512x128xf32>
    %c0_19 = arith.constant 0 : index
    %c0_20 = arith.constant 0 : index
    %15 = vector.load %arg5[%c0_19, %c0_20] : memref<512x128xf32, #tpu.memory_space<vmem>>, vector<512x128xf32>
    tpu.vector_store %arg5[%c0_19, %c0_20], %14 {strides = array<i32>} : memref<512x128xf32, #tpu.memory_space<vmem>>, vector<512x128xf32>,
    %c0_21 = arith.constant 0 : index
    %c0_22 = arith.constant 0 : index
    %c2 = arith.constant 2 : index
    %c0_23 = arith.constant 0 : index
    %c0_24 = arith.constant 0 : index
    %16 = vector.load %arg1[%c0_21, %c0_22, %c2, %c0_23, %c0_24] : memref<1x10x10x8x12xbf16, #tpu.memory_space<vmem>>, vector<1x8x8x8x12xbf16>
    %17 = vector.shape_cast %16 : vector<1x8x8x8x12xbf16> to vector<8x8x8x12xbf16>
    %18 = vector.shape_cast %17 : vector<8x8x8x12xbf16> to vector<512x12xbf16>
    %c2_25 = arith.constant 2 : index
    %c0_26 = arith.constant 0 : index
    %c0_27 = arith.constant 0 : index
    %19 = vector.load %arg2[%c2_25, %c0_26, %c0_27] : memref<9x12x128xbf16, #tpu.memory_space<vmem>>, vector<1x12x128xbf16>
    %20 = vector.shape_cast %19 : vector<1x12x128xbf16> to vector<12x128xbf16>
    %cst_28 = arith.constant dense<0.000000e+00> : vector<512x128xf32>
    %21 = tpu.matmul %18, %20, %cst_28 {dimension_numbers = #tpu.dot_dimension_numbers<[1], [0], [0], [1], [0, 0, 1, 1], [], []>} : vector<512x12xbf16>, vector<12x128xbf16>, vector<512x128xf32> -> vector<512x128xf32>
    %c0_29 = arith.constant 0 : index
    %c0_30 = arith.constant 0 : index
    %22 = vector.load %arg5[%c0_29, %c0_30] : memref<512x128xf32, #tpu.memory_space<vmem>>, vector<512x128xf32>
    %23 = arith.addf %22, %21 : vector<512x128xf32>
    %c0_31 = arith.constant 0 : index
    %c0_32 = arith.constant 0 : index
    %24 = vector.load %arg5[%c0_31, %c0_32] : memref<512x128xf32, #tpu.memory_space<vmem>>, vector<512x128xf32>
    tpu.vector_store %arg5[%c0_31, %c0_32], %23 {strides = array<i32>} : memref<512x128xf32, #tpu.memory_space<vmem>>, vector<512x128xf32>,
    %c0_33 = arith.constant 0 : index
    %c1_34 = arith.constant 1 : index
    %c0_35 = arith.constant 0 : index
    %c0_36 = arith.constant 0 : index
    %c0_37 = arith.constant 0 : index
    %25 = vector.load %arg1[%c0_33, %c1_34, %c0_35, %c0_36, %c0_37] : memref<1x10x10x8x12xbf16, #tpu.memory_space<vmem>>, vector<1x8x8x8x12xbf16>
    %26 = vector.shape_cast %25 : vector<1x8x8x8x12xbf16> to vector<8x8x8x12xbf16>
    %27 = vector.shape_cast %26 : vector<8x8x8x12xbf16> to vector<512x12xbf16>
    %c3 = arith.constant 3 : index
    %c0_38 = arith.constant 0 : index
    %c0_39 = arith.constant 0 : index
    %28 = vector.load %arg2[%c3, %c0_38, %c0_39] : memref<9x12x128xbf16, #tpu.memory_space<vmem>>, vector<1x12x128xbf16>
    %29 = vector.shape_cast %28 : vector<1x12x128xbf16> to vector<12x128xbf16>
    %cst_40 = arith.constant dense<0.000000e+00> : vector<512x128xf32>
    %30 = tpu.matmul %27, %29, %cst_40 {dimension_numbers = #tpu.dot_dimension_numbers<[1], [0], [0], [1], [0, 0, 1, 1], [], []>} : vector<512x12xbf16>, vector<12x128xbf16>, vector<512x128xf32> -> vector<512x128xf32>
    %c0_41 = arith.constant 0 : index
    %c0_42 = arith.constant 0 : index
    %31 = vector.load %arg5[%c0_41, %c0_42] : memref<512x128xf32, #tpu.memory_space<vmem>>, vector<512x128xf32>
    %32 = arith.addf %31, %30 : vector<512x128xf32>
    %c0_43 = arith.constant 0 : index
    %c0_44 = arith.constant 0 : index
    %33 = vector.load %arg5[%c0_43, %c0_44] : memref<512x128xf32, #tpu.memory_space<vmem>>, vector<512x128xf32>
    tpu.vector_store %arg5[%c0_43, %c0_44], %32 {strides = array<i32>} : memref<512x128xf32, #tpu.memory_space<vmem>>, vector<512x128xf32>,
    %c0_45 = arith.constant 0 : index
    %c1_46 = arith.constant 1 : index
    %c1_47 = arith.constant 1 : index
    %c0_48 = arith.constant 0 : index
    %c0_49 = arith.constant 0 : index
    %34 = vector.load %arg1[%c0_45, %c1_46, %c1_47, %c0_48, %c0_49] : memref<1x10x10x8x12xbf16, #tpu.memory_space<vmem>>, vector<1x8x8x8x12xbf16>
    %35 = vector.shape_cast %34 : vector<1x8x8x8x12xbf16> to vector<8x8x8x12xbf16>
    %36 = vector.shape_cast %35 : vector<8x8x8x12xbf16> to vector<512x12xbf16>
    %c4 = arith.constant 4 : index
    %c0_50 = arith.constant 0 : index
    %c0_51 = arith.constant 0 : index
    %37 = vector.load %arg2[%c4, %c0_50, %c0_51] : memref<9x12x128xbf16, #tpu.memory_space<vmem>>, vector<1x12x128xbf16>
    %38 = vector.shape_cast %37 : vector<1x12x128xbf16> to vector<12x128xbf16>
    %cst_52 = arith.constant dense<0.000000e+00> : vector<512x128xf32>
    %39 = tpu.matmul %36, %38, %cst_52 {dimension_numbers = #tpu.dot_dimension_numbers<[1], [0], [0], [1], [0, 0, 1, 1], [], []>} : vector<512x12xbf16>, vector<12x128xbf16>, vector<512x128xf32> -> vector<512x128xf32>
    %c0_53 = arith.constant 0 : index
    %c0_54 = arith.constant 0 : index
    %40 = vector.load %arg5[%c0_53, %c0_54] : memref<512x128xf32, #tpu.memory_space<vmem>>, vector<512x128xf32>
    %41 = arith.addf %40, %39 : vector<512x128xf32>
    %c0_55 = arith.constant 0 : index
    %c0_56 = arith.constant 0 : index
    %42 = vector.load %arg5[%c0_55, %c0_56] : memref<512x128xf32, #tpu.memory_space<vmem>>, vector<512x128xf32>
    tpu.vector_store %arg5[%c0_55, %c0_56], %41 {strides = array<i32>} : memref<512x128xf32, #tpu.memory_space<vmem>>, vector<512x128xf32>,
    %c0_57 = arith.constant 0 : index
    %c1_58 = arith.constant 1 : index
    %c2_59 = arith.constant 2 : index
    %c0_60 = arith.constant 0 : index
    %c0_61 = arith.constant 0 : index
    %43 = vector.load %arg1[%c0_57, %c1_58, %c2_59, %c0_60, %c0_61] : memref<1x10x10x8x12xbf16, #tpu.memory_space<vmem>>, vector<1x8x8x8x12xbf16>
    %44 = vector.shape_cast %43 : vector<1x8x8x8x12xbf16> to vector<8x8x8x12xbf16>
    %45 = vector.shape_cast %44 : vector<8x8x8x12xbf16> to vector<512x12xbf16>
    %c5 = arith.constant 5 : index
    %c0_62 = arith.constant 0 : index
    %c0_63 = arith.constant 0 : index
    %46 = vector.load %arg2[%c5, %c0_62, %c0_63] : memref<9x12x128xbf16, #tpu.memory_space<vmem>>, vector<1x12x128xbf16>
    %47 = vector.shape_cast %46 : vector<1x12x128xbf16> to vector<12x128xbf16>
    %cst_64 = arith.constant dense<0.000000e+00> : vector<512x128xf32>
    %48 = tpu.matmul %45, %47, %cst_64 {dimension_numbers = #tpu.dot_dimension_numbers<[1], [0], [0], [1], [0, 0, 1, 1], [], []>} : vector<512x12xbf16>, vector<12x128xbf16>, vector<512x128xf32> -> vector<512x128xf32>
    %c0_65 = arith.constant 0 : index
    %c0_66 = arith.constant 0 : index
    %49 = vector.load %arg5[%c0_65, %c0_66] : memref<512x128xf32, #tpu.memory_space<vmem>>, vector<512x128xf32>
    %50 = arith.addf %49, %48 : vector<512x128xf32>
    %c0_67 = arith.constant 0 : index
    %c0_68 = arith.constant 0 : index
    %51 = vector.load %arg5[%c0_67, %c0_68] : memref<512x128xf32, #tpu.memory_space<vmem>>, vector<512x128xf32>
    tpu.vector_store %arg5[%c0_67, %c0_68], %50 {strides = array<i32>} : memref<512x128xf32, #tpu.memory_space<vmem>>, vector<512x128xf32>,
    %c0_69 = arith.constant 0 : index
    %c2_70 = arith.constant 2 : index
    %c0_71 = arith.constant 0 : index
    %c0_72 = arith.constant 0 : index
    %c0_73 = arith.constant 0 : index
    %52 = vector.load %arg1[%c0_69, %c2_70, %c0_71, %c0_72, %c0_73] : memref<1x10x10x8x12xbf16, #tpu.memory_space<vmem>>, vector<1x8x8x8x12xbf16>
    %53 = vector.shape_cast %52 : vector<1x8x8x8x12xbf16> to vector<8x8x8x12xbf16>
    %54 = vector.shape_cast %53 : vector<8x8x8x12xbf16> to vector<512x12xbf16>
    %c6 = arith.constant 6 : index
    %c0_74 = arith.constant 0 : index
    %c0_75 = arith.constant 0 : index
    %55 = vector.load %arg2[%c6, %c0_74, %c0_75] : memref<9x12x128xbf16, #tpu.memory_space<vmem>>, vector<1x12x128xbf16>
    %56 = vector.shape_cast %55 : vector<1x12x128xbf16> to vector<12x128xbf16>
    %cst_76 = arith.constant dense<0.000000e+00> : vector<512x128xf32>
    %57 = tpu.matmul %54, %56, %cst_76 {dimension_numbers = #tpu.dot_dimension_numbers<[1], [0], [0], [1], [0, 0, 1, 1], [], []>} : vector<512x12xbf16>, vector<12x128xbf16>, vector<512x128xf32> -> vector<512x128xf32>
    %c0_77 = arith.constant 0 : index
    %c0_78 = arith.constant 0 : index
    %58 = vector.load %arg5[%c0_77, %c0_78] : memref<512x128xf32, #tpu.memory_space<vmem>>, vector<512x128xf32>
    %59 = arith.addf %58, %57 : vector<512x128xf32>
    %c0_79 = arith.constant 0 : index
    %c0_80 = arith.constant 0 : index
    %60 = vector.load %arg5[%c0_79, %c0_80] : memref<512x128xf32, #tpu.memory_space<vmem>>, vector<512x128xf32>
    tpu.vector_store %arg5[%c0_79, %c0_80], %59 {strides = array<i32>} : memref<512x128xf32, #tpu.memory_space<vmem>>, vector<512x128xf32>,
    %c0_81 = arith.constant 0 : index
    %c2_82 = arith.constant 2 : index
    %c1_83 = arith.constant 1 : index
    %c0_84 = arith.constant 0 : index
    %c0_85 = arith.constant 0 : index
    %61 = vector.load %arg1[%c0_81, %c2_82, %c1_83, %c0_84, %c0_85] : memref<1x10x10x8x12xbf16, #tpu.memory_space<vmem>>, vector<1x8x8x8x12xbf16>
    %62 = vector.shape_cast %61 : vector<1x8x8x8x12xbf16> to vector<8x8x8x12xbf16>
    %63 = vector.shape_cast %62 : vector<8x8x8x12xbf16> to vector<512x12xbf16>
    %c7 = arith.constant 7 : index
    %c0_86 = arith.constant 0 : index
    %c0_87 = arith.constant 0 : index
    %64 = vector.load %arg2[%c7, %c0_86, %c0_87] : memref<9x12x128xbf16, #tpu.memory_space<vmem>>, vector<1x12x128xbf16>
    %65 = vector.shape_cast %64 : vector<1x12x128xbf16> to vector<12x128xbf16>
    %cst_88 = arith.constant dense<0.000000e+00> : vector<512x128xf32>
    %66 = tpu.matmul %63, %65, %cst_88 {dimension_numbers = #tpu.dot_dimension_numbers<[1], [0], [0], [1], [0, 0, 1, 1], [], []>} : vector<512x12xbf16>, vector<12x128xbf16>, vector<512x128xf32> -> vector<512x128xf32>
    %c0_89 = arith.constant 0 : index
    %c0_90 = arith.constant 0 : index
    %67 = vector.load %arg5[%c0_89, %c0_90] : memref<512x128xf32, #tpu.memory_space<vmem>>, vector<512x128xf32>
    %68 = arith.addf %67, %66 : vector<512x128xf32>
    %c0_91 = arith.constant 0 : index
    %c0_92 = arith.constant 0 : index
    %69 = vector.load %arg5[%c0_91, %c0_92] : memref<512x128xf32, #tpu.memory_space<vmem>>, vector<512x128xf32>
    tpu.vector_store %arg5[%c0_91, %c0_92], %68 {strides = array<i32>} : memref<512x128xf32, #tpu.memory_space<vmem>>, vector<512x128xf32>,
    %c0_93 = arith.constant 0 : index
    %c2_94 = arith.constant 2 : index
    %c2_95 = arith.constant 2 : index
    %c0_96 = arith.constant 0 : index
    %c0_97 = arith.constant 0 : index
    %70 = vector.load %arg1[%c0_93, %c2_94, %c2_95, %c0_96, %c0_97] : memref<1x10x10x8x12xbf16, #tpu.memory_space<vmem>>, vector<1x8x8x8x12xbf16>
    %71 = vector.shape_cast %70 : vector<1x8x8x8x12xbf16> to vector<8x8x8x12xbf16>
    %72 = vector.shape_cast %71 : vector<8x8x8x12xbf16> to vector<512x12xbf16>
    %c8 = arith.constant 8 : index
    %c0_98 = arith.constant 0 : index
    %c0_99 = arith.constant 0 : index
    %73 = vector.load %arg2[%c8, %c0_98, %c0_99] : memref<9x12x128xbf16, #tpu.memory_space<vmem>>, vector<1x12x128xbf16>
    %74 = vector.shape_cast %73 : vector<1x12x128xbf16> to vector<12x128xbf16>
    %cst_100 = arith.constant dense<0.000000e+00> : vector<512x128xf32>
    %75 = tpu.matmul %72, %74, %cst_100 {dimension_numbers = #tpu.dot_dimension_numbers<[1], [0], [0], [1], [0, 0, 1, 1], [], []>} : vector<512x12xbf16>, vector<12x128xbf16>, vector<512x128xf32> -> vector<512x128xf32>
    %c0_101 = arith.constant 0 : index
    %c0_102 = arith.constant 0 : index
    %76 = vector.load %arg5[%c0_101, %c0_102] : memref<512x128xf32, #tpu.memory_space<vmem>>, vector<512x128xf32>
    %77 = arith.addf %76, %75 : vector<512x128xf32>
    %c0_103 = arith.constant 0 : index
    %c0_104 = arith.constant 0 : index
    %78 = vector.load %arg5[%c0_103, %c0_104] : memref<512x128xf32, #tpu.memory_space<vmem>>, vector<512x128xf32>
    tpu.vector_store %arg5[%c0_103, %c0_104], %77 {strides = array<i32>} : memref<512x128xf32, #tpu.memory_space<vmem>>, vector<512x128xf32>,
    %c0_105 = arith.constant 0 : index
    %c0_106 = arith.constant 0 : index
    %79 = vector.load %arg5[%c0_105, %c0_106] : memref<512x128xf32, #tpu.memory_space<vmem>>, vector<512x128xf32>
    %c0_107 = arith.constant 0 : index
    %c0_108 = arith.constant 0 : index
    %80 = vector.load %arg3[%c0_107, %c0_108] : memref<1x128xf32, #tpu.memory_space<vmem>>, vector<1x128xf32>
    %81 = vector.broadcast %80 : vector<1x128xf32> to vector<512x128xf32>
    %82 = arith.addf %79, %81 : vector<512x128xf32>
    %cst_109 = arith.constant 0.000000e+00 : f32
    %83 = vector.broadcast %cst_109 : f32 to vector<512x128xf32>
    %84 = arith.maximumf %82, %83 : vector<512x128xf32>
    %85 = arith.truncf %84 : vector<512x128xf32> to vector<512x128xbf16>
    %c0_110 = arith.constant 0 : index
    %c0_111 = arith.constant 0 : index
    %c0_112 = arith.constant 0 : index
    %86 = vector.load %arg4[%c0_110, %c0_111, %c0_112] : memref<1x512x128xbf16, #tpu.memory_space<vmem>>, vector<1x512x128xbf16>
    %87 = vector.shape_cast %86 : vector<1x512x128xbf16> to vector<512x128xbf16>
    %88 = vector.shape_cast %85 : vector<512x128xbf16> to vector<1x512x128xbf16>
    tpu.vector_store %arg4[%c0_110, %c0_111, %c0_112], %88 {strides = array<i32>} : memref<1x512x128xbf16, #tpu.memory_space<vmem>>, vector<1x512x128xbf16>,
    return
  }
  func.func @transform_0(%arg0: i32) -> (i32, i32, i32, i32, i32) {
    %c0_i32 = arith.constant 0 : i32
    %c0_i32_0 = arith.constant 0 : i32
    %c0_i32_1 = arith.constant 0 : i32
    %c0_i32_2 = arith.constant 0 : i32
    %c0_i32_3 = arith.constant 0 : i32
    return %arg0, %c0_i32, %c0_i32_0, %c0_i32_1, %c0_i32_2 : i32, i32, i32, i32, i32
  }
  func.func @transform_1(%arg0: i32) -> (i32, i32, i32) {
    %c0_i32 = arith.constant 0 : i32
    %c0_i32_0 = arith.constant 0 : i32
    %c0_i32_1 = arith.constant 0 : i32
    %c0_i32_2 = arith.constant 0 : i32
    return %c0_i32, %c0_i32_0, %c0_i32_1 : i32, i32, i32
  }
  func.func @transform_2(%arg0: i32) -> (i32, i32) {
    %c0_i32 = arith.constant 0 : i32
    %c0_i32_0 = arith.constant 0 : i32
    %c0_i32_1 = arith.constant 0 : i32
    return %c0_i32, %c0_i32_0 : i32, i32
  }
  func.func @transform_3(%arg0: i32) -> (i32, i32, i32) {
    %c0_i32 = arith.constant 0 : i32
    %c0_i32_0 = arith.constant 0 : i32
    %c0_i32_1 = arith.constant 0 : i32
    return %arg0, %c0_i32, %c0_i32_0 : i32, i32, i32
  }
}

</mosaic_0001>

<llo_original>
// kernel: tpu_custom_call.1
$region0: #{tpu_custom_call.1}
  #allocation0 [shape = 'u32[]', space=smem, size = 0x4, offset = 0x4, fixed_abs, tag = 'smem constant byte address 0x4 - core index']
  #allocation1 [shape = 'u32[72,128]{1,0:T(1,128)}', space=vmem, size = 0x9000, scoped, tag = 'internal scratch']
  #allocation2 [shape = 'f32[512,128]{1,0:T(8,128)}', space=vmem, size = 0x40000, scoped, tag = 'scratch operand']
  %s0 = inlined_call_operand.hbm [shape: bf16[2,10,10,8,12], index: 0, kind: input, shape index: {}]
  %s1 = inlined_call_operand.hbm [shape: bf16[9,12,128], index: 1, kind: input, shape index: {}]
  %s2 = inlined_call_operand.vmem [shape: f32[1,128], index: 2, kind: input, shape index: {}]
  %s3 = inlined_call_operand.hbm [shape: bf16[2,512,128], index: 3, kind: output, shape index: {}]
  %s4 = sld [smem:[#allocation0]]
  $region53: #{tpu_custom_call.1} parent=0
    _
  %s6 = ssub.s32 1, %s4
  %s7 = scalar_select 0, %s6, %s4
  $region1: #{tpu_custom_call.1} parent=0
    #allocation3 [shape = 'u8[409600]{0}', space=vmem, size = 0x64000, scoped, tag = 'input window, operand 0']
    #allocation4 [shape = 's32[2]{0}', space=sflag, size = 0x8, scoped, tag = 'scoped memory for tpu_custom_call.1']
    #allocation5 [shape = 's32[2]{0}', space=sflag, size = 0x8, scoped, tag = 'scoped memory for tpu_custom_call.1']
    #allocation6 [shape = 'u8[36864]{0}', space=vmem, size = 0x9000, scoped, tag = 'input window, operand 1, single buffered']
    #allocation7 [shape = 's32[1]{0}', space=sflag, size = 0x4, scoped, tag = 'scoped memory for tpu_custom_call.1']
    #allocation8 [shape = 'u8[262144]{0}', space=vmem, size = 0x40000, scoped, tag = 'output window, operand 0']
    %8 = vsyncpa [#allocation4], 0
    %s9 = scalar_lea.sflag [#allocation4], 1
    %10 = vsyncpa %s9, 0
    %11 = vsyncpa [#allocation7], 0
    %12 = vsyncpa [#allocation5], 0
    %s13 = scalar_lea.sflag [#allocation5], 1
    %14 = vsyncpa %s13, 0
    loop: start=0, step=1, limit=4
    $region2: #{tpu_custom_call.1} parent=1 // loop_pre_header
      _
    $region3: #{tpu_custom_call.1} parent=1 // loop_header
      %s16 = sphi 0, %s20
      %p17 = scmp.ge.s32.totalorder %s16, 4
      %s26 = sphi 0, %s28
      %s29 = sphi 0, %s26
      %s30 = sphi 0, %s29
      %s46 = sphi 0, %s30
      %s50 = sphi 0, %s50
      %s52 = sphi 0, %s50
      %s53 = sphi 0, %s52
      %s67 = sphi 0, %s53
      %s71 = sphi 0, %s71
      %s73 = sphi 0, %s71
      %s74 = sphi 0, %s73
      %s88 = sphi 0, %s74
      %s94 = sphi 0, %s96
      %s97 = sphi 0, %s94
      %s98 = sphi 0, %s97
      %s114 = sphi 0, %s98
    $region4: #{tpu_custom_call.1} parent=1 // loop_header_branch
      %19 = sbr.rel (%p17) target = $region8
    $region5: #{tpu_custom_call.1} parent=1 // loop_body
      %s21 = ssub.s32 %s16, 1
      %s22 = ssub.s32 %s16, 2
      %s23 = sadd.s32 %s16, 1
      %s24 = ssub.s32 %s16, %s23
      %p25 = scmp.eq.s32.totalorder %s24, 0
      %s27 = sadd.s32 %s26, 1
      %s28 = scalar_select %p25, %s26, %s27
      %p31 = pneg %p25
      %p32 = scmp.eq.s32.totalorder %s16, 1
      %p33 = por %p31, %p32
      %p34 = scmp.ne.s32.totalorder %s26, %s29
      %p35 = scmp.eq.s32.totalorder %s16, 0
      %p36 = por %p34, %p35
      %p37 = scmp.ne.s32.totalorder %s26, %s29
      %p38 = scmp.eq.s32.totalorder %s21, 1
      %p39 = por %p37, %p38
      %p40 = scmp.ne.s32.totalorder %s29, %s30
      %p41 = scmp.eq.s32.totalorder %s21, 0
      %p42 = por %p40, %p41
      %p43 = scmp.ne.s32.totalorder %s29, %s30
      %p44 = scmp.eq.s32.totalorder %s22, 1
      %p45 = por %p43, %p44
      %p47 = scmp.ne.s32.totalorder %s30, %s46
      %p48 = scmp.eq.s32.totalorder %s22, 0
      %p49 = por %p47, %p48
      %s51 = sadd.s32 %s50, 1
      %p54 = scmp.eq.s32.totalorder %s16, 1
      %p55 = scmp.ne.s32.totalorder %s50, %s52
      %p56 = scmp.eq.s32.totalorder %s16, 0
      %p57 = por %p55, %p56
      %p58 = scmp.ne.s32.totalorder %s50, %s52
      %p59 = scmp.eq.s32.totalorder %s21, 1
      %p60 = por %p58, %p59
      %p61 = scmp.ne.s32.totalorder %s52, %s53
      %p62 = scmp.eq.s32.totalorder %s21, 0
      %p63 = por %p61, %p62
      %p64 = scmp.ne.s32.totalorder %s52, %s53
      %p65 = scmp.eq.s32.totalorder %s22, 1
      %p66 = por %p64, %p65
      %p68 = scmp.ne.s32.totalorder %s53, %s67
      %p69 = scmp.eq.s32.totalorder %s22, 0
      %p70 = por %p68, %p69
      %s72 = sadd.s32 %s71, 1
      %p75 = scmp.eq.s32.totalorder %s16, 1
      %p76 = scmp.ne.s32.totalorder %s71, %s73
      %p77 = scmp.eq.s32.totalorder %s16, 0
      %p78 = por %p76, %p77
      %p79 = scmp.ne.s32.totalorder %s71, %s73
      %p80 = scmp.eq.s32.totalorder %s21, 1
      %p81 = por %p79, %p80
      %p82 = scmp.ne.s32.totalorder %s73, %s74
      %p83 = scmp.eq.s32.totalorder %s21, 0
      %p84 = por %p82, %p83
      %p85 = scmp.ne.s32.totalorder %s73, %s74
      %p86 = scmp.eq.s32.totalorder %s22, 1
      %p87 = por %p85, %p86
      %p89 = scmp.ne.s32.totalorder %s74, %s88
      %p90 = scmp.eq.s32.totalorder %s22, 0
      %p91 = por %p89, %p90
      %s92 = ssub.s32 %s16, %s23
      %p93 = scmp.eq.s32.totalorder %s92, 0
      %s95 = sadd.s32 %s94, 1
      %s96 = scalar_select %p93, %s94, %s95
      %p99 = pneg %p93
      %p100 = scmp.eq.s32.totalorder %s16, 1
      %p101 = por %p99, %p100
      %p102 = scmp.ne.s32.totalorder %s94, %s97
      %p103 = scmp.eq.s32.totalorder %s16, 0
      %p104 = por %p102, %p103
      %p105 = scmp.ne.s32.totalorder %s94, %s97
      %p106 = scmp.eq.s32.totalorder %s21, 1
      %p107 = por %p105, %p106
      %p108 = scmp.ne.s32.totalorder %s97, %s98
      %p109 = scmp.eq.s32.totalorder %s21, 0
      %p110 = por %p108, %p109
      %p111 = scmp.ne.s32.totalorder %s97, %s98
      %p112 = scmp.eq.s32.totalorder %s22, 1
      %p113 = por %p111, %p112
      %p115 = scmp.ne.s32.totalorder %s98, %s114
      %p116 = scmp.eq.s32.totalorder %s22, 0
      %p117 = por %p115, %p116
      %p118 = scmp.le.s32.totalorder 1, %s16
      %p119 = scmp.lt.s32.totalorder %s16, 3
      %p120 = pnand %p118, %p119
      %p121 = pneg %p120
      // Predicated region
      $region9: #{tpu_custom_call.1} parent=5 // pred_check
        _
      $region10: #{tpu_custom_call.1} parent=5 // pred_check_branch
        %123 = sbr.rel (%p120) target = $region12
      $region11: #{tpu_custom_call.1} parent=5 // pred_region
        %s124 = ssub.s32 %s16, 1
        // Predicated region
        $region13: #{tpu_custom_call.1} parent=11 // pred_check
          %p125 = pneg %p63
        $region14: #{tpu_custom_call.1} parent=11 // pred_check_branch
          %127 = sbr.rel (%p125) target = $region16
        $region15: #{tpu_custom_call.1} parent=11 // pred_region
          %129 = vsyncadd [#allocation7], 0
          %s130 = sshll.u32 %s1, 4
          %s131 = int_to_ptr.hbm [resolvable:$true] %s130
          %s132 = sshll.u32 [#allocation6], 4
          %s133 = int_to_ptr.vmem [resolvable:$true] %s132
          %138 = dma.hbm_to_vmem [thread:$0]  %s131, 1152, %s133, [#allocation7], 64, 64, 4
        $region16: #{tpu_custom_call.1} parent=11 // pred_fallthru
          _
        // Predicated region
        $region17: #{tpu_custom_call.1} parent=11 // pred_check
          %p139 = pneg %p84
        $region18: #{tpu_custom_call.1} parent=11 // pred_check_branch
          %141 = sbr.rel (%p139) target = $region20
        $region19: #{tpu_custom_call.1} parent=11 // pred_region
          _
        $region20: #{tpu_custom_call.1} parent=11 // pred_fallthru
          _
      $region12: #{tpu_custom_call.1} parent=5 // pred_fallthru
        _
      %p142 = scmp.lt.s32.totalorder %s16, 2
      // Predicated region
      $region21: #{tpu_custom_call.1} parent=5 // pred_check
        %p143 = pneg %p142
      $region22: #{tpu_custom_call.1} parent=5 // pred_check_branch
        %145 = sbr.rel (%p143) target = $region24
      $region23: #{tpu_custom_call.1} parent=5 // pred_region
        // Predicated region
        $region25: #{tpu_custom_call.1} parent=23 // pred_check
          %p146 = pneg %p36
        $region26: #{tpu_custom_call.1} parent=23 // pred_check_branch
          %148 = sbr.rel (%p146) target = $region28
        $region27: #{tpu_custom_call.1} parent=23 // pred_region
          %s149 = sand.u32 %s26, 1
          %s150 = scalar_lea.sflag [#allocation4], %s149
          %s151 = sand.u32 %s26, 1
          %s152 = smul.addr %s151, 400
          %s153 = scalar_lea.vmem [#allocation3], %s152
          %155 = vsyncadd %s150, 0
          %s156 = smul.addr %s16, 100
          %s157 = smul.addr %s156, 4
          %s158 = scalar_lea.hbm %s0, %s157
          %s159 = sshll.u32 %s158, 4
          %s160 = int_to_ptr.hbm [resolvable:$true] %s159
          %s161 = sshll.u32 %s153, 4
          %s162 = int_to_ptr.vmem [resolvable:$true] %s161
          %167 = dma.hbm_to_vmem [thread:$0]  %s160, 6400, %s162, %s150, 64, 64, 4
        $region28: #{tpu_custom_call.1} parent=23 // pred_fallthru
          _
      $region24: #{tpu_custom_call.1} parent=5 // pred_fallthru
        _
      %p168 = scmp.le.s32.totalorder 1, %s16
      %p169 = scmp.lt.s32.totalorder %s16, 3
      %p170 = pnand %p168, %p169
      %p171 = pneg %p170
      // Predicated region
      $region29: #{tpu_custom_call.1} parent=5 // pred_check
        _
      $region30: #{tpu_custom_call.1} parent=5 // pred_check_branch
        %173 = sbr.rel (%p170) target = $region32
      $region31: #{tpu_custom_call.1} parent=5 // pred_region
        %s174 = ssub.s32 %s16, 1
        %s175 = sand.u32 %s29, 1
        %s176 = scalar_lea.sflag [#allocation4], %s175
        %s177 = sand.u32 %s29, 1
        %s178 = smul.addr %s177, 400
        %s179 = scalar_lea.vmem [#allocation3], %s178
        // Predicated region
        $region33: #{tpu_custom_call.1} parent=31 // pred_check
          %p180 = pneg %p42
        $region34: #{tpu_custom_call.1} parent=31 // pred_check_branch
          %182 = sbr.rel (%p180) target = $region36
        $region35: #{tpu_custom_call.1} parent=31 // pred_region
          %184 = dma.done %s176, 6400
        $region36: #{tpu_custom_call.1} parent=31 // pred_fallthru
          _
        // Predicated region
        $region37: #{tpu_custom_call.1} parent=31 // pred_check
          %p185 = pneg %p63
        $region38: #{tpu_custom_call.1} parent=31 // pred_check_branch
          %187 = sbr.rel (%p185) target = $region40
        $region39: #{tpu_custom_call.1} parent=31 // pred_region
          %189 = dma.done [#allocation7], 1152
        $region40: #{tpu_custom_call.1} parent=31 // pred_fallthru
          _
        %s190 = sand.u32 %s29, 1
        %s191 = scalar_lea.sflag [#allocation4], %s190
        %s192 = sand.u32 %s29, 1
        %s193 = smul.addr %s192, 400
        %s194 = scalar_lea.vmem [#allocation3], %s193
        %p195 = pneg %p42
        %p196 = pneg %p39
        %p197 = pneg %p63
        %p198 = pneg %p60
        %p199 = pneg %p84
        %p200 = pneg %p81
        %p201 = pneg %p110
        %p202 = pneg %p107
        %s203 = sand.u32 %s97, 1
        %s204 = scalar_lea.sflag [#allocation5], %s203
        %s205 = sand.u32 %s97, 1
        %s206 = smul.addr %s205, 256
        %s207 = scalar_lea.vmem [#allocation8], %s206
        %v209 = vld [vmem:[%s179] sm:$0xf]
        %v210 = vld [vmem:[%s179 + $0x4] sm:$0xf]
        %v211 = vld [vmem:[%s179 + $0x8] sm:$0xf]
        %v212 = vld [vmem:[%s179 + $0xc] sm:$0xf]
        %v213 = vld [vmem:[%s179 + $0x10] sm:$0xf]
        %v214 = vld [vmem:[%s179 + $0x14] sm:$0xf]
        %v215 = vld [vmem:[%s179 + $0x18] sm:$0xf]
        %v216 = vld [vmem:[%s179 + $0x1c] sm:$0xf]
        %v217 = vld [vmem:[%s179 + $0x28] sm:$0xf]
        %v218 = vld [vmem:[%s179 + $0x2c] sm:$0xf]
        %v219 = vld [vmem:[%s179 + $0x30] sm:$0xf]
        %v220 = vld [vmem:[%s179 + $0x34] sm:$0xf]
        %v221 = vld [vmem:[%s179 + $0x38] sm:$0xf]
        %v222 = vld [vmem:[%s179 + $0x3c] sm:$0xf]
        %v223 = vld [vmem:[%s179 + $0x40] sm:$0xf]
        %v224 = vld [vmem:[%s179 + $0x44] sm:$0xf]
        %v225 = vld [vmem:[%s179 + $0x50] sm:$0xf]
        %v226 = vld [vmem:[%s179 + $0x54] sm:$0xf]
        %v227 = vld [vmem:[%s179 + $0x58] sm:$0xf]
        %v228 = vld [vmem:[%s179 + $0x5c] sm:$0xf]
        %v229 = vld [vmem:[%s179 + $0x60] sm:$0xf]
        %v230 = vld [vmem:[%s179 + $0x64] sm:$0xf]
        %v231 = vld [vmem:[%s179 + $0x68] sm:$0xf]
        %v232 = vld [vmem:[%s179 + $0x6c] sm:$0xf]
        %v233 = vld [vmem:[%s179 + $0x78] sm:$0xf]
        %v234 = vld [vmem:[%s179 + $0x7c] sm:$0xf]
        %v235 = vld [vmem:[%s179 + $0x80] sm:$0xf]
        %v236 = vld [vmem:[%s179 + $0x84] sm:$0xf]
        %v237 = vld [vmem:[%s179 + $0x88] sm:$0xf]
        %v238 = vld [vmem:[%s179 + $0x8c] sm:$0xf]
        %v239 = vld [vmem:[%s179 + $0x90] sm:$0xf]
        %v240 = vld [vmem:[%s179 + $0x94] sm:$0xf]
        %v241 = vld [vmem:[%s179 + $0xa0] sm:$0xf]
        %v242 = vld [vmem:[%s179 + $0xa4] sm:$0xf]
        %v243 = vld [vmem:[%s179 + $0xa8] sm:$0xf]
        %v244 = vld [vmem:[%s179 + $0xac] sm:$0xf]
        %v245 = vld [vmem:[%s179 + $0xb0] sm:$0xf]
        %v246 = vld [vmem:[%s179 + $0xb4] sm:$0xf]
        %v247 = vld [vmem:[%s179 + $0xb8] sm:$0xf]
        %v248 = vld [vmem:[%s179 + $0xbc] sm:$0xf]
        %v249 = vld [vmem:[%s179 + $0xc8] sm:$0xf]
        %v250 = vld [vmem:[%s179 + $0xcc] sm:$0xf]
        %v251 = vld [vmem:[%s179 + $0xd0] sm:$0xf]
        %v252 = vld [vmem:[%s179 + $0xd4] sm:$0xf]
        %v253 = vld [vmem:[%s179 + $0xd8] sm:$0xf]
        %v254 = vld [vmem:[%s179 + $0xdc] sm:$0xf]
        %v255 = vld [vmem:[%s179 + $0xe0] sm:$0xf]
        %v256 = vld [vmem:[%s179 + $0xe4] sm:$0xf]
        %v257 = vld [vmem:[%s179 + $0xf0] sm:$0xf]
        %v258 = vld [vmem:[%s179 + $0xf4] sm:$0xf]
        %v259 = vld [vmem:[%s179 + $0xf8] sm:$0xf]
        %v260 = vld [vmem:[%s179 + $0xfc] sm:$0xf]
        %v261 = vld [vmem:[%s179 + $0x100] sm:$0xf]
        %v262 = vld [vmem:[%s179 + $0x104] sm:$0xf]
        %v263 = vld [vmem:[%s179 + $0x108] sm:$0xf]
        %v264 = vld [vmem:[%s179 + $0x10c] sm:$0xf]
        %v265 = vld [vmem:[%s179 + $0x118] sm:$0xf]
        %v266 = vld [vmem:[%s179 + $0x11c] sm:$0xf]
        %v267 = vld [vmem:[%s179 + $0x120] sm:$0xf]
        %v268 = vld [vmem:[%s179 + $0x124] sm:$0xf]
        %v269 = vld [vmem:[%s179 + $0x128] sm:$0xf]
        %v270 = vld [vmem:[%s179 + $0x12c] sm:$0xf]
        %v271 = vld [vmem:[%s179 + $0x130] sm:$0xf]
        %v272 = vld [vmem:[%s179 + $0x134] sm:$0xf]
        %v273 = vld [vmem:[#allocation6] sm:$0xf]
        %v274 = vld [vmem:[#allocation6 + $0x4] sm:$0x3]
        %v339 = vunpack.c.l.b16 %v209
        %v340 = vunpack.c.l.b16 %v210
        %v341 = vunpack.c.l.b16 %v211
        %v342 = vunpack.c.l.b16 %v212
        %v343 = vunpack.c.l.b16 %v213
        %v344 = vunpack.c.l.b16 %v214
        %v345 = vunpack.c.l.b16 %v215
        %v346 = vunpack.c.l.b16 %v216
        %v347 = vunpack.c.l.b16 %v217
        %v348 = vunpack.c.l.b16 %v218
        %v349 = vunpack.c.l.b16 %v219
        %v350 = vunpack.c.l.b16 %v220
        %v351 = vunpack.c.l.b16 %v221
        %v352 = vunpack.c.l.b16 %v222
        %v353 = vunpack.c.l.b16 %v223
        %v354 = vunpack.c.l.b16 %v224
        %v355 = vunpack.c.l.b16 %v225
        %v356 = vunpack.c.l.b16 %v226
        %v357 = vunpack.c.l.b16 %v227
        %v358 = vunpack.c.l.b16 %v228
        %v359 = vunpack.c.l.b16 %v229
        %v360 = vunpack.c.l.b16 %v230
        %v361 = vunpack.c.l.b16 %v231
        %v362 = vunpack.c.l.b16 %v232
        %v363 = vunpack.c.l.b16 %v233
        %v364 = vunpack.c.l.b16 %v234
        %v365 = vunpack.c.l.b16 %v235
        %v366 = vunpack.c.l.b16 %v236
        %v367 = vunpack.c.l.b16 %v237
        %v368 = vunpack.c.l.b16 %v238
        %v369 = vunpack.c.l.b16 %v239
        %v370 = vunpack.c.l.b16 %v240
        %v371 = vunpack.c.l.b16 %v241
        %v372 = vunpack.c.l.b16 %v242
        %v373 = vunpack.c.l.b16 %v243
        %v374 = vunpack.c.l.b16 %v244
        %v375 = vunpack.c.l.b16 %v245
        %v376 = vunpack.c.l.b16 %v246
        %v377 = vunpack.c.l.b16 %v247
        %v378 = vunpack.c.l.b16 %v248
        %v379 = vunpack.c.l.b16 %v249
        %v380 = vunpack.c.l.b16 %v250
        %v381 = vunpack.c.l.b16 %v251
        %v382 = vunpack.c.l.b16 %v252
        %v383 = vunpack.c.l.b16 %v253
        %v384 = vunpack.c.l.b16 %v254
        %v385 = vunpack.c.l.b16 %v255
        %v386 = vunpack.c.l.b16 %v256
        %v387 = vunpack.c.l.b16 %v257
        %v388 = vunpack.c.l.b16 %v258
        %v389 = vunpack.c.l.b16 %v259
        %v390 = vunpack.c.l.b16 %v260
        %v391 = vunpack.c.l.b16 %v261
        %v392 = vunpack.c.l.b16 %v262
        %v393 = vunpack.c.l.b16 %v263
        %v394 = vunpack.c.l.b16 %v264
        %v395 = vunpack.c.l.b16 %v265
        %v396 = vunpack.c.l.b16 %v266
        %v397 = vunpack.c.l.b16 %v267
        %v398 = vunpack.c.l.b16 %v268
        %v399 = vunpack.c.l.b16 %v269
        %v400 = vunpack.c.l.b16 %v270
        %v401 = vunpack.c.l.b16 %v271
        %v402 = vunpack.c.l.b16 %v272
        %v403 = vpack.c.b16 %v340, %v339
        %v404 = vpack.c.b16 %v342, %v341
        %v405 = vpack.c.b16 %v344, %v343
        %v406 = vpack.c.b16 %v346, %v345
        %v407 = vpack.c.b16 %v348, %v347
        %v408 = vpack.c.b16 %v350, %v349
        %v409 = vpack.c.b16 %v352, %v351
        %v410 = vpack.c.b16 %v354, %v353
        %v411 = vpack.c.b16 %v356, %v355
        %v412 = vpack.c.b16 %v358, %v357
        %v413 = vpack.c.b16 %v360, %v359
        %v414 = vpack.c.b16 %v362, %v361
        %v415 = vpack.c.b16 %v364, %v363
        %v416 = vpack.c.b16 %v366, %v365
        %v417 = vpack.c.b16 %v368, %v367
        %v418 = vpack.c.b16 %v370, %v369
        %v419 = vpack.c.b16 %v372, %v371
        %v420 = vpack.c.b16 %v374, %v373
        %v421 = vpack.c.b16 %v376, %v375
        %v422 = vpack.c.b16 %v378, %v377
        %v423 = vpack.c.b16 %v380, %v379
        %v424 = vpack.c.b16 %v382, %v381
        %v425 = vpack.c.b16 %v384, %v383
        %v426 = vpack.c.b16 %v386, %v385
        %v427 = vpack.c.b16 %v388, %v387
        %v428 = vpack.c.b16 %v390, %v389
        %v429 = vpack.c.b16 %v392, %v391
        %v430 = vpack.c.b16 %v394, %v393
        %v431 = vpack.c.b16 %v396, %v395
        %v432 = vpack.c.b16 %v398, %v397
        %v433 = vpack.c.b16 %v400, %v399
        %v434 = vpack.c.b16 %v402, %v401
        %v437 = vunpack.c.l.b16 %v273
        %v438 = vunpack.c.l.b16 %v274
        %v439 = vpack.c.b16 %v438, %v437
        %vm440 = vcmask 97280
        %v442 = vsel %vm440, %v403, 0
        %v445 = vsel %vm440, %v404, 0
        %v448 = vsel %vm440, %v405, 0
        %v451 = vsel %vm440, %v406, 0
        %v454 = vsel %vm440, %v407, 0
        %v457 = vsel %vm440, %v408, 0
        %v460 = vsel %vm440, %v409, 0
        %v463 = vsel %vm440, %v410, 0
        %v466 = vsel %vm440, %v411, 0
        %v469 = vsel %vm440, %v412, 0
        %v472 = vsel %vm440, %v413, 0
        %v475 = vsel %vm440, %v414, 0
        %v478 = vsel %vm440, %v415, 0
        %v481 = vsel %vm440, %v416, 0
        %v484 = vsel %vm440, %v417, 0
        %v487 = vsel %vm440, %v418, 0
        %v490 = vsel %vm440, %v419, 0
        %v493 = vsel %vm440, %v420, 0
        %v496 = vsel %vm440, %v421, 0
        %v499 = vsel %vm440, %v422, 0
        %v502 = vsel %vm440, %v423, 0
        %v505 = vsel %vm440, %v424, 0
        %v508 = vsel %vm440, %v425, 0
        %v511 = vsel %vm440, %v426, 0
        %v514 = vsel %vm440, %v427, 0
        %v517 = vsel %vm440, %v428, 0
        %v520 = vsel %vm440, %v429, 0
        %v523 = vsel %vm440, %v430, 0
        %v526 = vsel %vm440, %v431, 0
        %v529 = vsel %vm440, %v432, 0
        %v532 = vsel %vm440, %v433, 0
        %v535 = vsel %vm440, %v434, 0
        %vm537 = vcmask 1045504
        %v539 = vsel %vm537, %v439, 0
        %541 = vmatpush.bf16.msra.mxu0 0
        %542 = vmatpush.bf16.msra.mxu0 0
        %543 = vmatpush.bf16.msra.mxu0 0
        %544 = vmatpush.bf16.msra.mxu0 0
        %545 = vmatpush.bf16.msra.mxu0 0
        %546 = vmatpush.bf16.msra.mxu0 0
        %547 = vmatpush.bf16.msra.mxu0 0
        %548 = vmatpush.bf16.msra.mxu0 %v539
        %549 = vmatmul.bf16.gmra.mxu0 %v442
        %v550 = vpop.f32.mrf.mxu0
        %v551 = vadd.f32 0.0, %v550
        %v552 = vpop.f32.mrf.mxu0
        %v553 = vadd.f32 0.0, %v552
        %554 = vmatmul.bf16.gmra.mxu0 %v445
        %v555 = vpop.f32.mrf.mxu0
        %v556 = vadd.f32 0.0, %v555
        %v557 = vpop.f32.mrf.mxu0
        %v558 = vadd.f32 0.0, %v557
        %559 = vmatmul.bf16.gmra.mxu0 %v448
        %v560 = vpop.f32.mrf.mxu0
        %v561 = vadd.f32 0.0, %v560
        %v562 = vpop.f32.mrf.mxu0
        %v563 = vadd.f32 0.0, %v562
        %564 = vmatmul.bf16.gmra.mxu0 %v451
        %v565 = vpop.f32.mrf.mxu0
        %v566 = vadd.f32 0.0, %v565
        %v567 = vpop.f32.mrf.mxu0
        %v568 = vadd.f32 0.0, %v567
        %569 = vmatmul.bf16.gmra.mxu0 %v454
        %v570 = vpop.f32.mrf.mxu0
        %v571 = vadd.f32 0.0, %v570
        %v572 = vpop.f32.mrf.mxu0
        %v573 = vadd.f32 0.0, %v572
        %574 = vmatmul.bf16.gmra.mxu0 %v457
        %v575 = vpop.f32.mrf.mxu0
        %v576 = vadd.f32 0.0, %v575
        %v577 = vpop.f32.mrf.mxu0
        %v578 = vadd.f32 0.0, %v577
        %579 = vmatmul.bf16.gmra.mxu0 %v460
        %v580 = vpop.f32.mrf.mxu0
        %v581 = vadd.f32 0.0, %v580
        %v582 = vpop.f32.mrf.mxu0
        %v583 = vadd.f32 0.0, %v582
        %584 = vmatmul.bf16.gmra.mxu0 %v463
        %v585 = vpop.f32.mrf.mxu0
        %v586 = vadd.f32 0.0, %v585
        %v587 = vpop.f32.mrf.mxu0
        %v588 = vadd.f32 0.0, %v587
        %589 = vmatmul.bf16.gmra.mxu0 %v466
        %v590 = vpop.f32.mrf.mxu0
        %v591 = vadd.f32 0.0, %v590
        %v592 = vpop.f32.mrf.mxu0
        %v593 = vadd.f32 0.0, %v592
        %594 = vmatmul.bf16.gmra.mxu0 %v469
        %v595 = vpop.f32.mrf.mxu0
        %v596 = vadd.f32 0.0, %v595
        %v597 = vpop.f32.mrf.mxu0
        %v598 = vadd.f32 0.0, %v597
        %599 = vmatmul.bf16.gmra.mxu0 %v472
        %v600 = vpop.f32.mrf.mxu0
        %v601 = vadd.f32 0.0, %v600
        %v602 = vpop.f32.mrf.mxu0
        %v603 = vadd.f32 0.0, %v602
        %604 = vmatmul.bf16.gmra.mxu0 %v475
        %v605 = vpop.f32.mrf.mxu0
        %v606 = vadd.f32 0.0, %v605
        %v607 = vpop.f32.mrf.mxu0
        %v608 = vadd.f32 0.0, %v607
        %609 = vmatmul.bf16.gmra.mxu0 %v478
        %v610 = vpop.f32.mrf.mxu0
        %v611 = vadd.f32 0.0, %v610
        %v612 = vpop.f32.mrf.mxu0
        %v613 = vadd.f32 0.0, %v612
        %614 = vmatmul.bf16.gmra.mxu0 %v481
        %v615 = vpop.f32.mrf.mxu0
        %v616 = vadd.f32 0.0, %v615
        %v617 = vpop.f32.mrf.mxu0
        %v618 = vadd.f32 0.0, %v617
        %619 = vmatmul.bf16.gmra.mxu0 %v484
        %v620 = vpop.f32.mrf.mxu0
        %v621 = vadd.f32 0.0, %v620
        %v622 = vpop.f32.mrf.mxu0
        %v623 = vadd.f32 0.0, %v622
        %624 = vmatmul.bf16.gmra.mxu0 %v487
        %v625 = vpop.f32.mrf.mxu0
        %v626 = vadd.f32 0.0, %v625
        %v627 = vpop.f32.mrf.mxu0
        %v628 = vadd.f32 0.0, %v627
        %629 = vmatmul.bf16.gmra.mxu0 %v490
        %v630 = vpop.f32.mrf.mxu0
        %v631 = vadd.f32 0.0, %v630
        %v632 = vpop.f32.mrf.mxu0
        %v633 = vadd.f32 0.0, %v632
        %634 = vmatmul.bf16.gmra.mxu0 %v493
        %v635 = vpop.f32.mrf.mxu0
        %v636 = vadd.f32 0.0, %v635
        %v637 = vpop.f32.mrf.mxu0
        %v638 = vadd.f32 0.0, %v637
        %639 = vmatmul.bf16.gmra.mxu0 %v496
        %v640 = vpop.f32.mrf.mxu0
        %v641 = vadd.f32 0.0, %v640
        %v642 = vpop.f32.mrf.mxu0
        %v643 = vadd.f32 0.0, %v642
        %644 = vmatmul.bf16.gmra.mxu0 %v499
        %v645 = vpop.f32.mrf.mxu0
        %v646 = vadd.f32 0.0, %v645
        %v647 = vpop.f32.mrf.mxu0
        %v648 = vadd.f32 0.0, %v647
        %649 = vmatmul.bf16.gmra.mxu0 %v502
        %v650 = vpop.f32.mrf.mxu0
        %v651 = vadd.f32 0.0, %v650
        %v652 = vpop.f32.mrf.mxu0
        %v653 = vadd.f32 0.0, %v652
        %654 = vmatmul.bf16.gmra.mxu0 %v505
        %v655 = vpop.f32.mrf.mxu0
        %v656 = vadd.f32 0.0, %v655
        %v657 = vpop.f32.mrf.mxu0
        %v658 = vadd.f32 0.0, %v657
        %659 = vmatmul.bf16.gmra.mxu0 %v508
        %v660 = vpop.f32.mrf.mxu0
        %v661 = vadd.f32 0.0, %v660
        %v662 = vpop.f32.mrf.mxu0
        %v663 = vadd.f32 0.0, %v662
        %664 = vmatmul.bf16.gmra.mxu0 %v511
        %v665 = vpop.f32.mrf.mxu0
        %v666 = vadd.f32 0.0, %v665
        %v667 = vpop.f32.mrf.mxu0
        %v668 = vadd.f32 0.0, %v667
        %669 = vmatmul.bf16.gmra.mxu0 %v514
        %v670 = vpop.f32.mrf.mxu0
        %v671 = vadd.f32 0.0, %v670
        %v672 = vpop.f32.mrf.mxu0
        %v673 = vadd.f32 0.0, %v672
        %674 = vmatmul.bf16.gmra.mxu0 %v517
        %v675 = vpop.f32.mrf.mxu0
        %v676 = vadd.f32 0.0, %v675
        %v677 = vpop.f32.mrf.mxu0
        %v678 = vadd.f32 0.0, %v677
        %679 = vmatmul.bf16.gmra.mxu0 %v520
        %v680 = vpop.f32.mrf.mxu0
        %v681 = vadd.f32 0.0, %v680
        %v682 = vpop.f32.mrf.mxu0
        %v683 = vadd.f32 0.0, %v682
        %684 = vmatmul.bf16.gmra.mxu0 %v523
        %v685 = vpop.f32.mrf.mxu0
        %v686 = vadd.f32 0.0, %v685
        %v687 = vpop.f32.mrf.mxu0
        %v688 = vadd.f32 0.0, %v687
        %689 = vmatmul.bf16.gmra.mxu0 %v526
        %v690 = vpop.f32.mrf.mxu0
        %v691 = vadd.f32 0.0, %v690
        %v692 = vpop.f32.mrf.mxu0
        %v693 = vadd.f32 0.0, %v692
        %694 = vmatmul.bf16.gmra.mxu0 %v529
        %v695 = vpop.f32.mrf.mxu0
        %v696 = vadd.f32 0.0, %v695
        %v697 = vpop.f32.mrf.mxu0
        %v698 = vadd.f32 0.0, %v697
        %699 = vmatmul.bf16.gmra.mxu0 %v532
        %v700 = vpop.f32.mrf.mxu0
        %v701 = vadd.f32 0.0, %v700
        %v702 = vpop.f32.mrf.mxu0
        %v703 = vadd.f32 0.0, %v702
        %704 = vmatmul.bf16.gmra.mxu0 %v535
        %v705 = vpop.f32.mrf.mxu0
        %v706 = vadd.f32 0.0, %v705
        %v707 = vpop.f32.mrf.mxu0
        %v708 = vadd.f32 0.0, %v707
        %709 = vdwg.mxu0
        %710 = vst [vmem:[#allocation2] sm:$0xff] %v551
        %711 = vst [vmem:[#allocation2 + $0x8] sm:$0xff] %v553
        %712 = vst [vmem:[#allocation2 + $0x10] sm:$0xff] %v556
        %713 = vst [vmem:[#allocation2 + $0x18] sm:$0xff] %v558
        %714 = vst [vmem:[#allocation2 + $0x20] sm:$0xff] %v561
        %715 = vst [vmem:[#allocation2 + $0x28] sm:$0xff] %v563
        %716 = vst [vmem:[#allocation2 + $0x30] sm:$0xff] %v566
        %717 = vst [vmem:[#allocation2 + $0x38] sm:$0xff] %v568
        %718 = vst [vmem:[#allocation2 + $0x40] sm:$0xff] %v571
        %719 = vst [vmem:[#allocation2 + $0x48] sm:$0xff] %v573
        %720 = vst [vmem:[#allocation2 + $0x50] sm:$0xff] %v576
        %721 = vst [vmem:[#allocation2 + $0x58] sm:$0xff] %v578
        %722 = vst [vmem:[#allocation2 + $0x60] sm:$0xff] %v581
        %723 = vst [vmem:[#allocation2 + $0x68] sm:$0xff] %v583
        %724 = vst [vmem:[#allocation2 + $0x70] sm:$0xff] %v586
        %725 = vst [vmem:[#allocation2 + $0x78] sm:$0xff] %v588
        %726 = vst [vmem:[#allocation2 + $0x80] sm:$0xff] %v591
        %727 = vst [vmem:[#allocation2 + $0x88] sm:$0xff] %v593
        %728 = vst [vmem:[#allocation2 + $0x90] sm:$0xff] %v596
        %729 = vst [vmem:[#allocation2 + $0x98] sm:$0xff] %v598
        %730 = vst [vmem:[#allocation2 + $0xa0] sm:$0xff] %v601
        %731 = vst [vmem:[#allocation2 + $0xa8] sm:$0xff] %v603
        %732 = vst [vmem:[#allocation2 + $0xb0] sm:$0xff] %v606
        %733 = vst [vmem:[#allocation2 + $0xb8] sm:$0xff] %v608
        %734 = vst [vmem:[#allocation2 + $0xc0] sm:$0xff] %v611
        %735 = vst [vmem:[#allocation2 + $0xc8] sm:$0xff] %v613
        %736 = vst [vmem:[#allocation2 + $0xd0] sm:$0xff] %v616
        %737 = vst [vmem:[#allocation2 + $0xd8] sm:$0xff] %v618
        %738 = vst [vmem:[#allocation2 + $0xe0] sm:$0xff] %v621
        %739 = vst [vmem:[#allocation2 + $0xe8] sm:$0xff] %v623
        %740 = vst [vmem:[#allocation2 + $0xf0] sm:$0xff] %v626
        %741 = vst [vmem:[#allocation2 + $0xf8] sm:$0xff] %v628
        %742 = vst [vmem:[#allocation2 + $0x100] sm:$0xff] %v631
        %743 = vst [vmem:[#allocation2 + $0x108] sm:$0xff] %v633
        %744 = vst [vmem:[#allocation2 + $0x110] sm:$0xff] %v636
        %745 = vst [vmem:[#allocation2 + $0x118] sm:$0xff] %v638
        %746 = vst [vmem:[#allocation2 + $0x120] sm:$0xff] %v641
        %747 = vst [vmem:[#allocation2 + $0x128] sm:$0xff] %v643
        %748 = vst [vmem:[#allocation2 + $0x130] sm:$0xff] %v646
        %749 = vst [vmem:[#allocation2 + $0x138] sm:$0xff] %v648
        %750 = vst [vmem:[#allocation2 + $0x140] sm:$0xff] %v651
        %751 = vst [vmem:[#allocation2 + $0x148] sm:$0xff] %v653
        %752 = vst [vmem:[#allocation2 + $0x150] sm:$0xff] %v656
        %753 = vst [vmem:[#allocation2 + $0x158] sm:$0xff] %v658
        %754 = vst [vmem:[#allocation2 + $0x160] sm:$0xff] %v661
        %755 = vst [vmem:[#allocation2 + $0x168] sm:$0xff] %v663
        %756 = vst [vmem:[#allocation2 + $0x170] sm:$0xff] %v666
        %757 = vst [vmem:[#allocation2 + $0x178] sm:$0xff] %v668
        %758 = vst [vmem:[#allocation2 + $0x180] sm:$0xff] %v671
        %759 = vst [vmem:[#allocation2 + $0x188] sm:$0xff] %v673
        %760 = vst [vmem:[#allocation2 + $0x190] sm:$0xff] %v676
        %761 = vst [vmem:[#allocation2 + $0x198] sm:$0xff] %v678
        %762 = vst [vmem:[#allocation2 + $0x1a0] sm:$0xff] %v681
        %763 = vst [vmem:[#allocation2 + $0x1a8] sm:$0xff] %v683
        %764 = vst [vmem:[#allocation2 + $0x1b0] sm:$0xff] %v686
        %765 = vst [vmem:[#allocation2 + $0x1b8] sm:$0xff] %v688
        %766 = vst [vmem:[#allocation2 + $0x1c0] sm:$0xff] %v691
        %767 = vst [vmem:[#allocation2 + $0x1c8] sm:$0xff] %v693
        %768 = vst [vmem:[#allocation2 + $0x1d0] sm:$0xff] %v696
        %769 = vst [vmem:[#allocation2 + $0x1d8] sm:$0xff] %v698
        %770 = vst [vmem:[#allocation2 + $0x1e0] sm:$0xff] %v701
        %771 = vst [vmem:[#allocation2 + $0x1e8] sm:$0xff] %v703
        %772 = vst [vmem:[#allocation2 + $0x1f0] sm:$0xff] %v706
        %773 = vst [vmem:[#allocation2 + $0x1f8] sm:$0xff] %v708
        %s774 = scalar_lea.vmem %s179, 4 [#allocation3]
        %v775 = vld [vmem:[%s774] sm:$0xf]
        %v776 = vld [vmem:[%s774 + $0x4] sm:$0xf]
        %v777 = vld [vmem:[%s774 + $0x8] sm:$0xf]
        %v778 = vld [vmem:[%s774 + $0xc] sm:$0xf]
        %v779 = vld [vmem:[%s774 + $0x10] sm:$0xf]
        %v780 = vld [vmem:[%s774 + $0x14] sm:$0xf]
        %v781 = vld [vmem:[%s774 + $0x18] sm:$0xf]
        %v782 = vld [vmem:[%s774 + $0x1c] sm:$0xf]
        %v783 = vld [vmem:[%s774 + $0x28] sm:$0xf]
        %v784 = vld [vmem:[%s774 + $0x2c] sm:$0xf]
        %v785 = vld [vmem:[%s774 + $0x30] sm:$0xf]
        %v786 = vld [vmem:[%s774 + $0x34] sm:$0xf]
        %v787 = vld [vmem:[%s774 + $0x38] sm:$0xf]
        %v788 = vld [vmem:[%s774 + $0x3c] sm:$0xf]
        %v789 = vld [vmem:[%s774 + $0x40] sm:$0xf]
        %v790 = vld [vmem:[%s774 + $0x44] sm:$0xf]
        %v791 = vld [vmem:[%s774 + $0x50] sm:$0xf]
        %v792 = vld [vmem:[%s774 + $0x54] sm:$0xf]
        %v793 = vld [vmem:[%s774 + $0x58] sm:$0xf]
        %v794 = vld [vmem:[%s774 + $0x5c] sm:$0xf]
        %v795 = vld [vmem:[%s774 + $0x60] sm:$0xf]
        %v796 = vld [vmem:[%s774 + $0x64] sm:$0xf]
        %v797 = vld [vmem:[%s774 + $0x68] sm:$0xf]
        %v798 = vld [vmem:[%s774 + $0x6c] sm:$0xf]
        %v799 = vld [vmem:[%s774 + $0x78] sm:$0xf]
        %v800 = vld [vmem:[%s774 + $0x7c] sm:$0xf]
        %v801 = vld [vmem:[%s774 + $0x80] sm:$0xf]
        %v802 = vld [vmem:[%s774 + $0x84] sm:$0xf]
        %v803 = vld [vmem:[%s774 + $0x88] sm:$0xf]
        %v804 = vld [vmem:[%s774 + $0x8c] sm:$0xf]
        %v805 = vld [vmem:[%s774 + $0x90] sm:$0xf]
        %v806 = vld [vmem:[%s774 + $0x94] sm:$0xf]
        %v807 = vld [vmem:[%s774 + $0xa0] sm:$0xf]
        %v808 = vld [vmem:[%s774 + $0xa4] sm:$0xf]
        %v809 = vld [vmem:[%s774 + $0xa8] sm:$0xf]
        %v810 = vld [vmem:[%s774 + $0xac] sm:$0xf]
        %v811 = vld [vmem:[%s774 + $0xb0] sm:$0xf]
        %v812 = vld [vmem:[%s774 + $0xb4] sm:$0xf]
        %v813 = vld [vmem:[%s774 + $0xb8] sm:$0xf]
        %v814 = vld [vmem:[%s774 + $0xbc] sm:$0xf]
        %v815 = vld [vmem:[%s774 + $0xc8] sm:$0xf]
        %v816 = vld [vmem:[%s774 + $0xcc] sm:$0xf]
        %v817 = vld [vmem:[%s774 + $0xd0] sm:$0xf]
        %v818 = vld [vmem:[%s774 + $0xd4] sm:$0xf]
        %v819 = vld [vmem:[%s774 + $0xd8] sm:$0xf]
        %v820 = vld [vmem:[%s774 + $0xdc] sm:$0xf]
        %v821 = vld [vmem:[%s774 + $0xe0] sm:$0xf]
        %v822 = vld [vmem:[%s774 + $0xe4] sm:$0xf]
        %v823 = vld [vmem:[%s774 + $0xf0] sm:$0xf]
        %v824 = vld [vmem:[%s774 + $0xf4] sm:$0xf]
        %v825 = vld [vmem:[%s774 + $0xf8] sm:$0xf]
        %v826 = vld [vmem:[%s774 + $0xfc] sm:$0xf]
        %v827 = vld [vmem:[%s774 + $0x100] sm:$0xf]
        %v828 = vld [vmem:[%s774 + $0x104] sm:$0xf]
        %v829 = vld [vmem:[%s774 + $0x108] sm:$0xf]
        %v830 = vld [vmem:[%s774 + $0x10c] sm:$0xf]
        %v831 = vld [vmem:[%s774 + $0x118] sm:$0xf]
        %v832 = vld [vmem:[%s774 + $0x11c] sm:$0xf]
        %v833 = vld [vmem:[%s774 + $0x120] sm:$0xf]
        %v834 = vld [vmem:[%s774 + $0x124] sm:$0xf]
        %v835 = vld [vmem:[%s774 + $0x128] sm:$0xf]
        %v836 = vld [vmem:[%s774 + $0x12c] sm:$0xf]
        %v837 = vld [vmem:[%s774 + $0x130] sm:$0xf]
        %v838 = vld [vmem:[%s774 + $0x134] sm:$0xf]
        %s839 = scalar_lea.vmem [#allocation6], 8
        %v840 = vld [vmem:[%s839] sm:$0xf]
        %v841 = vld [vmem:[%s839 + $0x4] sm:$0x3]
        %v906 = vunpack.c.l.b16 %v775
        %v907 = vunpack.c.l.b16 %v776
        %v908 = vunpack.c.l.b16 %v777
        %v909 = vunpack.c.l.b16 %v778
        %v910 = vunpack.c.l.b16 %v779
        %v911 = vunpack.c.l.b16 %v780
        %v912 = vunpack.c.l.b16 %v781
        %v913 = vunpack.c.l.b16 %v782
        %v914 = vunpack.c.l.b16 %v783
        %v915 = vunpack.c.l.b16 %v784
        %v916 = vunpack.c.l.b16 %v785
        %v917 = vunpack.c.l.b16 %v786
        %v918 = vunpack.c.l.b16 %v787
        %v919 = vunpack.c.l.b16 %v788
        %v920 = vunpack.c.l.b16 %v789
        %v921 = vunpack.c.l.b16 %v790
        %v922 = vunpack.c.l.b16 %v791
        %v923 = vunpack.c.l.b16 %v792
        %v924 = vunpack.c.l.b16 %v793
        %v925 = vunpack.c.l.b16 %v794
        %v926 = vunpack.c.l.b16 %v795
        %v927 = vunpack.c.l.b16 %v796
        %v928 = vunpack.c.l.b16 %v797
        %v929 = vunpack.c.l.b16 %v798
        %v930 = vunpack.c.l.b16 %v799
        %v931 = vunpack.c.l.b16 %v800
        %v932 = vunpack.c.l.b16 %v801
        %v933 = vunpack.c.l.b16 %v802
        %v934 = vunpack.c.l.b16 %v803
        %v935 = vunpack.c.l.b16 %v804
        %v936 = vunpack.c.l.b16 %v805
        %v937 = vunpack.c.l.b16 %v806
        %v938 = vunpack.c.l.b16 %v807
        %v939 = vunpack.c.l.b16 %v808
        %v940 = vunpack.c.l.b16 %v809
        %v941 = vunpack.c.l.b16 %v810
        %v942 = vunpack.c.l.b16 %v811
        %v943 = vunpack.c.l.b16 %v812
        %v944 = vunpack.c.l.b16 %v813
        %v945 = vunpack.c.l.b16 %v814
        %v946 = vunpack.c.l.b16 %v815
        %v947 = vunpack.c.l.b16 %v816
        %v948 = vunpack.c.l.b16 %v817
        %v949 = vunpack.c.l.b16 %v818
        %v950 = vunpack.c.l.b16 %v819
        %v951 = vunpack.c.l.b16 %v820
        %v952 = vunpack.c.l.b16 %v821
        %v953 = vunpack.c.l.b16 %v822
        %v954 = vunpack.c.l.b16 %v823
        %v955 = vunpack.c.l.b16 %v824
        %v956 = vunpack.c.l.b16 %v825
        %v957 = vunpack.c.l.b16 %v826
        %v958 = vunpack.c.l.b16 %v827
        %v959 = vunpack.c.l.b16 %v828
        %v960 = vunpack.c.l.b16 %v829
        %v961 = vunpack.c.l.b16 %v830
        %v962 = vunpack.c.l.b16 %v831
        %v963 = vunpack.c.l.b16 %v832
        %v964 = vunpack.c.l.b16 %v833
        %v965 = vunpack.c.l.b16 %v834
        %v966 = vunpack.c.l.b16 %v835
        %v967 = vunpack.c.l.b16 %v836
        %v968 = vunpack.c.l.b16 %v837
        %v969 = vunpack.c.l.b16 %v838
        %v970 = vpack.c.b16 %v907, %v906
        %v971 = vpack.c.b16 %v909, %v908
        %v972 = vpack.c.b16 %v911, %v910
        %v973 = vpack.c.b16 %v913, %v912
        %v974 = vpack.c.b16 %v915, %v914
        %v975 = vpack.c.b16 %v917, %v916
        %v976 = vpack.c.b16 %v919, %v918
        %v977 = vpack.c.b16 %v921, %v920
        %v978 = vpack.c.b16 %v923, %v922
        %v979 = vpack.c.b16 %v925, %v924
        %v980 = vpack.c.b16 %v927, %v926
        %v981 = vpack.c.b16 %v929, %v928
        %v982 = vpack.c.b16 %v931, %v930
        %v983 = vpack.c.b16 %v933, %v932
        %v984 = vpack.c.b16 %v935, %v934
        %v985 = vpack.c.b16 %v937, %v936
        %v986 = vpack.c.b16 %v939, %v938
        %v987 = vpack.c.b16 %v941, %v940
        %v988 = vpack.c.b16 %v943, %v942
        %v989 = vpack.c.b16 %v945, %v944
        %v990 = vpack.c.b16 %v947, %v946
        %v991 = vpack.c.b16 %v949, %v948
        %v992 = vpack.c.b16 %v951, %v950
        %v993 = vpack.c.b16 %v953, %v952
        %v994 = vpack.c.b16 %v955, %v954
        %v995 = vpack.c.b16 %v957, %v956
        %v996 = vpack.c.b16 %v959, %v958
        %v997 = vpack.c.b16 %v961, %v960
        %v998 = vpack.c.b16 %v963, %v962
        %v999 = vpack.c.b16 %v965, %v964
        %v1000 = vpack.c.b16 %v967, %v966
        %v1001 = vpack.c.b16 %v969, %v968
        %v1004 = vunpack.c.l.b16 %v840
        %v1005 = vunpack.c.l.b16 %v841
        %v1006 = vpack.c.b16 %v1005, %v1004
        %v1008 = vsel %vm440, %v970, 0
        %v1011 = vsel %vm440, %v971, 0
        %v1014 = vsel %vm440, %v972, 0
        %v1017 = vsel %vm440, %v973, 0
        %v1020 = vsel %vm440, %v974, 0
        %v1023 = vsel %vm440, %v975, 0
        %v1026 = vsel %vm440, %v976, 0
        %v1029 = vsel %vm440, %v977, 0
        %v1032 = vsel %vm440, %v978, 0
        %v1035 = vsel %vm440, %v979, 0
        %v1038 = vsel %vm440, %v980, 0
        %v1041 = vsel %vm440, %v981, 0
        %v1044 = vsel %vm440, %v982, 0
        %v1047 = vsel %vm440, %v983, 0
        %v1050 = vsel %vm440, %v984, 0
        %v1053 = vsel %vm440, %v985, 0
        %v1056 = vsel %vm440, %v986, 0
        %v1059 = vsel %vm440, %v987, 0
        %v1062 = vsel %vm440, %v988, 0
        %v1065 = vsel %vm440, %v989, 0
        %v1068 = vsel %vm440, %v990, 0
        %v1071 = vsel %vm440, %v991, 0
        %v1074 = vsel %vm440, %v992, 0
        %v1077 = vsel %vm440, %v993, 0
        %v1080 = vsel %vm440, %v994, 0
        %v1083 = vsel %vm440, %v995, 0
        %v1086 = vsel %vm440, %v996, 0
        %v1089 = vsel %vm440, %v997, 0
        %v1092 = vsel %vm440, %v998, 0
        %v1095 = vsel %vm440, %v999, 0
        %v1098 = vsel %vm440, %v1000, 0
        %v1101 = vsel %vm440, %v1001, 0
        %v1104 = vsel %vm537, %v1006, 0
        %1106 = vmatpush.bf16.msra.mxu0 0
        %1107 = vmatpush.bf16.msra.mxu0 0
        %1108 = vmatpush.bf16.msra.mxu0 0
        %1109 = vmatpush.bf16.msra.mxu0 0
        %1110 = vmatpush.bf16.msra.mxu0 0
        %1111 = vmatpush.bf16.msra.mxu0 0
        %1112 = vmatpush.bf16.msra.mxu0 0
        %1113 = vmatpush.bf16.msra.mxu0 %v1104
        %1114 = vmatmul.bf16.gmra.mxu0 %v1008
        %v1115 = vpop.f32.mrf.mxu0
        %v1116 = vadd.f32 0.0, %v1115
        %v1117 = vpop.f32.mrf.mxu0
        %v1118 = vadd.f32 0.0, %v1117
        %1119 = vmatmul.bf16.gmra.mxu0 %v1011
        %v1120 = vpop.f32.mrf.mxu0
        %v1121 = vadd.f32 0.0, %v1120
        %v1122 = vpop.f32.mrf.mxu0
        %v1123 = vadd.f32 0.0, %v1122
        %1124 = vmatmul.bf16.gmra.mxu0 %v1014
        %v1125 = vpop.f32.mrf.mxu0
        %v1126 = vadd.f32 0.0, %v1125
        %v1127 = vpop.f32.mrf.mxu0
        %v1128 = vadd.f32 0.0, %v1127
        %1129 = vmatmul.bf16.gmra.mxu0 %v1017
        %v1130 = vpop.f32.mrf.mxu0
        %v1131 = vadd.f32 0.0, %v1130
        %v1132 = vpop.f32.mrf.mxu0
        %v1133 = vadd.f32 0.0, %v1132
        %1134 = vmatmul.bf16.gmra.mxu0 %v1020
        %v1135 = vpop.f32.mrf.mxu0
        %v1136 = vadd.f32 0.0, %v1135
        %v1137 = vpop.f32.mrf.mxu0
        %v1138 = vadd.f32 0.0, %v1137
        %1139 = vmatmul.bf16.gmra.mxu0 %v1023
        %v1140 = vpop.f32.mrf.mxu0
        %v1141 = vadd.f32 0.0, %v1140
        %v1142 = vpop.f32.mrf.mxu0
        %v1143 = vadd.f32 0.0, %v1142
        %1144 = vmatmul.bf16.gmra.mxu0 %v1026
        %v1145 = vpop.f32.mrf.mxu0
        %v1146 = vadd.f32 0.0, %v1145
        %v1147 = vpop.f32.mrf.mxu0
        %v1148 = vadd.f32 0.0, %v1147
        %1149 = vmatmul.bf16.gmra.mxu0 %v1029
        %v1150 = vpop.f32.mrf.mxu0
        %v1151 = vadd.f32 0.0, %v1150
        %v1152 = vpop.f32.mrf.mxu0
        %v1153 = vadd.f32 0.0, %v1152
        %1154 = vmatmul.bf16.gmra.mxu0 %v1032
        %v1155 = vpop.f32.mrf.mxu0
        %v1156 = vadd.f32 0.0, %v1155
        %v1157 = vpop.f32.mrf.mxu0
        %v1158 = vadd.f32 0.0, %v1157
        %1159 = vmatmul.bf16.gmra.mxu0 %v1035
        %v1160 = vpop.f32.mrf.mxu0
        %v1161 = vadd.f32 0.0, %v1160
        %v1162 = vpop.f32.mrf.mxu0
        %v1163 = vadd.f32 0.0, %v1162
        %1164 = vmatmul.bf16.gmra.mxu0 %v1038
        %v1165 = vpop.f32.mrf.mxu0
        %v1166 = vadd.f32 0.0, %v1165
        %v1167 = vpop.f32.mrf.mxu0
        %v1168 = vadd.f32 0.0, %v1167
        %1169 = vmatmul.bf16.gmra.mxu0 %v1041
        %v1170 = vpop.f32.mrf.mxu0
        %v1171 = vadd.f32 0.0, %v1170
        %v1172 = vpop.f32.mrf.mxu0
        %v1173 = vadd.f32 0.0, %v1172
        %1174 = vmatmul.bf16.gmra.mxu0 %v1044
        %v1175 = vpop.f32.mrf.mxu0
        %v1176 = vadd.f32 0.0, %v1175
        %v1177 = vpop.f32.mrf.mxu0
        %v1178 = vadd.f32 0.0, %v1177
        %1179 = vmatmul.bf16.gmra.mxu0 %v1047
        %v1180 = vpop.f32.mrf.mxu0
        %v1181 = vadd.f32 0.0, %v1180
        %v1182 = vpop.f32.mrf.mxu0
        %v1183 = vadd.f32 0.0, %v1182
        %1184 = vmatmul.bf16.gmra.mxu0 %v1050
        %v1185 = vpop.f32.mrf.mxu0
        %v1186 = vadd.f32 0.0, %v1185
        %v1187 = vpop.f32.mrf.mxu0
        %v1188 = vadd.f32 0.0, %v1187
        %1189 = vmatmul.bf16.gmra.mxu0 %v1053
        %v1190 = vpop.f32.mrf.mxu0
        %v1191 = vadd.f32 0.0, %v1190
        %v1192 = vpop.f32.mrf.mxu0
        %v1193 = vadd.f32 0.0, %v1192
        %1194 = vmatmul.bf16.gmra.mxu0 %v1056
        %v1195 = vpop.f32.mrf.mxu0
        %v1196 = vadd.f32 0.0, %v1195
        %v1197 = vpop.f32.mrf.mxu0
        %v1198 = vadd.f32 0.0, %v1197
        %1199 = vmatmul.bf16.gmra.mxu0 %v1059
        %v1200 = vpop.f32.mrf.mxu0
        %v1201 = vadd.f32 0.0, %v1200
        %v1202 = vpop.f32.mrf.mxu0
        %v1203 = vadd.f32 0.0, %v1202
        %1204 = vmatmul.bf16.gmra.mxu0 %v1062
        %v1205 = vpop.f32.mrf.mxu0
        %v1206 = vadd.f32 0.0, %v1205
        %v1207 = vpop.f32.mrf.mxu0
        %v1208 = vadd.f32 0.0, %v1207
        %1209 = vmatmul.bf16.gmra.mxu0 %v1065
        %v1210 = vpop.f32.mrf.mxu0
        %v1211 = vadd.f32 0.0, %v1210
        %v1212 = vpop.f32.mrf.mxu0
        %v1213 = vadd.f32 0.0, %v1212
        %1214 = vmatmul.bf16.gmra.mxu0 %v1068
        %v1215 = vpop.f32.mrf.mxu0
        %v1216 = vadd.f32 0.0, %v1215
        %v1217 = vpop.f32.mrf.mxu0
        %v1218 = vadd.f32 0.0, %v1217
        %1219 = vmatmul.bf16.gmra.mxu0 %v1071
        %v1220 = vpop.f32.mrf.mxu0
        %v1221 = vadd.f32 0.0, %v1220
        %v1222 = vpop.f32.mrf.mxu0
        %v1223 = vadd.f32 0.0, %v1222
        %1224 = vmatmul.bf16.gmra.mxu0 %v1074
        %v1225 = vpop.f32.mrf.mxu0
        %v1226 = vadd.f32 0.0, %v1225
        %v1227 = vpop.f32.mrf.mxu0
        %v1228 = vadd.f32 0.0, %v1227
        %1229 = vmatmul.bf16.gmra.mxu0 %v1077
        %v1230 = vpop.f32.mrf.mxu0
        %v1231 = vadd.f32 0.0, %v1230
        %v1232 = vpop.f32.mrf.mxu0
        %v1233 = vadd.f32 0.0, %v1232
        %1234 = vmatmul.bf16.gmra.mxu0 %v1080
        %v1235 = vpop.f32.mrf.mxu0
        %v1236 = vadd.f32 0.0, %v1235
        %v1237 = vpop.f32.mrf.mxu0
        %v1238 = vadd.f32 0.0, %v1237
        %1239 = vmatmul.bf16.gmra.mxu0 %v1083
        %v1240 = vpop.f32.mrf.mxu0
        %v1241 = vadd.f32 0.0, %v1240
        %v1242 = vpop.f32.mrf.mxu0
        %v1243 = vadd.f32 0.0, %v1242
        %1244 = vmatmul.bf16.gmra.mxu0 %v1086
        %v1245 = vpop.f32.mrf.mxu0
        %v1246 = vadd.f32 0.0, %v1245
        %v1247 = vpop.f32.mrf.mxu0
        %v1248 = vadd.f32 0.0, %v1247
        %1249 = vmatmul.bf16.gmra.mxu0 %v1089
        %v1250 = vpop.f32.mrf.mxu0
        %v1251 = vadd.f32 0.0, %v1250
        %v1252 = vpop.f32.mrf.mxu0
        %v1253 = vadd.f32 0.0, %v1252
        %1254 = vmatmul.bf16.gmra.mxu0 %v1092
        %v1255 = vpop.f32.mrf.mxu0
        %v1256 = vadd.f32 0.0, %v1255
        %v1257 = vpop.f32.mrf.mxu0
        %v1258 = vadd.f32 0.0, %v1257
        %1259 = vmatmul.bf16.gmra.mxu0 %v1095
        %v1260 = vpop.f32.mrf.mxu0
        %v1261 = vadd.f32 0.0, %v1260
        %v1262 = vpop.f32.mrf.mxu0
        %v1263 = vadd.f32 0.0, %v1262
        %1264 = vmatmul.bf16.gmra.mxu0 %v1098
        %v1265 = vpop.f32.mrf.mxu0
        %v1266 = vadd.f32 0.0, %v1265
        %v1267 = vpop.f32.mrf.mxu0
        %v1268 = vadd.f32 0.0, %v1267
        %1269 = vmatmul.bf16.gmra.mxu0 %v1101
        %v1270 = vpop.f32.mrf.mxu0
        %v1271 = vadd.f32 0.0, %v1270
        %v1272 = vpop.f32.mrf.mxu0
        %v1273 = vadd.f32 0.0, %v1272
        %1274 = vdwg.mxu0
        %v1275 = vld [vmem:[#allocation2] sm:$0xff]
        %v1276 = vld [vmem:[#allocation2 + $0x8] sm:$0xff]
        %v1277 = vld [vmem:[#allocation2 + $0x10] sm:$0xff]
        %v1278 = vld [vmem:[#allocation2 + $0x18] sm:$0xff]
        %v1279 = vld [vmem:[#allocation2 + $0x20] sm:$0xff]
        %v1280 = vld [vmem:[#allocation2 + $0x28] sm:$0xff]
        %v1281 = vld [vmem:[#allocation2 + $0x30] sm:$0xff]
        %v1282 = vld [vmem:[#allocation2 + $0x38] sm:$0xff]
        %v1283 = vld [vmem:[#allocation2 + $0x40] sm:$0xff]
        %v1284 = vld [vmem:[#allocation2 + $0x48] sm:$0xff]
        %v1285 = vld [vmem:[#allocation2 + $0x50] sm:$0xff]
        %v1286 = vld [vmem:[#allocation2 + $0x58] sm:$0xff]
        %v1287 = vld [vmem:[#allocation2 + $0x60] sm:$0xff]
        %v1288 = vld [vmem:[#allocation2 + $0x68] sm:$0xff]
        %v1289 = vld [vmem:[#allocation2 + $0x70] sm:$0xff]
        %v1290 = vld [vmem:[#allocation2 + $0x78] sm:$0xff]
        %v1291 = vld [vmem:[#allocation2 + $0x80] sm:$0xff]
        %v1292 = vld [vmem:[#allocation2 + $0x88] sm:$0xff]
        %v1293 = vld [vmem:[#allocation2 + $0x90] sm:$0xff]
        %v1294 = vld [vmem:[#allocation2 + $0x98] sm:$0xff]
        %v1295 = vld [vmem:[#allocation2 + $0xa0] sm:$0xff]
        %v1296 = vld [vmem:[#allocation2 + $0xa8] sm:$0xff]
        %v1297 = vld [vmem:[#allocation2 + $0xb0] sm:$0xff]
        %v1298 = vld [vmem:[#allocation2 + $0xb8] sm:$0xff]
        %v1299 = vld [vmem:[#allocation2 + $0xc0] sm:$0xff]
        %v1300 = vld [vmem:[#allocation2 + $0xc8] sm:$0xff]
        %v1301 = vld [vmem:[#allocation2 + $0xd0] sm:$0xff]
        %v1302 = vld [vmem:[#allocation2 + $0xd8] sm:$0xff]
        %v1303 = vld [vmem:[#allocation2 + $0xe0] sm:$0xff]
        %v1304 = vld [vmem:[#allocation2 + $0xe8] sm:$0xff]
        %v1305 = vld [vmem:[#allocation2 + $0xf0] sm:$0xff]
        %v1306 = vld [vmem:[#allocation2 + $0xf8] sm:$0xff]
        %v1307 = vld [vmem:[#allocation2 + $0x100] sm:$0xff]
        %v1308 = vld [vmem:[#allocation2 + $0x108] sm:$0xff]
        %v1309 = vld [vmem:[#allocation2 + $0x110] sm:$0xff]
        %v1310 = vld [vmem:[#allocation2 + $0x118] sm:$0xff]
        %v1311 = vld [vmem:[#allocation2 + $0x120] sm:$0xff]
        %v1312 = vld [vmem:[#allocation2 + $0x128] sm:$0xff]
        %v1313 = vld [vmem:[#allocation2 + $0x130] sm:$0xff]
        %v1314 = vld [vmem:[#allocation2 + $0x138] sm:$0xff]
        %v1315 = vld [vmem:[#allocation2 + $0x140] sm:$0xff]
        %v1316 = vld [vmem:[#allocation2 + $0x148] sm:$0xff]
        %v1317 = vld [vmem:[#allocation2 + $0x150] sm:$0xff]
        %v1318 = vld [vmem:[#allocation2 + $0x158] sm:$0xff]
        %v1319 = vld [vmem:[#allocation2 + $0x160] sm:$0xff]
        %v1320 = vld [vmem:[#allocation2 + $0x168] sm:$0xff]
        %v1321 = vld [vmem:[#allocation2 + $0x170] sm:$0xff]
        %v1322 = vld [vmem:[#allocation2 + $0x178] sm:$0xff]
        %v1323 = vld [vmem:[#allocation2 + $0x180] sm:$0xff]
        %v1324 = vld [vmem:[#allocation2 + $0x188] sm:$0xff]
        %v1325 = vld [vmem:[#allocation2 + $0x190] sm:$0xff]
        %v1326 = vld [vmem:[#allocation2 + $0x198] sm:$0xff]
        %v1327 = vld [vmem:[#allocation2 + $0x1a0] sm:$0xff]
        %v1328 = vld [vmem:[#allocation2 + $0x1a8] sm:$0xff]
        %v1329 = vld [vmem:[#allocation2 + $0x1b0] sm:$0xff]
        %v1330 = vld [vmem:[#allocation2 + $0x1b8] sm:$0xff]
        %v1331 = vld [vmem:[#allocation2 + $0x1c0] sm:$0xff]
        %v1332 = vld [vmem:[#allocation2 + $0x1c8] sm:$0xff]
        %v1333 = vld [vmem:[#allocation2 + $0x1d0] sm:$0xff]
        %v1334 = vld [vmem:[#allocation2 + $0x1d8] sm:$0xff]
        %v1335 = vld [vmem:[#allocation2 + $0x1e0] sm:$0xff]
        %v1336 = vld [vmem:[#allocation2 + $0x1e8] sm:$0xff]
        %v1337 = vld [vmem:[#allocation2 + $0x1f0] sm:$0xff]
        %v1338 = vld [vmem:[#allocation2 + $0x1f8] sm:$0xff]
        %v1339 = vadd.f32 %v1275, %v1116
        %v1340 = vadd.f32 %v1276, %v1118
        %v1341 = vadd.f32 %v1277, %v1121
        %v1342 = vadd.f32 %v1278, %v1123
        %v1343 = vadd.f32 %v1279, %v1126
        %v1344 = vadd.f32 %v1280, %v1128
        %v1345 = vadd.f32 %v1281, %v1131
        %v1346 = vadd.f32 %v1282, %v1133
        %v1347 = vadd.f32 %v1283, %v1136
        %v1348 = vadd.f32 %v1284, %v1138
        %v1349 = vadd.f32 %v1285, %v1141
        %v1350 = vadd.f32 %v1286, %v1143
        %v1351 = vadd.f32 %v1287, %v1146
        %v1352 = vadd.f32 %v1288, %v1148
        %v1353 = vadd.f32 %v1289, %v1151
        %v1354 = vadd.f32 %v1290, %v1153
        %v1355 = vadd.f32 %v1291, %v1156
        %v1356 = vadd.f32 %v1292, %v1158
        %v1357 = vadd.f32 %v1293, %v1161
        %v1358 = vadd.f32 %v1294, %v1163
        %v1359 = vadd.f32 %v1295, %v1166
        %v1360 = vadd.f32 %v1296, %v1168
        %v1361 = vadd.f32 %v1297, %v1171
        %v1362 = vadd.f32 %v1298, %v1173
        %v1363 = vadd.f32 %v1299, %v1176
        %v1364 = vadd.f32 %v1300, %v1178
        %v1365 = vadd.f32 %v1301, %v1181
        %v1366 = vadd.f32 %v1302, %v1183
        %v1367 = vadd.f32 %v1303, %v1186
        %v1368 = vadd.f32 %v1304, %v1188
        %v1369 = vadd.f32 %v1305, %v1191
        %v1370 = vadd.f32 %v1306, %v1193
        %v1371 = vadd.f32 %v1307, %v1196
        %v1372 = vadd.f32 %v1308, %v1198
        %v1373 = vadd.f32 %v1309, %v1201
        %v1374 = vadd.f32 %v1310, %v1203
        %v1375 = vadd.f32 %v1311, %v1206
        %v1376 = vadd.f32 %v1312, %v1208
        %v1377 = vadd.f32 %v1313, %v1211
        %v1378 = vadd.f32 %v1314, %v1213
        %v1379 = vadd.f32 %v1315, %v1216
        %v1380 = vadd.f32 %v1316, %v1218
        %v1381 = vadd.f32 %v1317, %v1221
        %v1382 = vadd.f32 %v1318, %v1223
        %v1383 = vadd.f32 %v1319, %v1226
        %v1384 = vadd.f32 %v1320, %v1228
        %v1385 = vadd.f32 %v1321, %v1231
        %v1386 = vadd.f32 %v1322, %v1233
        %v1387 = vadd.f32 %v1323, %v1236
        %v1388 = vadd.f32 %v1324, %v1238
        %v1389 = vadd.f32 %v1325, %v1241
        %v1390 = vadd.f32 %v1326, %v1243
        %v1391 = vadd.f32 %v1327, %v1246
        %v1392 = vadd.f32 %v1328, %v1248
        %v1393 = vadd.f32 %v1329, %v1251
        %v1394 = vadd.f32 %v1330, %v1253
        %v1395 = vadd.f32 %v1331, %v1256
        %v1396 = vadd.f32 %v1332, %v1258
        %v1397 = vadd.f32 %v1333, %v1261
        %v1398 = vadd.f32 %v1334, %v1263
        %v1399 = vadd.f32 %v1335, %v1266
        %v1400 = vadd.f32 %v1336, %v1268
        %v1401 = vadd.f32 %v1337, %v1271
        %v1402 = vadd.f32 %v1338, %v1273
        %1403 = vst [vmem:[#allocation2] sm:$0xff] %v1339
        %1404 = vst [vmem:[#allocation2 + $0x8] sm:$0xff] %v1340
        %1405 = vst [vmem:[#allocation2 + $0x10] sm:$0xff] %v1341
        %1406 = vst [vmem:[#allocation2 + $0x18] sm:$0xff] %v1342
        %1407 = vst [vmem:[#allocation2 + $0x20] sm:$0xff] %v1343
        %1408 = vst [vmem:[#allocation2 + $0x28] sm:$0xff] %v1344
        %1409 = vst [vmem:[#allocation2 + $0x30] sm:$0xff] %v1345
        %1410 = vst [vmem:[#allocation2 + $0x38] sm:$0xff] %v1346
        %1411 = vst [vmem:[#allocation2 + $0x40] sm:$0xff] %v1347
        %1412 = vst [vmem:[#allocation2 + $0x48] sm:$0xff] %v1348
        %1413 = vst [vmem:[#allocation2 + $0x50] sm:$0xff] %v1349
        %1414 = vst [vmem:[#allocation2 + $0x58] sm:$0xff] %v1350
        %1415 = vst [vmem:[#allocation2 + $0x60] sm:$0xff] %v1351
        %1416 = vst [vmem:[#allocation2 + $0x68] sm:$0xff] %v1352
        %1417 = vst [vmem:[#allocation2 + $0x70] sm:$0xff] %v1353
        %1418 = vst [vmem:[#allocation2 + $0x78] sm:$0xff] %v1354
        %1419 = vst [vmem:[#allocation2 + $0x80] sm:$0xff] %v1355
        %1420 = vst [vmem:[#allocation2 + $0x88] sm:$0xff] %v1356
        %1421 = vst [vmem:[#allocation2 + $0x90] sm:$0xff] %v1357
        %1422 = vst [vmem:[#allocation2 + $0x98] sm:$0xff] %v1358
        %1423 = vst [vmem:[#allocation2 + $0xa0] sm:$0xff] %v1359
        %1424 = vst [vmem:[#allocation2 + $0xa8] sm:$0xff] %v1360
        %1425 = vst [vmem:[#allocation2 + $0xb0] sm:$0xff] %v1361
        %1426 = vst [vmem:[#allocation2 + $0xb8] sm:$0xff] %v1362
        %1427 = vst [vmem:[#allocation2 + $0xc0] sm:$0xff] %v1363
        %1428 = vst [vmem:[#allocation2 + $0xc8] sm:$0xff] %v1364
        %1429 = vst [vmem:[#allocation2 + $0xd0] sm:$0xff] %v1365
        %1430 = vst [vmem:[#allocation2 + $0xd8] sm:$0xff] %v1366
        %1431 = vst [vmem:[#allocation2 + $0xe0] sm:$0xff] %v1367
        %1432 = vst [vmem:[#allocation2 + $0xe8] sm:$0xff] %v1368
        %1433 = vst [vmem:[#allocation2 + $0xf0] sm:$0xff] %v1369
        %1434 = vst [vmem:[#allocation2 + $0xf8] sm:$0xff] %v1370
        %1435 = vst [vmem:[#allocation2 + $0x100] sm:$0xff] %v1371
        %1436 = vst [vmem:[#allocation2 + $0x108] sm:$0xff] %v1372
        %1437 = vst [vmem:[#allocation2 + $0x110] sm:$0xff] %v1373
        %1438 = vst [vmem:[#allocation2 + $0x118] sm:$0xff] %v1374
        %1439 = vst [vmem:[#allocation2 + $0x120] sm:$0xff] %v1375
        %1440 = vst [vmem:[#allocation2 + $0x128] sm:$0xff] %v1376
        %1441 = vst [vmem:[#allocation2 + $0x130] sm:$0xff] %v1377
        %1442 = vst [vmem:[#allocation2 + $0x138] sm:$0xff] %v1378
        %1443 = vst [vmem:[#allocation2 + $0x140] sm:$0xff] %v1379
        %1444 = vst [vmem:[#allocation2 + $0x148] sm:$0xff] %v1380
        %1445 = vst [vmem:[#allocation2 + $0x150] sm:$0xff] %v1381
        %1446 = vst [vmem:[#allocation2 + $0x158] sm:$0xff] %v1382
        %1447 = vst [vmem:[#allocation2 + $0x160] sm:$0xff] %v1383
        %1448 = vst [vmem:[#allocation2 + $0x168] sm:$0xff] %v1384
        %1449 = vst [vmem:[#allocation2 + $0x170] sm:$0xff] %v1385
        %1450 = vst [vmem:[#allocation2 + $0x178] sm:$0xff] %v1386
        %1451 = vst [vmem:[#allocation2 + $0x180] sm:$0xff] %v1387
        %1452 = vst [vmem:[#allocation2 + $0x188] sm:$0xff] %v1388
        %1453 = vst [vmem:[#allocation2 + $0x190] sm:$0xff] %v1389
        %1454 = vst [vmem:[#allocation2 + $0x198] sm:$0xff] %v1390
        %1455 = vst [vmem:[#allocation2 + $0x1a0] sm:$0xff] %v1391
        %1456 = vst [vmem:[#allocation2 + $0x1a8] sm:$0xff] %v1392
        %1457 = vst [vmem:[#allocation2 + $0x1b0] sm:$0xff] %v1393
        %1458 = vst [vmem:[#allocation2 + $0x1b8] sm:$0xff] %v1394
        %1459 = vst [vmem:[#allocation2 + $0x1c0] sm:$0xff] %v1395
        %1460 = vst [vmem:[#allocation2 + $0x1c8] sm:$0xff] %v1396
        %1461 = vst [vmem:[#allocation2 + $0x1d0] sm:$0xff] %v1397
        %1462 = vst [vmem:[#allocation2 + $0x1d8] sm:$0xff] %v1398
        %1463 = vst [vmem:[#allocation2 + $0x1e0] sm:$0xff] %v1399
        %1464 = vst [vmem:[#allocation2 + $0x1e8] sm:$0xff] %v1400
        %1465 = vst [vmem:[#allocation2 + $0x1f0] sm:$0xff] %v1401
        %1466 = vst [vmem:[#allocation2 + $0x1f8] sm:$0xff] %v1402
        %s1467 = scalar_lea.vmem %s179, 8 [#allocation3]
        %v1468 = vld [vmem:[%s1467] sm:$0xf]
        %v1469 = vld [vmem:[%s1467 + $0x4] sm:$0xf]
        %v1470 = vld [vmem:[%s1467 + $0x8] sm:$0xf]
        %v1471 = vld [vmem:[%s1467 + $0xc] sm:$0xf]
        %v1472 = vld [vmem:[%s1467 + $0x10] sm:$0xf]
        %v1473 = vld [vmem:[%s1467 + $0x14] sm:$0xf]
        %v1474 = vld [vmem:[%s1467 + $0x18] sm:$0xf]
        %v1475 = vld [vmem:[%s1467 + $0x1c] sm:$0xf]
        %v1476 = vld [vmem:[%s1467 + $0x28] sm:$0xf]
        %v1477 = vld [vmem:[%s1467 + $0x2c] sm:$0xf]
        %v1478 = vld [vmem:[%s1467 + $0x30] sm:$0xf]
        %v1479 = vld [vmem:[%s1467 + $0x34] sm:$0xf]
        %v1480 = vld [vmem:[%s1467 + $0x38] sm:$0xf]
        %v1481 = vld [vmem:[%s1467 + $0x3c] sm:$0xf]
        %v1482 = vld [vmem:[%s1467 + $0x40] sm:$0xf]
        %v1483 = vld [vmem:[%s1467 + $0x44] sm:$0xf]
        %v1484 = vld [vmem:[%s1467 + $0x50] sm:$0xf]
        %v1485 = vld [vmem:[%s1467 + $0x54] sm:$0xf]
        %v1486 = vld [vmem:[%s1467 + $0x58] sm:$0xf]
        %v1487 = vld [vmem:[%s1467 + $0x5c] sm:$0xf]
        %v1488 = vld [vmem:[%s1467 + $0x60] sm:$0xf]
        %v1489 = vld [vmem:[%s1467 + $0x64] sm:$0xf]
        %v1490 = vld [vmem:[%s1467 + $0x68] sm:$0xf]
        %v1491 = vld [vmem:[%s1467 + $0x6c] sm:$0xf]
        %v1492 = vld [vmem:[%s1467 + $0x78] sm:$0xf]
        %v1493 = vld [vmem:[%s1467 + $0x7c] sm:$0xf]
        %v1494 = vld [vmem:[%s1467 + $0x80] sm:$0xf]
        %v1495 = vld [vmem:[%s1467 + $0x84] sm:$0xf]
        %v1496 = vld [vmem:[%s1467 + $0x88] sm:$0xf]
        %v1497 = vld [vmem:[%s1467 + $0x8c] sm:$0xf]
        %v1498 = vld [vmem:[%s1467 + $0x90] sm:$0xf]
        %v1499 = vld [vmem:[%s1467 + $0x94] sm:$0xf]
        %v1500 = vld [vmem:[%s1467 + $0xa0] sm:$0xf]
        %v1501 = vld [vmem:[%s1467 + $0xa4] sm:$0xf]
        %v1502 = vld [vmem:[%s1467 + $0xa8] sm:$0xf]
        %v1503 = vld [vmem:[%s1467 + $0xac] sm:$0xf]
        %v1504 = vld [vmem:[%s1467 + $0xb0] sm:$0xf]
        %v1505 = vld [vmem:[%s1467 + $0xb4] sm:$0xf]
        %v1506 = vld [vmem:[%s1467 + $0xb8] sm:$0xf]
        %v1507 = vld [vmem:[%s1467 + $0xbc] sm:$0xf]
        %v1508 = vld [vmem:[%s1467 + $0xc8] sm:$0xf]
        %v1509 = vld [vmem:[%s1467 + $0xcc] sm:$0xf]
        %v1510 = vld [vmem:[%s1467 + $0xd0] sm:$0xf]
        %v1511 = vld [vmem:[%s1467 + $0xd4] sm:$0xf]
        %v1512 = vld [vmem:[%s1467 + $0xd8] sm:$0xf]
        %v1513 = vld [vmem:[%s1467 + $0xdc] sm:$0xf]
        %v1514 = vld [vmem:[%s1467 + $0xe0] sm:$0xf]
        %v1515 = vld [vmem:[%s1467 + $0xe4] sm:$0xf]
        %v1516 = vld [vmem:[%s1467 + $0xf0] sm:$0xf]
        %v1517 = vld [vmem:[%s1467 + $0xf4] sm:$0xf]
        %v1518 = vld [vmem:[%s1467 + $0xf8] sm:$0xf]
        %v1519 = vld [vmem:[%s1467 + $0xfc] sm:$0xf]
        %v1520 = vld [vmem:[%s1467 + $0x100] sm:$0xf]
        %v1521 = vld [vmem:[%s1467 + $0x104] sm:$0xf]
        %v1522 = vld [vmem:[%s1467 + $0x108] sm:$0xf]
        %v1523 = vld [vmem:[%s1467 + $0x10c] sm:$0xf]
        %v1524 = vld [vmem:[%s1467 + $0x118] sm:$0xf]
        %v1525 = vld [vmem:[%s1467 + $0x11c] sm:$0xf]
        %v1526 = vld [vmem:[%s1467 + $0x120] sm:$0xf]
        %v1527 = vld [vmem:[%s1467 + $0x124] sm:$0xf]
        %v1528 = vld [vmem:[%s1467 + $0x128] sm:$0xf]
        %v1529 = vld [vmem:[%s1467 + $0x12c] sm:$0xf]
        %v1530 = vld [vmem:[%s1467 + $0x130] sm:$0xf]
        %v1531 = vld [vmem:[%s1467 + $0x134] sm:$0xf]
        %s1532 = scalar_lea.vmem [#allocation6], 16
        %v1533 = vld [vmem:[%s1532] sm:$0xf]
        %v1534 = vld [vmem:[%s1532 + $0x4] sm:$0x3]
        %v1599 = vunpack.c.l.b16 %v1468
        %v1600 = vunpack.c.l.b16 %v1469
        %v1601 = vunpack.c.l.b16 %v1470
        %v1602 = vunpack.c.l.b16 %v1471
        %v1603 = vunpack.c.l.b16 %v1472
        %v1604 = vunpack.c.l.b16 %v1473
        %v1605 = vunpack.c.l.b16 %v1474
        %v1606 = vunpack.c.l.b16 %v1475
        %v1607 = vunpack.c.l.b16 %v1476
        %v1608 = vunpack.c.l.b16 %v1477
        %v1609 = vunpack.c.l.b16 %v1478
        %v1610 = vunpack.c.l.b16 %v1479
        %v1611 = vunpack.c.l.b16 %v1480
        %v1612 = vunpack.c.l.b16 %v1481
        %v1613 = vunpack.c.l.b16 %v1482
        %v1614 = vunpack.c.l.b16 %v1483
        %v1615 = vunpack.c.l.b16 %v1484
        %v1616 = vunpack.c.l.b16 %v1485
        %v1617 = vunpack.c.l.b16 %v1486
        %v1618 = vunpack.c.l.b16 %v1487
        %v1619 = vunpack.c.l.b16 %v1488
        %v1620 = vunpack.c.l.b16 %v1489
        %v1621 = vunpack.c.l.b16 %v1490
        %v1622 = vunpack.c.l.b16 %v1491
        %v1623 = vunpack.c.l.b16 %v1492
        %v1624 = vunpack.c.l.b16 %v1493
        %v1625 = vunpack.c.l.b16 %v1494
        %v1626 = vunpack.c.l.b16 %v1495
        %v1627 = vunpack.c.l.b16 %v1496
        %v1628 = vunpack.c.l.b16 %v1497
        %v1629 = vunpack.c.l.b16 %v1498
        %v1630 = vunpack.c.l.b16 %v1499
        %v1631 = vunpack.c.l.b16 %v1500
        %v1632 = vunpack.c.l.b16 %v1501
        %v1633 = vunpack.c.l.b16 %v1502
        %v1634 = vunpack.c.l.b16 %v1503
        %v1635 = vunpack.c.l.b16 %v1504
        %v1636 = vunpack.c.l.b16 %v1505
        %v1637 = vunpack.c.l.b16 %v1506
        %v1638 = vunpack.c.l.b16 %v1507
        %v1639 = vunpack.c.l.b16 %v1508
        %v1640 = vunpack.c.l.b16 %v1509
        %v1641 = vunpack.c.l.b16 %v1510
        %v1642 = vunpack.c.l.b16 %v1511
        %v1643 = vunpack.c.l.b16 %v1512
        %v1644 = vunpack.c.l.b16 %v1513
        %v1645 = vunpack.c.l.b16 %v1514
        %v1646 = vunpack.c.l.b16 %v1515
        %v1647 = vunpack.c.l.b16 %v1516
        %v1648 = vunpack.c.l.b16 %v1517
        %v1649 = vunpack.c.l.b16 %v1518
        %v1650 = vunpack.c.l.b16 %v1519
        %v1651 = vunpack.c.l.b16 %v1520
        %v1652 = vunpack.c.l.b16 %v1521
        %v1653 = vunpack.c.l.b16 %v1522
        %v1654 = vunpack.c.l.b16 %v1523
        %v1655 = vunpack.c.l.b16 %v1524
        %v1656 = vunpack.c.l.b16 %v1525
        %v1657 = vunpack.c.l.b16 %v1526
        %v1658 = vunpack.c.l.b16 %v1527
        %v1659 = vunpack.c.l.b16 %v1528
        %v1660 = vunpack.c.l.b16 %v1529
        %v1661 = vunpack.c.l.b16 %v1530
        %v1662 = vunpack.c.l.b16 %v1531
        %v1663 = vpack.c.b16 %v1600, %v1599
        %v1664 = vpack.c.b16 %v1602, %v1601
        %v1665 = vpack.c.b16 %v1604, %v1603
        %v1666 = vpack.c.b16 %v1606, %v1605
        %v1667 = vpack.c.b16 %v1608, %v1607
        %v1668 = vpack.c.b16 %v1610, %v1609
        %v1669 = vpack.c.b16 %v1612, %v1611
        %v1670 = vpack.c.b16 %v1614, %v1613
        %v1671 = vpack.c.b16 %v1616, %v1615
        %v1672 = vpack.c.b16 %v1618, %v1617
        %v1673 = vpack.c.b16 %v1620, %v1619
        %v1674 = vpack.c.b16 %v1622, %v1621
        %v1675 = vpack.c.b16 %v1624, %v1623
        %v1676 = vpack.c.b16 %v1626, %v1625
        %v1677 = vpack.c.b16 %v1628, %v1627
        %v1678 = vpack.c.b16 %v1630, %v1629
        %v1679 = vpack.c.b16 %v1632, %v1631
        %v1680 = vpack.c.b16 %v1634, %v1633
        %v1681 = vpack.c.b16 %v1636, %v1635
        %v1682 = vpack.c.b16 %v1638, %v1637
        %v1683 = vpack.c.b16 %v1640, %v1639
        %v1684 = vpack.c.b16 %v1642, %v1641
        %v1685 = vpack.c.b16 %v1644, %v1643
        %v1686 = vpack.c.b16 %v1646, %v1645
        %v1687 = vpack.c.b16 %v1648, %v1647
        %v1688 = vpack.c.b16 %v1650, %v1649
        %v1689 = vpack.c.b16 %v1652, %v1651
        %v1690 = vpack.c.b16 %v1654, %v1653
        %v1691 = vpack.c.b16 %v1656, %v1655
        %v1692 = vpack.c.b16 %v1658, %v1657
        %v1693 = vpack.c.b16 %v1660, %v1659
        %v1694 = vpack.c.b16 %v1662, %v1661
        %v1697 = vunpack.c.l.b16 %v1533
        %v1698 = vunpack.c.l.b16 %v1534
        %v1699 = vpack.c.b16 %v1698, %v1697
        %v1701 = vsel %vm440, %v1663, 0
        %v1704 = vsel %vm440, %v1664, 0
        %v1707 = vsel %vm440, %v1665, 0
        %v1710 = vsel %vm440, %v1666, 0
        %v1713 = vsel %vm440, %v1667, 0
        %v1716 = vsel %vm440, %v1668, 0
        %v1719 = vsel %vm440, %v1669, 0
        %v1722 = vsel %vm440, %v1670, 0
        %v1725 = vsel %vm440, %v1671, 0
        %v1728 = vsel %vm440, %v1672, 0
        %v1731 = vsel %vm440, %v1673, 0
        %v1734 = vsel %vm440, %v1674, 0
        %v1737 = vsel %vm440, %v1675, 0
        %v1740 = vsel %vm440, %v1676, 0
        %v1743 = vsel %vm440, %v1677, 0
        %v1746 = vsel %vm440, %v1678, 0
        %v1749 = vsel %vm440, %v1679, 0
        %v1752 = vsel %vm440, %v1680, 0
        %v1755 = vsel %vm440, %v1681, 0
        %v1758 = vsel %vm440, %v1682, 0
        %v1761 = vsel %vm440, %v1683, 0
        %v1764 = vsel %vm440, %v1684, 0
        %v1767 = vsel %vm440, %v1685, 0
        %v1770 = vsel %vm440, %v1686, 0
        %v1773 = vsel %vm440, %v1687, 0
        %v1776 = vsel %vm440, %v1688, 0
        %v1779 = vsel %vm440, %v1689, 0
        %v1782 = vsel %vm440, %v1690, 0
        %v1785 = vsel %vm440, %v1691, 0
        %v1788 = vsel %vm440, %v1692, 0
        %v1791 = vsel %vm440, %v1693, 0
        %v1794 = vsel %vm440, %v1694, 0
        %v1797 = vsel %vm537, %v1699, 0
        %1799 = vmatpush.bf16.msra.mxu0 0
        %1800 = vmatpush.bf16.msra.mxu0 0
        %1801 = vmatpush.bf16.msra.mxu0 0
        %1802 = vmatpush.bf16.msra.mxu0 0
        %1803 = vmatpush.bf16.msra.mxu0 0
        %1804 = vmatpush.bf16.msra.mxu0 0
        %1805 = vmatpush.bf16.msra.mxu0 0
        %1806 = vmatpush.bf16.msra.mxu0 %v1797
        %1807 = vmatmul.bf16.gmra.mxu0 %v1701
        %v1808 = vpop.f32.mrf.mxu0
        %v1809 = vadd.f32 0.0, %v1808
        %v1810 = vpop.f32.mrf.mxu0
        %v1811 = vadd.f32 0.0, %v1810
        %1812 = vmatmul.bf16.gmra.mxu0 %v1704
        %v1813 = vpop.f32.mrf.mxu0
        %v1814 = vadd.f32 0.0, %v1813
        %v1815 = vpop.f32.mrf.mxu0
        %v1816 = vadd.f32 0.0, %v1815
        %1817 = vmatmul.bf16.gmra.mxu0 %v1707
        %v1818 = vpop.f32.mrf.mxu0
        %v1819 = vadd.f32 0.0, %v1818
        %v1820 = vpop.f32.mrf.mxu0
        %v1821 = vadd.f32 0.0, %v1820
        %1822 = vmatmul.bf16.gmra.mxu0 %v1710
        %v1823 = vpop.f32.mrf.mxu0
        %v1824 = vadd.f32 0.0, %v1823
        %v1825 = vpop.f32.mrf.mxu0
        %v1826 = vadd.f32 0.0, %v1825
        %1827 = vmatmul.bf16.gmra.mxu0 %v1713
        %v1828 = vpop.f32.mrf.mxu0
        %v1829 = vadd.f32 0.0, %v1828
        %v1830 = vpop.f32.mrf.mxu0
        %v1831 = vadd.f32 0.0, %v1830
        %1832 = vmatmul.bf16.gmra.mxu0 %v1716
        %v1833 = vpop.f32.mrf.mxu0
        %v1834 = vadd.f32 0.0, %v1833
        %v1835 = vpop.f32.mrf.mxu0
        %v1836 = vadd.f32 0.0, %v1835
        %1837 = vmatmul.bf16.gmra.mxu0 %v1719
        %v1838 = vpop.f32.mrf.mxu0
        %v1839 = vadd.f32 0.0, %v1838
        %v1840 = vpop.f32.mrf.mxu0
        %v1841 = vadd.f32 0.0, %v1840
        %1842 = vmatmul.bf16.gmra.mxu0 %v1722
        %v1843 = vpop.f32.mrf.mxu0
        %v1844 = vadd.f32 0.0, %v1843
        %v1845 = vpop.f32.mrf.mxu0
        %v1846 = vadd.f32 0.0, %v1845
        %1847 = vmatmul.bf16.gmra.mxu0 %v1725
        %v1848 = vpop.f32.mrf.mxu0
        %v1849 = vadd.f32 0.0, %v1848
        %v1850 = vpop.f32.mrf.mxu0
        %v1851 = vadd.f32 0.0, %v1850
        %1852 = vmatmul.bf16.gmra.mxu0 %v1728
        %v1853 = vpop.f32.mrf.mxu0
        %v1854 = vadd.f32 0.0, %v1853
        %v1855 = vpop.f32.mrf.mxu0
        %v1856 = vadd.f32 0.0, %v1855
        %1857 = vmatmul.bf16.gmra.mxu0 %v1731
        %v1858 = vpop.f32.mrf.mxu0
        %v1859 = vadd.f32 0.0, %v1858
        %v1860 = vpop.f32.mrf.mxu0
        %v1861 = vadd.f32 0.0, %v1860
        %1862 = vmatmul.bf16.gmra.mxu0 %v1734
        %v1863 = vpop.f32.mrf.mxu0
        %v1864 = vadd.f32 0.0, %v1863
        %v1865 = vpop.f32.mrf.mxu0
        %v1866 = vadd.f32 0.0, %v1865
        %1867 = vmatmul.bf16.gmra.mxu0 %v1737
        %v1868 = vpop.f32.mrf.mxu0
        %v1869 = vadd.f32 0.0, %v1868
        %v1870 = vpop.f32.mrf.mxu0
        %v1871 = vadd.f32 0.0, %v1870
        %1872 = vmatmul.bf16.gmra.mxu0 %v1740
        %v1873 = vpop.f32.mrf.mxu0
        %v1874 = vadd.f32 0.0, %v1873
        %v1875 = vpop.f32.mrf.mxu0
        %v1876 = vadd.f32 0.0, %v1875
        %1877 = vmatmul.bf16.gmra.mxu0 %v1743
        %v1878 = vpop.f32.mrf.mxu0
        %v1879 = vadd.f32 0.0, %v1878
        %v1880 = vpop.f32.mrf.mxu0
        %v1881 = vadd.f32 0.0, %v1880
        %1882 = vmatmul.bf16.gmra.mxu0 %v1746
        %v1883 = vpop.f32.mrf.mxu0
        %v1884 = vadd.f32 0.0, %v1883
        %v1885 = vpop.f32.mrf.mxu0
        %v1886 = vadd.f32 0.0, %v1885
        %1887 = vmatmul.bf16.gmra.mxu0 %v1749
        %v1888 = vpop.f32.mrf.mxu0
        %v1889 = vadd.f32 0.0, %v1888
        %v1890 = vpop.f32.mrf.mxu0
        %v1891 = vadd.f32 0.0, %v1890
        %1892 = vmatmul.bf16.gmra.mxu0 %v1752
        %v1893 = vpop.f32.mrf.mxu0
        %v1894 = vadd.f32 0.0, %v1893
        %v1895 = vpop.f32.mrf.mxu0
        %v1896 = vadd.f32 0.0, %v1895
        %1897 = vmatmul.bf16.gmra.mxu0 %v1755
        %v1898 = vpop.f32.mrf.mxu0
        %v1899 = vadd.f32 0.0, %v1898
        %v1900 = vpop.f32.mrf.mxu0
        %v1901 = vadd.f32 0.0, %v1900
        %1902 = vmatmul.bf16.gmra.mxu0 %v1758
        %v1903 = vpop.f32.mrf.mxu0
        %v1904 = vadd.f32 0.0, %v1903
        %v1905 = vpop.f32.mrf.mxu0
        %v1906 = vadd.f32 0.0, %v1905
        %1907 = vmatmul.bf16.gmra.mxu0 %v1761
        %v1908 = vpop.f32.mrf.mxu0
        %v1909 = vadd.f32 0.0, %v1908
        %v1910 = vpop.f32.mrf.mxu0
        %v1911 = vadd.f32 0.0, %v1910
        %1912 = vmatmul.bf16.gmra.mxu0 %v1764
        %v1913 = vpop.f32.mrf.mxu0
        %v1914 = vadd.f32 0.0, %v1913
        %v1915 = vpop.f32.mrf.mxu0
        %v1916 = vadd.f32 0.0, %v1915
        %1917 = vmatmul.bf16.gmra.mxu0 %v1767
        %v1918 = vpop.f32.mrf.mxu0
        %v1919 = vadd.f32 0.0, %v1918
        %v1920 = vpop.f32.mrf.mxu0
        %v1921 = vadd.f32 0.0, %v1920
        %1922 = vmatmul.bf16.gmra.mxu0 %v1770
        %v1923 = vpop.f32.mrf.mxu0
        %v1924 = vadd.f32 0.0, %v1923
        %v1925 = vpop.f32.mrf.mxu0
        %v1926 = vadd.f32 0.0, %v1925
        %1927 = vmatmul.bf16.gmra.mxu0 %v1773
        %v1928 = vpop.f32.mrf.mxu0
        %v1929 = vadd.f32 0.0, %v1928
        %v1930 = vpop.f32.mrf.mxu0
        %v1931 = vadd.f32 0.0, %v1930
        %1932 = vmatmul.bf16.gmra.mxu0 %v1776
        %v1933 = vpop.f32.mrf.mxu0
        %v1934 = vadd.f32 0.0, %v1933
        %v1935 = vpop.f32.mrf.mxu0
        %v1936 = vadd.f32 0.0, %v1935
        %1937 = vmatmul.bf16.gmra.mxu0 %v1779
        %v1938 = vpop.f32.mrf.mxu0
        %v1939 = vadd.f32 0.0, %v1938
        %v1940 = vpop.f32.mrf.mxu0
        %v1941 = vadd.f32 0.0, %v1940
        %1942 = vmatmul.bf16.gmra.mxu0 %v1782
        %v1943 = vpop.f32.mrf.mxu0
        %v1944 = vadd.f32 0.0, %v1943
        %v1945 = vpop.f32.mrf.mxu0
        %v1946 = vadd.f32 0.0, %v1945
        %1947 = vmatmul.bf16.gmra.mxu0 %v1785
        %v1948 = vpop.f32.mrf.mxu0
        %v1949 = vadd.f32 0.0, %v1948
        %v1950 = vpop.f32.mrf.mxu0
        %v1951 = vadd.f32 0.0, %v1950
        %1952 = vmatmul.bf16.gmra.mxu0 %v1788
        %v1953 = vpop.f32.mrf.mxu0
        %v1954 = vadd.f32 0.0, %v1953
        %v1955 = vpop.f32.mrf.mxu0
        %v1956 = vadd.f32 0.0, %v1955
        %1957 = vmatmul.bf16.gmra.mxu0 %v1791
        %v1958 = vpop.f32.mrf.mxu0
        %v1959 = vadd.f32 0.0, %v1958
        %v1960 = vpop.f32.mrf.mxu0
        %v1961 = vadd.f32 0.0, %v1960
        %1962 = vmatmul.bf16.gmra.mxu0 %v1794
        %v1963 = vpop.f32.mrf.mxu0
        %v1964 = vadd.f32 0.0, %v1963
        %v1965 = vpop.f32.mrf.mxu0
        %v1966 = vadd.f32 0.0, %v1965
        %1967 = vdwg.mxu0
        %v1968 = vld [vmem:[#allocation2] sm:$0xff]
        %v1969 = vld [vmem:[#allocation2 + $0x8] sm:$0xff]
        %v1970 = vld [vmem:[#allocation2 + $0x10] sm:$0xff]
        %v1971 = vld [vmem:[#allocation2 + $0x18] sm:$0xff]
        %v1972 = vld [vmem:[#allocation2 + $0x20] sm:$0xff]
        %v1973 = vld [vmem:[#allocation2 + $0x28] sm:$0xff]
        %v1974 = vld [vmem:[#allocation2 + $0x30] sm:$0xff]
        %v1975 = vld [vmem:[#allocation2 + $0x38] sm:$0xff]
        %v1976 = vld [vmem:[#allocation2 + $0x40] sm:$0xff]
        %v1977 = vld [vmem:[#allocation2 + $0x48] sm:$0xff]
        %v1978 = vld [vmem:[#allocation2 + $0x50] sm:$0xff]
        %v1979 = vld [vmem:[#allocation2 + $0x58] sm:$0xff]
        %v1980 = vld [vmem:[#allocation2 + $0x60] sm:$0xff]
        %v1981 = vld [vmem:[#allocation2 + $0x68] sm:$0xff]
        %v1982 = vld [vmem:[#allocation2 + $0x70] sm:$0xff]
        %v1983 = vld [vmem:[#allocation2 + $0x78] sm:$0xff]
        %v1984 = vld [vmem:[#allocation2 + $0x80] sm:$0xff]
        %v1985 = vld [vmem:[#allocation2 + $0x88] sm:$0xff]
        %v1986 = vld [vmem:[#allocation2 + $0x90] sm:$0xff]
        %v1987 = vld [vmem:[#allocation2 + $0x98] sm:$0xff]
        %v1988 = vld [vmem:[#allocation2 + $0xa0] sm:$0xff]
        %v1989 = vld [vmem:[#allocation2 + $0xa8] sm:$0xff]
        %v1990 = vld [vmem:[#allocation2 + $0xb0] sm:$0xff]
        %v1991 = vld [vmem:[#allocation2 + $0xb8] sm:$0xff]
        %v1992 = vld [vmem:[#allocation2 + $0xc0] sm:$0xff]
        %v1993 = vld [vmem:[#allocation2 + $0xc8] sm:$0xff]
        %v1994 = vld [vmem:[#allocation2 + $0xd0] sm:$0xff]
        %v1995 = vld [vmem:[#allocation2 + $0xd8] sm:$0xff]
        %v1996 = vld [vmem:[#allocation2 + $0xe0] sm:$0xff]
        %v1997 = vld [vmem:[#allocation2 + $0xe8] sm:$0xff]
        %v1998 = vld [vmem:[#allocation2 + $0xf0] sm:$0xff]
        %v1999 = vld [vmem:[#allocation2 + $0xf8] sm:$0xff]
        %v2000 = vld [vmem:[#allocation2 + $0x100] sm:$0xff]
        %v2001 = vld [vmem:[#allocation2 + $0x108] sm:$0xff]
        %v2002 = vld [vmem:[#allocation2 + $0x110] sm:$0xff]
        %v2003 = vld [vmem:[#allocation2 + $0x118] sm:$0xff]
        %v2004 = vld [vmem:[#allocation2 + $0x120] sm:$0xff]
        %v2005 = vld [vmem:[#allocation2 + $0x128] sm:$0xff]
        %v2006 = vld [vmem:[#allocation2 + $0x130] sm:$0xff]
        %v2007 = vld [vmem:[#allocation2 + $0x138] sm:$0xff]
        %v2008 = vld [vmem:[#allocation2 + $0x140] sm:$0xff]
        %v2009 = vld [vmem:[#allocation2 + $0x148] sm:$0xff]
        %v2010 = vld [vmem:[#allocation2 + $0x150] sm:$0xff]
        %v2011 = vld [vmem:[#allocation2 + $0x158] sm:$0xff]
        %v2012 = vld [vmem:[#allocation2 + $0x160] sm:$0xff]
        %v2013 = vld [vmem:[#allocation2 + $0x168] sm:$0xff]
        %v2014 = vld [vmem:[#allocation2 + $0x170] sm:$0xff]
        %v2015 = vld [vmem:[#allocation2 + $0x178] sm:$0xff]
        %v2016 = vld [vmem:[#allocation2 + $0x180] sm:$0xff]
        %v2017 = vld [vmem:[#allocation2 + $0x188] sm:$0xff]
        %v2018 = vld [vmem:[#allocation2 + $0x190] sm:$0xff]
        %v2019 = vld [vmem:[#allocation2 + $0x198] sm:$0xff]
        %v2020 = vld [vmem:[#allocation2 + $0x1a0] sm:$0xff]
        %v2021 = vld [vmem:[#allocation2 + $0x1a8] sm:$0xff]
        %v2022 = vld [vmem:[#allocation2 + $0x1b0] sm:$0xff]
        %v2023 = vld [vmem:[#allocation2 + $0x1b8] sm:$0xff]
        %v2024 = vld [vmem:[#allocation2 + $0x1c0] sm:$0xff]
        %v2025 = vld [vmem:[#allocation2 + $0x1c8] sm:$0xff]
        %v2026 = vld [vmem:[#allocation2 + $0x1d0] sm:$0xff]
        %v2027 = vld [vmem:[#allocation2 + $0x1d8] sm:$0xff]
        %v2028 = vld [vmem:[#allocation2 + $0x1e0] sm:$0xff]
        %v2029 = vld [vmem:[#allocation2 + $0x1e8] sm:$0xff]
        %v2030 = vld [vmem:[#allocation2 + $0x1f0] sm:$0xff]
        %v2031 = vld [vmem:[#allocation2 + $0x1f8] sm:$0xff]
        %v2032 = vadd.f32 %v1968, %v1809
        %v2033 = vadd.f32 %v1969, %v1811
        %v2034 = vadd.f32 %v1970, %v1814
        %v2035 = vadd.f32 %v1971, %v1816
        %v2036 = vadd.f32 %v1972, %v1819
        %v2037 = vadd.f32 %v1973, %v1821
        %v2038 = vadd.f32 %v1974, %v1824
        %v2039 = vadd.f32 %v1975, %v1826
        %v2040 = vadd.f32 %v1976, %v1829
        %v2041 = vadd.f32 %v1977, %v1831
        %v2042 = vadd.f32 %v1978, %v1834
        %v2043 = vadd.f32 %v1979, %v1836
        %v2044 = vadd.f32 %v1980, %v1839
        %v2045 = vadd.f32 %v1981, %v1841
        %v2046 = vadd.f32 %v1982, %v1844
        %v2047 = vadd.f32 %v1983, %v1846
        %v2048 = vadd.f32 %v1984, %v1849
        %v2049 = vadd.f32 %v1985, %v1851
        %v2050 = vadd.f32 %v1986, %v1854
        %v2051 = vadd.f32 %v1987, %v1856
        %v2052 = vadd.f32 %v1988, %v1859
        %v2053 = vadd.f32 %v1989, %v1861
        %v2054 = vadd.f32 %v1990, %v1864
        %v2055 = vadd.f32 %v1991, %v1866
        %v2056 = vadd.f32 %v1992, %v1869
        %v2057 = vadd.f32 %v1993, %v1871
        %v2058 = vadd.f32 %v1994, %v1874
        %v2059 = vadd.f32 %v1995, %v1876
        %v2060 = vadd.f32 %v1996, %v1879
        %v2061 = vadd.f32 %v1997, %v1881
        %v2062 = vadd.f32 %v1998, %v1884
        %v2063 = vadd.f32 %v1999, %v1886
        %v2064 = vadd.f32 %v2000, %v1889
        %v2065 = vadd.f32 %v2001, %v1891
        %v2066 = vadd.f32 %v2002, %v1894
        %v2067 = vadd.f32 %v2003, %v1896
        %v2068 = vadd.f32 %v2004, %v1899
        %v2069 = vadd.f32 %v2005, %v1901
        %v2070 = vadd.f32 %v2006, %v1904
        %v2071 = vadd.f32 %v2007, %v1906
        %v2072 = vadd.f32 %v2008, %v1909
        %v2073 = vadd.f32 %v2009, %v1911
        %v2074 = vadd.f32 %v2010, %v1914
        %v2075 = vadd.f32 %v2011, %v1916
        %v2076 = vadd.f32 %v2012, %v1919
        %v2077 = vadd.f32 %v2013, %v1921
        %v2078 = vadd.f32 %v2014, %v1924
        %v2079 = vadd.f32 %v2015, %v1926
        %v2080 = vadd.f32 %v2016, %v1929
        %v2081 = vadd.f32 %v2017, %v1931
        %v2082 = vadd.f32 %v2018, %v1934
        %v2083 = vadd.f32 %v2019, %v1936
        %v2084 = vadd.f32 %v2020, %v1939
        %v2085 = vadd.f32 %v2021, %v1941
        %v2086 = vadd.f32 %v2022, %v1944
        %v2087 = vadd.f32 %v2023, %v1946
        %v2088 = vadd.f32 %v2024, %v1949
        %v2089 = vadd.f32 %v2025, %v1951
        %v2090 = vadd.f32 %v2026, %v1954
        %v2091 = vadd.f32 %v2027, %v1956
        %v2092 = vadd.f32 %v2028, %v1959
        %v2093 = vadd.f32 %v2029, %v1961
        %v2094 = vadd.f32 %v2030, %v1964
        %v2095 = vadd.f32 %v2031, %v1966
        %2096 = vst [vmem:[#allocation2] sm:$0xff] %v2032
        %2097 = vst [vmem:[#allocation2 + $0x8] sm:$0xff] %v2033
        %2098 = vst [vmem:[#allocation2 + $0x10] sm:$0xff] %v2034
        %2099 = vst [vmem:[#allocation2 + $0x18] sm:$0xff] %v2035
        %2100 = vst [vmem:[#allocation2 + $0x20] sm:$0xff] %v2036
        %2101 = vst [vmem:[#allocation2 + $0x28] sm:$0xff] %v2037
        %2102 = vst [vmem:[#allocation2 + $0x30] sm:$0xff] %v2038
        %2103 = vst [vmem:[#allocation2 + $0x38] sm:$0xff] %v2039
        %2104 = vst [vmem:[#allocation2 + $0x40] sm:$0xff] %v2040
        %2105 = vst [vmem:[#allocation2 + $0x48] sm:$0xff] %v2041
        %2106 = vst [vmem:[#allocation2 + $0x50] sm:$0xff] %v2042
        %2107 = vst [vmem:[#allocation2 + $0x58] sm:$0xff] %v2043
        %2108 = vst [vmem:[#allocation2 + $0x60] sm:$0xff] %v2044
        %2109 = vst [vmem:[#allocation2 + $0x68] sm:$0xff] %v2045
        %2110 = vst [vmem:[#allocation2 + $0x70] sm:$0xff] %v2046
        %2111 = vst [vmem:[#allocation2 + $0x78] sm:$0xff] %v2047
        %2112 = vst [vmem:[#allocation2 + $0x80] sm:$0xff] %v2048
        %2113 = vst [vmem:[#allocation2 + $0x88] sm:$0xff] %v2049
        %2114 = vst [vmem:[#allocation2 + $0x90] sm:$0xff] %v2050
        %2115 = vst [vmem:[#allocation2 + $0x98] sm:$0xff] %v2051
        %2116 = vst [vmem:[#allocation2 + $0xa0] sm:$0xff] %v2052
        %2117 = vst [vmem:[#allocation2 + $0xa8] sm:$0xff] %v2053
        %2118 = vst [vmem:[#allocation2 + $0xb0] sm:$0xff] %v2054
        %2119 = vst [vmem:[#allocation2 + $0xb8] sm:$0xff] %v2055
        %2120 = vst [vmem:[#allocation2 + $0xc0] sm:$0xff] %v2056
        %2121 = vst [vmem:[#allocation2 + $0xc8] sm:$0xff] %v2057
        %2122 = vst [vmem:[#allocation2 + $0xd0] sm:$0xff] %v2058
        %2123 = vst [vmem:[#allocation2 + $0xd8] sm:$0xff] %v2059
        %2124 = vst [vmem:[#allocation2 + $0xe0] sm:$0xff] %v2060
        %2125 = vst [vmem:[#allocation2 + $0xe8] sm:$0xff] %v2061
        %2126 = vst [vmem:[#allocation2 + $0xf0] sm:$0xff] %v2062
        %2127 = vst [vmem:[#allocation2 + $0xf8] sm:$0xff] %v2063
        %2128 = vst [vmem:[#allocation2 + $0x100] sm:$0xff] %v2064
        %2129 = vst [vmem:[#allocation2 + $0x108] sm:$0xff] %v2065
        %2130 = vst [vmem:[#allocation2 + $0x110] sm:$0xff] %v2066
        %2131 = vst [vmem:[#allocation2 + $0x118] sm:$0xff] %v2067
        %2132 = vst [vmem:[#allocation2 + $0x120] sm:$0xff] %v2068
        %2133 = vst [vmem:[#allocation2 + $0x128] sm:$0xff] %v2069
        %2134 = vst [vmem:[#allocation2 + $0x130] sm:$0xff] %v2070
        %2135 = vst [vmem:[#allocation2 + $0x138] sm:$0xff] %v2071
        %2136 = vst [vmem:[#allocation2 + $0x140] sm:$0xff] %v2072
        %2137 = vst [vmem:[#allocation2 + $0x148] sm:$0xff] %v2073
        %2138 = vst [vmem:[#allocation2 + $0x150] sm:$0xff] %v2074
        %2139 = vst [vmem:[#allocation2 + $0x158] sm:$0xff] %v2075
        %2140 = vst [vmem:[#allocation2 + $0x160] sm:$0xff] %v2076
        %2141 = vst [vmem:[#allocation2 + $0x168] sm:$0xff] %v2077
        %2142 = vst [vmem:[#allocation2 + $0x170] sm:$0xff] %v2078
        %2143 = vst [vmem:[#allocation2 + $0x178] sm:$0xff] %v2079
        %2144 = vst [vmem:[#allocation2 + $0x180] sm:$0xff] %v2080
        %2145 = vst [vmem:[#allocation2 + $0x188] sm:$0xff] %v2081
        %2146 = vst [vmem:[#allocation2 + $0x190] sm:$0xff] %v2082
        %2147 = vst [vmem:[#allocation2 + $0x198] sm:$0xff] %v2083
        %2148 = vst [vmem:[#allocation2 + $0x1a0] sm:$0xff] %v2084
        %2149 = vst [vmem:[#allocation2 + $0x1a8] sm:$0xff] %v2085
        %2150 = vst [vmem:[#allocation2 + $0x1b0] sm:$0xff] %v2086
        %2151 = vst [vmem:[#allocation2 + $0x1b8] sm:$0xff] %v2087
        %2152 = vst [vmem:[#allocation2 + $0x1c0] sm:$0xff] %v2088
        %2153 = vst [vmem:[#allocation2 + $0x1c8] sm:$0xff] %v2089
        %2154 = vst [vmem:[#allocation2 + $0x1d0] sm:$0xff] %v2090
        %2155 = vst [vmem:[#allocation2 + $0x1d8] sm:$0xff] %v2091
        %2156 = vst [vmem:[#allocation2 + $0x1e0] sm:$0xff] %v2092
        %2157 = vst [vmem:[#allocation2 + $0x1e8] sm:$0xff] %v2093
        %2158 = vst [vmem:[#allocation2 + $0x1f0] sm:$0xff] %v2094
        %2159 = vst [vmem:[#allocation2 + $0x1f8] sm:$0xff] %v2095
        %s2160 = scalar_lea.vmem %s179, 40 [#allocation3]
        %v2161 = vld [vmem:[%s2160] sm:$0xf]
        %v2162 = vld [vmem:[%s2160 + $0x4] sm:$0xf]
        %v2163 = vld [vmem:[%s2160 + $0x8] sm:$0xf]
        %v2164 = vld [vmem:[%s2160 + $0xc] sm:$0xf]
        %v2165 = vld [vmem:[%s2160 + $0x10] sm:$0xf]
        %v2166 = vld [vmem:[%s2160 + $0x14] sm:$0xf]
        %v2167 = vld [vmem:[%s2160 + $0x18] sm:$0xf]
        %v2168 = vld [vmem:[%s2160 + $0x1c] sm:$0xf]
        %v2169 = vld [vmem:[%s2160 + $0x28] sm:$0xf]
        %v2170 = vld [vmem:[%s2160 + $0x2c] sm:$0xf]
        %v2171 = vld [vmem:[%s2160 + $0x30] sm:$0xf]
        %v2172 = vld [vmem:[%s2160 + $0x34] sm:$0xf]
        %v2173 = vld [vmem:[%s2160 + $0x38] sm:$0xf]
        %v2174 = vld [vmem:[%s2160 + $0x3c] sm:$0xf]
        %v2175 = vld [vmem:[%s2160 + $0x40] sm:$0xf]
        %v2176 = vld [vmem:[%s2160 + $0x44] sm:$0xf]
        %v2177 = vld [vmem:[%s2160 + $0x50] sm:$0xf]
        %v2178 = vld [vmem:[%s2160 + $0x54] sm:$0xf]
        %v2179 = vld [vmem:[%s2160 + $0x58] sm:$0xf]
        %v2180 = vld [vmem:[%s2160 + $0x5c] sm:$0xf]
        %v2181 = vld [vmem:[%s2160 + $0x60] sm:$0xf]
        %v2182 = vld [vmem:[%s2160 + $0x64] sm:$0xf]
        %v2183 = vld [vmem:[%s2160 + $0x68] sm:$0xf]
        %v2184 = vld [vmem:[%s2160 + $0x6c] sm:$0xf]
        %v2185 = vld [vmem:[%s2160 + $0x78] sm:$0xf]
        %v2186 = vld [vmem:[%s2160 + $0x7c] sm:$0xf]
        %v2187 = vld [vmem:[%s2160 + $0x80] sm:$0xf]
        %v2188 = vld [vmem:[%s2160 + $0x84] sm:$0xf]
        %v2189 = vld [vmem:[%s2160 + $0x88] sm:$0xf]
        %v2190 = vld [vmem:[%s2160 + $0x8c] sm:$0xf]
        %v2191 = vld [vmem:[%s2160 + $0x90] sm:$0xf]
        %v2192 = vld [vmem:[%s2160 + $0x94] sm:$0xf]
        %v2193 = vld [vmem:[%s2160 + $0xa0] sm:$0xf]
        %v2194 = vld [vmem:[%s2160 + $0xa4] sm:$0xf]
        %v2195 = vld [vmem:[%s2160 + $0xa8] sm:$0xf]
        %v2196 = vld [vmem:[%s2160 + $0xac] sm:$0xf]
        %v2197 = vld [vmem:[%s2160 + $0xb0] sm:$0xf]
        %v2198 = vld [vmem:[%s2160 + $0xb4] sm:$0xf]
        %v2199 = vld [vmem:[%s2160 + $0xb8] sm:$0xf]
        %v2200 = vld [vmem:[%s2160 + $0xbc] sm:$0xf]
        %v2201 = vld [vmem:[%s2160 + $0xc8] sm:$0xf]
        %v2202 = vld [vmem:[%s2160 + $0xcc] sm:$0xf]
        %v2203 = vld [vmem:[%s2160 + $0xd0] sm:$0xf]
        %v2204 = vld [vmem:[%s2160 + $0xd4] sm:$0xf]
        %v2205 = vld [vmem:[%s2160 + $0xd8] sm:$0xf]
        %v2206 = vld [vmem:[%s2160 + $0xdc] sm:$0xf]
        %v2207 = vld [vmem:[%s2160 + $0xe0] sm:$0xf]
        %v2208 = vld [vmem:[%s2160 + $0xe4] sm:$0xf]
        %v2209 = vld [vmem:[%s2160 + $0xf0] sm:$0xf]
        %v2210 = vld [vmem:[%s2160 + $0xf4] sm:$0xf]
        %v2211 = vld [vmem:[%s2160 + $0xf8] sm:$0xf]
        %v2212 = vld [vmem:[%s2160 + $0xfc] sm:$0xf]
        %v2213 = vld [vmem:[%s2160 + $0x100] sm:$0xf]
        %v2214 = vld [vmem:[%s2160 + $0x104] sm:$0xf]
        %v2215 = vld [vmem:[%s2160 + $0x108] sm:$0xf]
        %v2216 = vld [vmem:[%s2160 + $0x10c] sm:$0xf]
        %v2217 = vld [vmem:[%s2160 + $0x118] sm:$0xf]
        %v2218 = vld [vmem:[%s2160 + $0x11c] sm:$0xf]
        %v2219 = vld [vmem:[%s2160 + $0x120] sm:$0xf]
        %v2220 = vld [vmem:[%s2160 + $0x124] sm:$0xf]
        %v2221 = vld [vmem:[%s2160 + $0x128] sm:$0xf]
        %v2222 = vld [vmem:[%s2160 + $0x12c] sm:$0xf]
        %v2223 = vld [vmem:[%s2160 + $0x130] sm:$0xf]
        %v2224 = vld [vmem:[%s2160 + $0x134] sm:$0xf]
        %s2225 = scalar_lea.vmem [#allocation6], 24
        %v2226 = vld [vmem:[%s2225] sm:$0xf]
        %v2227 = vld [vmem:[%s2225 + $0x4] sm:$0x3]
        %v2292 = vunpack.c.l.b16 %v2161
        %v2293 = vunpack.c.l.b16 %v2162
        %v2294 = vunpack.c.l.b16 %v2163
        %v2295 = vunpack.c.l.b16 %v2164
        %v2296 = vunpack.c.l.b16 %v2165
        %v2297 = vunpack.c.l.b16 %v2166
        %v2298 = vunpack.c.l.b16 %v2167
        %v2299 = vunpack.c.l.b16 %v2168
        %v2300 = vunpack.c.l.b16 %v2169
        %v2301 = vunpack.c.l.b16 %v2170
        %v2302 = vunpack.c.l.b16 %v2171
        %v2303 = vunpack.c.l.b16 %v2172
        %v2304 = vunpack.c.l.b16 %v2173
        %v2305 = vunpack.c.l.b16 %v2174
        %v2306 = vunpack.c.l.b16 %v2175
        %v2307 = vunpack.c.l.b16 %v2176
        %v2308 = vunpack.c.l.b16 %v2177
        %v2309 = vunpack.c.l.b16 %v2178
        %v2310 = vunpack.c.l.b16 %v2179
        %v2311 = vunpack.c.l.b16 %v2180
        %v2312 = vunpack.c.l.b16 %v2181
        %v2313 = vunpack.c.l.b16 %v2182
        %v2314 = vunpack.c.l.b16 %v2183
        %v2315 = vunpack.c.l.b16 %v2184
        %v2316 = vunpack.c.l.b16 %v2185
        %v2317 = vunpack.c.l.b16 %v2186
        %v2318 = vunpack.c.l.b16 %v2187
        %v2319 = vunpack.c.l.b16 %v2188
        %v2320 = vunpack.c.l.b16 %v2189
        %v2321 = vunpack.c.l.b16 %v2190
        %v2322 = vunpack.c.l.b16 %v2191
        %v2323 = vunpack.c.l.b16 %v2192
        %v2324 = vunpack.c.l.b16 %v2193
        %v2325 = vunpack.c.l.b16 %v2194
        %v2326 = vunpack.c.l.b16 %v2195
        %v2327 = vunpack.c.l.b16 %v2196
        %v2328 = vunpack.c.l.b16 %v2197
        %v2329 = vunpack.c.l.b16 %v2198
        %v2330 = vunpack.c.l.b16 %v2199
        %v2331 = vunpack.c.l.b16 %v2200
        %v2332 = vunpack.c.l.b16 %v2201
        %v2333 = vunpack.c.l.b16 %v2202
        %v2334 = vunpack.c.l.b16 %v2203
        %v2335 = vunpack.c.l.b16 %v2204
        %v2336 = vunpack.c.l.b16 %v2205
        %v2337 = vunpack.c.l.b16 %v2206
        %v2338 = vunpack.c.l.b16 %v2207
        %v2339 = vunpack.c.l.b16 %v2208
        %v2340 = vunpack.c.l.b16 %v2209
        %v2341 = vunpack.c.l.b16 %v2210
        %v2342 = vunpack.c.l.b16 %v2211
        %v2343 = vunpack.c.l.b16 %v2212
        %v2344 = vunpack.c.l.b16 %v2213
        %v2345 = vunpack.c.l.b16 %v2214
        %v2346 = vunpack.c.l.b16 %v2215
        %v2347 = vunpack.c.l.b16 %v2216
        %v2348 = vunpack.c.l.b16 %v2217
        %v2349 = vunpack.c.l.b16 %v2218
        %v2350 = vunpack.c.l.b16 %v2219
        %v2351 = vunpack.c.l.b16 %v2220
        %v2352 = vunpack.c.l.b16 %v2221
        %v2353 = vunpack.c.l.b16 %v2222
        %v2354 = vunpack.c.l.b16 %v2223
        %v2355 = vunpack.c.l.b16 %v2224
        %v2356 = vpack.c.b16 %v2293, %v2292
        %v2357 = vpack.c.b16 %v2295, %v2294
        %v2358 = vpack.c.b16 %v2297, %v2296
        %v2359 = vpack.c.b16 %v2299, %v2298
        %v2360 = vpack.c.b16 %v2301, %v2300
        %v2361 = vpack.c.b16 %v2303, %v2302
        %v2362 = vpack.c.b16 %v2305, %v2304
        %v2363 = vpack.c.b16 %v2307, %v2306
        %v2364 = vpack.c.b16 %v2309, %v2308
        %v2365 = vpack.c.b16 %v2311, %v2310
        %v2366 = vpack.c.b16 %v2313, %v2312
        %v2367 = vpack.c.b16 %v2315, %v2314
        %v2368 = vpack.c.b16 %v2317, %v2316
        %v2369 = vpack.c.b16 %v2319, %v2318
        %v2370 = vpack.c.b16 %v2321, %v2320
        %v2371 = vpack.c.b16 %v2323, %v2322
        %v2372 = vpack.c.b16 %v2325, %v2324
        %v2373 = vpack.c.b16 %v2327, %v2326
        %v2374 = vpack.c.b16 %v2329, %v2328
        %v2375 = vpack.c.b16 %v2331, %v2330
        %v2376 = vpack.c.b16 %v2333, %v2332
        %v2377 = vpack.c.b16 %v2335, %v2334
        %v2378 = vpack.c.b16 %v2337, %v2336
        %v2379 = vpack.c.b16 %v2339, %v2338
        %v2380 = vpack.c.b16 %v2341, %v2340
        %v2381 = vpack.c.b16 %v2343, %v2342
        %v2382 = vpack.c.b16 %v2345, %v2344
        %v2383 = vpack.c.b16 %v2347, %v2346
        %v2384 = vpack.c.b16 %v2349, %v2348
        %v2385 = vpack.c.b16 %v2351, %v2350
        %v2386 = vpack.c.b16 %v2353, %v2352
        %v2387 = vpack.c.b16 %v2355, %v2354
        %v2390 = vunpack.c.l.b16 %v2226
        %v2391 = vunpack.c.l.b16 %v2227
        %v2392 = vpack.c.b16 %v2391, %v2390
        %v2394 = vsel %vm440, %v2356, 0
        %v2397 = vsel %vm440, %v2357, 0
        %v2400 = vsel %vm440, %v2358, 0
        %v2403 = vsel %vm440, %v2359, 0
        %v2406 = vsel %vm440, %v2360, 0
        %v2409 = vsel %vm440, %v2361, 0
        %v2412 = vsel %vm440, %v2362, 0
        %v2415 = vsel %vm440, %v2363, 0
        %v2418 = vsel %vm440, %v2364, 0
        %v2421 = vsel %vm440, %v2365, 0
        %v2424 = vsel %vm440, %v2366, 0
        %v2427 = vsel %vm440, %v2367, 0
        %v2430 = vsel %vm440, %v2368, 0
        %v2433 = vsel %vm440, %v2369, 0
        %v2436 = vsel %vm440, %v2370, 0
        %v2439 = vsel %vm440, %v2371, 0
        %v2442 = vsel %vm440, %v2372, 0
        %v2445 = vsel %vm440, %v2373, 0
        %v2448 = vsel %vm440, %v2374, 0
        %v2451 = vsel %vm440, %v2375, 0
        %v2454 = vsel %vm440, %v2376, 0
        %v2457 = vsel %vm440, %v2377, 0
        %v2460 = vsel %vm440, %v2378, 0
        %v2463 = vsel %vm440, %v2379, 0
        %v2466 = vsel %vm440, %v2380, 0
        %v2469 = vsel %vm440, %v2381, 0
        %v2472 = vsel %vm440, %v2382, 0
        %v2475 = vsel %vm440, %v2383, 0
        %v2478 = vsel %vm440, %v2384, 0
        %v2481 = vsel %vm440, %v2385, 0
        %v2484 = vsel %vm440, %v2386, 0
        %v2487 = vsel %vm440, %v2387, 0
        %v2490 = vsel %vm537, %v2392, 0
        %2492 = vmatpush.bf16.msra.mxu0 0
        %2493 = vmatpush.bf16.msra.mxu0 0
        %2494 = vmatpush.bf16.msra.mxu0 0
        %2495 = vmatpush.bf16.msra.mxu0 0
        %2496 = vmatpush.bf16.msra.mxu0 0
        %2497 = vmatpush.bf16.msra.mxu0 0
        %2498 = vmatpush.bf16.msra.mxu0 0
        %2499 = vmatpush.bf16.msra.mxu0 %v2490
        %2500 = vmatmul.bf16.gmra.mxu0 %v2394
        %v2501 = vpop.f32.mrf.mxu0
        %v2502 = vadd.f32 0.0, %v2501
        %v2503 = vpop.f32.mrf.mxu0
        %v2504 = vadd.f32 0.0, %v2503
        %2505 = vmatmul.bf16.gmra.mxu0 %v2397
        %v2506 = vpop.f32.mrf.mxu0
        %v2507 = vadd.f32 0.0, %v2506
        %v2508 = vpop.f32.mrf.mxu0
        %v2509 = vadd.f32 0.0, %v2508
        %2510 = vmatmul.bf16.gmra.mxu0 %v2400
        %v2511 = vpop.f32.mrf.mxu0
        %v2512 = vadd.f32 0.0, %v2511
        %v2513 = vpop.f32.mrf.mxu0
        %v2514 = vadd.f32 0.0, %v2513
        %2515 = vmatmul.bf16.gmra.mxu0 %v2403
        %v2516 = vpop.f32.mrf.mxu0
        %v2517 = vadd.f32 0.0, %v2516
        %v2518 = vpop.f32.mrf.mxu0
        %v2519 = vadd.f32 0.0, %v2518
        %2520 = vmatmul.bf16.gmra.mxu0 %v2406
        %v2521 = vpop.f32.mrf.mxu0
        %v2522 = vadd.f32 0.0, %v2521
        %v2523 = vpop.f32.mrf.mxu0
        %v2524 = vadd.f32 0.0, %v2523
        %2525 = vmatmul.bf16.gmra.mxu0 %v2409
        %v2526 = vpop.f32.mrf.mxu0
        %v2527 = vadd.f32 0.0, %v2526
        %v2528 = vpop.f32.mrf.mxu0
        %v2529 = vadd.f32 0.0, %v2528
        %2530 = vmatmul.bf16.gmra.mxu0 %v2412
        %v2531 = vpop.f32.mrf.mxu0
        %v2532 = vadd.f32 0.0, %v2531
        %v2533 = vpop.f32.mrf.mxu0
        %v2534 = vadd.f32 0.0, %v2533
        %2535 = vmatmul.bf16.gmra.mxu0 %v2415
        %v2536 = vpop.f32.mrf.mxu0
        %v2537 = vadd.f32 0.0, %v2536
        %v2538 = vpop.f32.mrf.mxu0
        %v2539 = vadd.f32 0.0, %v2538
        %2540 = vmatmul.bf16.gmra.mxu0 %v2418
        %v2541 = vpop.f32.mrf.mxu0
        %v2542 = vadd.f32 0.0, %v2541
        %v2543 = vpop.f32.mrf.mxu0
        %v2544 = vadd.f32 0.0, %v2543
        %2545 = vmatmul.bf16.gmra.mxu0 %v2421
        %v2546 = vpop.f32.mrf.mxu0
        %v2547 = vadd.f32 0.0, %v2546
        %v2548 = vpop.f32.mrf.mxu0
        %v2549 = vadd.f32 0.0, %v2548
        %2550 = vmatmul.bf16.gmra.mxu0 %v2424
        %v2551 = vpop.f32.mrf.mxu0
        %v2552 = vadd.f32 0.0, %v2551
        %v2553 = vpop.f32.mrf.mxu0
        %v2554 = vadd.f32 0.0, %v2553
        %2555 = vmatmul.bf16.gmra.mxu0 %v2427
        %v2556 = vpop.f32.mrf.mxu0
        %v2557 = vadd.f32 0.0, %v2556
        %v2558 = vpop.f32.mrf.mxu0
        %v2559 = vadd.f32 0.0, %v2558
        %2560 = vmatmul.bf16.gmra.mxu0 %v2430
        %v2561 = vpop.f32.mrf.mxu0
        %v2562 = vadd.f32 0.0, %v2561
        %v2563 = vpop.f32.mrf.mxu0
        %v2564 = vadd.f32 0.0, %v2563
        %2565 = vmatmul.bf16.gmra.mxu0 %v2433
        %v2566 = vpop.f32.mrf.mxu0
        %v2567 = vadd.f32 0.0, %v2566
        %v2568 = vpop.f32.mrf.mxu0
        %v2569 = vadd.f32 0.0, %v2568
        %2570 = vmatmul.bf16.gmra.mxu0 %v2436
        %v2571 = vpop.f32.mrf.mxu0
        %v2572 = vadd.f32 0.0, %v2571
        %v2573 = vpop.f32.mrf.mxu0
        %v2574 = vadd.f32 0.0, %v2573
        %2575 = vmatmul.bf16.gmra.mxu0 %v2439
        %v2576 = vpop.f32.mrf.mxu0
        %v2577 = vadd.f32 0.0, %v2576
        %v2578 = vpop.f32.mrf.mxu0
        %v2579 = vadd.f32 0.0, %v2578
        %2580 = vmatmul.bf16.gmra.mxu0 %v2442
        %v2581 = vpop.f32.mrf.mxu0
        %v2582 = vadd.f32 0.0, %v2581
        %v2583 = vpop.f32.mrf.mxu0
        %v2584 = vadd.f32 0.0, %v2583
        %2585 = vmatmul.bf16.gmra.mxu0 %v2445
        %v2586 = vpop.f32.mrf.mxu0
        %v2587 = vadd.f32 0.0, %v2586
        %v2588 = vpop.f32.mrf.mxu0
        %v2589 = vadd.f32 0.0, %v2588
        %2590 = vmatmul.bf16.gmra.mxu0 %v2448
        %v2591 = vpop.f32.mrf.mxu0
        %v2592 = vadd.f32 0.0, %v2591
        %v2593 = vpop.f32.mrf.mxu0
        %v2594 = vadd.f32 0.0, %v2593
        %2595 = vmatmul.bf16.gmra.mxu0 %v2451
        %v2596 = vpop.f32.mrf.mxu0
        %v2597 = vadd.f32 0.0, %v2596
        %v2598 = vpop.f32.mrf.mxu0
        %v2599 = vadd.f32 0.0, %v2598
        %2600 = vmatmul.bf16.gmra.mxu0 %v2454
        %v2601 = vpop.f32.mrf.mxu0
        %v2602 = vadd.f32 0.0, %v2601
        %v2603 = vpop.f32.mrf.mxu0
        %v2604 = vadd.f32 0.0, %v2603
        %2605 = vmatmul.bf16.gmra.mxu0 %v2457
        %v2606 = vpop.f32.mrf.mxu0
        %v2607 = vadd.f32 0.0, %v2606
        %v2608 = vpop.f32.mrf.mxu0
        %v2609 = vadd.f32 0.0, %v2608
        %2610 = vmatmul.bf16.gmra.mxu0 %v2460
        %v2611 = vpop.f32.mrf.mxu0
        %v2612 = vadd.f32 0.0, %v2611
        %v2613 = vpop.f32.mrf.mxu0
        %v2614 = vadd.f32 0.0, %v2613
        %2615 = vmatmul.bf16.gmra.mxu0 %v2463
        %v2616 = vpop.f32.mrf.mxu0
        %v2617 = vadd.f32 0.0, %v2616
        %v2618 = vpop.f32.mrf.mxu0
        %v2619 = vadd.f32 0.0, %v2618
        %2620 = vmatmul.bf16.gmra.mxu0 %v2466
        %v2621 = vpop.f32.mrf.mxu0
        %v2622 = vadd.f32 0.0, %v2621
        %v2623 = vpop.f32.mrf.mxu0
        %v2624 = vadd.f32 0.0, %v2623
        %2625 = vmatmul.bf16.gmra.mxu0 %v2469
        %v2626 = vpop.f32.mrf.mxu0
        %v2627 = vadd.f32 0.0, %v2626
        %v2628 = vpop.f32.mrf.mxu0
        %v2629 = vadd.f32 0.0, %v2628
        %2630 = vmatmul.bf16.gmra.mxu0 %v2472
        %v2631 = vpop.f32.mrf.mxu0
        %v2632 = vadd.f32 0.0, %v2631
        %v2633 = vpop.f32.mrf.mxu0
        %v2634 = vadd.f32 0.0, %v2633
        %2635 = vmatmul.bf16.gmra.mxu0 %v2475
        %v2636 = vpop.f32.mrf.mxu0
        %v2637 = vadd.f32 0.0, %v2636
        %v2638 = vpop.f32.mrf.mxu0
        %v2639 = vadd.f32 0.0, %v2638
        %2640 = vmatmul.bf16.gmra.mxu0 %v2478
        %v2641 = vpop.f32.mrf.mxu0
        %v2642 = vadd.f32 0.0, %v2641
        %v2643 = vpop.f32.mrf.mxu0
        %v2644 = vadd.f32 0.0, %v2643
        %2645 = vmatmul.bf16.gmra.mxu0 %v2481
        %v2646 = vpop.f32.mrf.mxu0
        %v2647 = vadd.f32 0.0, %v2646
        %v2648 = vpop.f32.mrf.mxu0
        %v2649 = vadd.f32 0.0, %v2648
        %2650 = vmatmul.bf16.gmra.mxu0 %v2484
        %v2651 = vpop.f32.mrf.mxu0
        %v2652 = vadd.f32 0.0, %v2651
        %v2653 = vpop.f32.mrf.mxu0
        %v2654 = vadd.f32 0.0, %v2653
        %2655 = vmatmul.bf16.gmra.mxu0 %v2487
        %v2656 = vpop.f32.mrf.mxu0
        %v2657 = vadd.f32 0.0, %v2656
        %v2658 = vpop.f32.mrf.mxu0
        %v2659 = vadd.f32 0.0, %v2658
        %2660 = vdwg.mxu0
        %v2661 = vld [vmem:[#allocation2] sm:$0xff]
        %v2662 = vld [vmem:[#allocation2 + $0x8] sm:$0xff]
        %v2663 = vld [vmem:[#allocation2 + $0x10] sm:$0xff]
        %v2664 = vld [vmem:[#allocation2 + $0x18] sm:$0xff]
        %v2665 = vld [vmem:[#allocation2 + $0x20] sm:$0xff]
        %v2666 = vld [vmem:[#allocation2 + $0x28] sm:$0xff]
        %v2667 = vld [vmem:[#allocation2 + $0x30] sm:$0xff]
        %v2668 = vld [vmem:[#allocation2 + $0x38] sm:$0xff]
        %v2669 = vld [vmem:[#allocation2 + $0x40] sm:$0xff]
        %v2670 = vld [vmem:[#allocation2 + $0x48] sm:$0xff]
        %v2671 = vld [vmem:[#allocation2 + $0x50] sm:$0xff]
        %v2672 = vld [vmem:[#allocation2 + $0x58] sm:$0xff]
        %v2673 = vld [vmem:[#allocation2 + $0x60] sm:$0xff]
        %v2674 = vld [vmem:[#allocation2 + $0x68] sm:$0xff]
        %v2675 = vld [vmem:[#allocation2 + $0x70] sm:$0xff]
        %v2676 = vld [vmem:[#allocation2 + $0x78] sm:$0xff]
        %v2677 = vld [vmem:[#allocation2 + $0x80] sm:$0xff]
        %v2678 = vld [vmem:[#allocation2 + $0x88] sm:$0xff]
        %v2679 = vld [vmem:[#allocation2 + $0x90] sm:$0xff]
        %v2680 = vld [vmem:[#allocation2 + $0x98] sm:$0xff]
        %v2681 = vld [vmem:[#allocation2 + $0xa0] sm:$0xff]
        %v2682 = vld [vmem:[#allocation2 + $0xa8] sm:$0xff]
        %v2683 = vld [vmem:[#allocation2 + $0xb0] sm:$0xff]
        %v2684 = vld [vmem:[#allocation2 + $0xb8] sm:$0xff]
        %v2685 = vld [vmem:[#allocation2 + $0xc0] sm:$0xff]
        %v2686 = vld [vmem:[#allocation2 + $0xc8] sm:$0xff]
        %v2687 = vld [vmem:[#allocation2 + $0xd0] sm:$0xff]
        %v2688 = vld [vmem:[#allocation2 + $0xd8] sm:$0xff]
        %v2689 = vld [vmem:[#allocation2 + $0xe0] sm:$0xff]
        %v2690 = vld [vmem:[#allocation2 + $0xe8] sm:$0xff]
        %v2691 = vld [vmem:[#allocation2 + $0xf0] sm:$0xff]
        %v2692 = vld [vmem:[#allocation2 + $0xf8] sm:$0xff]
        %v2693 = vld [vmem:[#allocation2 + $0x100] sm:$0xff]
        %v2694 = vld [vmem:[#allocation2 + $0x108] sm:$0xff]
        %v2695 = vld [vmem:[#allocation2 + $0x110] sm:$0xff]
        %v2696 = vld [vmem:[#allocation2 + $0x118] sm:$0xff]
        %v2697 = vld [vmem:[#allocation2 + $0x120] sm:$0xff]
        %v2698 = vld [vmem:[#allocation2 + $0x128] sm:$0xff]
        %v2699 = vld [vmem:[#allocation2 + $0x130] sm:$0xff]
        %v2700 = vld [vmem:[#allocation2 + $0x138] sm:$0xff]
        %v2701 = vld [vmem:[#allocation2 + $0x140] sm:$0xff]
        %v2702 = vld [vmem:[#allocation2 + $0x148] sm:$0xff]
        %v2703 = vld [vmem:[#allocation2 + $0x150] sm:$0xff]
        %v2704 = vld [vmem:[#allocation2 + $0x158] sm:$0xff]
        %v2705 = vld [vmem:[#allocation2 + $0x160] sm:$0xff]
        %v2706 = vld [vmem:[#allocation2 + $0x168] sm:$0xff]
        %v2707 = vld [vmem:[#allocation2 + $0x170] sm:$0xff]
        %v2708 = vld [vmem:[#allocation2 + $0x178] sm:$0xff]
        %v2709 = vld [vmem:[#allocation2 + $0x180] sm:$0xff]
        %v2710 = vld [vmem:[#allocation2 + $0x188] sm:$0xff]
        %v2711 = vld [vmem:[#allocation2 + $0x190] sm:$0xff]
        %v2712 = vld [vmem:[#allocation2 + $0x198] sm:$0xff]
        %v2713 = vld [vmem:[#allocation2 + $0x1a0] sm:$0xff]
        %v2714 = vld [vmem:[#allocation2 + $0x1a8] sm:$0xff]
        %v2715 = vld [vmem:[#allocation2 + $0x1b0] sm:$0xff]
        %v2716 = vld [vmem:[#allocation2 + $0x1b8] sm:$0xff]
        %v2717 = vld [vmem:[#allocation2 + $0x1c0] sm:$0xff]
        %v2718 = vld [vmem:[#allocation2 + $0x1c8] sm:$0xff]
        %v2719 = vld [vmem:[#allocation2 + $0x1d0] sm:$0xff]
        %v2720 = vld [vmem:[#allocation2 + $0x1d8] sm:$0xff]
        %v2721 = vld [vmem:[#allocation2 + $0x1e0] sm:$0xff]
        %v2722 = vld [vmem:[#allocation2 + $0x1e8] sm:$0xff]
        %v2723 = vld [vmem:[#allocation2 + $0x1f0] sm:$0xff]
        %v2724 = vld [vmem:[#allocation2 + $0x1f8] sm:$0xff]
        %v2725 = vadd.f32 %v2661, %v2502
        %v2726 = vadd.f32 %v2662, %v2504
        %v2727 = vadd.f32 %v2663, %v2507
        %v2728 = vadd.f32 %v2664, %v2509
        %v2729 = vadd.f32 %v2665, %v2512
        %v2730 = vadd.f32 %v2666, %v2514
        %v2731 = vadd.f32 %v2667, %v2517
        %v2732 = vadd.f32 %v2668, %v2519
        %v2733 = vadd.f32 %v2669, %v2522
        %v2734 = vadd.f32 %v2670, %v2524
        %v2735 = vadd.f32 %v2671, %v2527
        %v2736 = vadd.f32 %v2672, %v2529
        %v2737 = vadd.f32 %v2673, %v2532
        %v2738 = vadd.f32 %v2674, %v2534
        %v2739 = vadd.f32 %v2675, %v2537
        %v2740 = vadd.f32 %v2676, %v2539
        %v2741 = vadd.f32 %v2677, %v2542
        %v2742 = vadd.f32 %v2678, %v2544
        %v2743 = vadd.f32 %v2679, %v2547
        %v2744 = vadd.f32 %v2680, %v2549
        %v2745 = vadd.f32 %v2681, %v2552
        %v2746 = vadd.f32 %v2682, %v2554
        %v2747 = vadd.f32 %v2683, %v2557
        %v2748 = vadd.f32 %v2684, %v2559
        %v2749 = vadd.f32 %v2685, %v2562
        %v2750 = vadd.f32 %v2686, %v2564
        %v2751 = vadd.f32 %v2687, %v2567
        %v2752 = vadd.f32 %v2688, %v2569
        %v2753 = vadd.f32 %v2689, %v2572
        %v2754 = vadd.f32 %v2690, %v2574
        %v2755 = vadd.f32 %v2691, %v2577
        %v2756 = vadd.f32 %v2692, %v2579
        %v2757 = vadd.f32 %v2693, %v2582
        %v2758 = vadd.f32 %v2694, %v2584
        %v2759 = vadd.f32 %v2695, %v2587
        %v2760 = vadd.f32 %v2696, %v2589
        %v2761 = vadd.f32 %v2697, %v2592
        %v2762 = vadd.f32 %v2698, %v2594
        %v2763 = vadd.f32 %v2699, %v2597
        %v2764 = vadd.f32 %v2700, %v2599
        %v2765 = vadd.f32 %v2701, %v2602
        %v2766 = vadd.f32 %v2702, %v2604
        %v2767 = vadd.f32 %v2703, %v2607
        %v2768 = vadd.f32 %v2704, %v2609
        %v2769 = vadd.f32 %v2705, %v2612
        %v2770 = vadd.f32 %v2706, %v2614
        %v2771 = vadd.f32 %v2707, %v2617
        %v2772 = vadd.f32 %v2708, %v2619
        %v2773 = vadd.f32 %v2709, %v2622
        %v2774 = vadd.f32 %v2710, %v2624
        %v2775 = vadd.f32 %v2711, %v2627
        %v2776 = vadd.f32 %v2712, %v2629
        %v2777 = vadd.f32 %v2713, %v2632
        %v2778 = vadd.f32 %v2714, %v2634
        %v2779 = vadd.f32 %v2715, %v2637
        %v2780 = vadd.f32 %v2716, %v2639
        %v2781 = vadd.f32 %v2717, %v2642
        %v2782 = vadd.f32 %v2718, %v2644
        %v2783 = vadd.f32 %v2719, %v2647
        %v2784 = vadd.f32 %v2720, %v2649
        %v2785 = vadd.f32 %v2721, %v2652
        %v2786 = vadd.f32 %v2722, %v2654
        %v2787 = vadd.f32 %v2723, %v2657
        %v2788 = vadd.f32 %v2724, %v2659
        %2789 = vst [vmem:[#allocation2] sm:$0xff] %v2725
        %2790 = vst [vmem:[#allocation2 + $0x8] sm:$0xff] %v2726
        %2791 = vst [vmem:[#allocation2 + $0x10] sm:$0xff] %v2727
        %2792 = vst [vmem:[#allocation2 + $0x18] sm:$0xff] %v2728
        %2793 = vst [vmem:[#allocation2 + $0x20] sm:$0xff] %v2729
        %2794 = vst [vmem:[#allocation2 + $0x28] sm:$0xff] %v2730
        %2795 = vst [vmem:[#allocation2 + $0x30] sm:$0xff] %v2731
        %2796 = vst [vmem:[#allocation2 + $0x38] sm:$0xff] %v2732
        %2797 = vst [vmem:[#allocation2 + $0x40] sm:$0xff] %v2733
        %2798 = vst [vmem:[#allocation2 + $0x48] sm:$0xff] %v2734
        %2799 = vst [vmem:[#allocation2 + $0x50] sm:$0xff] %v2735
        %2800 = vst [vmem:[#allocation2 + $0x58] sm:$0xff] %v2736
        %2801 = vst [vmem:[#allocation2 + $0x60] sm:$0xff] %v2737
        %2802 = vst [vmem:[#allocation2 + $0x68] sm:$0xff] %v2738
        %2803 = vst [vmem:[#allocation2 + $0x70] sm:$0xff] %v2739
        %2804 = vst [vmem:[#allocation2 + $0x78] sm:$0xff] %v2740
        %2805 = vst [vmem:[#allocation2 + $0x80] sm:$0xff] %v2741
        %2806 = vst [vmem:[#allocation2 + $0x88] sm:$0xff] %v2742
        %2807 = vst [vmem:[#allocation2 + $0x90] sm:$0xff] %v2743
        %2808 = vst [vmem:[#allocation2 + $0x98] sm:$0xff] %v2744
        %2809 = vst [vmem:[#allocation2 + $0xa0] sm:$0xff] %v2745
        %2810 = vst [vmem:[#allocation2 + $0xa8] sm:$0xff] %v2746
        %2811 = vst [vmem:[#allocation2 + $0xb0] sm:$0xff] %v2747
        %2812 = vst [vmem:[#allocation2 + $0xb8] sm:$0xff] %v2748
        %2813 = vst [vmem:[#allocation2 + $0xc0] sm:$0xff] %v2749
        %2814 = vst [vmem:[#allocation2 + $0xc8] sm:$0xff] %v2750
        %2815 = vst [vmem:[#allocation2 + $0xd0] sm:$0xff] %v2751
        %2816 = vst [vmem:[#allocation2 + $0xd8] sm:$0xff] %v2752
        %2817 = vst [vmem:[#allocation2 + $0xe0] sm:$0xff] %v2753
        %2818 = vst [vmem:[#allocation2 + $0xe8] sm:$0xff] %v2754
        %2819 = vst [vmem:[#allocation2 + $0xf0] sm:$0xff] %v2755
        %2820 = vst [vmem:[#allocation2 + $0xf8] sm:$0xff] %v2756
        %2821 = vst [vmem:[#allocation2 + $0x100] sm:$0xff] %v2757
        %2822 = vst [vmem:[#allocation2 + $0x108] sm:$0xff] %v2758
        %2823 = vst [vmem:[#allocation2 + $0x110] sm:$0xff] %v2759
        %2824 = vst [vmem:[#allocation2 + $0x118] sm:$0xff] %v2760
        %2825 = vst [vmem:[#allocation2 + $0x120] sm:$0xff] %v2761
        %2826 = vst [vmem:[#allocation2 + $0x128] sm:$0xff] %v2762
        %2827 = vst [vmem:[#allocation2 + $0x130] sm:$0xff] %v2763
        %2828 = vst [vmem:[#allocation2 + $0x138] sm:$0xff] %v2764
        %2829 = vst [vmem:[#allocation2 + $0x140] sm:$0xff] %v2765
        %2830 = vst [vmem:[#allocation2 + $0x148] sm:$0xff] %v2766
        %2831 = vst [vmem:[#allocation2 + $0x150] sm:$0xff] %v2767
        %2832 = vst [vmem:[#allocation2 + $0x158] sm:$0xff] %v2768
        %2833 = vst [vmem:[#allocation2 + $0x160] sm:$0xff] %v2769
        %2834 = vst [vmem:[#allocation2 + $0x168] sm:$0xff] %v2770
        %2835 = vst [vmem:[#allocation2 + $0x170] sm:$0xff] %v2771
        %2836 = vst [vmem:[#allocation2 + $0x178] sm:$0xff] %v2772
        %2837 = vst [vmem:[#allocation2 + $0x180] sm:$0xff] %v2773
        %2838 = vst [vmem:[#allocation2 + $0x188] sm:$0xff] %v2774
        %2839 = vst [vmem:[#allocation2 + $0x190] sm:$0xff] %v2775
        %2840 = vst [vmem:[#allocation2 + $0x198] sm:$0xff] %v2776
        %2841 = vst [vmem:[#allocation2 + $0x1a0] sm:$0xff] %v2777
        %2842 = vst [vmem:[#allocation2 + $0x1a8] sm:$0xff] %v2778
        %2843 = vst [vmem:[#allocation2 + $0x1b0] sm:$0xff] %v2779
        %2844 = vst [vmem:[#allocation2 + $0x1b8] sm:$0xff] %v2780
        %2845 = vst [vmem:[#allocation2 + $0x1c0] sm:$0xff] %v2781
        %2846 = vst [vmem:[#allocation2 + $0x1c8] sm:$0xff] %v2782
        %2847 = vst [vmem:[#allocation2 + $0x1d0] sm:$0xff] %v2783
        %2848 = vst [vmem:[#allocation2 + $0x1d8] sm:$0xff] %v2784
        %2849 = vst [vmem:[#allocation2 + $0x1e0] sm:$0xff] %v2785
        %2850 = vst [vmem:[#allocation2 + $0x1e8] sm:$0xff] %v2786
        %2851 = vst [vmem:[#allocation2 + $0x1f0] sm:$0xff] %v2787
        %2852 = vst [vmem:[#allocation2 + $0x1f8] sm:$0xff] %v2788
        %s2853 = scalar_lea.vmem %s179, 44 [#allocation3]
        %v2854 = vld [vmem:[%s2853] sm:$0xf]
        %v2855 = vld [vmem:[%s2853 + $0x4] sm:$0xf]
        %v2856 = vld [vmem:[%s2853 + $0x8] sm:$0xf]
        %v2857 = vld [vmem:[%s2853 + $0xc] sm:$0xf]
        %v2858 = vld [vmem:[%s2853 + $0x10] sm:$0xf]
        %v2859 = vld [vmem:[%s2853 + $0x14] sm:$0xf]
        %v2860 = vld [vmem:[%s2853 + $0x18] sm:$0xf]
        %v2861 = vld [vmem:[%s2853 + $0x1c] sm:$0xf]
        %v2862 = vld [vmem:[%s2853 + $0x28] sm:$0xf]
        %v2863 = vld [vmem:[%s2853 + $0x2c] sm:$0xf]
        %v2864 = vld [vmem:[%s2853 + $0x30] sm:$0xf]
        %v2865 = vld [vmem:[%s2853 + $0x34] sm:$0xf]
        %v2866 = vld [vmem:[%s2853 + $0x38] sm:$0xf]
        %v2867 = vld [vmem:[%s2853 + $0x3c] sm:$0xf]
        %v2868 = vld [vmem:[%s2853 + $0x40] sm:$0xf]
        %v2869 = vld [vmem:[%s2853 + $0x44] sm:$0xf]
        %v2870 = vld [vmem:[%s2853 + $0x50] sm:$0xf]
        %v2871 = vld [vmem:[%s2853 + $0x54] sm:$0xf]
        %v2872 = vld [vmem:[%s2853 + $0x58] sm:$0xf]
        %v2873 = vld [vmem:[%s2853 + $0x5c] sm:$0xf]
        %v2874 = vld [vmem:[%s2853 + $0x60] sm:$0xf]
        %v2875 = vld [vmem:[%s2853 + $0x64] sm:$0xf]
        %v2876 = vld [vmem:[%s2853 + $0x68] sm:$0xf]
        %v2877 = vld [vmem:[%s2853 + $0x6c] sm:$0xf]
        %v2878 = vld [vmem:[%s2853 + $0x78] sm:$0xf]
        %v2879 = vld [vmem:[%s2853 + $0x7c] sm:$0xf]
        %v2880 = vld [vmem:[%s2853 + $0x80] sm:$0xf]
        %v2881 = vld [vmem:[%s2853 + $0x84] sm:$0xf]
        %v2882 = vld [vmem:[%s2853 + $0x88] sm:$0xf]
        %v2883 = vld [vmem:[%s2853 + $0x8c] sm:$0xf]
        %v2884 = vld [vmem:[%s2853 + $0x90] sm:$0xf]
        %v2885 = vld [vmem:[%s2853 + $0x94] sm:$0xf]
        %v2886 = vld [vmem:[%s2853 + $0xa0] sm:$0xf]
        %v2887 = vld [vmem:[%s2853 + $0xa4] sm:$0xf]
        %v2888 = vld [vmem:[%s2853 + $0xa8] sm:$0xf]
        %v2889 = vld [vmem:[%s2853 + $0xac] sm:$0xf]
        %v2890 = vld [vmem:[%s2853 + $0xb0] sm:$0xf]
        %v2891 = vld [vmem:[%s2853 + $0xb4] sm:$0xf]
        %v2892 = vld [vmem:[%s2853 + $0xb8] sm:$0xf]
        %v2893 = vld [vmem:[%s2853 + $0xbc] sm:$0xf]
        %v2894 = vld [vmem:[%s2853 + $0xc8] sm:$0xf]
        %v2895 = vld [vmem:[%s2853 + $0xcc] sm:$0xf]
        %v2896 = vld [vmem:[%s2853 + $0xd0] sm:$0xf]
        %v2897 = vld [vmem:[%s2853 + $0xd4] sm:$0xf]
        %v2898 = vld [vmem:[%s2853 + $0xd8] sm:$0xf]
        %v2899 = vld [vmem:[%s2853 + $0xdc] sm:$0xf]
        %v2900 = vld [vmem:[%s2853 + $0xe0] sm:$0xf]
        %v2901 = vld [vmem:[%s2853 + $0xe4] sm:$0xf]
        %v2902 = vld [vmem:[%s2853 + $0xf0] sm:$0xf]
        %v2903 = vld [vmem:[%s2853 + $0xf4] sm:$0xf]
        %v2904 = vld [vmem:[%s2853 + $0xf8] sm:$0xf]
        %v2905 = vld [vmem:[%s2853 + $0xfc] sm:$0xf]
        %v2906 = vld [vmem:[%s2853 + $0x100] sm:$0xf]
        %v2907 = vld [vmem:[%s2853 + $0x104] sm:$0xf]
        %v2908 = vld [vmem:[%s2853 + $0x108] sm:$0xf]
        %v2909 = vld [vmem:[%s2853 + $0x10c] sm:$0xf]
        %v2910 = vld [vmem:[%s2853 + $0x118] sm:$0xf]
        %v2911 = vld [vmem:[%s2853 + $0x11c] sm:$0xf]
        %v2912 = vld [vmem:[%s2853 + $0x120] sm:$0xf]
        %v2913 = vld [vmem:[%s2853 + $0x124] sm:$0xf]
        %v2914 = vld [vmem:[%s2853 + $0x128] sm:$0xf]
        %v2915 = vld [vmem:[%s2853 + $0x12c] sm:$0xf]
        %v2916 = vld [vmem:[%s2853 + $0x130] sm:$0xf]
        %v2917 = vld [vmem:[%s2853 + $0x134] sm:$0xf]
        %s2918 = scalar_lea.vmem [#allocation6], 32
        %v2919 = vld [vmem:[%s2918] sm:$0xf]
        %v2920 = vld [vmem:[%s2918 + $0x4] sm:$0x3]
        %v2985 = vunpack.c.l.b16 %v2854
        %v2986 = vunpack.c.l.b16 %v2855
        %v2987 = vunpack.c.l.b16 %v2856
        %v2988 = vunpack.c.l.b16 %v2857
        %v2989 = vunpack.c.l.b16 %v2858
        %v2990 = vunpack.c.l.b16 %v2859
        %v2991 = vunpack.c.l.b16 %v2860
        %v2992 = vunpack.c.l.b16 %v2861
        %v2993 = vunpack.c.l.b16 %v2862
        %v2994 = vunpack.c.l.b16 %v2863
        %v2995 = vunpack.c.l.b16 %v2864
        %v2996 = vunpack.c.l.b16 %v2865
        %v2997 = vunpack.c.l.b16 %v2866
        %v2998 = vunpack.c.l.b16 %v2867
        %v2999 = vunpack.c.l.b16 %v2868
        %v3000 = vunpack.c.l.b16 %v2869
        %v3001 = vunpack.c.l.b16 %v2870
        %v3002 = vunpack.c.l.b16 %v2871
        %v3003 = vunpack.c.l.b16 %v2872
        %v3004 = vunpack.c.l.b16 %v2873
        %v3005 = vunpack.c.l.b16 %v2874
        %v3006 = vunpack.c.l.b16 %v2875
        %v3007 = vunpack.c.l.b16 %v2876
        %v3008 = vunpack.c.l.b16 %v2877
        %v3009 = vunpack.c.l.b16 %v2878
        %v3010 = vunpack.c.l.b16 %v2879
        %v3011 = vunpack.c.l.b16 %v2880
        %v3012 = vunpack.c.l.b16 %v2881
        %v3013 = vunpack.c.l.b16 %v2882
        %v3014 = vunpack.c.l.b16 %v2883
        %v3015 = vunpack.c.l.b16 %v2884
        %v3016 = vunpack.c.l.b16 %v2885
        %v3017 = vunpack.c.l.b16 %v2886
        %v3018 = vunpack.c.l.b16 %v2887
        %v3019 = vunpack.c.l.b16 %v2888
        %v3020 = vunpack.c.l.b16 %v2889
        %v3021 = vunpack.c.l.b16 %v2890
        %v3022 = vunpack.c.l.b16 %v2891
        %v3023 = vunpack.c.l.b16 %v2892
        %v3024 = vunpack.c.l.b16 %v2893
        %v3025 = vunpack.c.l.b16 %v2894
        %v3026 = vunpack.c.l.b16 %v2895
        %v3027 = vunpack.c.l.b16 %v2896
        %v3028 = vunpack.c.l.b16 %v2897
        %v3029 = vunpack.c.l.b16 %v2898
        %v3030 = vunpack.c.l.b16 %v2899
        %v3031 = vunpack.c.l.b16 %v2900
        %v3032 = vunpack.c.l.b16 %v2901
        %v3033 = vunpack.c.l.b16 %v2902
        %v3034 = vunpack.c.l.b16 %v2903
        %v3035 = vunpack.c.l.b16 %v2904
        %v3036 = vunpack.c.l.b16 %v2905
        %v3037 = vunpack.c.l.b16 %v2906
        %v3038 = vunpack.c.l.b16 %v2907
        %v3039 = vunpack.c.l.b16 %v2908
        %v3040 = vunpack.c.l.b16 %v2909
        %v3041 = vunpack.c.l.b16 %v2910
        %v3042 = vunpack.c.l.b16 %v2911
        %v3043 = vunpack.c.l.b16 %v2912
        %v3044 = vunpack.c.l.b16 %v2913
        %v3045 = vunpack.c.l.b16 %v2914
        %v3046 = vunpack.c.l.b16 %v2915
        %v3047 = vunpack.c.l.b16 %v2916
        %v3048 = vunpack.c.l.b16 %v2917
        %v3049 = vpack.c.b16 %v2986, %v2985
        %v3050 = vpack.c.b16 %v2988, %v2987
        %v3051 = vpack.c.b16 %v2990, %v2989
        %v3052 = vpack.c.b16 %v2992, %v2991
        %v3053 = vpack.c.b16 %v2994, %v2993
        %v3054 = vpack.c.b16 %v2996, %v2995
        %v3055 = vpack.c.b16 %v2998, %v2997
        %v3056 = vpack.c.b16 %v3000, %v2999
        %v3057 = vpack.c.b16 %v3002, %v3001
        %v3058 = vpack.c.b16 %v3004, %v3003
        %v3059 = vpack.c.b16 %v3006, %v3005
        %v3060 = vpack.c.b16 %v3008, %v3007
        %v3061 = vpack.c.b16 %v3010, %v3009
        %v3062 = vpack.c.b16 %v3012, %v3011
        %v3063 = vpack.c.b16 %v3014, %v3013
        %v3064 = vpack.c.b16 %v3016, %v3015
        %v3065 = vpack.c.b16 %v3018, %v3017
        %v3066 = vpack.c.b16 %v3020, %v3019
        %v3067 = vpack.c.b16 %v3022, %v3021
        %v3068 = vpack.c.b16 %v3024, %v3023
        %v3069 = vpack.c.b16 %v3026, %v3025
        %v3070 = vpack.c.b16 %v3028, %v3027
        %v3071 = vpack.c.b16 %v3030, %v3029
        %v3072 = vpack.c.b16 %v3032, %v3031
        %v3073 = vpack.c.b16 %v3034, %v3033
        %v3074 = vpack.c.b16 %v3036, %v3035
        %v3075 = vpack.c.b16 %v3038, %v3037
        %v3076 = vpack.c.b16 %v3040, %v3039
        %v3077 = vpack.c.b16 %v3042, %v3041
        %v3078 = vpack.c.b16 %v3044, %v3043
        %v3079 = vpack.c.b16 %v3046, %v3045
        %v3080 = vpack.c.b16 %v3048, %v3047
        %v3083 = vunpack.c.l.b16 %v2919
        %v3084 = vunpack.c.l.b16 %v2920
        %v3085 = vpack.c.b16 %v3084, %v3083
        %v3087 = vsel %vm440, %v3049, 0
        %v3090 = vsel %vm440, %v3050, 0
        %v3093 = vsel %vm440, %v3051, 0
        %v3096 = vsel %vm440, %v3052, 0
        %v3099 = vsel %vm440, %v3053, 0
        %v3102 = vsel %vm440, %v3054, 0
        %v3105 = vsel %vm440, %v3055, 0
        %v3108 = vsel %vm440, %v3056, 0
        %v3111 = vsel %vm440, %v3057, 0
        %v3114 = vsel %vm440, %v3058, 0
        %v3117 = vsel %vm440, %v3059, 0
        %v3120 = vsel %vm440, %v3060, 0
        %v3123 = vsel %vm440, %v3061, 0
        %v3126 = vsel %vm440, %v3062, 0
        %v3129 = vsel %vm440, %v3063, 0
        %v3132 = vsel %vm440, %v3064, 0
        %v3135 = vsel %vm440, %v3065, 0
        %v3138 = vsel %vm440, %v3066, 0
        %v3141 = vsel %vm440, %v3067, 0
        %v3144 = vsel %vm440, %v3068, 0
        %v3147 = vsel %vm440, %v3069, 0
        %v3150 = vsel %vm440, %v3070, 0
        %v3153 = vsel %vm440, %v3071, 0
        %v3156 = vsel %vm440, %v3072, 0
        %v3159 = vsel %vm440, %v3073, 0
        %v3162 = vsel %vm440, %v3074, 0
        %v3165 = vsel %vm440, %v3075, 0
        %v3168 = vsel %vm440, %v3076, 0
        %v3171 = vsel %vm440, %v3077, 0
        %v3174 = vsel %vm440, %v3078, 0
        %v3177 = vsel %vm440, %v3079, 0
        %v3180 = vsel %vm440, %v3080, 0
        %v3183 = vsel %vm537, %v3085, 0
        %3185 = vmatpush.bf16.msra.mxu0 0
        %3186 = vmatpush.bf16.msra.mxu0 0
        %3187 = vmatpush.bf16.msra.mxu0 0
        %3188 = vmatpush.bf16.msra.mxu0 0
        %3189 = vmatpush.bf16.msra.mxu0 0
        %3190 = vmatpush.bf16.msra.mxu0 0
        %3191 = vmatpush.bf16.msra.mxu0 0
        %3192 = vmatpush.bf16.msra.mxu0 %v3183
        %3193 = vmatmul.bf16.gmra.mxu0 %v3087
        %v3194 = vpop.f32.mrf.mxu0
        %v3195 = vadd.f32 0.0, %v3194
        %v3196 = vpop.f32.mrf.mxu0
        %v3197 = vadd.f32 0.0, %v3196
        %3198 = vmatmul.bf16.gmra.mxu0 %v3090
        %v3199 = vpop.f32.mrf.mxu0
        %v3200 = vadd.f32 0.0, %v3199
        %v3201 = vpop.f32.mrf.mxu0
        %v3202 = vadd.f32 0.0, %v3201
        %3203 = vmatmul.bf16.gmra.mxu0 %v3093
        %v3204 = vpop.f32.mrf.mxu0
        %v3205 = vadd.f32 0.0, %v3204
        %v3206 = vpop.f32.mrf.mxu0
        %v3207 = vadd.f32 0.0, %v3206
        %3208 = vmatmul.bf16.gmra.mxu0 %v3096
        %v3209 = vpop.f32.mrf.mxu0
        %v3210 = vadd.f32 0.0, %v3209
        %v3211 = vpop.f32.mrf.mxu0
        %v3212 = vadd.f32 0.0, %v3211
        %3213 = vmatmul.bf16.gmra.mxu0 %v3099
        %v3214 = vpop.f32.mrf.mxu0
        %v3215 = vadd.f32 0.0, %v3214
        %v3216 = vpop.f32.mrf.mxu0
        %v3217 = vadd.f32 0.0, %v3216
        %3218 = vmatmul.bf16.gmra.mxu0 %v3102
        %v3219 = vpop.f32.mrf.mxu0
        %v3220 = vadd.f32 0.0, %v3219
        %v3221 = vpop.f32.mrf.mxu0
        %v3222 = vadd.f32 0.0, %v3221
        %3223 = vmatmul.bf16.gmra.mxu0 %v3105
        %v3224 = vpop.f32.mrf.mxu0
        %v3225 = vadd.f32 0.0, %v3224
        %v3226 = vpop.f32.mrf.mxu0
        %v3227 = vadd.f32 0.0, %v3226
        %3228 = vmatmul.bf16.gmra.mxu0 %v3108
        %v3229 = vpop.f32.mrf.mxu0
        %v3230 = vadd.f32 0.0, %v3229
        %v3231 = vpop.f32.mrf.mxu0
        %v3232 = vadd.f32 0.0, %v3231
        %3233 = vmatmul.bf16.gmra.mxu0 %v3111
        %v3234 = vpop.f32.mrf.mxu0
        %v3235 = vadd.f32 0.0, %v3234
        %v3236 = vpop.f32.mrf.mxu0
        %v3237 = vadd.f32 0.0, %v3236
        %3238 = vmatmul.bf16.gmra.mxu0 %v3114
        %v3239 = vpop.f32.mrf.mxu0
        %v3240 = vadd.f32 0.0, %v3239
        %v3241 = vpop.f32.mrf.mxu0
        %v3242 = vadd.f32 0.0, %v3241
        %3243 = vmatmul.bf16.gmra.mxu0 %v3117
        %v3244 = vpop.f32.mrf.mxu0
        %v3245 = vadd.f32 0.0, %v3244
        %v3246 = vpop.f32.mrf.mxu0
        %v3247 = vadd.f32 0.0, %v3246
        %3248 = vmatmul.bf16.gmra.mxu0 %v3120
        %v3249 = vpop.f32.mrf.mxu0
        %v3250 = vadd.f32 0.0, %v3249
        %v3251 = vpop.f32.mrf.mxu0
        %v3252 = vadd.f32 0.0, %v3251
        %3253 = vmatmul.bf16.gmra.mxu0 %v3123
        %v3254 = vpop.f32.mrf.mxu0
        %v3255 = vadd.f32 0.0, %v3254
        %v3256 = vpop.f32.mrf.mxu0
        %v3257 = vadd.f32 0.0, %v3256
        %3258 = vmatmul.bf16.gmra.mxu0 %v3126
        %v3259 = vpop.f32.mrf.mxu0
        %v3260 = vadd.f32 0.0, %v3259
        %v3261 = vpop.f32.mrf.mxu0
        %v3262 = vadd.f32 0.0, %v3261
        %3263 = vmatmul.bf16.gmra.mxu0 %v3129
        %v3264 = vpop.f32.mrf.mxu0
        %v3265 = vadd.f32 0.0, %v3264
        %v3266 = vpop.f32.mrf.mxu0
        %v3267 = vadd.f32 0.0, %v3266
        %3268 = vmatmul.bf16.gmra.mxu0 %v3132
        %v3269 = vpop.f32.mrf.mxu0
        %v3270 = vadd.f32 0.0, %v3269
        %v3271 = vpop.f32.mrf.mxu0
        %v3272 = vadd.f32 0.0, %v3271
        %3273 = vmatmul.bf16.gmra.mxu0 %v3135
        %v3274 = vpop.f32.mrf.mxu0
        %v3275 = vadd.f32 0.0, %v3274
        %v3276 = vpop.f32.mrf.mxu0
        %v3277 = vadd.f32 0.0, %v3276
        %3278 = vmatmul.bf16.gmra.mxu0 %v3138
        %v3279 = vpop.f32.mrf.mxu0
        %v3280 = vadd.f32 0.0, %v3279
        %v3281 = vpop.f32.mrf.mxu0
        %v3282 = vadd.f32 0.0, %v3281
        %3283 = vmatmul.bf16.gmra.mxu0 %v3141
        %v3284 = vpop.f32.mrf.mxu0
        %v3285 = vadd.f32 0.0, %v3284
        %v3286 = vpop.f32.mrf.mxu0
        %v3287 = vadd.f32 0.0, %v3286
        %3288 = vmatmul.bf16.gmra.mxu0 %v3144
        %v3289 = vpop.f32.mrf.mxu0
        %v3290 = vadd.f32 0.0, %v3289
        %v3291 = vpop.f32.mrf.mxu0
        %v3292 = vadd.f32 0.0, %v3291
        %3293 = vmatmul.bf16.gmra.mxu0 %v3147
        %v3294 = vpop.f32.mrf.mxu0
        %v3295 = vadd.f32 0.0, %v3294
        %v3296 = vpop.f32.mrf.mxu0
        %v3297 = vadd.f32 0.0, %v3296
        %3298 = vmatmul.bf16.gmra.mxu0 %v3150
        %v3299 = vpop.f32.mrf.mxu0
        %v3300 = vadd.f32 0.0, %v3299
        %v3301 = vpop.f32.mrf.mxu0
        %v3302 = vadd.f32 0.0, %v3301
        %3303 = vmatmul.bf16.gmra.mxu0 %v3153
        %v3304 = vpop.f32.mrf.mxu0
        %v3305 = vadd.f32 0.0, %v3304
        %v3306 = vpop.f32.mrf.mxu0
        %v3307 = vadd.f32 0.0, %v3306
        %3308 = vmatmul.bf16.gmra.mxu0 %v3156
        %v3309 = vpop.f32.mrf.mxu0
        %v3310 = vadd.f32 0.0, %v3309
        %v3311 = vpop.f32.mrf.mxu0
        %v3312 = vadd.f32 0.0, %v3311
        %3313 = vmatmul.bf16.gmra.mxu0 %v3159
        %v3314 = vpop.f32.mrf.mxu0
        %v3315 = vadd.f32 0.0, %v3314
        %v3316 = vpop.f32.mrf.mxu0
        %v3317 = vadd.f32 0.0, %v3316
        %3318 = vmatmul.bf16.gmra.mxu0 %v3162
        %v3319 = vpop.f32.mrf.mxu0
        %v3320 = vadd.f32 0.0, %v3319
        %v3321 = vpop.f32.mrf.mxu0
        %v3322 = vadd.f32 0.0, %v3321
        %3323 = vmatmul.bf16.gmra.mxu0 %v3165
        %v3324 = vpop.f32.mrf.mxu0
        %v3325 = vadd.f32 0.0, %v3324
        %v3326 = vpop.f32.mrf.mxu0
        %v3327 = vadd.f32 0.0, %v3326
        %3328 = vmatmul.bf16.gmra.mxu0 %v3168
        %v3329 = vpop.f32.mrf.mxu0
        %v3330 = vadd.f32 0.0, %v3329
        %v3331 = vpop.f32.mrf.mxu0
        %v3332 = vadd.f32 0.0, %v3331
        %3333 = vmatmul.bf16.gmra.mxu0 %v3171
        %v3334 = vpop.f32.mrf.mxu0
        %v3335 = vadd.f32 0.0, %v3334
        %v3336 = vpop.f32.mrf.mxu0
        %v3337 = vadd.f32 0.0, %v3336
        %3338 = vmatmul.bf16.gmra.mxu0 %v3174
        %v3339 = vpop.f32.mrf.mxu0
        %v3340 = vadd.f32 0.0, %v3339
        %v3341 = vpop.f32.mrf.mxu0
        %v3342 = vadd.f32 0.0, %v3341
        %3343 = vmatmul.bf16.gmra.mxu0 %v3177
        %v3344 = vpop.f32.mrf.mxu0
        %v3345 = vadd.f32 0.0, %v3344
        %v3346 = vpop.f32.mrf.mxu0
        %v3347 = vadd.f32 0.0, %v3346
        %3348 = vmatmul.bf16.gmra.mxu0 %v3180
        %v3349 = vpop.f32.mrf.mxu0
        %v3350 = vadd.f32 0.0, %v3349
        %v3351 = vpop.f32.mrf.mxu0
        %v3352 = vadd.f32 0.0, %v3351
        %3353 = vdwg.mxu0
        %v3354 = vld [vmem:[#allocation2] sm:$0xff]
        %v3355 = vld [vmem:[#allocation2 + $0x8] sm:$0xff]
        %v3356 = vld [vmem:[#allocation2 + $0x10] sm:$0xff]
        %v3357 = vld [vmem:[#allocation2 + $0x18] sm:$0xff]
        %v3358 = vld [vmem:[#allocation2 + $0x20] sm:$0xff]
        %v3359 = vld [vmem:[#allocation2 + $0x28] sm:$0xff]
        %v3360 = vld [vmem:[#allocation2 + $0x30] sm:$0xff]
        %v3361 = vld [vmem:[#allocation2 + $0x38] sm:$0xff]
        %v3362 = vld [vmem:[#allocation2 + $0x40] sm:$0xff]
        %v3363 = vld [vmem:[#allocation2 + $0x48] sm:$0xff]
        %v3364 = vld [vmem:[#allocation2 + $0x50] sm:$0xff]
        %v3365 = vld [vmem:[#allocation2 + $0x58] sm:$0xff]
        %v3366 = vld [vmem:[#allocation2 + $0x60] sm:$0xff]
        %v3367 = vld [vmem:[#allocation2 + $0x68] sm:$0xff]
        %v3368 = vld [vmem:[#allocation2 + $0x70] sm:$0xff]
        %v3369 = vld [vmem:[#allocation2 + $0x78] sm:$0xff]
        %v3370 = vld [vmem:[#allocation2 + $0x80] sm:$0xff]
        %v3371 = vld [vmem:[#allocation2 + $0x88] sm:$0xff]
        %v3372 = vld [vmem:[#allocation2 + $0x90] sm:$0xff]
        %v3373 = vld [vmem:[#allocation2 + $0x98] sm:$0xff]
        %v3374 = vld [vmem:[#allocation2 + $0xa0] sm:$0xff]
        %v3375 = vld [vmem:[#allocation2 + $0xa8] sm:$0xff]
        %v3376 = vld [vmem:[#allocation2 + $0xb0] sm:$0xff]
        %v3377 = vld [vmem:[#allocation2 + $0xb8] sm:$0xff]
        %v3378 = vld [vmem:[#allocation2 + $0xc0] sm:$0xff]
        %v3379 = vld [vmem:[#allocation2 + $0xc8] sm:$0xff]
        %v3380 = vld [vmem:[#allocation2 + $0xd0] sm:$0xff]
        %v3381 = vld [vmem:[#allocation2 + $0xd8] sm:$0xff]
        %v3382 = vld [vmem:[#allocation2 + $0xe0] sm:$0xff]
        %v3383 = vld [vmem:[#allocation2 + $0xe8] sm:$0xff]
        %v3384 = vld [vmem:[#allocation2 + $0xf0] sm:$0xff]
        %v3385 = vld [vmem:[#allocation2 + $0xf8] sm:$0xff]
        %v3386 = vld [vmem:[#allocation2 + $0x100] sm:$0xff]
        %v3387 = vld [vmem:[#allocation2 + $0x108] sm:$0xff]
        %v3388 = vld [vmem:[#allocation2 + $0x110] sm:$0xff]
        %v3389 = vld [vmem:[#allocation2 + $0x118] sm:$0xff]
        %v3390 = vld [vmem:[#allocation2 + $0x120] sm:$0xff]
        %v3391 = vld [vmem:[#allocation2 + $0x128] sm:$0xff]
        %v3392 = vld [vmem:[#allocation2 + $0x130] sm:$0xff]
        %v3393 = vld [vmem:[#allocation2 + $0x138] sm:$0xff]
        %v3394 = vld [vmem:[#allocation2 + $0x140] sm:$0xff]
        %v3395 = vld [vmem:[#allocation2 + $0x148] sm:$0xff]
        %v3396 = vld [vmem:[#allocation2 + $0x150] sm:$0xff]
        %v3397 = vld [vmem:[#allocation2 + $0x158] sm:$0xff]
        %v3398 = vld [vmem:[#allocation2 + $0x160] sm:$0xff]
        %v3399 = vld [vmem:[#allocation2 + $0x168] sm:$0xff]
        %v3400 = vld [vmem:[#allocation2 + $0x170] sm:$0xff]
        %v3401 = vld [vmem:[#allocation2 + $0x178] sm:$0xff]
        %v3402 = vld [vmem:[#allocation2 + $0x180] sm:$0xff]
        %v3403 = vld [vmem:[#allocation2 + $0x188] sm:$0xff]
        %v3404 = vld [vmem:[#allocation2 + $0x190] sm:$0xff]
        %v3405 = vld [vmem:[#allocation2 + $0x198] sm:$0xff]
        %v3406 = vld [vmem:[#allocation2 + $0x1a0] sm:$0xff]
        %v3407 = vld [vmem:[#allocation2 + $0x1a8] sm:$0xff]
        %v3408 = vld [vmem:[#allocation2 + $0x1b0] sm:$0xff]
        %v3409 = vld [vmem:[#allocation2 + $0x1b8] sm:$0xff]
        %v3410 = vld [vmem:[#allocation2 + $0x1c0] sm:$0xff]
        %v3411 = vld [vmem:[#allocation2 + $0x1c8] sm:$0xff]
        %v3412 = vld [vmem:[#allocation2 + $0x1d0] sm:$0xff]
        %v3413 = vld [vmem:[#allocation2 + $0x1d8] sm:$0xff]
        %v3414 = vld [vmem:[#allocation2 + $0x1e0] sm:$0xff]
        %v3415 = vld [vmem:[#allocation2 + $0x1e8] sm:$0xff]
        %v3416 = vld [vmem:[#allocation2 + $0x1f0] sm:$0xff]
        %v3417 = vld [vmem:[#allocation2 + $0x1f8] sm:$0xff]
        %v3418 = vadd.f32 %v3354, %v3195
        %v3419 = vadd.f32 %v3355, %v3197
        %v3420 = vadd.f32 %v3356, %v3200
        %v3421 = vadd.f32 %v3357, %v3202
        %v3422 = vadd.f32 %v3358, %v3205
        %v3423 = vadd.f32 %v3359, %v3207
        %v3424 = vadd.f32 %v3360, %v3210
        %v3425 = vadd.f32 %v3361, %v3212
        %v3426 = vadd.f32 %v3362, %v3215
        %v3427 = vadd.f32 %v3363, %v3217
        %v3428 = vadd.f32 %v3364, %v3220
        %v3429 = vadd.f32 %v3365, %v3222
        %v3430 = vadd.f32 %v3366, %v3225
        %v3431 = vadd.f32 %v3367, %v3227
        %v3432 = vadd.f32 %v3368, %v3230
        %v3433 = vadd.f32 %v3369, %v3232
        %v3434 = vadd.f32 %v3370, %v3235
        %v3435 = vadd.f32 %v3371, %v3237
        %v3436 = vadd.f32 %v3372, %v3240
        %v3437 = vadd.f32 %v3373, %v3242
        %v3438 = vadd.f32 %v3374, %v3245
        %v3439 = vadd.f32 %v3375, %v3247
        %v3440 = vadd.f32 %v3376, %v3250
        %v3441 = vadd.f32 %v3377, %v3252
        %v3442 = vadd.f32 %v3378, %v3255
        %v3443 = vadd.f32 %v3379, %v3257
        %v3444 = vadd.f32 %v3380, %v3260
        %v3445 = vadd.f32 %v3381, %v3262
        %v3446 = vadd.f32 %v3382, %v3265
        %v3447 = vadd.f32 %v3383, %v3267
        %v3448 = vadd.f32 %v3384, %v3270
        %v3449 = vadd.f32 %v3385, %v3272
        %v3450 = vadd.f32 %v3386, %v3275
        %v3451 = vadd.f32 %v3387, %v3277
        %v3452 = vadd.f32 %v3388, %v3280
        %v3453 = vadd.f32 %v3389, %v3282
        %v3454 = vadd.f32 %v3390, %v3285
        %v3455 = vadd.f32 %v3391, %v3287
        %v3456 = vadd.f32 %v3392, %v3290
        %v3457 = vadd.f32 %v3393, %v3292
        %v3458 = vadd.f32 %v3394, %v3295
        %v3459 = vadd.f32 %v3395, %v3297
        %v3460 = vadd.f32 %v3396, %v3300
        %v3461 = vadd.f32 %v3397, %v3302
        %v3462 = vadd.f32 %v3398, %v3305
        %v3463 = vadd.f32 %v3399, %v3307
        %v3464 = vadd.f32 %v3400, %v3310
        %v3465 = vadd.f32 %v3401, %v3312
        %v3466 = vadd.f32 %v3402, %v3315
        %v3467 = vadd.f32 %v3403, %v3317
        %v3468 = vadd.f32 %v3404, %v3320
        %v3469 = vadd.f32 %v3405, %v3322
        %v3470 = vadd.f32 %v3406, %v3325
        %v3471 = vadd.f32 %v3407, %v3327
        %v3472 = vadd.f32 %v3408, %v3330
        %v3473 = vadd.f32 %v3409, %v3332
        %v3474 = vadd.f32 %v3410, %v3335
        %v3475 = vadd.f32 %v3411, %v3337
        %v3476 = vadd.f32 %v3412, %v3340
        %v3477 = vadd.f32 %v3413, %v3342
        %v3478 = vadd.f32 %v3414, %v3345
        %v3479 = vadd.f32 %v3415, %v3347
        %v3480 = vadd.f32 %v3416, %v3350
        %v3481 = vadd.f32 %v3417, %v3352
        %3482 = vst [vmem:[#allocation2] sm:$0xff] %v3418
        %3483 = vst [vmem:[#allocation2 + $0x8] sm:$0xff] %v3419
        %3484 = vst [vmem:[#allocation2 + $0x10] sm:$0xff] %v3420
        %3485 = vst [vmem:[#allocation2 + $0x18] sm:$0xff] %v3421
        %3486 = vst [vmem:[#allocation2 + $0x20] sm:$0xff] %v3422
        %3487 = vst [vmem:[#allocation2 + $0x28] sm:$0xff] %v3423
        %3488 = vst [vmem:[#allocation2 + $0x30] sm:$0xff] %v3424
        %3489 = vst [vmem:[#allocation2 + $0x38] sm:$0xff] %v3425
        %3490 = vst [vmem:[#allocation2 + $0x40] sm:$0xff] %v3426
        %3491 = vst [vmem:[#allocation2 + $0x48] sm:$0xff] %v3427
        %3492 = vst [vmem:[#allocation2 + $0x50] sm:$0xff] %v3428
        %3493 = vst [vmem:[#allocation2 + $0x58] sm:$0xff] %v3429
        %3494 = vst [vmem:[#allocation2 + $0x60] sm:$0xff] %v3430
        %3495 = vst [vmem:[#allocation2 + $0x68] sm:$0xff] %v3431
        %3496 = vst [vmem:[#allocation2 + $0x70] sm:$0xff] %v3432
        %3497 = vst [vmem:[#allocation2 + $0x78] sm:$0xff] %v3433
        %3498 = vst [vmem:[#allocation2 + $0x80] sm:$0xff] %v3434
        %3499 = vst [vmem:[#allocation2 + $0x88] sm:$0xff] %v3435
        %3500 = vst [vmem:[#allocation2 + $0x90] sm:$0xff] %v3436
        %3501 = vst [vmem:[#allocation2 + $0x98] sm:$0xff] %v3437
        %3502 = vst [vmem:[#allocation2 + $0xa0] sm:$0xff] %v3438
        %3503 = vst [vmem:[#allocation2 + $0xa8] sm:$0xff] %v3439
        %3504 = vst [vmem:[#allocation2 + $0xb0] sm:$0xff] %v3440
        %3505 = vst [vmem:[#allocation2 + $0xb8] sm:$0xff] %v3441
        %3506 = vst [vmem:[#allocation2 + $0xc0] sm:$0xff] %v3442
        %3507 = vst [vmem:[#allocation2 + $0xc8] sm:$0xff] %v3443
        %3508 = vst [vmem:[#allocation2 + $0xd0] sm:$0xff] %v3444
        %3509 = vst [vmem:[#allocation2 + $0xd8] sm:$0xff] %v3445
        %3510 = vst [vmem:[#allocation2 + $0xe0] sm:$0xff] %v3446
        %3511 = vst [vmem:[#allocation2 + $0xe8] sm:$0xff] %v3447
        %3512 = vst [vmem:[#allocation2 + $0xf0] sm:$0xff] %v3448
        %3513 = vst [vmem:[#allocation2 + $0xf8] sm:$0xff] %v3449
        %3514 = vst [vmem:[#allocation2 + $0x100] sm:$0xff] %v3450
        %3515 = vst [vmem:[#allocation2 + $0x108] sm:$0xff] %v3451
        %3516 = vst [vmem:[#allocation2 + $0x110] sm:$0xff] %v3452
        %3517 = vst [vmem:[#allocation2 + $0x118] sm:$0xff] %v3453
        %3518 = vst [vmem:[#allocation2 + $0x120] sm:$0xff] %v3454
        %3519 = vst [vmem:[#allocation2 + $0x128] sm:$0xff] %v3455
        %3520 = vst [vmem:[#allocation2 + $0x130] sm:$0xff] %v3456
        %3521 = vst [vmem:[#allocation2 + $0x138] sm:$0xff] %v3457
        %3522 = vst [vmem:[#allocation2 + $0x140] sm:$0xff] %v3458
        %3523 = vst [vmem:[#allocation2 + $0x148] sm:$0xff] %v3459
        %3524 = vst [vmem:[#allocation2 + $0x150] sm:$0xff] %v3460
        %3525 = vst [vmem:[#allocation2 + $0x158] sm:$0xff] %v3461
        %3526 = vst [vmem:[#allocation2 + $0x160] sm:$0xff] %v3462
        %3527 = vst [vmem:[#allocation2 + $0x168] sm:$0xff] %v3463
        %3528 = vst [vmem:[#allocation2 + $0x170] sm:$0xff] %v3464
        %3529 = vst [vmem:[#allocation2 + $0x178] sm:$0xff] %v3465
        %3530 = vst [vmem:[#allocation2 + $0x180] sm:$0xff] %v3466
        %3531 = vst [vmem:[#allocation2 + $0x188] sm:$0xff] %v3467
        %3532 = vst [vmem:[#allocation2 + $0x190] sm:$0xff] %v3468
        %3533 = vst [vmem:[#allocation2 + $0x198] sm:$0xff] %v3469
        %3534 = vst [vmem:[#allocation2 + $0x1a0] sm:$0xff] %v3470
        %3535 = vst [vmem:[#allocation2 + $0x1a8] sm:$0xff] %v3471
        %3536 = vst [vmem:[#allocation2 + $0x1b0] sm:$0xff] %v3472
        %3537 = vst [vmem:[#allocation2 + $0x1b8] sm:$0xff] %v3473
        %3538 = vst [vmem:[#allocation2 + $0x1c0] sm:$0xff] %v3474
        %3539 = vst [vmem:[#allocation2 + $0x1c8] sm:$0xff] %v3475
        %3540 = vst [vmem:[#allocation2 + $0x1d0] sm:$0xff] %v3476
        %3541 = vst [vmem:[#allocation2 + $0x1d8] sm:$0xff] %v3477
        %3542 = vst [vmem:[#allocation2 + $0x1e0] sm:$0xff] %v3478
        %3543 = vst [vmem:[#allocation2 + $0x1e8] sm:$0xff] %v3479
        %3544 = vst [vmem:[#allocation2 + $0x1f0] sm:$0xff] %v3480
        %3545 = vst [vmem:[#allocation2 + $0x1f8] sm:$0xff] %v3481
        %s3546 = scalar_lea.vmem %s179, 48 [#allocation3]
        %v3547 = vld [vmem:[%s3546] sm:$0xf]
        %v3548 = vld [vmem:[%s3546 + $0x4] sm:$0xf]
        %v3549 = vld [vmem:[%s3546 + $0x8] sm:$0xf]
        %v3550 = vld [vmem:[%s3546 + $0xc] sm:$0xf]
        %v3551 = vld [vmem:[%s3546 + $0x10] sm:$0xf]
        %v3552 = vld [vmem:[%s3546 + $0x14] sm:$0xf]
        %v3553 = vld [vmem:[%s3546 + $0x18] sm:$0xf]
        %v3554 = vld [vmem:[%s3546 + $0x1c] sm:$0xf]
        %v3555 = vld [vmem:[%s3546 + $0x28] sm:$0xf]
        %v3556 = vld [vmem:[%s3546 + $0x2c] sm:$0xf]
        %v3557 = vld [vmem:[%s3546 + $0x30] sm:$0xf]
        %v3558 = vld [vmem:[%s3546 + $0x34] sm:$0xf]
        %v3559 = vld [vmem:[%s3546 + $0x38] sm:$0xf]
        %v3560 = vld [vmem:[%s3546 + $0x3c] sm:$0xf]
        %v3561 = vld [vmem:[%s3546 + $0x40] sm:$0xf]
        %v3562 = vld [vmem:[%s3546 + $0x44] sm:$0xf]
        %v3563 = vld [vmem:[%s3546 + $0x50] sm:$0xf]
        %v3564 = vld [vmem:[%s3546 + $0x54] sm:$0xf]
        %v3565 = vld [vmem:[%s3546 + $0x58] sm:$0xf]
        %v3566 = vld [vmem:[%s3546 + $0x5c] sm:$0xf]
        %v3567 = vld [vmem:[%s3546 + $0x60] sm:$0xf]
        %v3568 = vld [vmem:[%s3546 + $0x64] sm:$0xf]
        %v3569 = vld [vmem:[%s3546 + $0x68] sm:$0xf]
        %v3570 = vld [vmem:[%s3546 + $0x6c] sm:$0xf]
        %v3571 = vld [vmem:[%s3546 + $0x78] sm:$0xf]
        %v3572 = vld [vmem:[%s3546 + $0x7c] sm:$0xf]
        %v3573 = vld [vmem:[%s3546 + $0x80] sm:$0xf]
        %v3574 = vld [vmem:[%s3546 + $0x84] sm:$0xf]
        %v3575 = vld [vmem:[%s3546 + $0x88] sm:$0xf]
        %v3576 = vld [vmem:[%s3546 + $0x8c] sm:$0xf]
        %v3577 = vld [vmem:[%s3546 + $0x90] sm:$0xf]
        %v3578 = vld [vmem:[%s3546 + $0x94] sm:$0xf]
        %v3579 = vld [vmem:[%s3546 + $0xa0] sm:$0xf]
        %v3580 = vld [vmem:[%s3546 + $0xa4] sm:$0xf]
        %v3581 = vld [vmem:[%s3546 + $0xa8] sm:$0xf]
        %v3582 = vld [vmem:[%s3546 + $0xac] sm:$0xf]
        %v3583 = vld [vmem:[%s3546 + $0xb0] sm:$0xf]
        %v3584 = vld [vmem:[%s3546 + $0xb4] sm:$0xf]
        %v3585 = vld [vmem:[%s3546 + $0xb8] sm:$0xf]
        %v3586 = vld [vmem:[%s3546 + $0xbc] sm:$0xf]
        %v3587 = vld [vmem:[%s3546 + $0xc8] sm:$0xf]
        %v3588 = vld [vmem:[%s3546 + $0xcc] sm:$0xf]
        %v3589 = vld [vmem:[%s3546 + $0xd0] sm:$0xf]
        %v3590 = vld [vmem:[%s3546 + $0xd4] sm:$0xf]
        %v3591 = vld [vmem:[%s3546 + $0xd8] sm:$0xf]
        %v3592 = vld [vmem:[%s3546 + $0xdc] sm:$0xf]
        %v3593 = vld [vmem:[%s3546 + $0xe0] sm:$0xf]
        %v3594 = vld [vmem:[%s3546 + $0xe4] sm:$0xf]
        %v3595 = vld [vmem:[%s3546 + $0xf0] sm:$0xf]
        %v3596 = vld [vmem:[%s3546 + $0xf4] sm:$0xf]
        %v3597 = vld [vmem:[%s3546 + $0xf8] sm:$0xf]
        %v3598 = vld [vmem:[%s3546 + $0xfc] sm:$0xf]
        %v3599 = vld [vmem:[%s3546 + $0x100] sm:$0xf]
        %v3600 = vld [vmem:[%s3546 + $0x104] sm:$0xf]
        %v3601 = vld [vmem:[%s3546 + $0x108] sm:$0xf]
        %v3602 = vld [vmem:[%s3546 + $0x10c] sm:$0xf]
        %v3603 = vld [vmem:[%s3546 + $0x118] sm:$0xf]
        %v3604 = vld [vmem:[%s3546 + $0x11c] sm:$0xf]
        %v3605 = vld [vmem:[%s3546 + $0x120] sm:$0xf]
        %v3606 = vld [vmem:[%s3546 + $0x124] sm:$0xf]
        %v3607 = vld [vmem:[%s3546 + $0x128] sm:$0xf]
        %v3608 = vld [vmem:[%s3546 + $0x12c] sm:$0xf]
        %v3609 = vld [vmem:[%s3546 + $0x130] sm:$0xf]
        %v3610 = vld [vmem:[%s3546 + $0x134] sm:$0xf]
        %s3611 = scalar_lea.vmem [#allocation6], 40
        %v3612 = vld [vmem:[%s3611] sm:$0xf]
        %v3613 = vld [vmem:[%s3611 + $0x4] sm:$0x3]
        %v3678 = vunpack.c.l.b16 %v3547
        %v3679 = vunpack.c.l.b16 %v3548
        %v3680 = vunpack.c.l.b16 %v3549
        %v3681 = vunpack.c.l.b16 %v3550
        %v3682 = vunpack.c.l.b16 %v3551
        %v3683 = vunpack.c.l.b16 %v3552
        %v3684 = vunpack.c.l.b16 %v3553
        %v3685 = vunpack.c.l.b16 %v3554
        %v3686 = vunpack.c.l.b16 %v3555
        %v3687 = vunpack.c.l.b16 %v3556
        %v3688 = vunpack.c.l.b16 %v3557
        %v3689 = vunpack.c.l.b16 %v3558
        %v3690 = vunpack.c.l.b16 %v3559
        %v3691 = vunpack.c.l.b16 %v3560
        %v3692 = vunpack.c.l.b16 %v3561
        %v3693 = vunpack.c.l.b16 %v3562
        %v3694 = vunpack.c.l.b16 %v3563
        %v3695 = vunpack.c.l.b16 %v3564
        %v3696 = vunpack.c.l.b16 %v3565
        %v3697 = vunpack.c.l.b16 %v3566
        %v3698 = vunpack.c.l.b16 %v3567
        %v3699 = vunpack.c.l.b16 %v3568
        %v3700 = vunpack.c.l.b16 %v3569
        %v3701 = vunpack.c.l.b16 %v3570
        %v3702 = vunpack.c.l.b16 %v3571
        %v3703 = vunpack.c.l.b16 %v3572
        %v3704 = vunpack.c.l.b16 %v3573
        %v3705 = vunpack.c.l.b16 %v3574
        %v3706 = vunpack.c.l.b16 %v3575
        %v3707 = vunpack.c.l.b16 %v3576
        %v3708 = vunpack.c.l.b16 %v3577
        %v3709 = vunpack.c.l.b16 %v3578
        %v3710 = vunpack.c.l.b16 %v3579
        %v3711 = vunpack.c.l.b16 %v3580
        %v3712 = vunpack.c.l.b16 %v3581
        %v3713 = vunpack.c.l.b16 %v3582
        %v3714 = vunpack.c.l.b16 %v3583
        %v3715 = vunpack.c.l.b16 %v3584
        %v3716 = vunpack.c.l.b16 %v3585
        %v3717 = vunpack.c.l.b16 %v3586
        %v3718 = vunpack.c.l.b16 %v3587
        %v3719 = vunpack.c.l.b16 %v3588
        %v3720 = vunpack.c.l.b16 %v3589
        %v3721 = vunpack.c.l.b16 %v3590
        %v3722 = vunpack.c.l.b16 %v3591
        %v3723 = vunpack.c.l.b16 %v3592
        %v3724 = vunpack.c.l.b16 %v3593
        %v3725 = vunpack.c.l.b16 %v3594
        %v3726 = vunpack.c.l.b16 %v3595
        %v3727 = vunpack.c.l.b16 %v3596
        %v3728 = vunpack.c.l.b16 %v3597
        %v3729 = vunpack.c.l.b16 %v3598
        %v3730 = vunpack.c.l.b16 %v3599
        %v3731 = vunpack.c.l.b16 %v3600
        %v3732 = vunpack.c.l.b16 %v3601
        %v3733 = vunpack.c.l.b16 %v3602
        %v3734 = vunpack.c.l.b16 %v3603
        %v3735 = vunpack.c.l.b16 %v3604
        %v3736 = vunpack.c.l.b16 %v3605
        %v3737 = vunpack.c.l.b16 %v3606
        %v3738 = vunpack.c.l.b16 %v3607
        %v3739 = vunpack.c.l.b16 %v3608
        %v3740 = vunpack.c.l.b16 %v3609
        %v3741 = vunpack.c.l.b16 %v3610
        %v3742 = vpack.c.b16 %v3679, %v3678
        %v3743 = vpack.c.b16 %v3681, %v3680
        %v3744 = vpack.c.b16 %v3683, %v3682
        %v3745 = vpack.c.b16 %v3685, %v3684
        %v3746 = vpack.c.b16 %v3687, %v3686
        %v3747 = vpack.c.b16 %v3689, %v3688
        %v3748 = vpack.c.b16 %v3691, %v3690
        %v3749 = vpack.c.b16 %v3693, %v3692
        %v3750 = vpack.c.b16 %v3695, %v3694
        %v3751 = vpack.c.b16 %v3697, %v3696
        %v3752 = vpack.c.b16 %v3699, %v3698
        %v3753 = vpack.c.b16 %v3701, %v3700
        %v3754 = vpack.c.b16 %v3703, %v3702
        %v3755 = vpack.c.b16 %v3705, %v3704
        %v3756 = vpack.c.b16 %v3707, %v3706
        %v3757 = vpack.c.b16 %v3709, %v3708
        %v3758 = vpack.c.b16 %v3711, %v3710
        %v3759 = vpack.c.b16 %v3713, %v3712
        %v3760 = vpack.c.b16 %v3715, %v3714
        %v3761 = vpack.c.b16 %v3717, %v3716
        %v3762 = vpack.c.b16 %v3719, %v3718
        %v3763 = vpack.c.b16 %v3721, %v3720
        %v3764 = vpack.c.b16 %v3723, %v3722
        %v3765 = vpack.c.b16 %v3725, %v3724
        %v3766 = vpack.c.b16 %v3727, %v3726
        %v3767 = vpack.c.b16 %v3729, %v3728
        %v3768 = vpack.c.b16 %v3731, %v3730
        %v3769 = vpack.c.b16 %v3733, %v3732
        %v3770 = vpack.c.b16 %v3735, %v3734
        %v3771 = vpack.c.b16 %v3737, %v3736
        %v3772 = vpack.c.b16 %v3739, %v3738
        %v3773 = vpack.c.b16 %v3741, %v3740
        %v3776 = vunpack.c.l.b16 %v3612
        %v3777 = vunpack.c.l.b16 %v3613
        %v3778 = vpack.c.b16 %v3777, %v3776
        %v3780 = vsel %vm440, %v3742, 0
        %v3783 = vsel %vm440, %v3743, 0
        %v3786 = vsel %vm440, %v3744, 0
        %v3789 = vsel %vm440, %v3745, 0
        %v3792 = vsel %vm440, %v3746, 0
        %v3795 = vsel %vm440, %v3747, 0
        %v3798 = vsel %vm440, %v3748, 0
        %v3801 = vsel %vm440, %v3749, 0
        %v3804 = vsel %vm440, %v3750, 0
        %v3807 = vsel %vm440, %v3751, 0
        %v3810 = vsel %vm440, %v3752, 0
        %v3813 = vsel %vm440, %v3753, 0
        %v3816 = vsel %vm440, %v3754, 0
        %v3819 = vsel %vm440, %v3755, 0
        %v3822 = vsel %vm440, %v3756, 0
        %v3825 = vsel %vm440, %v3757, 0
        %v3828 = vsel %vm440, %v3758, 0
        %v3831 = vsel %vm440, %v3759, 0
        %v3834 = vsel %vm440, %v3760, 0
        %v3837 = vsel %vm440, %v3761, 0
        %v3840 = vsel %vm440, %v3762, 0
        %v3843 = vsel %vm440, %v3763, 0
        %v3846 = vsel %vm440, %v3764, 0
        %v3849 = vsel %vm440, %v3765, 0
        %v3852 = vsel %vm440, %v3766, 0
        %v3855 = vsel %vm440, %v3767, 0
        %v3858 = vsel %vm440, %v3768, 0
        %v3861 = vsel %vm440, %v3769, 0
        %v3864 = vsel %vm440, %v3770, 0
        %v3867 = vsel %vm440, %v3771, 0
        %v3870 = vsel %vm440, %v3772, 0
        %v3873 = vsel %vm440, %v3773, 0
        %v3876 = vsel %vm537, %v3778, 0
        %3878 = vmatpush.bf16.msra.mxu0 0
        %3879 = vmatpush.bf16.msra.mxu0 0
        %3880 = vmatpush.bf16.msra.mxu0 0
        %3881 = vmatpush.bf16.msra.mxu0 0
        %3882 = vmatpush.bf16.msra.mxu0 0
        %3883 = vmatpush.bf16.msra.mxu0 0
        %3884 = vmatpush.bf16.msra.mxu0 0
        %3885 = vmatpush.bf16.msra.mxu0 %v3876
        %3886 = vmatmul.bf16.gmra.mxu0 %v3780
        %v3887 = vpop.f32.mrf.mxu0
        %v3888 = vadd.f32 0.0, %v3887
        %v3889 = vpop.f32.mrf.mxu0
        %v3890 = vadd.f32 0.0, %v3889
        %3891 = vmatmul.bf16.gmra.mxu0 %v3783
        %v3892 = vpop.f32.mrf.mxu0
        %v3893 = vadd.f32 0.0, %v3892
        %v3894 = vpop.f32.mrf.mxu0
        %v3895 = vadd.f32 0.0, %v3894
        %3896 = vmatmul.bf16.gmra.mxu0 %v3786
        %v3897 = vpop.f32.mrf.mxu0
        %v3898 = vadd.f32 0.0, %v3897
        %v3899 = vpop.f32.mrf.mxu0
        %v3900 = vadd.f32 0.0, %v3899
        %3901 = vmatmul.bf16.gmra.mxu0 %v3789
        %v3902 = vpop.f32.mrf.mxu0
        %v3903 = vadd.f32 0.0, %v3902
        %v3904 = vpop.f32.mrf.mxu0
        %v3905 = vadd.f32 0.0, %v3904
        %3906 = vmatmul.bf16.gmra.mxu0 %v3792
        %v3907 = vpop.f32.mrf.mxu0
        %v3908 = vadd.f32 0.0, %v3907
        %v3909 = vpop.f32.mrf.mxu0
        %v3910 = vadd.f32 0.0, %v3909
        %3911 = vmatmul.bf16.gmra.mxu0 %v3795
        %v3912 = vpop.f32.mrf.mxu0
        %v3913 = vadd.f32 0.0, %v3912
        %v3914 = vpop.f32.mrf.mxu0
        %v3915 = vadd.f32 0.0, %v3914
        %3916 = vmatmul.bf16.gmra.mxu0 %v3798
        %v3917 = vpop.f32.mrf.mxu0
        %v3918 = vadd.f32 0.0, %v3917
        %v3919 = vpop.f32.mrf.mxu0
        %v3920 = vadd.f32 0.0, %v3919
        %3921 = vmatmul.bf16.gmra.mxu0 %v3801
        %v3922 = vpop.f32.mrf.mxu0
        %v3923 = vadd.f32 0.0, %v3922
        %v3924 = vpop.f32.mrf.mxu0
        %v3925 = vadd.f32 0.0, %v3924
        %3926 = vmatmul.bf16.gmra.mxu0 %v3804
        %v3927 = vpop.f32.mrf.mxu0
        %v3928 = vadd.f32 0.0, %v3927
        %v3929 = vpop.f32.mrf.mxu0
        %v3930 = vadd.f32 0.0, %v3929
        %3931 = vmatmul.bf16.gmra.mxu0 %v3807
        %v3932 = vpop.f32.mrf.mxu0
        %v3933 = vadd.f32 0.0, %v3932
        %v3934 = vpop.f32.mrf.mxu0
        %v3935 = vadd.f32 0.0, %v3934
        %3936 = vmatmul.bf16.gmra.mxu0 %v3810
        %v3937 = vpop.f32.mrf.mxu0
        %v3938 = vadd.f32 0.0, %v3937
        %v3939 = vpop.f32.mrf.mxu0
        %v3940 = vadd.f32 0.0, %v3939
        %3941 = vmatmul.bf16.gmra.mxu0 %v3813
        %v3942 = vpop.f32.mrf.mxu0
        %v3943 = vadd.f32 0.0, %v3942
        %v3944 = vpop.f32.mrf.mxu0
        %v3945 = vadd.f32 0.0, %v3944
        %3946 = vmatmul.bf16.gmra.mxu0 %v3816
        %v3947 = vpop.f32.mrf.mxu0
        %v3948 = vadd.f32 0.0, %v3947
        %v3949 = vpop.f32.mrf.mxu0
        %v3950 = vadd.f32 0.0, %v3949
        %3951 = vmatmul.bf16.gmra.mxu0 %v3819
        %v3952 = vpop.f32.mrf.mxu0
        %v3953 = vadd.f32 0.0, %v3952
        %v3954 = vpop.f32.mrf.mxu0
        %v3955 = vadd.f32 0.0, %v3954
        %3956 = vmatmul.bf16.gmra.mxu0 %v3822
        %v3957 = vpop.f32.mrf.mxu0
        %v3958 = vadd.f32 0.0, %v3957
        %v3959 = vpop.f32.mrf.mxu0
        %v3960 = vadd.f32 0.0, %v3959
        %3961 = vmatmul.bf16.gmra.mxu0 %v3825
        %v3962 = vpop.f32.mrf.mxu0
        %v3963 = vadd.f32 0.0, %v3962
        %v3964 = vpop.f32.mrf.mxu0
        %v3965 = vadd.f32 0.0, %v3964
        %3966 = vmatmul.bf16.gmra.mxu0 %v3828
        %v3967 = vpop.f32.mrf.mxu0
        %v3968 = vadd.f32 0.0, %v3967
        %v3969 = vpop.f32.mrf.mxu0
        %v3970 = vadd.f32 0.0, %v3969
        %3971 = vmatmul.bf16.gmra.mxu0 %v3831
        %v3972 = vpop.f32.mrf.mxu0
        %v3973 = vadd.f32 0.0, %v3972
        %v3974 = vpop.f32.mrf.mxu0
        %v3975 = vadd.f32 0.0, %v3974
        %3976 = vmatmul.bf16.gmra.mxu0 %v3834
        %v3977 = vpop.f32.mrf.mxu0
        %v3978 = vadd.f32 0.0, %v3977
        %v3979 = vpop.f32.mrf.mxu0
        %v3980 = vadd.f32 0.0, %v3979
        %3981 = vmatmul.bf16.gmra.mxu0 %v3837
        %v3982 = vpop.f32.mrf.mxu0
        %v3983 = vadd.f32 0.0, %v3982
        %v3984 = vpop.f32.mrf.mxu0
        %v3985 = vadd.f32 0.0, %v3984
        %3986 = vmatmul.bf16.gmra.mxu0 %v3840
        %v3987 = vpop.f32.mrf.mxu0
        %v3988 = vadd.f32 0.0, %v3987
        %v3989 = vpop.f32.mrf.mxu0
        %v3990 = vadd.f32 0.0, %v3989
        %3991 = vmatmul.bf16.gmra.mxu0 %v3843
        %v3992 = vpop.f32.mrf.mxu0
        %v3993 = vadd.f32 0.0, %v3992
        %v3994 = vpop.f32.mrf.mxu0
        %v3995 = vadd.f32 0.0, %v3994
        %3996 = vmatmul.bf16.gmra.mxu0 %v3846
        %v3997 = vpop.f32.mrf.mxu0
        %v3998 = vadd.f32 0.0, %v3997
        %v3999 = vpop.f32.mrf.mxu0
        %v4000 = vadd.f32 0.0, %v3999
        %4001 = vmatmul.bf16.gmra.mxu0 %v3849
        %v4002 = vpop.f32.mrf.mxu0
        %v4003 = vadd.f32 0.0, %v4002
        %v4004 = vpop.f32.mrf.mxu0
        %v4005 = vadd.f32 0.0, %v4004
        %4006 = vmatmul.bf16.gmra.mxu0 %v3852
        %v4007 = vpop.f32.mrf.mxu0
        %v4008 = vadd.f32 0.0, %v4007
        %v4009 = vpop.f32.mrf.mxu0
        %v4010 = vadd.f32 0.0, %v4009
        %4011 = vmatmul.bf16.gmra.mxu0 %v3855
        %v4012 = vpop.f32.mrf.mxu0
        %v4013 = vadd.f32 0.0, %v4012
        %v4014 = vpop.f32.mrf.mxu0
        %v4015 = vadd.f32 0.0, %v4014
        %4016 = vmatmul.bf16.gmra.mxu0 %v3858
        %v4017 = vpop.f32.mrf.mxu0
        %v4018 = vadd.f32 0.0, %v4017
        %v4019 = vpop.f32.mrf.mxu0
        %v4020 = vadd.f32 0.0, %v4019
        %4021 = vmatmul.bf16.gmra.mxu0 %v3861
        %v4022 = vpop.f32.mrf.mxu0
        %v4023 = vadd.f32 0.0, %v4022
        %v4024 = vpop.f32.mrf.mxu0
        %v4025 = vadd.f32 0.0, %v4024
        %4026 = vmatmul.bf16.gmra.mxu0 %v3864
        %v4027 = vpop.f32.mrf.mxu0
        %v4028 = vadd.f32 0.0, %v4027
        %v4029 = vpop.f32.mrf.mxu0
        %v4030 = vadd.f32 0.0, %v4029
        %4031 = vmatmul.bf16.gmra.mxu0 %v3867
        %v4032 = vpop.f32.mrf.mxu0
        %v4033 = vadd.f32 0.0, %v4032
        %v4034 = vpop.f32.mrf.mxu0
        %v4035 = vadd.f32 0.0, %v4034
        %4036 = vmatmul.bf16.gmra.mxu0 %v3870
        %v4037 = vpop.f32.mrf.mxu0
        %v4038 = vadd.f32 0.0, %v4037
        %v4039 = vpop.f32.mrf.mxu0
        %v4040 = vadd.f32 0.0, %v4039
        %4041 = vmatmul.bf16.gmra.mxu0 %v3873
        %v4042 = vpop.f32.mrf.mxu0
        %v4043 = vadd.f32 0.0, %v4042
        %v4044 = vpop.f32.mrf.mxu0
        %v4045 = vadd.f32 0.0, %v4044
        %4046 = vdwg.mxu0
        %v4047 = vld [vmem:[#allocation2] sm:$0xff]
        %v4048 = vld [vmem:[#allocation2 + $0x8] sm:$0xff]
        %v4049 = vld [vmem:[#allocation2 + $0x10] sm:$0xff]
        %v4050 = vld [vmem:[#allocation2 + $0x18] sm:$0xff]
        %v4051 = vld [vmem:[#allocation2 + $0x20] sm:$0xff]
        %v4052 = vld [vmem:[#allocation2 + $0x28] sm:$0xff]
        %v4053 = vld [vmem:[#allocation2 + $0x30] sm:$0xff]
        %v4054 = vld [vmem:[#allocation2 + $0x38] sm:$0xff]
        %v4055 = vld [vmem:[#allocation2 + $0x40] sm:$0xff]
        %v4056 = vld [vmem:[#allocation2 + $0x48] sm:$0xff]
        %v4057 = vld [vmem:[#allocation2 + $0x50] sm:$0xff]
        %v4058 = vld [vmem:[#allocation2 + $0x58] sm:$0xff]
        %v4059 = vld [vmem:[#allocation2 + $0x60] sm:$0xff]
        %v4060 = vld [vmem:[#allocation2 + $0x68] sm:$0xff]
        %v4061 = vld [vmem:[#allocation2 + $0x70] sm:$0xff]
        %v4062 = vld [vmem:[#allocation2 + $0x78] sm:$0xff]
        %v4063 = vld [vmem:[#allocation2 + $0x80] sm:$0xff]
        %v4064 = vld [vmem:[#allocation2 + $0x88] sm:$0xff]
        %v4065 = vld [vmem:[#allocation2 + $0x90] sm:$0xff]
        %v4066 = vld [vmem:[#allocation2 + $0x98] sm:$0xff]
        %v4067 = vld [vmem:[#allocation2 + $0xa0] sm:$0xff]
        %v4068 = vld [vmem:[#allocation2 + $0xa8] sm:$0xff]
        %v4069 = vld [vmem:[#allocation2 + $0xb0] sm:$0xff]
        %v4070 = vld [vmem:[#allocation2 + $0xb8] sm:$0xff]
        %v4071 = vld [vmem:[#allocation2 + $0xc0] sm:$0xff]
        %v4072 = vld [vmem:[#allocation2 + $0xc8] sm:$0xff]
        %v4073 = vld [vmem:[#allocation2 + $0xd0] sm:$0xff]
        %v4074 = vld [vmem:[#allocation2 + $0xd8] sm:$0xff]
        %v4075 = vld [vmem:[#allocation2 + $0xe0] sm:$0xff]
        %v4076 = vld [vmem:[#allocation2 + $0xe8] sm:$0xff]
        %v4077 = vld [vmem:[#allocation2 + $0xf0] sm:$0xff]
        %v4078 = vld [vmem:[#allocation2 + $0xf8] sm:$0xff]
        %v4079 = vld [vmem:[#allocation2 + $0x100] sm:$0xff]
        %v4080 = vld [vmem:[#allocation2 + $0x108] sm:$0xff]
        %v4081 = vld [vmem:[#allocation2 + $0x110] sm:$0xff]
        %v4082 = vld [vmem:[#allocation2 + $0x118] sm:$0xff]
        %v4083 = vld [vmem:[#allocation2 + $0x120] sm:$0xff]
        %v4084 = vld [vmem:[#allocation2 + $0x128] sm:$0xff]
        %v4085 = vld [vmem:[#allocation2 + $0x130] sm:$0xff]
        %v4086 = vld [vmem:[#allocation2 + $0x138] sm:$0xff]
        %v4087 = vld [vmem:[#allocation2 + $0x140] sm:$0xff]
        %v4088 = vld [vmem:[#allocation2 + $0x148] sm:$0xff]
        %v4089 = vld [vmem:[#allocation2 + $0x150] sm:$0xff]
        %v4090 = vld [vmem:[#allocation2 + $0x158] sm:$0xff]
        %v4091 = vld [vmem:[#allocation2 + $0x160] sm:$0xff]
        %v4092 = vld [vmem:[#allocation2 + $0x168] sm:$0xff]
        %v4093 = vld [vmem:[#allocation2 + $0x170] sm:$0xff]
        %v4094 = vld [vmem:[#allocation2 + $0x178] sm:$0xff]
        %v4095 = vld [vmem:[#allocation2 + $0x180] sm:$0xff]
        %v4096 = vld [vmem:[#allocation2 + $0x188] sm:$0xff]
        %v4097 = vld [vmem:[#allocation2 + $0x190] sm:$0xff]
        %v4098 = vld [vmem:[#allocation2 + $0x198] sm:$0xff]
        %v4099 = vld [vmem:[#allocation2 + $0x1a0] sm:$0xff]
        %v4100 = vld [vmem:[#allocation2 + $0x1a8] sm:$0xff]
        %v4101 = vld [vmem:[#allocation2 + $0x1b0] sm:$0xff]
        %v4102 = vld [vmem:[#allocation2 + $0x1b8] sm:$0xff]
        %v4103 = vld [vmem:[#allocation2 + $0x1c0] sm:$0xff]
        %v4104 = vld [vmem:[#allocation2 + $0x1c8] sm:$0xff]
        %v4105 = vld [vmem:[#allocation2 + $0x1d0] sm:$0xff]
        %v4106 = vld [vmem:[#allocation2 + $0x1d8] sm:$0xff]
        %v4107 = vld [vmem:[#allocation2 + $0x1e0] sm:$0xff]
        %v4108 = vld [vmem:[#allocation2 + $0x1e8] sm:$0xff]
        %v4109 = vld [vmem:[#allocation2 + $0x1f0] sm:$0xff]
        %v4110 = vld [vmem:[#allocation2 + $0x1f8] sm:$0xff]
        %v4111 = vadd.f32 %v4047, %v3888
        %v4112 = vadd.f32 %v4048, %v3890
        %v4113 = vadd.f32 %v4049, %v3893
        %v4114 = vadd.f32 %v4050, %v3895
        %v4115 = vadd.f32 %v4051, %v3898
        %v4116 = vadd.f32 %v4052, %v3900
        %v4117 = vadd.f32 %v4053, %v3903
        %v4118 = vadd.f32 %v4054, %v3905
        %v4119 = vadd.f32 %v4055, %v3908
        %v4120 = vadd.f32 %v4056, %v3910
        %v4121 = vadd.f32 %v4057, %v3913
        %v4122 = vadd.f32 %v4058, %v3915
        %v4123 = vadd.f32 %v4059, %v3918
        %v4124 = vadd.f32 %v4060, %v3920
        %v4125 = vadd.f32 %v4061, %v3923
        %v4126 = vadd.f32 %v4062, %v3925
        %v4127 = vadd.f32 %v4063, %v3928
        %v4128 = vadd.f32 %v4064, %v3930
        %v4129 = vadd.f32 %v4065, %v3933
        %v4130 = vadd.f32 %v4066, %v3935
        %v4131 = vadd.f32 %v4067, %v3938
        %v4132 = vadd.f32 %v4068, %v3940
        %v4133 = vadd.f32 %v4069, %v3943
        %v4134 = vadd.f32 %v4070, %v3945
        %v4135 = vadd.f32 %v4071, %v3948
        %v4136 = vadd.f32 %v4072, %v3950
        %v4137 = vadd.f32 %v4073, %v3953
        %v4138 = vadd.f32 %v4074, %v3955
        %v4139 = vadd.f32 %v4075, %v3958
        %v4140 = vadd.f32 %v4076, %v3960
        %v4141 = vadd.f32 %v4077, %v3963
        %v4142 = vadd.f32 %v4078, %v3965
        %v4143 = vadd.f32 %v4079, %v3968
        %v4144 = vadd.f32 %v4080, %v3970
        %v4145 = vadd.f32 %v4081, %v3973
        %v4146 = vadd.f32 %v4082, %v3975
        %v4147 = vadd.f32 %v4083, %v3978
        %v4148 = vadd.f32 %v4084, %v3980
        %v4149 = vadd.f32 %v4085, %v3983
        %v4150 = vadd.f32 %v4086, %v3985
        %v4151 = vadd.f32 %v4087, %v3988
        %v4152 = vadd.f32 %v4088, %v3990
        %v4153 = vadd.f32 %v4089, %v3993
        %v4154 = vadd.f32 %v4090, %v3995
        %v4155 = vadd.f32 %v4091, %v3998
        %v4156 = vadd.f32 %v4092, %v4000
        %v4157 = vadd.f32 %v4093, %v4003
        %v4158 = vadd.f32 %v4094, %v4005
        %v4159 = vadd.f32 %v4095, %v4008
        %v4160 = vadd.f32 %v4096, %v4010
        %v4161 = vadd.f32 %v4097, %v4013
        %v4162 = vadd.f32 %v4098, %v4015
        %v4163 = vadd.f32 %v4099, %v4018
        %v4164 = vadd.f32 %v4100, %v4020
        %v4165 = vadd.f32 %v4101, %v4023
        %v4166 = vadd.f32 %v4102, %v4025
        %v4167 = vadd.f32 %v4103, %v4028
        %v4168 = vadd.f32 %v4104, %v4030
        %v4169 = vadd.f32 %v4105, %v4033
        %v4170 = vadd.f32 %v4106, %v4035
        %v4171 = vadd.f32 %v4107, %v4038
        %v4172 = vadd.f32 %v4108, %v4040
        %v4173 = vadd.f32 %v4109, %v4043
        %v4174 = vadd.f32 %v4110, %v4045
        %4175 = vst [vmem:[#allocation2] sm:$0xff] %v4111
        %4176 = vst [vmem:[#allocation2 + $0x8] sm:$0xff] %v4112
        %4177 = vst [vmem:[#allocation2 + $0x10] sm:$0xff] %v4113
        %4178 = vst [vmem:[#allocation2 + $0x18] sm:$0xff] %v4114
        %4179 = vst [vmem:[#allocation2 + $0x20] sm:$0xff] %v4115
        %4180 = vst [vmem:[#allocation2 + $0x28] sm:$0xff] %v4116
        %4181 = vst [vmem:[#allocation2 + $0x30] sm:$0xff] %v4117
        %4182 = vst [vmem:[#allocation2 + $0x38] sm:$0xff] %v4118
        %4183 = vst [vmem:[#allocation2 + $0x40] sm:$0xff] %v4119
        %4184 = vst [vmem:[#allocation2 + $0x48] sm:$0xff] %v4120
        %4185 = vst [vmem:[#allocation2 + $0x50] sm:$0xff] %v4121
        %4186 = vst [vmem:[#allocation2 + $0x58] sm:$0xff] %v4122
        %4187 = vst [vmem:[#allocation2 + $0x60] sm:$0xff] %v4123
        %4188 = vst [vmem:[#allocation2 + $0x68] sm:$0xff] %v4124
        %4189 = vst [vmem:[#allocation2 + $0x70] sm:$0xff] %v4125
        %4190 = vst [vmem:[#allocation2 + $0x78] sm:$0xff] %v4126
        %4191 = vst [vmem:[#allocation2 + $0x80] sm:$0xff] %v4127
        %4192 = vst [vmem:[#allocation2 + $0x88] sm:$0xff] %v4128
        %4193 = vst [vmem:[#allocation2 + $0x90] sm:$0xff] %v4129
        %4194 = vst [vmem:[#allocation2 + $0x98] sm:$0xff] %v4130
        %4195 = vst [vmem:[#allocation2 + $0xa0] sm:$0xff] %v4131
        %4196 = vst [vmem:[#allocation2 + $0xa8] sm:$0xff] %v4132
        %4197 = vst [vmem:[#allocation2 + $0xb0] sm:$0xff] %v4133
        %4198 = vst [vmem:[#allocation2 + $0xb8] sm:$0xff] %v4134
        %4199 = vst [vmem:[#allocation2 + $0xc0] sm:$0xff] %v4135
        %4200 = vst [vmem:[#allocation2 + $0xc8] sm:$0xff] %v4136
        %4201 = vst [vmem:[#allocation2 + $0xd0] sm:$0xff] %v4137
        %4202 = vst [vmem:[#allocation2 + $0xd8] sm:$0xff] %v4138
        %4203 = vst [vmem:[#allocation2 + $0xe0] sm:$0xff] %v4139
        %4204 = vst [vmem:[#allocation2 + $0xe8] sm:$0xff] %v4140
        %4205 = vst [vmem:[#allocation2 + $0xf0] sm:$0xff] %v4141
        %4206 = vst [vmem:[#allocation2 + $0xf8] sm:$0xff] %v4142
        %4207 = vst [vmem:[#allocation2 + $0x100] sm:$0xff] %v4143
        %4208 = vst [vmem:[#allocation2 + $0x108] sm:$0xff] %v4144
        %4209 = vst [vmem:[#allocation2 + $0x110] sm:$0xff] %v4145
        %4210 = vst [vmem:[#allocation2 + $0x118] sm:$0xff] %v4146
        %4211 = vst [vmem:[#allocation2 + $0x120] sm:$0xff] %v4147
        %4212 = vst [vmem:[#allocation2 + $0x128] sm:$0xff] %v4148
        %4213 = vst [vmem:[#allocation2 + $0x130] sm:$0xff] %v4149
        %4214 = vst [vmem:[#allocation2 + $0x138] sm:$0xff] %v4150
        %4215 = vst [vmem:[#allocation2 + $0x140] sm:$0xff] %v4151
        %4216 = vst [vmem:[#allocation2 + $0x148] sm:$0xff] %v4152
        %4217 = vst [vmem:[#allocation2 + $0x150] sm:$0xff] %v4153
        %4218 = vst [vmem:[#allocation2 + $0x158] sm:$0xff] %v4154
        %4219 = vst [vmem:[#allocation2 + $0x160] sm:$0xff] %v4155
        %4220 = vst [vmem:[#allocation2 + $0x168] sm:$0xff] %v4156
        %4221 = vst [vmem:[#allocation2 + $0x170] sm:$0xff] %v4157
        %4222 = vst [vmem:[#allocation2 + $0x178] sm:$0xff] %v4158
        %4223 = vst [vmem:[#allocation2 + $0x180] sm:$0xff] %v4159
        %4224 = vst [vmem:[#allocation2 + $0x188] sm:$0xff] %v4160
        %4225 = vst [vmem:[#allocation2 + $0x190] sm:$0xff] %v4161
        %4226 = vst [vmem:[#allocation2 + $0x198] sm:$0xff] %v4162
        %4227 = vst [vmem:[#allocation2 + $0x1a0] sm:$0xff] %v4163
        %4228 = vst [vmem:[#allocation2 + $0x1a8] sm:$0xff] %v4164
        %4229 = vst [vmem:[#allocation2 + $0x1b0] sm:$0xff] %v4165
        %4230 = vst [vmem:[#allocation2 + $0x1b8] sm:$0xff] %v4166
        %4231 = vst [vmem:[#allocation2 + $0x1c0] sm:$0xff] %v4167
        %4232 = vst [vmem:[#allocation2 + $0x1c8] sm:$0xff] %v4168
        %4233 = vst [vmem:[#allocation2 + $0x1d0] sm:$0xff] %v4169
        %4234 = vst [vmem:[#allocation2 + $0x1d8] sm:$0xff] %v4170
        %4235 = vst [vmem:[#allocation2 + $0x1e0] sm:$0xff] %v4171
        %4236 = vst [vmem:[#allocation2 + $0x1e8] sm:$0xff] %v4172
        %4237 = vst [vmem:[#allocation2 + $0x1f0] sm:$0xff] %v4173
        %4238 = vst [vmem:[#allocation2 + $0x1f8] sm:$0xff] %v4174
        %s4239 = scalar_lea.vmem %s179, 80 [#allocation3]
        %v4240 = vld [vmem:[%s4239] sm:$0xf]
        %v4241 = vld [vmem:[%s4239 + $0x4] sm:$0xf]
        %v4242 = vld [vmem:[%s4239 + $0x8] sm:$0xf]
        %v4243 = vld [vmem:[%s4239 + $0xc] sm:$0xf]
        %v4244 = vld [vmem:[%s4239 + $0x10] sm:$0xf]
        %v4245 = vld [vmem:[%s4239 + $0x14] sm:$0xf]
        %v4246 = vld [vmem:[%s4239 + $0x18] sm:$0xf]
        %v4247 = vld [vmem:[%s4239 + $0x1c] sm:$0xf]
        %v4248 = vld [vmem:[%s4239 + $0x28] sm:$0xf]
        %v4249 = vld [vmem:[%s4239 + $0x2c] sm:$0xf]
        %v4250 = vld [vmem:[%s4239 + $0x30] sm:$0xf]
        %v4251 = vld [vmem:[%s4239 + $0x34] sm:$0xf]
        %v4252 = vld [vmem:[%s4239 + $0x38] sm:$0xf]
        %v4253 = vld [vmem:[%s4239 + $0x3c] sm:$0xf]
        %v4254 = vld [vmem:[%s4239 + $0x40] sm:$0xf]
        %v4255 = vld [vmem:[%s4239 + $0x44] sm:$0xf]
        %v4256 = vld [vmem:[%s4239 + $0x50] sm:$0xf]
        %v4257 = vld [vmem:[%s4239 + $0x54] sm:$0xf]
        %v4258 = vld [vmem:[%s4239 + $0x58] sm:$0xf]
        %v4259 = vld [vmem:[%s4239 + $0x5c] sm:$0xf]
        %v4260 = vld [vmem:[%s4239 + $0x60] sm:$0xf]
        %v4261 = vld [vmem:[%s4239 + $0x64] sm:$0xf]
        %v4262 = vld [vmem:[%s4239 + $0x68] sm:$0xf]
        %v4263 = vld [vmem:[%s4239 + $0x6c] sm:$0xf]
        %v4264 = vld [vmem:[%s4239 + $0x78] sm:$0xf]
        %v4265 = vld [vmem:[%s4239 + $0x7c] sm:$0xf]
        %v4266 = vld [vmem:[%s4239 + $0x80] sm:$0xf]
        %v4267 = vld [vmem:[%s4239 + $0x84] sm:$0xf]
        %v4268 = vld [vmem:[%s4239 + $0x88] sm:$0xf]
        %v4269 = vld [vmem:[%s4239 + $0x8c] sm:$0xf]
        %v4270 = vld [vmem:[%s4239 + $0x90] sm:$0xf]
        %v4271 = vld [vmem:[%s4239 + $0x94] sm:$0xf]
        %v4272 = vld [vmem:[%s4239 + $0xa0] sm:$0xf]
        %v4273 = vld [vmem:[%s4239 + $0xa4] sm:$0xf]
        %v4274 = vld [vmem:[%s4239 + $0xa8] sm:$0xf]
        %v4275 = vld [vmem:[%s4239 + $0xac] sm:$0xf]
        %v4276 = vld [vmem:[%s4239 + $0xb0] sm:$0xf]
        %v4277 = vld [vmem:[%s4239 + $0xb4] sm:$0xf]
        %v4278 = vld [vmem:[%s4239 + $0xb8] sm:$0xf]
        %v4279 = vld [vmem:[%s4239 + $0xbc] sm:$0xf]
        %v4280 = vld [vmem:[%s4239 + $0xc8] sm:$0xf]
        %v4281 = vld [vmem:[%s4239 + $0xcc] sm:$0xf]
        %v4282 = vld [vmem:[%s4239 + $0xd0] sm:$0xf]
        %v4283 = vld [vmem:[%s4239 + $0xd4] sm:$0xf]
        %v4284 = vld [vmem:[%s4239 + $0xd8] sm:$0xf]
        %v4285 = vld [vmem:[%s4239 + $0xdc] sm:$0xf]
        %v4286 = vld [vmem:[%s4239 + $0xe0] sm:$0xf]
        %v4287 = vld [vmem:[%s4239 + $0xe4] sm:$0xf]
        %v4288 = vld [vmem:[%s4239 + $0xf0] sm:$0xf]
        %v4289 = vld [vmem:[%s4239 + $0xf4] sm:$0xf]
        %v4290 = vld [vmem:[%s4239 + $0xf8] sm:$0xf]
        %v4291 = vld [vmem:[%s4239 + $0xfc] sm:$0xf]
        %v4292 = vld [vmem:[%s4239 + $0x100] sm:$0xf]
        %v4293 = vld [vmem:[%s4239 + $0x104] sm:$0xf]
        %v4294 = vld [vmem:[%s4239 + $0x108] sm:$0xf]
        %v4295 = vld [vmem:[%s4239 + $0x10c] sm:$0xf]
        %v4296 = vld [vmem:[%s4239 + $0x118] sm:$0xf]
        %v4297 = vld [vmem:[%s4239 + $0x11c] sm:$0xf]
        %v4298 = vld [vmem:[%s4239 + $0x120] sm:$0xf]
        %v4299 = vld [vmem:[%s4239 + $0x124] sm:$0xf]
        %v4300 = vld [vmem:[%s4239 + $0x128] sm:$0xf]
        %v4301 = vld [vmem:[%s4239 + $0x12c] sm:$0xf]
        %v4302 = vld [vmem:[%s4239 + $0x130] sm:$0xf]
        %v4303 = vld [vmem:[%s4239 + $0x134] sm:$0xf]
        %s4304 = scalar_lea.vmem [#allocation6], 48
        %v4305 = vld [vmem:[%s4304] sm:$0xf]
        %v4306 = vld [vmem:[%s4304 + $0x4] sm:$0x3]
        %v4371 = vunpack.c.l.b16 %v4240
        %v4372 = vunpack.c.l.b16 %v4241
        %v4373 = vunpack.c.l.b16 %v4242
        %v4374 = vunpack.c.l.b16 %v4243
        %v4375 = vunpack.c.l.b16 %v4244
        %v4376 = vunpack.c.l.b16 %v4245
        %v4377 = vunpack.c.l.b16 %v4246
        %v4378 = vunpack.c.l.b16 %v4247
        %v4379 = vunpack.c.l.b16 %v4248
        %v4380 = vunpack.c.l.b16 %v4249
        %v4381 = vunpack.c.l.b16 %v4250
        %v4382 = vunpack.c.l.b16 %v4251
        %v4383 = vunpack.c.l.b16 %v4252
        %v4384 = vunpack.c.l.b16 %v4253
        %v4385 = vunpack.c.l.b16 %v4254
        %v4386 = vunpack.c.l.b16 %v4255
        %v4387 = vunpack.c.l.b16 %v4256
        %v4388 = vunpack.c.l.b16 %v4257
        %v4389 = vunpack.c.l.b16 %v4258
        %v4390 = vunpack.c.l.b16 %v4259
        %v4391 = vunpack.c.l.b16 %v4260
        %v4392 = vunpack.c.l.b16 %v4261
        %v4393 = vunpack.c.l.b16 %v4262
        %v4394 = vunpack.c.l.b16 %v4263
        %v4395 = vunpack.c.l.b16 %v4264
        %v4396 = vunpack.c.l.b16 %v4265
        %v4397 = vunpack.c.l.b16 %v4266
        %v4398 = vunpack.c.l.b16 %v4267
        %v4399 = vunpack.c.l.b16 %v4268
        %v4400 = vunpack.c.l.b16 %v4269
        %v4401 = vunpack.c.l.b16 %v4270
        %v4402 = vunpack.c.l.b16 %v4271
        %v4403 = vunpack.c.l.b16 %v4272
        %v4404 = vunpack.c.l.b16 %v4273
        %v4405 = vunpack.c.l.b16 %v4274
        %v4406 = vunpack.c.l.b16 %v4275
        %v4407 = vunpack.c.l.b16 %v4276
        %v4408 = vunpack.c.l.b16 %v4277
        %v4409 = vunpack.c.l.b16 %v4278
        %v4410 = vunpack.c.l.b16 %v4279
        %v4411 = vunpack.c.l.b16 %v4280
        %v4412 = vunpack.c.l.b16 %v4281
        %v4413 = vunpack.c.l.b16 %v4282
        %v4414 = vunpack.c.l.b16 %v4283
        %v4415 = vunpack.c.l.b16 %v4284
        %v4416 = vunpack.c.l.b16 %v4285
        %v4417 = vunpack.c.l.b16 %v4286
        %v4418 = vunpack.c.l.b16 %v4287
        %v4419 = vunpack.c.l.b16 %v4288
        %v4420 = vunpack.c.l.b16 %v4289
        %v4421 = vunpack.c.l.b16 %v4290
        %v4422 = vunpack.c.l.b16 %v4291
        %v4423 = vunpack.c.l.b16 %v4292
        %v4424 = vunpack.c.l.b16 %v4293
        %v4425 = vunpack.c.l.b16 %v4294
        %v4426 = vunpack.c.l.b16 %v4295
        %v4427 = vunpack.c.l.b16 %v4296
        %v4428 = vunpack.c.l.b16 %v4297
        %v4429 = vunpack.c.l.b16 %v4298
        %v4430 = vunpack.c.l.b16 %v4299
        %v4431 = vunpack.c.l.b16 %v4300
        %v4432 = vunpack.c.l.b16 %v4301
        %v4433 = vunpack.c.l.b16 %v4302
        %v4434 = vunpack.c.l.b16 %v4303
        %v4435 = vpack.c.b16 %v4372, %v4371
        %v4436 = vpack.c.b16 %v4374, %v4373
        %v4437 = vpack.c.b16 %v4376, %v4375
        %v4438 = vpack.c.b16 %v4378, %v4377
        %v4439 = vpack.c.b16 %v4380, %v4379
        %v4440 = vpack.c.b16 %v4382, %v4381
        %v4441 = vpack.c.b16 %v4384, %v4383
        %v4442 = vpack.c.b16 %v4386, %v4385
        %v4443 = vpack.c.b16 %v4388, %v4387
        %v4444 = vpack.c.b16 %v4390, %v4389
        %v4445 = vpack.c.b16 %v4392, %v4391
        %v4446 = vpack.c.b16 %v4394, %v4393
        %v4447 = vpack.c.b16 %v4396, %v4395
        %v4448 = vpack.c.b16 %v4398, %v4397
        %v4449 = vpack.c.b16 %v4400, %v4399
        %v4450 = vpack.c.b16 %v4402, %v4401
        %v4451 = vpack.c.b16 %v4404, %v4403
        %v4452 = vpack.c.b16 %v4406, %v4405
        %v4453 = vpack.c.b16 %v4408, %v4407
        %v4454 = vpack.c.b16 %v4410, %v4409
        %v4455 = vpack.c.b16 %v4412, %v4411
        %v4456 = vpack.c.b16 %v4414, %v4413
        %v4457 = vpack.c.b16 %v4416, %v4415
        %v4458 = vpack.c.b16 %v4418, %v4417
        %v4459 = vpack.c.b16 %v4420, %v4419
        %v4460 = vpack.c.b16 %v4422, %v4421
        %v4461 = vpack.c.b16 %v4424, %v4423
        %v4462 = vpack.c.b16 %v4426, %v4425
        %v4463 = vpack.c.b16 %v4428, %v4427
        %v4464 = vpack.c.b16 %v4430, %v4429
        %v4465 = vpack.c.b16 %v4432, %v4431
        %v4466 = vpack.c.b16 %v4434, %v4433
        %v4469 = vunpack.c.l.b16 %v4305
        %v4470 = vunpack.c.l.b16 %v4306
        %v4471 = vpack.c.b16 %v4470, %v4469
        %v4473 = vsel %vm440, %v4435, 0
        %v4476 = vsel %vm440, %v4436, 0
        %v4479 = vsel %vm440, %v4437, 0
        %v4482 = vsel %vm440, %v4438, 0
        %v4485 = vsel %vm440, %v4439, 0
        %v4488 = vsel %vm440, %v4440, 0
        %v4491 = vsel %vm440, %v4441, 0
        %v4494 = vsel %vm440, %v4442, 0
        %v4497 = vsel %vm440, %v4443, 0
        %v4500 = vsel %vm440, %v4444, 0
        %v4503 = vsel %vm440, %v4445, 0
        %v4506 = vsel %vm440, %v4446, 0
        %v4509 = vsel %vm440, %v4447, 0
        %v4512 = vsel %vm440, %v4448, 0
        %v4515 = vsel %vm440, %v4449, 0
        %v4518 = vsel %vm440, %v4450, 0
        %v4521 = vsel %vm440, %v4451, 0
        %v4524 = vsel %vm440, %v4452, 0
        %v4527 = vsel %vm440, %v4453, 0
        %v4530 = vsel %vm440, %v4454, 0
        %v4533 = vsel %vm440, %v4455, 0
        %v4536 = vsel %vm440, %v4456, 0
        %v4539 = vsel %vm440, %v4457, 0
        %v4542 = vsel %vm440, %v4458, 0
        %v4545 = vsel %vm440, %v4459, 0
        %v4548 = vsel %vm440, %v4460, 0
        %v4551 = vsel %vm440, %v4461, 0
        %v4554 = vsel %vm440, %v4462, 0
        %v4557 = vsel %vm440, %v4463, 0
        %v4560 = vsel %vm440, %v4464, 0
        %v4563 = vsel %vm440, %v4465, 0
        %v4566 = vsel %vm440, %v4466, 0
        %v4569 = vsel %vm537, %v4471, 0
        %4571 = vmatpush.bf16.msra.mxu0 0
        %4572 = vmatpush.bf16.msra.mxu0 0
        %4573 = vmatpush.bf16.msra.mxu0 0
        %4574 = vmatpush.bf16.msra.mxu0 0
        %4575 = vmatpush.bf16.msra.mxu0 0
        %4576 = vmatpush.bf16.msra.mxu0 0
        %4577 = vmatpush.bf16.msra.mxu0 0
        %4578 = vmatpush.bf16.msra.mxu0 %v4569
        %4579 = vmatmul.bf16.gmra.mxu0 %v4473
        %v4580 = vpop.f32.mrf.mxu0
        %v4581 = vadd.f32 0.0, %v4580
        %v4582 = vpop.f32.mrf.mxu0
        %v4583 = vadd.f32 0.0, %v4582
        %4584 = vmatmul.bf16.gmra.mxu0 %v4476
        %v4585 = vpop.f32.mrf.mxu0
        %v4586 = vadd.f32 0.0, %v4585
        %v4587 = vpop.f32.mrf.mxu0
        %v4588 = vadd.f32 0.0, %v4587
        %4589 = vmatmul.bf16.gmra.mxu0 %v4479
        %v4590 = vpop.f32.mrf.mxu0
        %v4591 = vadd.f32 0.0, %v4590
        %v4592 = vpop.f32.mrf.mxu0
        %v4593 = vadd.f32 0.0, %v4592
        %4594 = vmatmul.bf16.gmra.mxu0 %v4482
        %v4595 = vpop.f32.mrf.mxu0
        %v4596 = vadd.f32 0.0, %v4595
        %v4597 = vpop.f32.mrf.mxu0
        %v4598 = vadd.f32 0.0, %v4597
        %4599 = vmatmul.bf16.gmra.mxu0 %v4485
        %v4600 = vpop.f32.mrf.mxu0
        %v4601 = vadd.f32 0.0, %v4600
        %v4602 = vpop.f32.mrf.mxu0
        %v4603 = vadd.f32 0.0, %v4602
        %4604 = vmatmul.bf16.gmra.mxu0 %v4488
        %v4605 = vpop.f32.mrf.mxu0
        %v4606 = vadd.f32 0.0, %v4605
        %v4607 = vpop.f32.mrf.mxu0
        %v4608 = vadd.f32 0.0, %v4607
        %4609 = vmatmul.bf16.gmra.mxu0 %v4491
        %v4610 = vpop.f32.mrf.mxu0
        %v4611 = vadd.f32 0.0, %v4610
        %v4612 = vpop.f32.mrf.mxu0
        %v4613 = vadd.f32 0.0, %v4612
        %4614 = vmatmul.bf16.gmra.mxu0 %v4494
        %v4615 = vpop.f32.mrf.mxu0
        %v4616 = vadd.f32 0.0, %v4615
        %v4617 = vpop.f32.mrf.mxu0
        %v4618 = vadd.f32 0.0, %v4617
        %4619 = vmatmul.bf16.gmra.mxu0 %v4497
        %v4620 = vpop.f32.mrf.mxu0
        %v4621 = vadd.f32 0.0, %v4620
        %v4622 = vpop.f32.mrf.mxu0
        %v4623 = vadd.f32 0.0, %v4622
        %4624 = vmatmul.bf16.gmra.mxu0 %v4500
        %v4625 = vpop.f32.mrf.mxu0
        %v4626 = vadd.f32 0.0, %v4625
        %v4627 = vpop.f32.mrf.mxu0
        %v4628 = vadd.f32 0.0, %v4627
        %4629 = vmatmul.bf16.gmra.mxu0 %v4503
        %v4630 = vpop.f32.mrf.mxu0
        %v4631 = vadd.f32 0.0, %v4630
        %v4632 = vpop.f32.mrf.mxu0
        %v4633 = vadd.f32 0.0, %v4632
        %4634 = vmatmul.bf16.gmra.mxu0 %v4506
        %v4635 = vpop.f32.mrf.mxu0
        %v4636 = vadd.f32 0.0, %v4635
        %v4637 = vpop.f32.mrf.mxu0
        %v4638 = vadd.f32 0.0, %v4637
        %4639 = vmatmul.bf16.gmra.mxu0 %v4509
        %v4640 = vpop.f32.mrf.mxu0
        %v4641 = vadd.f32 0.0, %v4640
        %v4642 = vpop.f32.mrf.mxu0
        %v4643 = vadd.f32 0.0, %v4642
        %4644 = vmatmul.bf16.gmra.mxu0 %v4512
        %v4645 = vpop.f32.mrf.mxu0
        %v4646 = vadd.f32 0.0, %v4645
        %v4647 = vpop.f32.mrf.mxu0
        %v4648 = vadd.f32 0.0, %v4647
        %4649 = vmatmul.bf16.gmra.mxu0 %v4515
        %v4650 = vpop.f32.mrf.mxu0
        %v4651 = vadd.f32 0.0, %v4650
        %v4652 = vpop.f32.mrf.mxu0
        %v4653 = vadd.f32 0.0, %v4652
        %4654 = vmatmul.bf16.gmra.mxu0 %v4518
        %v4655 = vpop.f32.mrf.mxu0
        %v4656 = vadd.f32 0.0, %v4655
        %v4657 = vpop.f32.mrf.mxu0
        %v4658 = vadd.f32 0.0, %v4657
        %4659 = vmatmul.bf16.gmra.mxu0 %v4521
        %v4660 = vpop.f32.mrf.mxu0
        %v4661 = vadd.f32 0.0, %v4660
        %v4662 = vpop.f32.mrf.mxu0
        %v4663 = vadd.f32 0.0, %v4662
        %4664 = vmatmul.bf16.gmra.mxu0 %v4524
        %v4665 = vpop.f32.mrf.mxu0
        %v4666 = vadd.f32 0.0, %v4665
        %v4667 = vpop.f32.mrf.mxu0
        %v4668 = vadd.f32 0.0, %v4667
        %4669 = vmatmul.bf16.gmra.mxu0 %v4527
        %v4670 = vpop.f32.mrf.mxu0
        %v4671 = vadd.f32 0.0, %v4670
        %v4672 = vpop.f32.mrf.mxu0
        %v4673 = vadd.f32 0.0, %v4672
        %4674 = vmatmul.bf16.gmra.mxu0 %v4530
        %v4675 = vpop.f32.mrf.mxu0
        %v4676 = vadd.f32 0.0, %v4675
        %v4677 = vpop.f32.mrf.mxu0
        %v4678 = vadd.f32 0.0, %v4677
        %4679 = vmatmul.bf16.gmra.mxu0 %v4533
        %v4680 = vpop.f32.mrf.mxu0
        %v4681 = vadd.f32 0.0, %v4680
        %v4682 = vpop.f32.mrf.mxu0
        %v4683 = vadd.f32 0.0, %v4682
        %4684 = vmatmul.bf16.gmra.mxu0 %v4536
        %v4685 = vpop.f32.mrf.mxu0
        %v4686 = vadd.f32 0.0, %v4685
        %v4687 = vpop.f32.mrf.mxu0
        %v4688 = vadd.f32 0.0, %v4687
        %4689 = vmatmul.bf16.gmra.mxu0 %v4539
        %v4690 = vpop.f32.mrf.mxu0
        %v4691 = vadd.f32 0.0, %v4690
        %v4692 = vpop.f32.mrf.mxu0
        %v4693 = vadd.f32 0.0, %v4692
        %4694 = vmatmul.bf16.gmra.mxu0 %v4542
        %v4695 = vpop.f32.mrf.mxu0
        %v4696 = vadd.f32 0.0, %v4695
        %v4697 = vpop.f32.mrf.mxu0
        %v4698 = vadd.f32 0.0, %v4697
        %4699 = vmatmul.bf16.gmra.mxu0 %v4545
        %v4700 = vpop.f32.mrf.mxu0
        %v4701 = vadd.f32 0.0, %v4700
        %v4702 = vpop.f32.mrf.mxu0
        %v4703 = vadd.f32 0.0, %v4702
        %4704 = vmatmul.bf16.gmra.mxu0 %v4548
        %v4705 = vpop.f32.mrf.mxu0
        %v4706 = vadd.f32 0.0, %v4705
        %v4707 = vpop.f32.mrf.mxu0
        %v4708 = vadd.f32 0.0, %v4707
        %4709 = vmatmul.bf16.gmra.mxu0 %v4551
        %v4710 = vpop.f32.mrf.mxu0
        %v4711 = vadd.f32 0.0, %v4710
        %v4712 = vpop.f32.mrf.mxu0
        %v4713 = vadd.f32 0.0, %v4712
        %4714 = vmatmul.bf16.gmra.mxu0 %v4554
        %v4715 = vpop.f32.mrf.mxu0
        %v4716 = vadd.f32 0.0, %v4715
        %v4717 = vpop.f32.mrf.mxu0
        %v4718 = vadd.f32 0.0, %v4717
        %4719 = vmatmul.bf16.gmra.mxu0 %v4557
        %v4720 = vpop.f32.mrf.mxu0
        %v4721 = vadd.f32 0.0, %v4720
        %v4722 = vpop.f32.mrf.mxu0
        %v4723 = vadd.f32 0.0, %v4722
        %4724 = vmatmul.bf16.gmra.mxu0 %v4560
        %v4725 = vpop.f32.mrf.mxu0
        %v4726 = vadd.f32 0.0, %v4725
        %v4727 = vpop.f32.mrf.mxu0
        %v4728 = vadd.f32 0.0, %v4727
        %4729 = vmatmul.bf16.gmra.mxu0 %v4563
        %v4730 = vpop.f32.mrf.mxu0
        %v4731 = vadd.f32 0.0, %v4730
        %v4732 = vpop.f32.mrf.mxu0
        %v4733 = vadd.f32 0.0, %v4732
        %4734 = vmatmul.bf16.gmra.mxu0 %v4566
        %v4735 = vpop.f32.mrf.mxu0
        %v4736 = vadd.f32 0.0, %v4735
        %v4737 = vpop.f32.mrf.mxu0
        %v4738 = vadd.f32 0.0, %v4737
        %4739 = vdwg.mxu0
        %v4740 = vld [vmem:[#allocation2] sm:$0xff]
        %v4741 = vld [vmem:[#allocation2 + $0x8] sm:$0xff]
        %v4742 = vld [vmem:[#allocation2 + $0x10] sm:$0xff]
        %v4743 = vld [vmem:[#allocation2 + $0x18] sm:$0xff]
        %v4744 = vld [vmem:[#allocation2 + $0x20] sm:$0xff]
        %v4745 = vld [vmem:[#allocation2 + $0x28] sm:$0xff]
        %v4746 = vld [vmem:[#allocation2 + $0x30] sm:$0xff]
        %v4747 = vld [vmem:[#allocation2 + $0x38] sm:$0xff]
        %v4748 = vld [vmem:[#allocation2 + $0x40] sm:$0xff]
        %v4749 = vld [vmem:[#allocation2 + $0x48] sm:$0xff]
        %v4750 = vld [vmem:[#allocation2 + $0x50] sm:$0xff]
        %v4751 = vld [vmem:[#allocation2 + $0x58] sm:$0xff]
        %v4752 = vld [vmem:[#allocation2 + $0x60] sm:$0xff]
        %v4753 = vld [vmem:[#allocation2 + $0x68] sm:$0xff]
        %v4754 = vld [vmem:[#allocation2 + $0x70] sm:$0xff]
        %v4755 = vld [vmem:[#allocation2 + $0x78] sm:$0xff]
        %v4756 = vld [vmem:[#allocation2 + $0x80] sm:$0xff]
        %v4757 = vld [vmem:[#allocation2 + $0x88] sm:$0xff]
        %v4758 = vld [vmem:[#allocation2 + $0x90] sm:$0xff]
        %v4759 = vld [vmem:[#allocation2 + $0x98] sm:$0xff]
        %v4760 = vld [vmem:[#allocation2 + $0xa0] sm:$0xff]
        %v4761 = vld [vmem:[#allocation2 + $0xa8] sm:$0xff]
        %v4762 = vld [vmem:[#allocation2 + $0xb0] sm:$0xff]
        %v4763 = vld [vmem:[#allocation2 + $0xb8] sm:$0xff]
        %v4764 = vld [vmem:[#allocation2 + $0xc0] sm:$0xff]
        %v4765 = vld [vmem:[#allocation2 + $0xc8] sm:$0xff]
        %v4766 = vld [vmem:[#allocation2 + $0xd0] sm:$0xff]
        %v4767 = vld [vmem:[#allocation2 + $0xd8] sm:$0xff]
        %v4768 = vld [vmem:[#allocation2 + $0xe0] sm:$0xff]
        %v4769 = vld [vmem:[#allocation2 + $0xe8] sm:$0xff]
        %v4770 = vld [vmem:[#allocation2 + $0xf0] sm:$0xff]
        %v4771 = vld [vmem:[#allocation2 + $0xf8] sm:$0xff]
        %v4772 = vld [vmem:[#allocation2 + $0x100] sm:$0xff]
        %v4773 = vld [vmem:[#allocation2 + $0x108] sm:$0xff]
        %v4774 = vld [vmem:[#allocation2 + $0x110] sm:$0xff]
        %v4775 = vld [vmem:[#allocation2 + $0x118] sm:$0xff]
        %v4776 = vld [vmem:[#allocation2 + $0x120] sm:$0xff]
        %v4777 = vld [vmem:[#allocation2 + $0x128] sm:$0xff]
        %v4778 = vld [vmem:[#allocation2 + $0x130] sm:$0xff]
        %v4779 = vld [vmem:[#allocation2 + $0x138] sm:$0xff]
        %v4780 = vld [vmem:[#allocation2 + $0x140] sm:$0xff]
        %v4781 = vld [vmem:[#allocation2 + $0x148] sm:$0xff]
        %v4782 = vld [vmem:[#allocation2 + $0x150] sm:$0xff]
        %v4783 = vld [vmem:[#allocation2 + $0x158] sm:$0xff]
        %v4784 = vld [vmem:[#allocation2 + $0x160] sm:$0xff]
        %v4785 = vld [vmem:[#allocation2 + $0x168] sm:$0xff]
        %v4786 = vld [vmem:[#allocation2 + $0x170] sm:$0xff]
        %v4787 = vld [vmem:[#allocation2 + $0x178] sm:$0xff]
        %v4788 = vld [vmem:[#allocation2 + $0x180] sm:$0xff]
        %v4789 = vld [vmem:[#allocation2 + $0x188] sm:$0xff]
        %v4790 = vld [vmem:[#allocation2 + $0x190] sm:$0xff]
        %v4791 = vld [vmem:[#allocation2 + $0x198] sm:$0xff]
        %v4792 = vld [vmem:[#allocation2 + $0x1a0] sm:$0xff]
        %v4793 = vld [vmem:[#allocation2 + $0x1a8] sm:$0xff]
        %v4794 = vld [vmem:[#allocation2 + $0x1b0] sm:$0xff]
        %v4795 = vld [vmem:[#allocation2 + $0x1b8] sm:$0xff]
        %v4796 = vld [vmem:[#allocation2 + $0x1c0] sm:$0xff]
        %v4797 = vld [vmem:[#allocation2 + $0x1c8] sm:$0xff]
        %v4798 = vld [vmem:[#allocation2 + $0x1d0] sm:$0xff]
        %v4799 = vld [vmem:[#allocation2 + $0x1d8] sm:$0xff]
        %v4800 = vld [vmem:[#allocation2 + $0x1e0] sm:$0xff]
        %v4801 = vld [vmem:[#allocation2 + $0x1e8] sm:$0xff]
        %v4802 = vld [vmem:[#allocation2 + $0x1f0] sm:$0xff]
        %v4803 = vld [vmem:[#allocation2 + $0x1f8] sm:$0xff]
        %v4804 = vadd.f32 %v4740, %v4581
        %v4805 = vadd.f32 %v4741, %v4583
        %v4806 = vadd.f32 %v4742, %v4586
        %v4807 = vadd.f32 %v4743, %v4588
        %v4808 = vadd.f32 %v4744, %v4591
        %v4809 = vadd.f32 %v4745, %v4593
        %v4810 = vadd.f32 %v4746, %v4596
        %v4811 = vadd.f32 %v4747, %v4598
        %v4812 = vadd.f32 %v4748, %v4601
        %v4813 = vadd.f32 %v4749, %v4603
        %v4814 = vadd.f32 %v4750, %v4606
        %v4815 = vadd.f32 %v4751, %v4608
        %v4816 = vadd.f32 %v4752, %v4611
        %v4817 = vadd.f32 %v4753, %v4613
        %v4818 = vadd.f32 %v4754, %v4616
        %v4819 = vadd.f32 %v4755, %v4618
        %v4820 = vadd.f32 %v4756, %v4621
        %v4821 = vadd.f32 %v4757, %v4623
        %v4822 = vadd.f32 %v4758, %v4626
        %v4823 = vadd.f32 %v4759, %v4628
        %v4824 = vadd.f32 %v4760, %v4631
        %v4825 = vadd.f32 %v4761, %v4633
        %v4826 = vadd.f32 %v4762, %v4636
        %v4827 = vadd.f32 %v4763, %v4638
        %v4828 = vadd.f32 %v4764, %v4641
        %v4829 = vadd.f32 %v4765, %v4643
        %v4830 = vadd.f32 %v4766, %v4646
        %v4831 = vadd.f32 %v4767, %v4648
        %v4832 = vadd.f32 %v4768, %v4651
        %v4833 = vadd.f32 %v4769, %v4653
        %v4834 = vadd.f32 %v4770, %v4656
        %v4835 = vadd.f32 %v4771, %v4658
        %v4836 = vadd.f32 %v4772, %v4661
        %v4837 = vadd.f32 %v4773, %v4663
        %v4838 = vadd.f32 %v4774, %v4666
        %v4839 = vadd.f32 %v4775, %v4668
        %v4840 = vadd.f32 %v4776, %v4671
        %v4841 = vadd.f32 %v4777, %v4673
        %v4842 = vadd.f32 %v4778, %v4676
        %v4843 = vadd.f32 %v4779, %v4678
        %v4844 = vadd.f32 %v4780, %v4681
        %v4845 = vadd.f32 %v4781, %v4683
        %v4846 = vadd.f32 %v4782, %v4686
        %v4847 = vadd.f32 %v4783, %v4688
        %v4848 = vadd.f32 %v4784, %v4691
        %v4849 = vadd.f32 %v4785, %v4693
        %v4850 = vadd.f32 %v4786, %v4696
        %v4851 = vadd.f32 %v4787, %v4698
        %v4852 = vadd.f32 %v4788, %v4701
        %v4853 = vadd.f32 %v4789, %v4703
        %v4854 = vadd.f32 %v4790, %v4706
        %v4855 = vadd.f32 %v4791, %v4708
        %v4856 = vadd.f32 %v4792, %v4711
        %v4857 = vadd.f32 %v4793, %v4713
        %v4858 = vadd.f32 %v4794, %v4716
        %v4859 = vadd.f32 %v4795, %v4718
        %v4860 = vadd.f32 %v4796, %v4721
        %v4861 = vadd.f32 %v4797, %v4723
        %v4862 = vadd.f32 %v4798, %v4726
        %v4863 = vadd.f32 %v4799, %v4728
        %v4864 = vadd.f32 %v4800, %v4731
        %v4865 = vadd.f32 %v4801, %v4733
        %v4866 = vadd.f32 %v4802, %v4736
        %v4867 = vadd.f32 %v4803, %v4738
        %4868 = vst [vmem:[#allocation2] sm:$0xff] %v4804
        %4869 = vst [vmem:[#allocation2 + $0x8] sm:$0xff] %v4805
        %4870 = vst [vmem:[#allocation2 + $0x10] sm:$0xff] %v4806
        %4871 = vst [vmem:[#allocation2 + $0x18] sm:$0xff] %v4807
        %4872 = vst [vmem:[#allocation2 + $0x20] sm:$0xff] %v4808
        %4873 = vst [vmem:[#allocation2 + $0x28] sm:$0xff] %v4809
        %4874 = vst [vmem:[#allocation2 + $0x30] sm:$0xff] %v4810
        %4875 = vst [vmem:[#allocation2 + $0x38] sm:$0xff] %v4811
        %4876 = vst [vmem:[#allocation2 + $0x40] sm:$0xff] %v4812
        %4877 = vst [vmem:[#allocation2 + $0x48] sm:$0xff] %v4813
        %4878 = vst [vmem:[#allocation2 + $0x50] sm:$0xff] %v4814
        %4879 = vst [vmem:[#allocation2 + $0x58] sm:$0xff] %v4815
        %4880 = vst [vmem:[#allocation2 + $0x60] sm:$0xff] %v4816
        %4881 = vst [vmem:[#allocation2 + $0x68] sm:$0xff] %v4817
        %4882 = vst [vmem:[#allocation2 + $0x70] sm:$0xff] %v4818
        %4883 = vst [vmem:[#allocation2 + $0x78] sm:$0xff] %v4819
        %4884 = vst [vmem:[#allocation2 + $0x80] sm:$0xff] %v4820
        %4885 = vst [vmem:[#allocation2 + $0x88] sm:$0xff] %v4821
        %4886 = vst [vmem:[#allocation2 + $0x90] sm:$0xff] %v4822
        %4887 = vst [vmem:[#allocation2 + $0x98] sm:$0xff] %v4823
        %4888 = vst [vmem:[#allocation2 + $0xa0] sm:$0xff] %v4824
        %4889 = vst [vmem:[#allocation2 + $0xa8] sm:$0xff] %v4825
        %4890 = vst [vmem:[#allocation2 + $0xb0] sm:$0xff] %v4826
        %4891 = vst [vmem:[#allocation2 + $0xb8] sm:$0xff] %v4827
        %4892 = vst [vmem:[#allocation2 + $0xc0] sm:$0xff] %v4828
        %4893 = vst [vmem:[#allocation2 + $0xc8] sm:$0xff] %v4829
        %4894 = vst [vmem:[#allocation2 + $0xd0] sm:$0xff] %v4830
        %4895 = vst [vmem:[#allocation2 + $0xd8] sm:$0xff] %v4831
        %4896 = vst [vmem:[#allocation2 + $0xe0] sm:$0xff] %v4832
        %4897 = vst [vmem:[#allocation2 + $0xe8] sm:$0xff] %v4833
        %4898 = vst [vmem:[#allocation2 + $0xf0] sm:$0xff] %v4834
        %4899 = vst [vmem:[#allocation2 + $0xf8] sm:$0xff] %v4835
        %4900 = vst [vmem:[#allocation2 + $0x100] sm:$0xff] %v4836
        %4901 = vst [vmem:[#allocation2 + $0x108] sm:$0xff] %v4837
        %4902 = vst [vmem:[#allocation2 + $0x110] sm:$0xff] %v4838
        %4903 = vst [vmem:[#allocation2 + $0x118] sm:$0xff] %v4839
        %4904 = vst [vmem:[#allocation2 + $0x120] sm:$0xff] %v4840
        %4905 = vst [vmem:[#allocation2 + $0x128] sm:$0xff] %v4841
        %4906 = vst [vmem:[#allocation2 + $0x130] sm:$0xff] %v4842
        %4907 = vst [vmem:[#allocation2 + $0x138] sm:$0xff] %v4843
        %4908 = vst [vmem:[#allocation2 + $0x140] sm:$0xff] %v4844
        %4909 = vst [vmem:[#allocation2 + $0x148] sm:$0xff] %v4845
        %4910 = vst [vmem:[#allocation2 + $0x150] sm:$0xff] %v4846
        %4911 = vst [vmem:[#allocation2 + $0x158] sm:$0xff] %v4847
        %4912 = vst [vmem:[#allocation2 + $0x160] sm:$0xff] %v4848
        %4913 = vst [vmem:[#allocation2 + $0x168] sm:$0xff] %v4849
        %4914 = vst [vmem:[#allocation2 + $0x170] sm:$0xff] %v4850
        %4915 = vst [vmem:[#allocation2 + $0x178] sm:$0xff] %v4851
        %4916 = vst [vmem:[#allocation2 + $0x180] sm:$0xff] %v4852
        %4917 = vst [vmem:[#allocation2 + $0x188] sm:$0xff] %v4853
        %4918 = vst [vmem:[#allocation2 + $0x190] sm:$0xff] %v4854
        %4919 = vst [vmem:[#allocation2 + $0x198] sm:$0xff] %v4855
        %4920 = vst [vmem:[#allocation2 + $0x1a0] sm:$0xff] %v4856
        %4921 = vst [vmem:[#allocation2 + $0x1a8] sm:$0xff] %v4857
        %4922 = vst [vmem:[#allocation2 + $0x1b0] sm:$0xff] %v4858
        %4923 = vst [vmem:[#allocation2 + $0x1b8] sm:$0xff] %v4859
        %4924 = vst [vmem:[#allocation2 + $0x1c0] sm:$0xff] %v4860
        %4925 = vst [vmem:[#allocation2 + $0x1c8] sm:$0xff] %v4861
        %4926 = vst [vmem:[#allocation2 + $0x1d0] sm:$0xff] %v4862
        %4927 = vst [vmem:[#allocation2 + $0x1d8] sm:$0xff] %v4863
        %4928 = vst [vmem:[#allocation2 + $0x1e0] sm:$0xff] %v4864
        %4929 = vst [vmem:[#allocation2 + $0x1e8] sm:$0xff] %v4865
        %4930 = vst [vmem:[#allocation2 + $0x1f0] sm:$0xff] %v4866
        %4931 = vst [vmem:[#allocation2 + $0x1f8] sm:$0xff] %v4867
        %s4932 = scalar_lea.vmem %s179, 84 [#allocation3]
        %v4933 = vld [vmem:[%s4932] sm:$0xf]
        %v4934 = vld [vmem:[%s4932 + $0x4] sm:$0xf]
        %v4935 = vld [vmem:[%s4932 + $0x8] sm:$0xf]
        %v4936 = vld [vmem:[%s4932 + $0xc] sm:$0xf]
        %v4937 = vld [vmem:[%s4932 + $0x10] sm:$0xf]
        %v4938 = vld [vmem:[%s4932 + $0x14] sm:$0xf]
        %v4939 = vld [vmem:[%s4932 + $0x18] sm:$0xf]
        %v4940 = vld [vmem:[%s4932 + $0x1c] sm:$0xf]
        %v4941 = vld [vmem:[%s4932 + $0x28] sm:$0xf]
        %v4942 = vld [vmem:[%s4932 + $0x2c] sm:$0xf]
        %v4943 = vld [vmem:[%s4932 + $0x30] sm:$0xf]
        %v4944 = vld [vmem:[%s4932 + $0x34] sm:$0xf]
        %v4945 = vld [vmem:[%s4932 + $0x38] sm:$0xf]
        %v4946 = vld [vmem:[%s4932 + $0x3c] sm:$0xf]
        %v4947 = vld [vmem:[%s4932 + $0x40] sm:$0xf]
        %v4948 = vld [vmem:[%s4932 + $0x44] sm:$0xf]
        %v4949 = vld [vmem:[%s4932 + $0x50] sm:$0xf]
        %v4950 = vld [vmem:[%s4932 + $0x54] sm:$0xf]
        %v4951 = vld [vmem:[%s4932 + $0x58] sm:$0xf]
        %v4952 = vld [vmem:[%s4932 + $0x5c] sm:$0xf]
        %v4953 = vld [vmem:[%s4932 + $0x60] sm:$0xf]
        %v4954 = vld [vmem:[%s4932 + $0x64] sm:$0xf]
        %v4955 = vld [vmem:[%s4932 + $0x68] sm:$0xf]
        %v4956 = vld [vmem:[%s4932 + $0x6c] sm:$0xf]
        %v4957 = vld [vmem:[%s4932 + $0x78] sm:$0xf]
        %v4958 = vld [vmem:[%s4932 + $0x7c] sm:$0xf]
        %v4959 = vld [vmem:[%s4932 + $0x80] sm:$0xf]
        %v4960 = vld [vmem:[%s4932 + $0x84] sm:$0xf]
        %v4961 = vld [vmem:[%s4932 + $0x88] sm:$0xf]
        %v4962 = vld [vmem:[%s4932 + $0x8c] sm:$0xf]
        %v4963 = vld [vmem:[%s4932 + $0x90] sm:$0xf]
        %v4964 = vld [vmem:[%s4932 + $0x94] sm:$0xf]
        %v4965 = vld [vmem:[%s4932 + $0xa0] sm:$0xf]
        %v4966 = vld [vmem:[%s4932 + $0xa4] sm:$0xf]
        %v4967 = vld [vmem:[%s4932 + $0xa8] sm:$0xf]
        %v4968 = vld [vmem:[%s4932 + $0xac] sm:$0xf]
        %v4969 = vld [vmem:[%s4932 + $0xb0] sm:$0xf]
        %v4970 = vld [vmem:[%s4932 + $0xb4] sm:$0xf]
        %v4971 = vld [vmem:[%s4932 + $0xb8] sm:$0xf]
        %v4972 = vld [vmem:[%s4932 + $0xbc] sm:$0xf]
        %v4973 = vld [vmem:[%s4932 + $0xc8] sm:$0xf]
        %v4974 = vld [vmem:[%s4932 + $0xcc] sm:$0xf]
        %v4975 = vld [vmem:[%s4932 + $0xd0] sm:$0xf]
        %v4976 = vld [vmem:[%s4932 + $0xd4] sm:$0xf]
        %v4977 = vld [vmem:[%s4932 + $0xd8] sm:$0xf]
        %v4978 = vld [vmem:[%s4932 + $0xdc] sm:$0xf]
        %v4979 = vld [vmem:[%s4932 + $0xe0] sm:$0xf]
        %v4980 = vld [vmem:[%s4932 + $0xe4] sm:$0xf]
        %v4981 = vld [vmem:[%s4932 + $0xf0] sm:$0xf]
        %v4982 = vld [vmem:[%s4932 + $0xf4] sm:$0xf]
        %v4983 = vld [vmem:[%s4932 + $0xf8] sm:$0xf]
        %v4984 = vld [vmem:[%s4932 + $0xfc] sm:$0xf]
        %v4985 = vld [vmem:[%s4932 + $0x100] sm:$0xf]
        %v4986 = vld [vmem:[%s4932 + $0x104] sm:$0xf]
        %v4987 = vld [vmem:[%s4932 + $0x108] sm:$0xf]
        %v4988 = vld [vmem:[%s4932 + $0x10c] sm:$0xf]
        %v4989 = vld [vmem:[%s4932 + $0x118] sm:$0xf]
        %v4990 = vld [vmem:[%s4932 + $0x11c] sm:$0xf]
        %v4991 = vld [vmem:[%s4932 + $0x120] sm:$0xf]
        %v4992 = vld [vmem:[%s4932 + $0x124] sm:$0xf]
        %v4993 = vld [vmem:[%s4932 + $0x128] sm:$0xf]
        %v4994 = vld [vmem:[%s4932 + $0x12c] sm:$0xf]
        %v4995 = vld [vmem:[%s4932 + $0x130] sm:$0xf]
        %v4996 = vld [vmem:[%s4932 + $0x134] sm:$0xf]
        %s4997 = scalar_lea.vmem [#allocation6], 56
        %v4998 = vld [vmem:[%s4997] sm:$0xf]
        %v4999 = vld [vmem:[%s4997 + $0x4] sm:$0x3]
        %v5064 = vunpack.c.l.b16 %v4933
        %v5065 = vunpack.c.l.b16 %v4934
        %v5066 = vunpack.c.l.b16 %v4935
        %v5067 = vunpack.c.l.b16 %v4936
        %v5068 = vunpack.c.l.b16 %v4937
        %v5069 = vunpack.c.l.b16 %v4938
        %v5070 = vunpack.c.l.b16 %v4939
        %v5071 = vunpack.c.l.b16 %v4940
        %v5072 = vunpack.c.l.b16 %v4941
        %v5073 = vunpack.c.l.b16 %v4942
        %v5074 = vunpack.c.l.b16 %v4943
        %v5075 = vunpack.c.l.b16 %v4944
        %v5076 = vunpack.c.l.b16 %v4945
        %v5077 = vunpack.c.l.b16 %v4946
        %v5078 = vunpack.c.l.b16 %v4947
        %v5079 = vunpack.c.l.b16 %v4948
        %v5080 = vunpack.c.l.b16 %v4949
        %v5081 = vunpack.c.l.b16 %v4950
        %v5082 = vunpack.c.l.b16 %v4951
        %v5083 = vunpack.c.l.b16 %v4952
        %v5084 = vunpack.c.l.b16 %v4953
        %v5085 = vunpack.c.l.b16 %v4954
        %v5086 = vunpack.c.l.b16 %v4955
        %v5087 = vunpack.c.l.b16 %v4956
        %v5088 = vunpack.c.l.b16 %v4957
        %v5089 = vunpack.c.l.b16 %v4958
        %v5090 = vunpack.c.l.b16 %v4959
        %v5091 = vunpack.c.l.b16 %v4960
        %v5092 = vunpack.c.l.b16 %v4961
        %v5093 = vunpack.c.l.b16 %v4962
        %v5094 = vunpack.c.l.b16 %v4963
        %v5095 = vunpack.c.l.b16 %v4964
        %v5096 = vunpack.c.l.b16 %v4965
        %v5097 = vunpack.c.l.b16 %v4966
        %v5098 = vunpack.c.l.b16 %v4967
        %v5099 = vunpack.c.l.b16 %v4968
        %v5100 = vunpack.c.l.b16 %v4969
        %v5101 = vunpack.c.l.b16 %v4970
        %v5102 = vunpack.c.l.b16 %v4971
        %v5103 = vunpack.c.l.b16 %v4972
        %v5104 = vunpack.c.l.b16 %v4973
        %v5105 = vunpack.c.l.b16 %v4974
        %v5106 = vunpack.c.l.b16 %v4975
        %v5107 = vunpack.c.l.b16 %v4976
        %v5108 = vunpack.c.l.b16 %v4977
        %v5109 = vunpack.c.l.b16 %v4978
        %v5110 = vunpack.c.l.b16 %v4979
        %v5111 = vunpack.c.l.b16 %v4980
        %v5112 = vunpack.c.l.b16 %v4981
        %v5113 = vunpack.c.l.b16 %v4982
        %v5114 = vunpack.c.l.b16 %v4983
        %v5115 = vunpack.c.l.b16 %v4984
        %v5116 = vunpack.c.l.b16 %v4985
        %v5117 = vunpack.c.l.b16 %v4986
        %v5118 = vunpack.c.l.b16 %v4987
        %v5119 = vunpack.c.l.b16 %v4988
        %v5120 = vunpack.c.l.b16 %v4989
        %v5121 = vunpack.c.l.b16 %v4990
        %v5122 = vunpack.c.l.b16 %v4991
        %v5123 = vunpack.c.l.b16 %v4992
        %v5124 = vunpack.c.l.b16 %v4993
        %v5125 = vunpack.c.l.b16 %v4994
        %v5126 = vunpack.c.l.b16 %v4995
        %v5127 = vunpack.c.l.b16 %v4996
        %v5128 = vpack.c.b16 %v5065, %v5064
        %v5129 = vpack.c.b16 %v5067, %v5066
        %v5130 = vpack.c.b16 %v5069, %v5068
        %v5131 = vpack.c.b16 %v5071, %v5070
        %v5132 = vpack.c.b16 %v5073, %v5072
        %v5133 = vpack.c.b16 %v5075, %v5074
        %v5134 = vpack.c.b16 %v5077, %v5076
        %v5135 = vpack.c.b16 %v5079, %v5078
        %v5136 = vpack.c.b16 %v5081, %v5080
        %v5137 = vpack.c.b16 %v5083, %v5082
        %v5138 = vpack.c.b16 %v5085, %v5084
        %v5139 = vpack.c.b16 %v5087, %v5086
        %v5140 = vpack.c.b16 %v5089, %v5088
        %v5141 = vpack.c.b16 %v5091, %v5090
        %v5142 = vpack.c.b16 %v5093, %v5092
        %v5143 = vpack.c.b16 %v5095, %v5094
        %v5144 = vpack.c.b16 %v5097, %v5096
        %v5145 = vpack.c.b16 %v5099, %v5098
        %v5146 = vpack.c.b16 %v5101, %v5100
        %v5147 = vpack.c.b16 %v5103, %v5102
        %v5148 = vpack.c.b16 %v5105, %v5104
        %v5149 = vpack.c.b16 %v5107, %v5106
        %v5150 = vpack.c.b16 %v5109, %v5108
        %v5151 = vpack.c.b16 %v5111, %v5110
        %v5152 = vpack.c.b16 %v5113, %v5112
        %v5153 = vpack.c.b16 %v5115, %v5114
        %v5154 = vpack.c.b16 %v5117, %v5116
        %v5155 = vpack.c.b16 %v5119, %v5118
        %v5156 = vpack.c.b16 %v5121, %v5120
        %v5157 = vpack.c.b16 %v5123, %v5122
        %v5158 = vpack.c.b16 %v5125, %v5124
        %v5159 = vpack.c.b16 %v5127, %v5126
        %v5162 = vunpack.c.l.b16 %v4998
        %v5163 = vunpack.c.l.b16 %v4999
        %v5164 = vpack.c.b16 %v5163, %v5162
        %v5166 = vsel %vm440, %v5128, 0
        %v5169 = vsel %vm440, %v5129, 0
        %v5172 = vsel %vm440, %v5130, 0
        %v5175 = vsel %vm440, %v5131, 0
        %v5178 = vsel %vm440, %v5132, 0
        %v5181 = vsel %vm440, %v5133, 0
        %v5184 = vsel %vm440, %v5134, 0
        %v5187 = vsel %vm440, %v5135, 0
        %v5190 = vsel %vm440, %v5136, 0
        %v5193 = vsel %vm440, %v5137, 0
        %v5196 = vsel %vm440, %v5138, 0
        %v5199 = vsel %vm440, %v5139, 0
        %v5202 = vsel %vm440, %v5140, 0
        %v5205 = vsel %vm440, %v5141, 0
        %v5208 = vsel %vm440, %v5142, 0
        %v5211 = vsel %vm440, %v5143, 0
        %v5214 = vsel %vm440, %v5144, 0
        %v5217 = vsel %vm440, %v5145, 0
        %v5220 = vsel %vm440, %v5146, 0
        %v5223 = vsel %vm440, %v5147, 0
        %v5226 = vsel %vm440, %v5148, 0
        %v5229 = vsel %vm440, %v5149, 0
        %v5232 = vsel %vm440, %v5150, 0
        %v5235 = vsel %vm440, %v5151, 0
        %v5238 = vsel %vm440, %v5152, 0
        %v5241 = vsel %vm440, %v5153, 0
        %v5244 = vsel %vm440, %v5154, 0
        %v5247 = vsel %vm440, %v5155, 0
        %v5250 = vsel %vm440, %v5156, 0
        %v5253 = vsel %vm440, %v5157, 0
        %v5256 = vsel %vm440, %v5158, 0
        %v5259 = vsel %vm440, %v5159, 0
        %v5262 = vsel %vm537, %v5164, 0
        %5264 = vmatpush.bf16.msra.mxu0 0
        %5265 = vmatpush.bf16.msra.mxu0 0
        %5266 = vmatpush.bf16.msra.mxu0 0
        %5267 = vmatpush.bf16.msra.mxu0 0
        %5268 = vmatpush.bf16.msra.mxu0 0
        %5269 = vmatpush.bf16.msra.mxu0 0
        %5270 = vmatpush.bf16.msra.mxu0 0
        %5271 = vmatpush.bf16.msra.mxu0 %v5262
        %5272 = vmatmul.bf16.gmra.mxu0 %v5166
        %v5273 = vpop.f32.mrf.mxu0
        %v5274 = vadd.f32 0.0, %v5273
        %v5275 = vpop.f32.mrf.mxu0
        %v5276 = vadd.f32 0.0, %v5275
        %5277 = vmatmul.bf16.gmra.mxu0 %v5169
        %v5278 = vpop.f32.mrf.mxu0
        %v5279 = vadd.f32 0.0, %v5278
        %v5280 = vpop.f32.mrf.mxu0
        %v5281 = vadd.f32 0.0, %v5280
        %5282 = vmatmul.bf16.gmra.mxu0 %v5172
        %v5283 = vpop.f32.mrf.mxu0
        %v5284 = vadd.f32 0.0, %v5283
        %v5285 = vpop.f32.mrf.mxu0
        %v5286 = vadd.f32 0.0, %v5285
        %5287 = vmatmul.bf16.gmra.mxu0 %v5175
        %v5288 = vpop.f32.mrf.mxu0
        %v5289 = vadd.f32 0.0, %v5288
        %v5290 = vpop.f32.mrf.mxu0
        %v5291 = vadd.f32 0.0, %v5290
        %5292 = vmatmul.bf16.gmra.mxu0 %v5178
        %v5293 = vpop.f32.mrf.mxu0
        %v5294 = vadd.f32 0.0, %v5293
        %v5295 = vpop.f32.mrf.mxu0
        %v5296 = vadd.f32 0.0, %v5295
        %5297 = vmatmul.bf16.gmra.mxu0 %v5181
        %v5298 = vpop.f32.mrf.mxu0
        %v5299 = vadd.f32 0.0, %v5298
        %v5300 = vpop.f32.mrf.mxu0
        %v5301 = vadd.f32 0.0, %v5300
        %5302 = vmatmul.bf16.gmra.mxu0 %v5184
        %v5303 = vpop.f32.mrf.mxu0
        %v5304 = vadd.f32 0.0, %v5303
        %v5305 = vpop.f32.mrf.mxu0
        %v5306 = vadd.f32 0.0, %v5305
        %5307 = vmatmul.bf16.gmra.mxu0 %v5187
        %v5308 = vpop.f32.mrf.mxu0
        %v5309 = vadd.f32 0.0, %v5308
        %v5310 = vpop.f32.mrf.mxu0
        %v5311 = vadd.f32 0.0, %v5310
        %5312 = vmatmul.bf16.gmra.mxu0 %v5190
        %v5313 = vpop.f32.mrf.mxu0
        %v5314 = vadd.f32 0.0, %v5313
        %v5315 = vpop.f32.mrf.mxu0
        %v5316 = vadd.f32 0.0, %v5315
        %5317 = vmatmul.bf16.gmra.mxu0 %v5193
        %v5318 = vpop.f32.mrf.mxu0
        %v5319 = vadd.f32 0.0, %v5318
        %v5320 = vpop.f32.mrf.mxu0
        %v5321 = vadd.f32 0.0, %v5320
        %5322 = vmatmul.bf16.gmra.mxu0 %v5196
        %v5323 = vpop.f32.mrf.mxu0
        %v5324 = vadd.f32 0.0, %v5323
        %v5325 = vpop.f32.mrf.mxu0
        %v5326 = vadd.f32 0.0, %v5325
        %5327 = vmatmul.bf16.gmra.mxu0 %v5199
        %v5328 = vpop.f32.mrf.mxu0
        %v5329 = vadd.f32 0.0, %v5328
        %v5330 = vpop.f32.mrf.mxu0
        %v5331 = vadd.f32 0.0, %v5330
        %5332 = vmatmul.bf16.gmra.mxu0 %v5202
        %v5333 = vpop.f32.mrf.mxu0
        %v5334 = vadd.f32 0.0, %v5333
        %v5335 = vpop.f32.mrf.mxu0
        %v5336 = vadd.f32 0.0, %v5335
        %5337 = vmatmul.bf16.gmra.mxu0 %v5205
        %v5338 = vpop.f32.mrf.mxu0
        %v5339 = vadd.f32 0.0, %v5338
        %v5340 = vpop.f32.mrf.mxu0
        %v5341 = vadd.f32 0.0, %v5340
        %5342 = vmatmul.bf16.gmra.mxu0 %v5208
        %v5343 = vpop.f32.mrf.mxu0
        %v5344 = vadd.f32 0.0, %v5343
        %v5345 = vpop.f32.mrf.mxu0
        %v5346 = vadd.f32 0.0, %v5345
        %5347 = vmatmul.bf16.gmra.mxu0 %v5211
        %v5348 = vpop.f32.mrf.mxu0
        %v5349 = vadd.f32 0.0, %v5348
        %v5350 = vpop.f32.mrf.mxu0
        %v5351 = vadd.f32 0.0, %v5350
        %5352 = vmatmul.bf16.gmra.mxu0 %v5214
        %v5353 = vpop.f32.mrf.mxu0
        %v5354 = vadd.f32 0.0, %v5353
        %v5355 = vpop.f32.mrf.mxu0
        %v5356 = vadd.f32 0.0, %v5355
        %5357 = vmatmul.bf16.gmra.mxu0 %v5217
        %v5358 = vpop.f32.mrf.mxu0
        %v5359 = vadd.f32 0.0, %v5358
        %v5360 = vpop.f32.mrf.mxu0
        %v5361 = vadd.f32 0.0, %v5360
        %5362 = vmatmul.bf16.gmra.mxu0 %v5220
        %v5363 = vpop.f32.mrf.mxu0
        %v5364 = vadd.f32 0.0, %v5363
        %v5365 = vpop.f32.mrf.mxu0
        %v5366 = vadd.f32 0.0, %v5365
        %5367 = vmatmul.bf16.gmra.mxu0 %v5223
        %v5368 = vpop.f32.mrf.mxu0
        %v5369 = vadd.f32 0.0, %v5368
        %v5370 = vpop.f32.mrf.mxu0
        %v5371 = vadd.f32 0.0, %v5370
        %5372 = vmatmul.bf16.gmra.mxu0 %v5226
        %v5373 = vpop.f32.mrf.mxu0
        %v5374 = vadd.f32 0.0, %v5373
        %v5375 = vpop.f32.mrf.mxu0
        %v5376 = vadd.f32 0.0, %v5375
        %5377 = vmatmul.bf16.gmra.mxu0 %v5229
        %v5378 = vpop.f32.mrf.mxu0
        %v5379 = vadd.f32 0.0, %v5378
        %v5380 = vpop.f32.mrf.mxu0
        %v5381 = vadd.f32 0.0, %v5380
        %5382 = vmatmul.bf16.gmra.mxu0 %v5232
        %v5383 = vpop.f32.mrf.mxu0
        %v5384 = vadd.f32 0.0, %v5383
        %v5385 = vpop.f32.mrf.mxu0
        %v5386 = vadd.f32 0.0, %v5385
        %5387 = vmatmul.bf16.gmra.mxu0 %v5235
        %v5388 = vpop.f32.mrf.mxu0
        %v5389 = vadd.f32 0.0, %v5388
        %v5390 = vpop.f32.mrf.mxu0
        %v5391 = vadd.f32 0.0, %v5390
        %5392 = vmatmul.bf16.gmra.mxu0 %v5238
        %v5393 = vpop.f32.mrf.mxu0
        %v5394 = vadd.f32 0.0, %v5393
        %v5395 = vpop.f32.mrf.mxu0
        %v5396 = vadd.f32 0.0, %v5395
        %5397 = vmatmul.bf16.gmra.mxu0 %v5241
        %v5398 = vpop.f32.mrf.mxu0
        %v5399 = vadd.f32 0.0, %v5398
        %v5400 = vpop.f32.mrf.mxu0
        %v5401 = vadd.f32 0.0, %v5400
        %5402 = vmatmul.bf16.gmra.mxu0 %v5244
        %v5403 = vpop.f32.mrf.mxu0
        %v5404 = vadd.f32 0.0, %v5403
        %v5405 = vpop.f32.mrf.mxu0
        %v5406 = vadd.f32 0.0, %v5405
        %5407 = vmatmul.bf16.gmra.mxu0 %v5247
        %v5408 = vpop.f32.mrf.mxu0
        %v5409 = vadd.f32 0.0, %v5408
        %v5410 = vpop.f32.mrf.mxu0
        %v5411 = vadd.f32 0.0, %v5410
        %5412 = vmatmul.bf16.gmra.mxu0 %v5250
        %v5413 = vpop.f32.mrf.mxu0
        %v5414 = vadd.f32 0.0, %v5413
        %v5415 = vpop.f32.mrf.mxu0
        %v5416 = vadd.f32 0.0, %v5415
        %5417 = vmatmul.bf16.gmra.mxu0 %v5253
        %v5418 = vpop.f32.mrf.mxu0
        %v5419 = vadd.f32 0.0, %v5418
        %v5420 = vpop.f32.mrf.mxu0
        %v5421 = vadd.f32 0.0, %v5420
        %5422 = vmatmul.bf16.gmra.mxu0 %v5256
        %v5423 = vpop.f32.mrf.mxu0
        %v5424 = vadd.f32 0.0, %v5423
        %v5425 = vpop.f32.mrf.mxu0
        %v5426 = vadd.f32 0.0, %v5425
        %5427 = vmatmul.bf16.gmra.mxu0 %v5259
        %v5428 = vpop.f32.mrf.mxu0
        %v5429 = vadd.f32 0.0, %v5428
        %v5430 = vpop.f32.mrf.mxu0
        %v5431 = vadd.f32 0.0, %v5430
        %5432 = vdwg.mxu0
        %v5433 = vld [vmem:[#allocation2] sm:$0xff]
        %v5434 = vld [vmem:[#allocation2 + $0x8] sm:$0xff]
        %v5435 = vld [vmem:[#allocation2 + $0x10] sm:$0xff]
        %v5436 = vld [vmem:[#allocation2 + $0x18] sm:$0xff]
        %v5437 = vld [vmem:[#allocation2 + $0x20] sm:$0xff]
        %v5438 = vld [vmem:[#allocation2 + $0x28] sm:$0xff]
        %v5439 = vld [vmem:[#allocation2 + $0x30] sm:$0xff]
        %v5440 = vld [vmem:[#allocation2 + $0x38] sm:$0xff]
        %v5441 = vld [vmem:[#allocation2 + $0x40] sm:$0xff]
        %v5442 = vld [vmem:[#allocation2 + $0x48] sm:$0xff]
        %v5443 = vld [vmem:[#allocation2 + $0x50] sm:$0xff]
        %v5444 = vld [vmem:[#allocation2 + $0x58] sm:$0xff]
        %v5445 = vld [vmem:[#allocation2 + $0x60] sm:$0xff]
        %v5446 = vld [vmem:[#allocation2 + $0x68] sm:$0xff]
        %v5447 = vld [vmem:[#allocation2 + $0x70] sm:$0xff]
        %v5448 = vld [vmem:[#allocation2 + $0x78] sm:$0xff]
        %v5449 = vld [vmem:[#allocation2 + $0x80] sm:$0xff]
        %v5450 = vld [vmem:[#allocation2 + $0x88] sm:$0xff]
        %v5451 = vld [vmem:[#allocation2 + $0x90] sm:$0xff]
        %v5452 = vld [vmem:[#allocation2 + $0x98] sm:$0xff]
        %v5453 = vld [vmem:[#allocation2 + $0xa0] sm:$0xff]
        %v5454 = vld [vmem:[#allocation2 + $0xa8] sm:$0xff]
        %v5455 = vld [vmem:[#allocation2 + $0xb0] sm:$0xff]
        %v5456 = vld [vmem:[#allocation2 + $0xb8] sm:$0xff]
        %v5457 = vld [vmem:[#allocation2 + $0xc0] sm:$0xff]
        %v5458 = vld [vmem:[#allocation2 + $0xc8] sm:$0xff]
        %v5459 = vld [vmem:[#allocation2 + $0xd0] sm:$0xff]
        %v5460 = vld [vmem:[#allocation2 + $0xd8] sm:$0xff]
        %v5461 = vld [vmem:[#allocation2 + $0xe0] sm:$0xff]
        %v5462 = vld [vmem:[#allocation2 + $0xe8] sm:$0xff]
        %v5463 = vld [vmem:[#allocation2 + $0xf0] sm:$0xff]
        %v5464 = vld [vmem:[#allocation2 + $0xf8] sm:$0xff]
        %v5465 = vld [vmem:[#allocation2 + $0x100] sm:$0xff]
        %v5466 = vld [vmem:[#allocation2 + $0x108] sm:$0xff]
        %v5467 = vld [vmem:[#allocation2 + $0x110] sm:$0xff]
        %v5468 = vld [vmem:[#allocation2 + $0x118] sm:$0xff]
        %v5469 = vld [vmem:[#allocation2 + $0x120] sm:$0xff]
        %v5470 = vld [vmem:[#allocation2 + $0x128] sm:$0xff]
        %v5471 = vld [vmem:[#allocation2 + $0x130] sm:$0xff]
        %v5472 = vld [vmem:[#allocation2 + $0x138] sm:$0xff]
        %v5473 = vld [vmem:[#allocation2 + $0x140] sm:$0xff]
        %v5474 = vld [vmem:[#allocation2 + $0x148] sm:$0xff]
        %v5475 = vld [vmem:[#allocation2 + $0x150] sm:$0xff]
        %v5476 = vld [vmem:[#allocation2 + $0x158] sm:$0xff]
        %v5477 = vld [vmem:[#allocation2 + $0x160] sm:$0xff]
        %v5478 = vld [vmem:[#allocation2 + $0x168] sm:$0xff]
        %v5479 = vld [vmem:[#allocation2 + $0x170] sm:$0xff]
        %v5480 = vld [vmem:[#allocation2 + $0x178] sm:$0xff]
        %v5481 = vld [vmem:[#allocation2 + $0x180] sm:$0xff]
        %v5482 = vld [vmem:[#allocation2 + $0x188] sm:$0xff]
        %v5483 = vld [vmem:[#allocation2 + $0x190] sm:$0xff]
        %v5484 = vld [vmem:[#allocation2 + $0x198] sm:$0xff]
        %v5485 = vld [vmem:[#allocation2 + $0x1a0] sm:$0xff]
        %v5486 = vld [vmem:[#allocation2 + $0x1a8] sm:$0xff]
        %v5487 = vld [vmem:[#allocation2 + $0x1b0] sm:$0xff]
        %v5488 = vld [vmem:[#allocation2 + $0x1b8] sm:$0xff]
        %v5489 = vld [vmem:[#allocation2 + $0x1c0] sm:$0xff]
        %v5490 = vld [vmem:[#allocation2 + $0x1c8] sm:$0xff]
        %v5491 = vld [vmem:[#allocation2 + $0x1d0] sm:$0xff]
        %v5492 = vld [vmem:[#allocation2 + $0x1d8] sm:$0xff]
        %v5493 = vld [vmem:[#allocation2 + $0x1e0] sm:$0xff]
        %v5494 = vld [vmem:[#allocation2 + $0x1e8] sm:$0xff]
        %v5495 = vld [vmem:[#allocation2 + $0x1f0] sm:$0xff]
        %v5496 = vld [vmem:[#allocation2 + $0x1f8] sm:$0xff]
        %v5497 = vadd.f32 %v5433, %v5274
        %v5498 = vadd.f32 %v5434, %v5276
        %v5499 = vadd.f32 %v5435, %v5279
        %v5500 = vadd.f32 %v5436, %v5281
        %v5501 = vadd.f32 %v5437, %v5284
        %v5502 = vadd.f32 %v5438, %v5286
        %v5503 = vadd.f32 %v5439, %v5289
        %v5504 = vadd.f32 %v5440, %v5291
        %v5505 = vadd.f32 %v5441, %v5294
        %v5506 = vadd.f32 %v5442, %v5296
        %v5507 = vadd.f32 %v5443, %v5299
        %v5508 = vadd.f32 %v5444, %v5301
        %v5509 = vadd.f32 %v5445, %v5304
        %v5510 = vadd.f32 %v5446, %v5306
        %v5511 = vadd.f32 %v5447, %v5309
        %v5512 = vadd.f32 %v5448, %v5311
        %v5513 = vadd.f32 %v5449, %v5314
        %v5514 = vadd.f32 %v5450, %v5316
        %v5515 = vadd.f32 %v5451, %v5319
        %v5516 = vadd.f32 %v5452, %v5321
        %v5517 = vadd.f32 %v5453, %v5324
        %v5518 = vadd.f32 %v5454, %v5326
        %v5519 = vadd.f32 %v5455, %v5329
        %v5520 = vadd.f32 %v5456, %v5331
        %v5521 = vadd.f32 %v5457, %v5334
        %v5522 = vadd.f32 %v5458, %v5336
        %v5523 = vadd.f32 %v5459, %v5339
        %v5524 = vadd.f32 %v5460, %v5341
        %v5525 = vadd.f32 %v5461, %v5344
        %v5526 = vadd.f32 %v5462, %v5346
        %v5527 = vadd.f32 %v5463, %v5349
        %v5528 = vadd.f32 %v5464, %v5351
        %v5529 = vadd.f32 %v5465, %v5354
        %v5530 = vadd.f32 %v5466, %v5356
        %v5531 = vadd.f32 %v5467, %v5359
        %v5532 = vadd.f32 %v5468, %v5361
        %v5533 = vadd.f32 %v5469, %v5364
        %v5534 = vadd.f32 %v5470, %v5366
        %v5535 = vadd.f32 %v5471, %v5369
        %v5536 = vadd.f32 %v5472, %v5371
        %v5537 = vadd.f32 %v5473, %v5374
        %v5538 = vadd.f32 %v5474, %v5376
        %v5539 = vadd.f32 %v5475, %v5379
        %v5540 = vadd.f32 %v5476, %v5381
        %v5541 = vadd.f32 %v5477, %v5384
        %v5542 = vadd.f32 %v5478, %v5386
        %v5543 = vadd.f32 %v5479, %v5389
        %v5544 = vadd.f32 %v5480, %v5391
        %v5545 = vadd.f32 %v5481, %v5394
        %v5546 = vadd.f32 %v5482, %v5396
        %v5547 = vadd.f32 %v5483, %v5399
        %v5548 = vadd.f32 %v5484, %v5401
        %v5549 = vadd.f32 %v5485, %v5404
        %v5550 = vadd.f32 %v5486, %v5406
        %v5551 = vadd.f32 %v5487, %v5409
        %v5552 = vadd.f32 %v5488, %v5411
        %v5553 = vadd.f32 %v5489, %v5414
        %v5554 = vadd.f32 %v5490, %v5416
        %v5555 = vadd.f32 %v5491, %v5419
        %v5556 = vadd.f32 %v5492, %v5421
        %v5557 = vadd.f32 %v5493, %v5424
        %v5558 = vadd.f32 %v5494, %v5426
        %v5559 = vadd.f32 %v5495, %v5429
        %v5560 = vadd.f32 %v5496, %v5431
        %5561 = vst [vmem:[#allocation2] sm:$0xff] %v5497
        %5562 = vst [vmem:[#allocation2 + $0x8] sm:$0xff] %v5498
        %5563 = vst [vmem:[#allocation2 + $0x10] sm:$0xff] %v5499
        %5564 = vst [vmem:[#allocation2 + $0x18] sm:$0xff] %v5500
        %5565 = vst [vmem:[#allocation2 + $0x20] sm:$0xff] %v5501
        %5566 = vst [vmem:[#allocation2 + $0x28] sm:$0xff] %v5502
        %5567 = vst [vmem:[#allocation2 + $0x30] sm:$0xff] %v5503
        %5568 = vst [vmem:[#allocation2 + $0x38] sm:$0xff] %v5504
        %5569 = vst [vmem:[#allocation2 + $0x40] sm:$0xff] %v5505
        %5570 = vst [vmem:[#allocation2 + $0x48] sm:$0xff] %v5506
        %5571 = vst [vmem:[#allocation2 + $0x50] sm:$0xff] %v5507
        %5572 = vst [vmem:[#allocation2 + $0x58] sm:$0xff] %v5508
        %5573 = vst [vmem:[#allocation2 + $0x60] sm:$0xff] %v5509
        %5574 = vst [vmem:[#allocation2 + $0x68] sm:$0xff] %v5510
        %5575 = vst [vmem:[#allocation2 + $0x70] sm:$0xff] %v5511
        %5576 = vst [vmem:[#allocation2 + $0x78] sm:$0xff] %v5512
        %5577 = vst [vmem:[#allocation2 + $0x80] sm:$0xff] %v5513
        %5578 = vst [vmem:[#allocation2 + $0x88] sm:$0xff] %v5514
        %5579 = vst [vmem:[#allocation2 + $0x90] sm:$0xff] %v5515
        %5580 = vst [vmem:[#allocation2 + $0x98] sm:$0xff] %v5516
        %5581 = vst [vmem:[#allocation2 + $0xa0] sm:$0xff] %v5517
        %5582 = vst [vmem:[#allocation2 + $0xa8] sm:$0xff] %v5518
        %5583 = vst [vmem:[#allocation2 + $0xb0] sm:$0xff] %v5519
        %5584 = vst [vmem:[#allocation2 + $0xb8] sm:$0xff] %v5520
        %5585 = vst [vmem:[#allocation2 + $0xc0] sm:$0xff] %v5521
        %5586 = vst [vmem:[#allocation2 + $0xc8] sm:$0xff] %v5522
        %5587 = vst [vmem:[#allocation2 + $0xd0] sm:$0xff] %v5523
        %5588 = vst [vmem:[#allocation2 + $0xd8] sm:$0xff] %v5524
        %5589 = vst [vmem:[#allocation2 + $0xe0] sm:$0xff] %v5525
        %5590 = vst [vmem:[#allocation2 + $0xe8] sm:$0xff] %v5526
        %5591 = vst [vmem:[#allocation2 + $0xf0] sm:$0xff] %v5527
        %5592 = vst [vmem:[#allocation2 + $0xf8] sm:$0xff] %v5528
        %5593 = vst [vmem:[#allocation2 + $0x100] sm:$0xff] %v5529
        %5594 = vst [vmem:[#allocation2 + $0x108] sm:$0xff] %v5530
        %5595 = vst [vmem:[#allocation2 + $0x110] sm:$0xff] %v5531
        %5596 = vst [vmem:[#allocation2 + $0x118] sm:$0xff] %v5532
        %5597 = vst [vmem:[#allocation2 + $0x120] sm:$0xff] %v5533
        %5598 = vst [vmem:[#allocation2 + $0x128] sm:$0xff] %v5534
        %5599 = vst [vmem:[#allocation2 + $0x130] sm:$0xff] %v5535
        %5600 = vst [vmem:[#allocation2 + $0x138] sm:$0xff] %v5536
        %5601 = vst [vmem:[#allocation2 + $0x140] sm:$0xff] %v5537
        %5602 = vst [vmem:[#allocation2 + $0x148] sm:$0xff] %v5538
        %5603 = vst [vmem:[#allocation2 + $0x150] sm:$0xff] %v5539
        %5604 = vst [vmem:[#allocation2 + $0x158] sm:$0xff] %v5540
        %5605 = vst [vmem:[#allocation2 + $0x160] sm:$0xff] %v5541
        %5606 = vst [vmem:[#allocation2 + $0x168] sm:$0xff] %v5542
        %5607 = vst [vmem:[#allocation2 + $0x170] sm:$0xff] %v5543
        %5608 = vst [vmem:[#allocation2 + $0x178] sm:$0xff] %v5544
        %5609 = vst [vmem:[#allocation2 + $0x180] sm:$0xff] %v5545
        %5610 = vst [vmem:[#allocation2 + $0x188] sm:$0xff] %v5546
        %5611 = vst [vmem:[#allocation2 + $0x190] sm:$0xff] %v5547
        %5612 = vst [vmem:[#allocation2 + $0x198] sm:$0xff] %v5548
        %5613 = vst [vmem:[#allocation2 + $0x1a0] sm:$0xff] %v5549
        %5614 = vst [vmem:[#allocation2 + $0x1a8] sm:$0xff] %v5550
        %5615 = vst [vmem:[#allocation2 + $0x1b0] sm:$0xff] %v5551
        %5616 = vst [vmem:[#allocation2 + $0x1b8] sm:$0xff] %v5552
        %5617 = vst [vmem:[#allocation2 + $0x1c0] sm:$0xff] %v5553
        %5618 = vst [vmem:[#allocation2 + $0x1c8] sm:$0xff] %v5554
        %5619 = vst [vmem:[#allocation2 + $0x1d0] sm:$0xff] %v5555
        %5620 = vst [vmem:[#allocation2 + $0x1d8] sm:$0xff] %v5556
        %5621 = vst [vmem:[#allocation2 + $0x1e0] sm:$0xff] %v5557
        %5622 = vst [vmem:[#allocation2 + $0x1e8] sm:$0xff] %v5558
        %5623 = vst [vmem:[#allocation2 + $0x1f0] sm:$0xff] %v5559
        %5624 = vst [vmem:[#allocation2 + $0x1f8] sm:$0xff] %v5560
        %s5625 = scalar_lea.vmem %s179, 88 [#allocation3]
        %v5626 = vld [vmem:[%s5625] sm:$0xf]
        %v5627 = vld [vmem:[%s5625 + $0x4] sm:$0xf]
        %v5628 = vld [vmem:[%s5625 + $0x8] sm:$0xf]
        %v5629 = vld [vmem:[%s5625 + $0xc] sm:$0xf]
        %v5630 = vld [vmem:[%s5625 + $0x10] sm:$0xf]
        %v5631 = vld [vmem:[%s5625 + $0x14] sm:$0xf]
        %v5632 = vld [vmem:[%s5625 + $0x18] sm:$0xf]
        %v5633 = vld [vmem:[%s5625 + $0x1c] sm:$0xf]
        %v5634 = vld [vmem:[%s5625 + $0x28] sm:$0xf]
        %v5635 = vld [vmem:[%s5625 + $0x2c] sm:$0xf]
        %v5636 = vld [vmem:[%s5625 + $0x30] sm:$0xf]
        %v5637 = vld [vmem:[%s5625 + $0x34] sm:$0xf]
        %v5638 = vld [vmem:[%s5625 + $0x38] sm:$0xf]
        %v5639 = vld [vmem:[%s5625 + $0x3c] sm:$0xf]
        %v5640 = vld [vmem:[%s5625 + $0x40] sm:$0xf]
        %v5641 = vld [vmem:[%s5625 + $0x44] sm:$0xf]
        %v5642 = vld [vmem:[%s5625 + $0x50] sm:$0xf]
        %v5643 = vld [vmem:[%s5625 + $0x54] sm:$0xf]
        %v5644 = vld [vmem:[%s5625 + $0x58] sm:$0xf]
        %v5645 = vld [vmem:[%s5625 + $0x5c] sm:$0xf]
        %v5646 = vld [vmem:[%s5625 + $0x60] sm:$0xf]
        %v5647 = vld [vmem:[%s5625 + $0x64] sm:$0xf]
        %v5648 = vld [vmem:[%s5625 + $0x68] sm:$0xf]
        %v5649 = vld [vmem:[%s5625 + $0x6c] sm:$0xf]
        %v5650 = vld [vmem:[%s5625 + $0x78] sm:$0xf]
        %v5651 = vld [vmem:[%s5625 + $0x7c] sm:$0xf]
        %v5652 = vld [vmem:[%s5625 + $0x80] sm:$0xf]
        %v5653 = vld [vmem:[%s5625 + $0x84] sm:$0xf]
        %v5654 = vld [vmem:[%s5625 + $0x88] sm:$0xf]
        %v5655 = vld [vmem:[%s5625 + $0x8c] sm:$0xf]
        %v5656 = vld [vmem:[%s5625 + $0x90] sm:$0xf]
        %v5657 = vld [vmem:[%s5625 + $0x94] sm:$0xf]
        %v5658 = vld [vmem:[%s5625 + $0xa0] sm:$0xf]
        %v5659 = vld [vmem:[%s5625 + $0xa4] sm:$0xf]
        %v5660 = vld [vmem:[%s5625 + $0xa8] sm:$0xf]
        %v5661 = vld [vmem:[%s5625 + $0xac] sm:$0xf]
        %v5662 = vld [vmem:[%s5625 + $0xb0] sm:$0xf]
        %v5663 = vld [vmem:[%s5625 + $0xb4] sm:$0xf]
        %v5664 = vld [vmem:[%s5625 + $0xb8] sm:$0xf]
        %v5665 = vld [vmem:[%s5625 + $0xbc] sm:$0xf]
        %v5666 = vld [vmem:[%s5625 + $0xc8] sm:$0xf]
        %v5667 = vld [vmem:[%s5625 + $0xcc] sm:$0xf]
        %v5668 = vld [vmem:[%s5625 + $0xd0] sm:$0xf]
        %v5669 = vld [vmem:[%s5625 + $0xd4] sm:$0xf]
        %v5670 = vld [vmem:[%s5625 + $0xd8] sm:$0xf]
        %v5671 = vld [vmem:[%s5625 + $0xdc] sm:$0xf]
        %v5672 = vld [vmem:[%s5625 + $0xe0] sm:$0xf]
        %v5673 = vld [vmem:[%s5625 + $0xe4] sm:$0xf]
        %v5674 = vld [vmem:[%s5625 + $0xf0] sm:$0xf]
        %v5675 = vld [vmem:[%s5625 + $0xf4] sm:$0xf]
        %v5676 = vld [vmem:[%s5625 + $0xf8] sm:$0xf]
        %v5677 = vld [vmem:[%s5625 + $0xfc] sm:$0xf]
        %v5678 = vld [vmem:[%s5625 + $0x100] sm:$0xf]
        %v5679 = vld [vmem:[%s5625 + $0x104] sm:$0xf]
        %v5680 = vld [vmem:[%s5625 + $0x108] sm:$0xf]
        %v5681 = vld [vmem:[%s5625 + $0x10c] sm:$0xf]
        %v5682 = vld [vmem:[%s5625 + $0x118] sm:$0xf]
        %v5683 = vld [vmem:[%s5625 + $0x11c] sm:$0xf]
        %v5684 = vld [vmem:[%s5625 + $0x120] sm:$0xf]
        %v5685 = vld [vmem:[%s5625 + $0x124] sm:$0xf]
        %v5686 = vld [vmem:[%s5625 + $0x128] sm:$0xf]
        %v5687 = vld [vmem:[%s5625 + $0x12c] sm:$0xf]
        %v5688 = vld [vmem:[%s5625 + $0x130] sm:$0xf]
        %v5689 = vld [vmem:[%s5625 + $0x134] sm:$0xf]
        %s5690 = scalar_lea.vmem [#allocation6], 64
        %v5691 = vld [vmem:[%s5690] sm:$0xf]
        %v5692 = vld [vmem:[%s5690 + $0x4] sm:$0x3]
        %v5757 = vunpack.c.l.b16 %v5626
        %v5758 = vunpack.c.l.b16 %v5627
        %v5759 = vunpack.c.l.b16 %v5628
        %v5760 = vunpack.c.l.b16 %v5629
        %v5761 = vunpack.c.l.b16 %v5630
        %v5762 = vunpack.c.l.b16 %v5631
        %v5763 = vunpack.c.l.b16 %v5632
        %v5764 = vunpack.c.l.b16 %v5633
        %v5765 = vunpack.c.l.b16 %v5634
        %v5766 = vunpack.c.l.b16 %v5635
        %v5767 = vunpack.c.l.b16 %v5636
        %v5768 = vunpack.c.l.b16 %v5637
        %v5769 = vunpack.c.l.b16 %v5638
        %v5770 = vunpack.c.l.b16 %v5639
        %v5771 = vunpack.c.l.b16 %v5640
        %v5772 = vunpack.c.l.b16 %v5641
        %v5773 = vunpack.c.l.b16 %v5642
        %v5774 = vunpack.c.l.b16 %v5643
        %v5775 = vunpack.c.l.b16 %v5644
        %v5776 = vunpack.c.l.b16 %v5645
        %v5777 = vunpack.c.l.b16 %v5646
        %v5778 = vunpack.c.l.b16 %v5647
        %v5779 = vunpack.c.l.b16 %v5648
        %v5780 = vunpack.c.l.b16 %v5649
        %v5781 = vunpack.c.l.b16 %v5650
        %v5782 = vunpack.c.l.b16 %v5651
        %v5783 = vunpack.c.l.b16 %v5652
        %v5784 = vunpack.c.l.b16 %v5653
        %v5785 = vunpack.c.l.b16 %v5654
        %v5786 = vunpack.c.l.b16 %v5655
        %v5787 = vunpack.c.l.b16 %v5656
        %v5788 = vunpack.c.l.b16 %v5657
        %v5789 = vunpack.c.l.b16 %v5658
        %v5790 = vunpack.c.l.b16 %v5659
        %v5791 = vunpack.c.l.b16 %v5660
        %v5792 = vunpack.c.l.b16 %v5661
        %v5793 = vunpack.c.l.b16 %v5662
        %v5794 = vunpack.c.l.b16 %v5663
        %v5795 = vunpack.c.l.b16 %v5664
        %v5796 = vunpack.c.l.b16 %v5665
        %v5797 = vunpack.c.l.b16 %v5666
        %v5798 = vunpack.c.l.b16 %v5667
        %v5799 = vunpack.c.l.b16 %v5668
        %v5800 = vunpack.c.l.b16 %v5669
        %v5801 = vunpack.c.l.b16 %v5670
        %v5802 = vunpack.c.l.b16 %v5671
        %v5803 = vunpack.c.l.b16 %v5672
        %v5804 = vunpack.c.l.b16 %v5673
        %v5805 = vunpack.c.l.b16 %v5674
        %v5806 = vunpack.c.l.b16 %v5675
        %v5807 = vunpack.c.l.b16 %v5676
        %v5808 = vunpack.c.l.b16 %v5677
        %v5809 = vunpack.c.l.b16 %v5678
        %v5810 = vunpack.c.l.b16 %v5679
        %v5811 = vunpack.c.l.b16 %v5680
        %v5812 = vunpack.c.l.b16 %v5681
        %v5813 = vunpack.c.l.b16 %v5682
        %v5814 = vunpack.c.l.b16 %v5683
        %v5815 = vunpack.c.l.b16 %v5684
        %v5816 = vunpack.c.l.b16 %v5685
        %v5817 = vunpack.c.l.b16 %v5686
        %v5818 = vunpack.c.l.b16 %v5687
        %v5819 = vunpack.c.l.b16 %v5688
        %v5820 = vunpack.c.l.b16 %v5689
        %v5821 = vpack.c.b16 %v5758, %v5757
        %v5822 = vpack.c.b16 %v5760, %v5759
        %v5823 = vpack.c.b16 %v5762, %v5761
        %v5824 = vpack.c.b16 %v5764, %v5763
        %v5825 = vpack.c.b16 %v5766, %v5765
        %v5826 = vpack.c.b16 %v5768, %v5767
        %v5827 = vpack.c.b16 %v5770, %v5769
        %v5828 = vpack.c.b16 %v5772, %v5771
        %v5829 = vpack.c.b16 %v5774, %v5773
        %v5830 = vpack.c.b16 %v5776, %v5775
        %v5831 = vpack.c.b16 %v5778, %v5777
        %v5832 = vpack.c.b16 %v5780, %v5779
        %v5833 = vpack.c.b16 %v5782, %v5781
        %v5834 = vpack.c.b16 %v5784, %v5783
        %v5835 = vpack.c.b16 %v5786, %v5785
        %v5836 = vpack.c.b16 %v5788, %v5787
        %v5837 = vpack.c.b16 %v5790, %v5789
        %v5838 = vpack.c.b16 %v5792, %v5791
        %v5839 = vpack.c.b16 %v5794, %v5793
        %v5840 = vpack.c.b16 %v5796, %v5795
        %v5841 = vpack.c.b16 %v5798, %v5797
        %v5842 = vpack.c.b16 %v5800, %v5799
        %v5843 = vpack.c.b16 %v5802, %v5801
        %v5844 = vpack.c.b16 %v5804, %v5803
        %v5845 = vpack.c.b16 %v5806, %v5805
        %v5846 = vpack.c.b16 %v5808, %v5807
        %v5847 = vpack.c.b16 %v5810, %v5809
        %v5848 = vpack.c.b16 %v5812, %v5811
        %v5849 = vpack.c.b16 %v5814, %v5813
        %v5850 = vpack.c.b16 %v5816, %v5815
        %v5851 = vpack.c.b16 %v5818, %v5817
        %v5852 = vpack.c.b16 %v5820, %v5819
        %v5855 = vunpack.c.l.b16 %v5691
        %v5856 = vunpack.c.l.b16 %v5692
        %v5857 = vpack.c.b16 %v5856, %v5855
        %v5859 = vsel %vm440, %v5821, 0
        %v5862 = vsel %vm440, %v5822, 0
        %v5865 = vsel %vm440, %v5823, 0
        %v5868 = vsel %vm440, %v5824, 0
        %v5871 = vsel %vm440, %v5825, 0
        %v5874 = vsel %vm440, %v5826, 0
        %v5877 = vsel %vm440, %v5827, 0
        %v5880 = vsel %vm440, %v5828, 0
        %v5883 = vsel %vm440, %v5829, 0
        %v5886 = vsel %vm440, %v5830, 0
        %v5889 = vsel %vm440, %v5831, 0
        %v5892 = vsel %vm440, %v5832, 0
        %v5895 = vsel %vm440, %v5833, 0
        %v5898 = vsel %vm440, %v5834, 0
        %v5901 = vsel %vm440, %v5835, 0
        %v5904 = vsel %vm440, %v5836, 0
        %v5907 = vsel %vm440, %v5837, 0
        %v5910 = vsel %vm440, %v5838, 0
        %v5913 = vsel %vm440, %v5839, 0
        %v5916 = vsel %vm440, %v5840, 0
        %v5919 = vsel %vm440, %v5841, 0
        %v5922 = vsel %vm440, %v5842, 0
        %v5925 = vsel %vm440, %v5843, 0
        %v5928 = vsel %vm440, %v5844, 0
        %v5931 = vsel %vm440, %v5845, 0
        %v5934 = vsel %vm440, %v5846, 0
        %v5937 = vsel %vm440, %v5847, 0
        %v5940 = vsel %vm440, %v5848, 0
        %v5943 = vsel %vm440, %v5849, 0
        %v5946 = vsel %vm440, %v5850, 0
        %v5949 = vsel %vm440, %v5851, 0
        %v5952 = vsel %vm440, %v5852, 0
        %v5955 = vsel %vm537, %v5857, 0
        %5957 = vmatpush.bf16.msra.mxu0 0
        %5958 = vmatpush.bf16.msra.mxu0 0
        %5959 = vmatpush.bf16.msra.mxu0 0
        %5960 = vmatpush.bf16.msra.mxu0 0
        %5961 = vmatpush.bf16.msra.mxu0 0
        %5962 = vmatpush.bf16.msra.mxu0 0
        %5963 = vmatpush.bf16.msra.mxu0 0
        %5964 = vmatpush.bf16.msra.mxu0 %v5955
        %5965 = vmatmul.bf16.gmra.mxu0 %v5859
        %v5966 = vpop.f32.mrf.mxu0
        %v5967 = vadd.f32 0.0, %v5966
        %v5968 = vpop.f32.mrf.mxu0
        %v5969 = vadd.f32 0.0, %v5968
        %5970 = vmatmul.bf16.gmra.mxu0 %v5862
        %v5971 = vpop.f32.mrf.mxu0
        %v5972 = vadd.f32 0.0, %v5971
        %v5973 = vpop.f32.mrf.mxu0
        %v5974 = vadd.f32 0.0, %v5973
        %5975 = vmatmul.bf16.gmra.mxu0 %v5865
        %v5976 = vpop.f32.mrf.mxu0
        %v5977 = vadd.f32 0.0, %v5976
        %v5978 = vpop.f32.mrf.mxu0
        %v5979 = vadd.f32 0.0, %v5978
        %5980 = vmatmul.bf16.gmra.mxu0 %v5868
        %v5981 = vpop.f32.mrf.mxu0
        %v5982 = vadd.f32 0.0, %v5981
        %v5983 = vpop.f32.mrf.mxu0
        %v5984 = vadd.f32 0.0, %v5983
        %5985 = vmatmul.bf16.gmra.mxu0 %v5871
        %v5986 = vpop.f32.mrf.mxu0
        %v5987 = vadd.f32 0.0, %v5986
        %v5988 = vpop.f32.mrf.mxu0
        %v5989 = vadd.f32 0.0, %v5988
        %5990 = vmatmul.bf16.gmra.mxu0 %v5874
        %v5991 = vpop.f32.mrf.mxu0
        %v5992 = vadd.f32 0.0, %v5991
        %v5993 = vpop.f32.mrf.mxu0
        %v5994 = vadd.f32 0.0, %v5993
        %5995 = vmatmul.bf16.gmra.mxu0 %v5877
        %v5996 = vpop.f32.mrf.mxu0
        %v5997 = vadd.f32 0.0, %v5996
        %v5998 = vpop.f32.mrf.mxu0
        %v5999 = vadd.f32 0.0, %v5998
        %6000 = vmatmul.bf16.gmra.mxu0 %v5880
        %v6001 = vpop.f32.mrf.mxu0
        %v6002 = vadd.f32 0.0, %v6001
        %v6003 = vpop.f32.mrf.mxu0
        %v6004 = vadd.f32 0.0, %v6003
        %6005 = vmatmul.bf16.gmra.mxu0 %v5883
        %v6006 = vpop.f32.mrf.mxu0
        %v6007 = vadd.f32 0.0, %v6006
        %v6008 = vpop.f32.mrf.mxu0
        %v6009 = vadd.f32 0.0, %v6008
        %6010 = vmatmul.bf16.gmra.mxu0 %v5886
        %v6011 = vpop.f32.mrf.mxu0
        %v6012 = vadd.f32 0.0, %v6011
        %v6013 = vpop.f32.mrf.mxu0
        %v6014 = vadd.f32 0.0, %v6013
        %6015 = vmatmul.bf16.gmra.mxu0 %v5889
        %v6016 = vpop.f32.mrf.mxu0
        %v6017 = vadd.f32 0.0, %v6016
        %v6018 = vpop.f32.mrf.mxu0
        %v6019 = vadd.f32 0.0, %v6018
        %6020 = vmatmul.bf16.gmra.mxu0 %v5892
        %v6021 = vpop.f32.mrf.mxu0
        %v6022 = vadd.f32 0.0, %v6021
        %v6023 = vpop.f32.mrf.mxu0
        %v6024 = vadd.f32 0.0, %v6023
        %6025 = vmatmul.bf16.gmra.mxu0 %v5895
        %v6026 = vpop.f32.mrf.mxu0
        %v6027 = vadd.f32 0.0, %v6026
        %v6028 = vpop.f32.mrf.mxu0
        %v6029 = vadd.f32 0.0, %v6028
        %6030 = vmatmul.bf16.gmra.mxu0 %v5898
        %v6031 = vpop.f32.mrf.mxu0
        %v6032 = vadd.f32 0.0, %v6031
        %v6033 = vpop.f32.mrf.mxu0
        %v6034 = vadd.f32 0.0, %v6033
        %6035 = vmatmul.bf16.gmra.mxu0 %v5901
        %v6036 = vpop.f32.mrf.mxu0
        %v6037 = vadd.f32 0.0, %v6036
        %v6038 = vpop.f32.mrf.mxu0
        %v6039 = vadd.f32 0.0, %v6038
        %6040 = vmatmul.bf16.gmra.mxu0 %v5904
        %v6041 = vpop.f32.mrf.mxu0
        %v6042 = vadd.f32 0.0, %v6041
        %v6043 = vpop.f32.mrf.mxu0
        %v6044 = vadd.f32 0.0, %v6043
        %6045 = vmatmul.bf16.gmra.mxu0 %v5907
        %v6046 = vpop.f32.mrf.mxu0
        %v6047 = vadd.f32 0.0, %v6046
        %v6048 = vpop.f32.mrf.mxu0
        %v6049 = vadd.f32 0.0, %v6048
        %6050 = vmatmul.bf16.gmra.mxu0 %v5910
        %v6051 = vpop.f32.mrf.mxu0
        %v6052 = vadd.f32 0.0, %v6051
        %v6053 = vpop.f32.mrf.mxu0
        %v6054 = vadd.f32 0.0, %v6053
        %6055 = vmatmul.bf16.gmra.mxu0 %v5913
        %v6056 = vpop.f32.mrf.mxu0
        %v6057 = vadd.f32 0.0, %v6056
        %v6058 = vpop.f32.mrf.mxu0
        %v6059 = vadd.f32 0.0, %v6058
        %6060 = vmatmul.bf16.gmra.mxu0 %v5916
        %v6061 = vpop.f32.mrf.mxu0
        %v6062 = vadd.f32 0.0, %v6061
        %v6063 = vpop.f32.mrf.mxu0
        %v6064 = vadd.f32 0.0, %v6063
        %6065 = vmatmul.bf16.gmra.mxu0 %v5919
        %v6066 = vpop.f32.mrf.mxu0
        %v6067 = vadd.f32 0.0, %v6066
        %v6068 = vpop.f32.mrf.mxu0
        %v6069 = vadd.f32 0.0, %v6068
        %6070 = vmatmul.bf16.gmra.mxu0 %v5922
        %v6071 = vpop.f32.mrf.mxu0
        %v6072 = vadd.f32 0.0, %v6071
        %v6073 = vpop.f32.mrf.mxu0
        %v6074 = vadd.f32 0.0, %v6073
        %6075 = vmatmul.bf16.gmra.mxu0 %v5925
        %v6076 = vpop.f32.mrf.mxu0
        %v6077 = vadd.f32 0.0, %v6076
        %v6078 = vpop.f32.mrf.mxu0
        %v6079 = vadd.f32 0.0, %v6078
        %6080 = vmatmul.bf16.gmra.mxu0 %v5928
        %v6081 = vpop.f32.mrf.mxu0
        %v6082 = vadd.f32 0.0, %v6081
        %v6083 = vpop.f32.mrf.mxu0
        %v6084 = vadd.f32 0.0, %v6083
        %6085 = vmatmul.bf16.gmra.mxu0 %v5931
        %v6086 = vpop.f32.mrf.mxu0
        %v6087 = vadd.f32 0.0, %v6086
        %v6088 = vpop.f32.mrf.mxu0
        %v6089 = vadd.f32 0.0, %v6088
        %6090 = vmatmul.bf16.gmra.mxu0 %v5934
        %v6091 = vpop.f32.mrf.mxu0
        %v6092 = vadd.f32 0.0, %v6091
        %v6093 = vpop.f32.mrf.mxu0
        %v6094 = vadd.f32 0.0, %v6093
        %6095 = vmatmul.bf16.gmra.mxu0 %v5937
        %v6096 = vpop.f32.mrf.mxu0
        %v6097 = vadd.f32 0.0, %v6096
        %v6098 = vpop.f32.mrf.mxu0
        %v6099 = vadd.f32 0.0, %v6098
        %6100 = vmatmul.bf16.gmra.mxu0 %v5940
        %v6101 = vpop.f32.mrf.mxu0
        %v6102 = vadd.f32 0.0, %v6101
        %v6103 = vpop.f32.mrf.mxu0
        %v6104 = vadd.f32 0.0, %v6103
        %6105 = vmatmul.bf16.gmra.mxu0 %v5943
        %v6106 = vpop.f32.mrf.mxu0
        %v6107 = vadd.f32 0.0, %v6106
        %v6108 = vpop.f32.mrf.mxu0
        %v6109 = vadd.f32 0.0, %v6108
        %6110 = vmatmul.bf16.gmra.mxu0 %v5946
        %v6111 = vpop.f32.mrf.mxu0
        %v6112 = vadd.f32 0.0, %v6111
        %v6113 = vpop.f32.mrf.mxu0
        %v6114 = vadd.f32 0.0, %v6113
        %6115 = vmatmul.bf16.gmra.mxu0 %v5949
        %v6116 = vpop.f32.mrf.mxu0
        %v6117 = vadd.f32 0.0, %v6116
        %v6118 = vpop.f32.mrf.mxu0
        %v6119 = vadd.f32 0.0, %v6118
        %6120 = vmatmul.bf16.gmra.mxu0 %v5952
        %v6121 = vpop.f32.mrf.mxu0
        %v6122 = vadd.f32 0.0, %v6121
        %v6123 = vpop.f32.mrf.mxu0
        %v6124 = vadd.f32 0.0, %v6123
        %6125 = vdwg.mxu0
        %v6126 = vld [vmem:[#allocation2] sm:$0xff]
        %v6127 = vld [vmem:[#allocation2 + $0x8] sm:$0xff]
        %v6128 = vld [vmem:[#allocation2 + $0x10] sm:$0xff]
        %v6129 = vld [vmem:[#allocation2 + $0x18] sm:$0xff]
        %v6130 = vld [vmem:[#allocation2 + $0x20] sm:$0xff]
        %v6131 = vld [vmem:[#allocation2 + $0x28] sm:$0xff]
        %v6132 = vld [vmem:[#allocation2 + $0x30] sm:$0xff]
        %v6133 = vld [vmem:[#allocation2 + $0x38] sm:$0xff]
        %v6134 = vld [vmem:[#allocation2 + $0x40] sm:$0xff]
        %v6135 = vld [vmem:[#allocation2 + $0x48] sm:$0xff]
        %v6136 = vld [vmem:[#allocation2 + $0x50] sm:$0xff]
        %v6137 = vld [vmem:[#allocation2 + $0x58] sm:$0xff]
        %v6138 = vld [vmem:[#allocation2 + $0x60] sm:$0xff]
        %v6139 = vld [vmem:[#allocation2 + $0x68] sm:$0xff]
        %v6140 = vld [vmem:[#allocation2 + $0x70] sm:$0xff]
        %v6141 = vld [vmem:[#allocation2 + $0x78] sm:$0xff]
        %v6142 = vld [vmem:[#allocation2 + $0x80] sm:$0xff]
        %v6143 = vld [vmem:[#allocation2 + $0x88] sm:$0xff]
        %v6144 = vld [vmem:[#allocation2 + $0x90] sm:$0xff]
        %v6145 = vld [vmem:[#allocation2 + $0x98] sm:$0xff]
        %v6146 = vld [vmem:[#allocation2 + $0xa0] sm:$0xff]
        %v6147 = vld [vmem:[#allocation2 + $0xa8] sm:$0xff]
        %v6148 = vld [vmem:[#allocation2 + $0xb0] sm:$0xff]
        %v6149 = vld [vmem:[#allocation2 + $0xb8] sm:$0xff]
        %v6150 = vld [vmem:[#allocation2 + $0xc0] sm:$0xff]
        %v6151 = vld [vmem:[#allocation2 + $0xc8] sm:$0xff]
        %v6152 = vld [vmem:[#allocation2 + $0xd0] sm:$0xff]
        %v6153 = vld [vmem:[#allocation2 + $0xd8] sm:$0xff]
        %v6154 = vld [vmem:[#allocation2 + $0xe0] sm:$0xff]
        %v6155 = vld [vmem:[#allocation2 + $0xe8] sm:$0xff]
        %v6156 = vld [vmem:[#allocation2 + $0xf0] sm:$0xff]
        %v6157 = vld [vmem:[#allocation2 + $0xf8] sm:$0xff]
        %v6158 = vld [vmem:[#allocation2 + $0x100] sm:$0xff]
        %v6159 = vld [vmem:[#allocation2 + $0x108] sm:$0xff]
        %v6160 = vld [vmem:[#allocation2 + $0x110] sm:$0xff]
        %v6161 = vld [vmem:[#allocation2 + $0x118] sm:$0xff]
        %v6162 = vld [vmem:[#allocation2 + $0x120] sm:$0xff]
        %v6163 = vld [vmem:[#allocation2 + $0x128] sm:$0xff]
        %v6164 = vld [vmem:[#allocation2 + $0x130] sm:$0xff]
        %v6165 = vld [vmem:[#allocation2 + $0x138] sm:$0xff]
        %v6166 = vld [vmem:[#allocation2 + $0x140] sm:$0xff]
        %v6167 = vld [vmem:[#allocation2 + $0x148] sm:$0xff]
        %v6168 = vld [vmem:[#allocation2 + $0x150] sm:$0xff]
        %v6169 = vld [vmem:[#allocation2 + $0x158] sm:$0xff]
        %v6170 = vld [vmem:[#allocation2 + $0x160] sm:$0xff]
        %v6171 = vld [vmem:[#allocation2 + $0x168] sm:$0xff]
        %v6172 = vld [vmem:[#allocation2 + $0x170] sm:$0xff]
        %v6173 = vld [vmem:[#allocation2 + $0x178] sm:$0xff]
        %v6174 = vld [vmem:[#allocation2 + $0x180] sm:$0xff]
        %v6175 = vld [vmem:[#allocation2 + $0x188] sm:$0xff]
        %v6176 = vld [vmem:[#allocation2 + $0x190] sm:$0xff]
        %v6177 = vld [vmem:[#allocation2 + $0x198] sm:$0xff]
        %v6178 = vld [vmem:[#allocation2 + $0x1a0] sm:$0xff]
        %v6179 = vld [vmem:[#allocation2 + $0x1a8] sm:$0xff]
        %v6180 = vld [vmem:[#allocation2 + $0x1b0] sm:$0xff]
        %v6181 = vld [vmem:[#allocation2 + $0x1b8] sm:$0xff]
        %v6182 = vld [vmem:[#allocation2 + $0x1c0] sm:$0xff]
        %v6183 = vld [vmem:[#allocation2 + $0x1c8] sm:$0xff]
        %v6184 = vld [vmem:[#allocation2 + $0x1d0] sm:$0xff]
        %v6185 = vld [vmem:[#allocation2 + $0x1d8] sm:$0xff]
        %v6186 = vld [vmem:[#allocation2 + $0x1e0] sm:$0xff]
        %v6187 = vld [vmem:[#allocation2 + $0x1e8] sm:$0xff]
        %v6188 = vld [vmem:[#allocation2 + $0x1f0] sm:$0xff]
        %v6189 = vld [vmem:[#allocation2 + $0x1f8] sm:$0xff]
        %v6190 = vadd.f32 %v6126, %v5967
        %v6191 = vadd.f32 %v6127, %v5969
        %v6192 = vadd.f32 %v6128, %v5972
        %v6193 = vadd.f32 %v6129, %v5974
        %v6194 = vadd.f32 %v6130, %v5977
        %v6195 = vadd.f32 %v6131, %v5979
        %v6196 = vadd.f32 %v6132, %v5982
        %v6197 = vadd.f32 %v6133, %v5984
        %v6198 = vadd.f32 %v6134, %v5987
        %v6199 = vadd.f32 %v6135, %v5989
        %v6200 = vadd.f32 %v6136, %v5992
        %v6201 = vadd.f32 %v6137, %v5994
        %v6202 = vadd.f32 %v6138, %v5997
        %v6203 = vadd.f32 %v6139, %v5999
        %v6204 = vadd.f32 %v6140, %v6002
        %v6205 = vadd.f32 %v6141, %v6004
        %v6206 = vadd.f32 %v6142, %v6007
        %v6207 = vadd.f32 %v6143, %v6009
        %v6208 = vadd.f32 %v6144, %v6012
        %v6209 = vadd.f32 %v6145, %v6014
        %v6210 = vadd.f32 %v6146, %v6017
        %v6211 = vadd.f32 %v6147, %v6019
        %v6212 = vadd.f32 %v6148, %v6022
        %v6213 = vadd.f32 %v6149, %v6024
        %v6214 = vadd.f32 %v6150, %v6027
        %v6215 = vadd.f32 %v6151, %v6029
        %v6216 = vadd.f32 %v6152, %v6032
        %v6217 = vadd.f32 %v6153, %v6034
        %v6218 = vadd.f32 %v6154, %v6037
        %v6219 = vadd.f32 %v6155, %v6039
        %v6220 = vadd.f32 %v6156, %v6042
        %v6221 = vadd.f32 %v6157, %v6044
        %v6222 = vadd.f32 %v6158, %v6047
        %v6223 = vadd.f32 %v6159, %v6049
        %v6224 = vadd.f32 %v6160, %v6052
        %v6225 = vadd.f32 %v6161, %v6054
        %v6226 = vadd.f32 %v6162, %v6057
        %v6227 = vadd.f32 %v6163, %v6059
        %v6228 = vadd.f32 %v6164, %v6062
        %v6229 = vadd.f32 %v6165, %v6064
        %v6230 = vadd.f32 %v6166, %v6067
        %v6231 = vadd.f32 %v6167, %v6069
        %v6232 = vadd.f32 %v6168, %v6072
        %v6233 = vadd.f32 %v6169, %v6074
        %v6234 = vadd.f32 %v6170, %v6077
        %v6235 = vadd.f32 %v6171, %v6079
        %v6236 = vadd.f32 %v6172, %v6082
        %v6237 = vadd.f32 %v6173, %v6084
        %v6238 = vadd.f32 %v6174, %v6087
        %v6239 = vadd.f32 %v6175, %v6089
        %v6240 = vadd.f32 %v6176, %v6092
        %v6241 = vadd.f32 %v6177, %v6094
        %v6242 = vadd.f32 %v6178, %v6097
        %v6243 = vadd.f32 %v6179, %v6099
        %v6244 = vadd.f32 %v6180, %v6102
        %v6245 = vadd.f32 %v6181, %v6104
        %v6246 = vadd.f32 %v6182, %v6107
        %v6247 = vadd.f32 %v6183, %v6109
        %v6248 = vadd.f32 %v6184, %v6112
        %v6249 = vadd.f32 %v6185, %v6114
        %v6250 = vadd.f32 %v6186, %v6117
        %v6251 = vadd.f32 %v6187, %v6119
        %v6252 = vadd.f32 %v6188, %v6122
        %v6253 = vadd.f32 %v6189, %v6124
        %6254 = vst [vmem:[#allocation2] sm:$0xff] %v6190
        %6255 = vst [vmem:[#allocation2 + $0x8] sm:$0xff] %v6191
        %6256 = vst [vmem:[#allocation2 + $0x10] sm:$0xff] %v6192
        %6257 = vst [vmem:[#allocation2 + $0x18] sm:$0xff] %v6193
        %6258 = vst [vmem:[#allocation2 + $0x20] sm:$0xff] %v6194
        %6259 = vst [vmem:[#allocation2 + $0x28] sm:$0xff] %v6195
        %6260 = vst [vmem:[#allocation2 + $0x30] sm:$0xff] %v6196
        %6261 = vst [vmem:[#allocation2 + $0x38] sm:$0xff] %v6197
        %6262 = vst [vmem:[#allocation2 + $0x40] sm:$0xff] %v6198
        %6263 = vst [vmem:[#allocation2 + $0x48] sm:$0xff] %v6199
        %6264 = vst [vmem:[#allocation2 + $0x50] sm:$0xff] %v6200
        %6265 = vst [vmem:[#allocation2 + $0x58] sm:$0xff] %v6201
        %6266 = vst [vmem:[#allocation2 + $0x60] sm:$0xff] %v6202
        %6267 = vst [vmem:[#allocation2 + $0x68] sm:$0xff] %v6203
        %6268 = vst [vmem:[#allocation2 + $0x70] sm:$0xff] %v6204
        %6269 = vst [vmem:[#allocation2 + $0x78] sm:$0xff] %v6205
        %6270 = vst [vmem:[#allocation2 + $0x80] sm:$0xff] %v6206
        %6271 = vst [vmem:[#allocation2 + $0x88] sm:$0xff] %v6207
        %6272 = vst [vmem:[#allocation2 + $0x90] sm:$0xff] %v6208
        %6273 = vst [vmem:[#allocation2 + $0x98] sm:$0xff] %v6209
        %6274 = vst [vmem:[#allocation2 + $0xa0] sm:$0xff] %v6210
        %6275 = vst [vmem:[#allocation2 + $0xa8] sm:$0xff] %v6211
        %6276 = vst [vmem:[#allocation2 + $0xb0] sm:$0xff] %v6212
        %6277 = vst [vmem:[#allocation2 + $0xb8] sm:$0xff] %v6213
        %6278 = vst [vmem:[#allocation2 + $0xc0] sm:$0xff] %v6214
        %6279 = vst [vmem:[#allocation2 + $0xc8] sm:$0xff] %v6215
        %6280 = vst [vmem:[#allocation2 + $0xd0] sm:$0xff] %v6216
        %6281 = vst [vmem:[#allocation2 + $0xd8] sm:$0xff] %v6217
        %6282 = vst [vmem:[#allocation2 + $0xe0] sm:$0xff] %v6218
        %6283 = vst [vmem:[#allocation2 + $0xe8] sm:$0xff] %v6219
        %6284 = vst [vmem:[#allocation2 + $0xf0] sm:$0xff] %v6220
        %6285 = vst [vmem:[#allocation2 + $0xf8] sm:$0xff] %v6221
        %6286 = vst [vmem:[#allocation2 + $0x100] sm:$0xff] %v6222
        %6287 = vst [vmem:[#allocation2 + $0x108] sm:$0xff] %v6223
        %6288 = vst [vmem:[#allocation2 + $0x110] sm:$0xff] %v6224
        %6289 = vst [vmem:[#allocation2 + $0x118] sm:$0xff] %v6225
        %6290 = vst [vmem:[#allocation2 + $0x120] sm:$0xff] %v6226
        %6291 = vst [vmem:[#allocation2 + $0x128] sm:$0xff] %v6227
        %6292 = vst [vmem:[#allocation2 + $0x130] sm:$0xff] %v6228
        %6293 = vst [vmem:[#allocation2 + $0x138] sm:$0xff] %v6229
        %6294 = vst [vmem:[#allocation2 + $0x140] sm:$0xff] %v6230
        %6295 = vst [vmem:[#allocation2 + $0x148] sm:$0xff] %v6231
        %6296 = vst [vmem:[#allocation2 + $0x150] sm:$0xff] %v6232
        %6297 = vst [vmem:[#allocation2 + $0x158] sm:$0xff] %v6233
        %6298 = vst [vmem:[#allocation2 + $0x160] sm:$0xff] %v6234
        %6299 = vst [vmem:[#allocation2 + $0x168] sm:$0xff] %v6235
        %6300 = vst [vmem:[#allocation2 + $0x170] sm:$0xff] %v6236
        %6301 = vst [vmem:[#allocation2 + $0x178] sm:$0xff] %v6237
        %6302 = vst [vmem:[#allocation2 + $0x180] sm:$0xff] %v6238
        %6303 = vst [vmem:[#allocation2 + $0x188] sm:$0xff] %v6239
        %6304 = vst [vmem:[#allocation2 + $0x190] sm:$0xff] %v6240
        %6305 = vst [vmem:[#allocation2 + $0x198] sm:$0xff] %v6241
        %6306 = vst [vmem:[#allocation2 + $0x1a0] sm:$0xff] %v6242
        %6307 = vst [vmem:[#allocation2 + $0x1a8] sm:$0xff] %v6243
        %6308 = vst [vmem:[#allocation2 + $0x1b0] sm:$0xff] %v6244
        %6309 = vst [vmem:[#allocation2 + $0x1b8] sm:$0xff] %v6245
        %6310 = vst [vmem:[#allocation2 + $0x1c0] sm:$0xff] %v6246
        %6311 = vst [vmem:[#allocation2 + $0x1c8] sm:$0xff] %v6247
        %6312 = vst [vmem:[#allocation2 + $0x1d0] sm:$0xff] %v6248
        %6313 = vst [vmem:[#allocation2 + $0x1d8] sm:$0xff] %v6249
        %6314 = vst [vmem:[#allocation2 + $0x1e0] sm:$0xff] %v6250
        %6315 = vst [vmem:[#allocation2 + $0x1e8] sm:$0xff] %v6251
        %6316 = vst [vmem:[#allocation2 + $0x1f0] sm:$0xff] %v6252
        %6317 = vst [vmem:[#allocation2 + $0x1f8] sm:$0xff] %v6253
        %v6318 = vld [vmem:[#allocation2] sm:$0xff]
        %v6319 = vld [vmem:[#allocation2 + $0x8] sm:$0xff]
        %v6320 = vld [vmem:[#allocation2 + $0x10] sm:$0xff]
        %v6321 = vld [vmem:[#allocation2 + $0x18] sm:$0xff]
        %v6322 = vld [vmem:[#allocation2 + $0x20] sm:$0xff]
        %v6323 = vld [vmem:[#allocation2 + $0x28] sm:$0xff]
        %v6324 = vld [vmem:[#allocation2 + $0x30] sm:$0xff]
        %v6325 = vld [vmem:[#allocation2 + $0x38] sm:$0xff]
        %v6326 = vld [vmem:[#allocation2 + $0x40] sm:$0xff]
        %v6327 = vld [vmem:[#allocation2 + $0x48] sm:$0xff]
        %v6328 = vld [vmem:[#allocation2 + $0x50] sm:$0xff]
        %v6329 = vld [vmem:[#allocation2 + $0x58] sm:$0xff]
        %v6330 = vld [vmem:[#allocation2 + $0x60] sm:$0xff]
        %v6331 = vld [vmem:[#allocation2 + $0x68] sm:$0xff]
        %v6332 = vld [vmem:[#allocation2 + $0x70] sm:$0xff]
        %v6333 = vld [vmem:[#allocation2 + $0x78] sm:$0xff]
        %v6334 = vld [vmem:[#allocation2 + $0x80] sm:$0xff]
        %v6335 = vld [vmem:[#allocation2 + $0x88] sm:$0xff]
        %v6336 = vld [vmem:[#allocation2 + $0x90] sm:$0xff]
        %v6337 = vld [vmem:[#allocation2 + $0x98] sm:$0xff]
        %v6338 = vld [vmem:[#allocation2 + $0xa0] sm:$0xff]
        %v6339 = vld [vmem:[#allocation2 + $0xa8] sm:$0xff]
        %v6340 = vld [vmem:[#allocation2 + $0xb0] sm:$0xff]
        %v6341 = vld [vmem:[#allocation2 + $0xb8] sm:$0xff]
        %v6342 = vld [vmem:[#allocation2 + $0xc0] sm:$0xff]
        %v6343 = vld [vmem:[#allocation2 + $0xc8] sm:$0xff]
        %v6344 = vld [vmem:[#allocation2 + $0xd0] sm:$0xff]
        %v6345 = vld [vmem:[#allocation2 + $0xd8] sm:$0xff]
        %v6346 = vld [vmem:[#allocation2 + $0xe0] sm:$0xff]
        %v6347 = vld [vmem:[#allocation2 + $0xe8] sm:$0xff]
        %v6348 = vld [vmem:[#allocation2 + $0xf0] sm:$0xff]
        %v6349 = vld [vmem:[#allocation2 + $0xf8] sm:$0xff]
        %v6350 = vld [vmem:[#allocation2 + $0x100] sm:$0xff]
        %v6351 = vld [vmem:[#allocation2 + $0x108] sm:$0xff]
        %v6352 = vld [vmem:[#allocation2 + $0x110] sm:$0xff]
        %v6353 = vld [vmem:[#allocation2 + $0x118] sm:$0xff]
        %v6354 = vld [vmem:[#allocation2 + $0x120] sm:$0xff]
        %v6355 = vld [vmem:[#allocation2 + $0x128] sm:$0xff]
        %v6356 = vld [vmem:[#allocation2 + $0x130] sm:$0xff]
        %v6357 = vld [vmem:[#allocation2 + $0x138] sm:$0xff]
        %v6358 = vld [vmem:[#allocation2 + $0x140] sm:$0xff]
        %v6359 = vld [vmem:[#allocation2 + $0x148] sm:$0xff]
        %v6360 = vld [vmem:[#allocation2 + $0x150] sm:$0xff]
        %v6361 = vld [vmem:[#allocation2 + $0x158] sm:$0xff]
        %v6362 = vld [vmem:[#allocation2 + $0x160] sm:$0xff]
        %v6363 = vld [vmem:[#allocation2 + $0x168] sm:$0xff]
        %v6364 = vld [vmem:[#allocation2 + $0x170] sm:$0xff]
        %v6365 = vld [vmem:[#allocation2 + $0x178] sm:$0xff]
        %v6366 = vld [vmem:[#allocation2 + $0x180] sm:$0xff]
        %v6367 = vld [vmem:[#allocation2 + $0x188] sm:$0xff]
        %v6368 = vld [vmem:[#allocation2 + $0x190] sm:$0xff]
        %v6369 = vld [vmem:[#allocation2 + $0x198] sm:$0xff]
        %v6370 = vld [vmem:[#allocation2 + $0x1a0] sm:$0xff]
        %v6371 = vld [vmem:[#allocation2 + $0x1a8] sm:$0xff]
        %v6372 = vld [vmem:[#allocation2 + $0x1b0] sm:$0xff]
        %v6373 = vld [vmem:[#allocation2 + $0x1b8] sm:$0xff]
        %v6374 = vld [vmem:[#allocation2 + $0x1c0] sm:$0xff]
        %v6375 = vld [vmem:[#allocation2 + $0x1c8] sm:$0xff]
        %v6376 = vld [vmem:[#allocation2 + $0x1d0] sm:$0xff]
        %v6377 = vld [vmem:[#allocation2 + $0x1d8] sm:$0xff]
        %v6378 = vld [vmem:[#allocation2 + $0x1e0] sm:$0xff]
        %v6379 = vld [vmem:[#allocation2 + $0x1e8] sm:$0xff]
        %v6380 = vld [vmem:[#allocation2 + $0x1f0] sm:$0xff]
        %v6381 = vld [vmem:[#allocation2 + $0x1f8] sm:$0xff]
        %v6382 = vld [vmem:[%s2] sm:$0x1]
        %v6384 = vperm.slane %v6382, 0
        %v6386 = vadd.f32 %v6318, %v6384
        %v6387 = vadd.f32 %v6319, %v6384
        %v6388 = vadd.f32 %v6320, %v6384
        %v6389 = vadd.f32 %v6321, %v6384
        %v6390 = vadd.f32 %v6322, %v6384
        %v6391 = vadd.f32 %v6323, %v6384
        %v6392 = vadd.f32 %v6324, %v6384
        %v6393 = vadd.f32 %v6325, %v6384
        %v6394 = vadd.f32 %v6326, %v6384
        %v6395 = vadd.f32 %v6327, %v6384
        %v6396 = vadd.f32 %v6328, %v6384
        %v6397 = vadd.f32 %v6329, %v6384
        %v6398 = vadd.f32 %v6330, %v6384
        %v6399 = vadd.f32 %v6331, %v6384
        %v6400 = vadd.f32 %v6332, %v6384
        %v6401 = vadd.f32 %v6333, %v6384
        %v6402 = vadd.f32 %v6334, %v6384
        %v6403 = vadd.f32 %v6335, %v6384
        %v6404 = vadd.f32 %v6336, %v6384
        %v6405 = vadd.f32 %v6337, %v6384
        %v6406 = vadd.f32 %v6338, %v6384
        %v6407 = vadd.f32 %v6339, %v6384
        %v6408 = vadd.f32 %v6340, %v6384
        %v6409 = vadd.f32 %v6341, %v6384
        %v6410 = vadd.f32 %v6342, %v6384
        %v6411 = vadd.f32 %v6343, %v6384
        %v6412 = vadd.f32 %v6344, %v6384
        %v6413 = vadd.f32 %v6345, %v6384
        %v6414 = vadd.f32 %v6346, %v6384
        %v6415 = vadd.f32 %v6347, %v6384
        %v6416 = vadd.f32 %v6348, %v6384
        %v6417 = vadd.f32 %v6349, %v6384
        %v6418 = vadd.f32 %v6350, %v6384
        %v6419 = vadd.f32 %v6351, %v6384
        %v6420 = vadd.f32 %v6352, %v6384
        %v6421 = vadd.f32 %v6353, %v6384
        %v6422 = vadd.f32 %v6354, %v6384
        %v6423 = vadd.f32 %v6355, %v6384
        %v6424 = vadd.f32 %v6356, %v6384
        %v6425 = vadd.f32 %v6357, %v6384
        %v6426 = vadd.f32 %v6358, %v6384
        %v6427 = vadd.f32 %v6359, %v6384
        %v6428 = vadd.f32 %v6360, %v6384
        %v6429 = vadd.f32 %v6361, %v6384
        %v6430 = vadd.f32 %v6362, %v6384
        %v6431 = vadd.f32 %v6363, %v6384
        %v6432 = vadd.f32 %v6364, %v6384
        %v6433 = vadd.f32 %v6365, %v6384
        %v6434 = vadd.f32 %v6366, %v6384
        %v6435 = vadd.f32 %v6367, %v6384
        %v6436 = vadd.f32 %v6368, %v6384
        %v6437 = vadd.f32 %v6369, %v6384
        %v6438 = vadd.f32 %v6370, %v6384
        %v6439 = vadd.f32 %v6371, %v6384
        %v6440 = vadd.f32 %v6372, %v6384
        %v6441 = vadd.f32 %v6373, %v6384
        %v6442 = vadd.f32 %v6374, %v6384
        %v6443 = vadd.f32 %v6375, %v6384
        %v6444 = vadd.f32 %v6376, %v6384
        %v6445 = vadd.f32 %v6377, %v6384
        %v6446 = vadd.f32 %v6378, %v6384
        %v6447 = vadd.f32 %v6379, %v6384
        %v6448 = vadd.f32 %v6380, %v6384
        %v6449 = vadd.f32 %v6381, %v6384
        %v6450 = vmax.f32 %v6386, 0.0
        %v6451 = vmax.f32 %v6387, 0.0
        %v6452 = vmax.f32 %v6388, 0.0
        %v6453 = vmax.f32 %v6389, 0.0
        %v6454 = vmax.f32 %v6390, 0.0
        %v6455 = vmax.f32 %v6391, 0.0
        %v6456 = vmax.f32 %v6392, 0.0
        %v6457 = vmax.f32 %v6393, 0.0
        %v6458 = vmax.f32 %v6394, 0.0
        %v6459 = vmax.f32 %v6395, 0.0
        %v6460 = vmax.f32 %v6396, 0.0
        %v6461 = vmax.f32 %v6397, 0.0
        %v6462 = vmax.f32 %v6398, 0.0
        %v6463 = vmax.f32 %v6399, 0.0
        %v6464 = vmax.f32 %v6400, 0.0
        %v6465 = vmax.f32 %v6401, 0.0
        %v6466 = vmax.f32 %v6402, 0.0
        %v6467 = vmax.f32 %v6403, 0.0
        %v6468 = vmax.f32 %v6404, 0.0
        %v6469 = vmax.f32 %v6405, 0.0
        %v6470 = vmax.f32 %v6406, 0.0
        %v6471 = vmax.f32 %v6407, 0.0
        %v6472 = vmax.f32 %v6408, 0.0
        %v6473 = vmax.f32 %v6409, 0.0
        %v6474 = vmax.f32 %v6410, 0.0
        %v6475 = vmax.f32 %v6411, 0.0
        %v6476 = vmax.f32 %v6412, 0.0
        %v6477 = vmax.f32 %v6413, 0.0
        %v6478 = vmax.f32 %v6414, 0.0
        %v6479 = vmax.f32 %v6415, 0.0
        %v6480 = vmax.f32 %v6416, 0.0
        %v6481 = vmax.f32 %v6417, 0.0
        %v6482 = vmax.f32 %v6418, 0.0
        %v6483 = vmax.f32 %v6419, 0.0
        %v6484 = vmax.f32 %v6420, 0.0
        %v6485 = vmax.f32 %v6421, 0.0
        %v6486 = vmax.f32 %v6422, 0.0
        %v6487 = vmax.f32 %v6423, 0.0
        %v6488 = vmax.f32 %v6424, 0.0
        %v6489 = vmax.f32 %v6425, 0.0
        %v6490 = vmax.f32 %v6426, 0.0
        %v6491 = vmax.f32 %v6427, 0.0
        %v6492 = vmax.f32 %v6428, 0.0
        %v6493 = vmax.f32 %v6429, 0.0
        %v6494 = vmax.f32 %v6430, 0.0
        %v6495 = vmax.f32 %v6431, 0.0
        %v6496 = vmax.f32 %v6432, 0.0
        %v6497 = vmax.f32 %v6433, 0.0
        %v6498 = vmax.f32 %v6434, 0.0
        %v6499 = vmax.f32 %v6435, 0.0
        %v6500 = vmax.f32 %v6436, 0.0
        %v6501 = vmax.f32 %v6437, 0.0
        %v6502 = vmax.f32 %v6438, 0.0
        %v6503 = vmax.f32 %v6439, 0.0
        %v6504 = vmax.f32 %v6440, 0.0
        %v6505 = vmax.f32 %v6441, 0.0
        %v6506 = vmax.f32 %v6442, 0.0
        %v6507 = vmax.f32 %v6443, 0.0
        %v6508 = vmax.f32 %v6444, 0.0
        %v6509 = vmax.f32 %v6445, 0.0
        %v6510 = vmax.f32 %v6446, 0.0
        %v6511 = vmax.f32 %v6447, 0.0
        %v6512 = vmax.f32 %v6448, 0.0
        %v6513 = vmax.f32 %v6449, 0.0
        %v6514 = vpack.c.bf16 %v6450, %v6450
        %v6515 = vpack.c.bf16 %v6451, %v6451
        %v6516 = vpack.c.bf16 %v6452, %v6452
        %v6517 = vpack.c.bf16 %v6453, %v6453
        %v6518 = vpack.c.bf16 %v6454, %v6454
        %v6519 = vpack.c.bf16 %v6455, %v6455
        %v6520 = vpack.c.bf16 %v6456, %v6456
        %v6521 = vpack.c.bf16 %v6457, %v6457
        %v6522 = vpack.c.bf16 %v6458, %v6458
        %v6523 = vpack.c.bf16 %v6459, %v6459
        %v6524 = vpack.c.bf16 %v6460, %v6460
        %v6525 = vpack.c.bf16 %v6461, %v6461
        %v6526 = vpack.c.bf16 %v6462, %v6462
        %v6527 = vpack.c.bf16 %v6463, %v6463
        %v6528 = vpack.c.bf16 %v6464, %v6464
        %v6529 = vpack.c.bf16 %v6465, %v6465
        %v6530 = vpack.c.bf16 %v6466, %v6466
        %v6531 = vpack.c.bf16 %v6467, %v6467
        %v6532 = vpack.c.bf16 %v6468, %v6468
        %v6533 = vpack.c.bf16 %v6469, %v6469
        %v6534 = vpack.c.bf16 %v6470, %v6470
        %v6535 = vpack.c.bf16 %v6471, %v6471
        %v6536 = vpack.c.bf16 %v6472, %v6472
        %v6537 = vpack.c.bf16 %v6473, %v6473
        %v6538 = vpack.c.bf16 %v6474, %v6474
        %v6539 = vpack.c.bf16 %v6475, %v6475
        %v6540 = vpack.c.bf16 %v6476, %v6476
        %v6541 = vpack.c.bf16 %v6477, %v6477
        %v6542 = vpack.c.bf16 %v6478, %v6478
        %v6543 = vpack.c.bf16 %v6479, %v6479
        %v6544 = vpack.c.bf16 %v6480, %v6480
        %v6545 = vpack.c.bf16 %v6481, %v6481
        %v6546 = vpack.c.bf16 %v6482, %v6482
        %v6547 = vpack.c.bf16 %v6483, %v6483
        %v6548 = vpack.c.bf16 %v6484, %v6484
        %v6549 = vpack.c.bf16 %v6485, %v6485
        %v6550 = vpack.c.bf16 %v6486, %v6486
        %v6551 = vpack.c.bf16 %v6487, %v6487
        %v6552 = vpack.c.bf16 %v6488, %v6488
        %v6553 = vpack.c.bf16 %v6489, %v6489
        %v6554 = vpack.c.bf16 %v6490, %v6490
        %v6555 = vpack.c.bf16 %v6491, %v6491
        %v6556 = vpack.c.bf16 %v6492, %v6492
        %v6557 = vpack.c.bf16 %v6493, %v6493
        %v6558 = vpack.c.bf16 %v6494, %v6494
        %v6559 = vpack.c.bf16 %v6495, %v6495
        %v6560 = vpack.c.bf16 %v6496, %v6496
        %v6561 = vpack.c.bf16 %v6497, %v6497
        %v6562 = vpack.c.bf16 %v6498, %v6498
        %v6563 = vpack.c.bf16 %v6499, %v6499
        %v6564 = vpack.c.bf16 %v6500, %v6500
        %v6565 = vpack.c.bf16 %v6501, %v6501
        %v6566 = vpack.c.bf16 %v6502, %v6502
        %v6567 = vpack.c.bf16 %v6503, %v6503
        %v6568 = vpack.c.bf16 %v6504, %v6504
        %v6569 = vpack.c.bf16 %v6505, %v6505
        %v6570 = vpack.c.bf16 %v6506, %v6506
        %v6571 = vpack.c.bf16 %v6507, %v6507
        %v6572 = vpack.c.bf16 %v6508, %v6508
        %v6573 = vpack.c.bf16 %v6509, %v6509
        %v6574 = vpack.c.bf16 %v6510, %v6510
        %v6575 = vpack.c.bf16 %v6511, %v6511
        %v6576 = vpack.c.bf16 %v6512, %v6512
        %v6577 = vpack.c.bf16 %v6513, %v6513
        %6578 = vst [vmem:[%s207] sm:$0xf] %v6514
        %6579 = vst [vmem:[%s207 + $0x4] sm:$0xf] %v6515
        %6580 = vst [vmem:[%s207 + $0x8] sm:$0xf] %v6516
        %6581 = vst [vmem:[%s207 + $0xc] sm:$0xf] %v6517
        %6582 = vst [vmem:[%s207 + $0x10] sm:$0xf] %v6518
        %6583 = vst [vmem:[%s207 + $0x14] sm:$0xf] %v6519
        %6584 = vst [vmem:[%s207 + $0x18] sm:$0xf] %v6520
        %6585 = vst [vmem:[%s207 + $0x1c] sm:$0xf] %v6521
        %6586 = vst [vmem:[%s207 + $0x20] sm:$0xf] %v6522
        %6587 = vst [vmem:[%s207 + $0x24] sm:$0xf] %v6523
        %6588 = vst [vmem:[%s207 + $0x28] sm:$0xf] %v6524
        %6589 = vst [vmem:[%s207 + $0x2c] sm:$0xf] %v6525
        %6590 = vst [vmem:[%s207 + $0x30] sm:$0xf] %v6526
        %6591 = vst [vmem:[%s207 + $0x34] sm:$0xf] %v6527
        %6592 = vst [vmem:[%s207 + $0x38] sm:$0xf] %v6528
        %6593 = vst [vmem:[%s207 + $0x3c] sm:$0xf] %v6529
        %6594 = vst [vmem:[%s207 + $0x40] sm:$0xf] %v6530
        %6595 = vst [vmem:[%s207 + $0x44] sm:$0xf] %v6531
        %6596 = vst [vmem:[%s207 + $0x48] sm:$0xf] %v6532
        %6597 = vst [vmem:[%s207 + $0x4c] sm:$0xf] %v6533
        %6598 = vst [vmem:[%s207 + $0x50] sm:$0xf] %v6534
        %6599 = vst [vmem:[%s207 + $0x54] sm:$0xf] %v6535
        %6600 = vst [vmem:[%s207 + $0x58] sm:$0xf] %v6536
        %6601 = vst [vmem:[%s207 + $0x5c] sm:$0xf] %v6537
        %6602 = vst [vmem:[%s207 + $0x60] sm:$0xf] %v6538
        %6603 = vst [vmem:[%s207 + $0x64] sm:$0xf] %v6539
        %6604 = vst [vmem:[%s207 + $0x68] sm:$0xf] %v6540
        %6605 = vst [vmem:[%s207 + $0x6c] sm:$0xf] %v6541
        %6606 = vst [vmem:[%s207 + $0x70] sm:$0xf] %v6542
        %6607 = vst [vmem:[%s207 + $0x74] sm:$0xf] %v6543
        %6608 = vst [vmem:[%s207 + $0x78] sm:$0xf] %v6544
        %6609 = vst [vmem:[%s207 + $0x7c] sm:$0xf] %v6545
        %6610 = vst [vmem:[%s207 + $0x80] sm:$0xf] %v6546
        %6611 = vst [vmem:[%s207 + $0x84] sm:$0xf] %v6547
        %6612 = vst [vmem:[%s207 + $0x88] sm:$0xf] %v6548
        %6613 = vst [vmem:[%s207 + $0x8c] sm:$0xf] %v6549
        %6614 = vst [vmem:[%s207 + $0x90] sm:$0xf] %v6550
        %6615 = vst [vmem:[%s207 + $0x94] sm:$0xf] %v6551
        %6616 = vst [vmem:[%s207 + $0x98] sm:$0xf] %v6552
        %6617 = vst [vmem:[%s207 + $0x9c] sm:$0xf] %v6553
        %6618 = vst [vmem:[%s207 + $0xa0] sm:$0xf] %v6554
        %6619 = vst [vmem:[%s207 + $0xa4] sm:$0xf] %v6555
        %6620 = vst [vmem:[%s207 + $0xa8] sm:$0xf] %v6556
        %6621 = vst [vmem:[%s207 + $0xac] sm:$0xf] %v6557
        %6622 = vst [vmem:[%s207 + $0xb0] sm:$0xf] %v6558
        %6623 = vst [vmem:[%s207 + $0xb4] sm:$0xf] %v6559
        %6624 = vst [vmem:[%s207 + $0xb8] sm:$0xf] %v6560
        %6625 = vst [vmem:[%s207 + $0xbc] sm:$0xf] %v6561
        %6626 = vst [vmem:[%s207 + $0xc0] sm:$0xf] %v6562
        %6627 = vst [vmem:[%s207 + $0xc4] sm:$0xf] %v6563
        %6628 = vst [vmem:[%s207 + $0xc8] sm:$0xf] %v6564
        %6629 = vst [vmem:[%s207 + $0xcc] sm:$0xf] %v6565
        %6630 = vst [vmem:[%s207 + $0xd0] sm:$0xf] %v6566
        %6631 = vst [vmem:[%s207 + $0xd4] sm:$0xf] %v6567
        %6632 = vst [vmem:[%s207 + $0xd8] sm:$0xf] %v6568
        %6633 = vst [vmem:[%s207 + $0xdc] sm:$0xf] %v6569
        %6634 = vst [vmem:[%s207 + $0xe0] sm:$0xf] %v6570
        %6635 = vst [vmem:[%s207 + $0xe4] sm:$0xf] %v6571
        %6636 = vst [vmem:[%s207 + $0xe8] sm:$0xf] %v6572
        %6637 = vst [vmem:[%s207 + $0xec] sm:$0xf] %v6573
        %6638 = vst [vmem:[%s207 + $0xf0] sm:$0xf] %v6574
        %6639 = vst [vmem:[%s207 + $0xf4] sm:$0xf] %v6575
        %6640 = vst [vmem:[%s207 + $0xf8] sm:$0xf] %v6576
        %6641 = vst [vmem:[%s207 + $0xfc] sm:$0xf] %v6577
        %s6642 = sand.u32 %s97, 1
        %s6643 = scalar_lea.sflag [#allocation5], %s6642
        %s6644 = sand.u32 %s97, 1
        %s6645 = smul.addr %s6644, 256
        %s6646 = scalar_lea.vmem [#allocation8], %s6645
        // Predicated region
        $region41: #{tpu_custom_call.1} parent=31 // pred_check
          %p6647 = pneg %p107
        $region42: #{tpu_custom_call.1} parent=31 // pred_check_branch
          %6649 = sbr.rel (%p6647) target = $region44
        $region43: #{tpu_custom_call.1} parent=31 // pred_region
          %6651 = vsyncadd %s6643, 0
          %s6652 = smul.addr %s21, 64
          %s6653 = smul.addr %s6652, 4
          %s6654 = scalar_lea.hbm %s3, %s6653
          %s6655 = sshll.u32 %s6646, 4
          %s6656 = int_to_ptr.vmem [resolvable:$true] %s6655
          %s6657 = sshll.u32 %s6654, 4
          %s6658 = int_to_ptr.hbm [resolvable:$true] %s6657
          %6663 = dma.vmem_to_hbm [thread:$0]  %s6656, 4096, %s6658, %s6643, 64, 64, 4
        $region44: #{tpu_custom_call.1} parent=31 // pred_fallthru
          _
      $region32: #{tpu_custom_call.1} parent=5 // pred_fallthru
        _
      %p6664 = scmp.le.s32.totalorder 2, %s16
      // Predicated region
      $region45: #{tpu_custom_call.1} parent=5 // pred_check
        %p6665 = pneg %p6664
      $region46: #{tpu_custom_call.1} parent=5 // pred_check_branch
        %6667 = sbr.rel (%p6665) target = $region48
      $region47: #{tpu_custom_call.1} parent=5 // pred_region
        %s6668 = ssub.s32 %s16, 2
        // Predicated region
        $region49: #{tpu_custom_call.1} parent=47 // pred_check
          %p6669 = pneg %p113
        $region50: #{tpu_custom_call.1} parent=47 // pred_check_branch
          %6671 = sbr.rel (%p6669) target = $region52
        $region51: #{tpu_custom_call.1} parent=47 // pred_region
          %s6672 = sand.u32 %s98, 1
          %s6673 = scalar_lea.sflag [#allocation5], %s6672
          %s6674 = sand.u32 %s98, 1
          %s6675 = smul.addr %s6674, 256
          %s6676 = scalar_lea.vmem [#allocation8], %s6675
          %6678 = dma.done %s6673, 4096
        $region52: #{tpu_custom_call.1} parent=47 // pred_fallthru
          _
      $region48: #{tpu_custom_call.1} parent=5 // pred_fallthru
        _
    $region6: #{tpu_custom_call.1} parent=1 // loop_footer
      %s20 = sadd.s32 1, %s16
    $region7: #{tpu_custom_call.1} parent=1 // loop_footer_branch
      %15 = sbr.rel target = $region3
    $region8: #{tpu_custom_call.1} parent=1 // loop_exit
      _
    %6679 = vsyncpa [#allocation4], 1
    %s6680 = scalar_lea.sflag [#allocation4], 1
    %6681 = vsyncpa %s6680, 1
    %6682 = vsyncpa [#allocation7], 1
    %6683 = vsyncpa [#allocation5], 1
    %s6684 = scalar_lea.sflag [#allocation5], 1
    %6685 = vsyncpa %s6684, 1

</llo_original>
